<compile_context>
chip_gen: v7x
topology: tpu7x:2x2x1
jax: 0.10.0
libtpu: 0.0.40
codegen_flags: <defaults>
</compile_context>

<pallas_src>
import functools

import jax
import jax.numpy as jnp
from jax import lax
from jax.experimental import pallas as pl
from jax.experimental.pallas import tpu as pltpu

SIGMA_3D = 0.3 * 30.0 / 36.0       # = 0.25, non-trainable sigma_3d parameter
VMEM_LIMIT = 64 * 1024 * 1024      # raise default scoped-VMEM (16/32 MiB) for prod shapes


def _pick_tile(n, target):
    """Largest multiple of 128 <= target that divides n evenly; falls back to full n."""
    if n % 128 == 0:
        t = max(128, min((target // 128) * 128, n))
        while n % t:
            t -= 128
        return t
    return n


# ------------------------------ fused kernels -------------------------------

def _spatial_kernel(inv_two_sigma, tj, x_ref, d_ref,
                    vw, vb, caw, cas, cash, ctw, cts, ctsh,
                    c1a, c1b, c1s, c1sh, gamma_ref,
                    out_ref, v_scr):
    """One (batch, view, target-row-tile) step of Spatial_Attn."""
    j = pl.program_id(2)

    # value_conv of the whole view, computed once per (batch, view) and reused
    # across all target-row tiles (scratch persists over the "arbitrary" j axis).
    @pl.when(j == 0)
    def _():
        v_scr[...] = (jnp.dot(x_ref[...].astype(jnp.bfloat16), vw[...],
                              preferred_element_type=jnp.float32) + vb[...]
                      ).astype(jnp.bfloat16)

    # attention kernel for this tile of target columns: a[i, t] (source i, target t).
    # d_ref may be streamed as bf16 by the caller; upcast before the exp.
    a = jnp.exp(d_ref[...].astype(jnp.float32) * (-inv_two_sigma))     # (N, TJ)
    norm = jnp.sum(a, axis=0, keepdims=True)                            # (1, TJ), exact

    # column-normalize fused into the (needed anyway) bf16 cast, then aggregate:
    # ca[t, c] = sum_i a[i, t] * v[i, c] / norm[t]   (A^T V via contraction on axis 0)
    an_b = (a * pl.reciprocal(norm, approx=True)).astype(jnp.bfloat16)
    ca = lax.dot_general(an_b, v_scr[...],
                         (((0,), (0,)), ((), ())),
                         preferred_element_type=jnp.float32)            # (TJ, C)

    i0 = pl.multiple_of(j * tj, tj)
    xj = x_ref[pl.ds(i0, tj), :]                                        # (TJ, C) f32
    xjb = xj.astype(jnp.bfloat16)

    # ca_conv + BN  /  context_conv + BN
    ca_c = jnp.dot(ca.astype(jnp.bfloat16), caw[...],
                   preferred_element_type=jnp.float32) * cas[...] + cash[...]
    ctx_c = jnp.dot(xjb, ctw[...], preferred_element_type=jnp.float32) * cts[...] + ctsh[...]

    # conv1 + BN on the (virtual) concat: split weight, accumulate two matmuls
    y = (jnp.dot(ca_c.astype(jnp.bfloat16), c1a[...], preferred_element_type=jnp.float32)
         + jnp.dot(ctx_c.astype(jnp.bfloat16), c1b[...], preferred_element_type=jnp.float32))
    y = y * c1s[...] + c1sh[...]

    out_ref[...] = (gamma_ref[0] * y + xj).astype(out_ref.dtype)        # fused residual


def _spatial_map_kernel(inv_two_sigma, d_ref, a_ref):
    """Tiny tiled elementwise pass: raw attention map exp(-d/2sigma) for view 0."""
    a_ref[...] = jnp.exp(d_ref[...].astype(jnp.float32) * (-inv_two_sigma))


def _temp_kernel(inv_sqrt_ck, tq, x_all_ref, x_tile_ref,
                 kw, ks, kt, vw, vb, ow, ob, fwr, fwm, fb,
                 out_ref, attn_ref, k_scr, v_scr):
    """One (batch, query-row-tile, reference-view) step of Temp_Attn."""
    qj = pl.program_id(1)
    i = pl.program_id(2)

    # Shared f_key(=f_query) and f_value projections of all 3 views, computed once per
    # batch into VMEM scratch (persists over the "arbitrary" qj / i axes).
    @pl.when((qj == 0) & (i == 0))
    def _():
        for view in range(3):
            xb = x_all_ref[view].astype(jnp.bfloat16)                   # (N, C)
            k_scr[view] = (jnp.dot(xb, kw[...], preferred_element_type=jnp.float32)
                           * ks[...] + kt[...]).astype(jnp.bfloat16)
            v_scr[view] = (jnp.dot(xb, vw[...], preferred_element_type=jnp.float32)
                           + vb[...]).astype(jnp.bfloat16)

    xr = x_tile_ref[...].astype(jnp.float32)                            # (TQ, C)
    xrb = xr.astype(jnp.bfloat16)
    # Query projection for this tile of the reference view (f_query == f_key).
    q = (jnp.dot(xrb, kw[...], preferred_element_type=jnp.float32)
         * ks[...] + kt[...]).astype(jnp.bfloat16)                      # (TQ, Ck)

    def slot_body(slot, matching):
        adj = lax.rem(i + slot + 1, 3)                                  # adjacent view idx
        sim = lax.dot_general(q, k_scr[adj],                            # Q K^T, no transpose
                              (((1,), (1,)), ((), ())),
                              preferred_element_type=jnp.float32) * inv_sqrt_ck   # (TQ, N)
        m = jnp.max(sim, axis=-1, keepdims=True)
        e = jnp.exp(sim - m)
        attn = e * pl.reciprocal(jnp.sum(e, axis=-1, keepdims=True), approx=True)
        ctx = jnp.dot(attn.astype(jnp.bfloat16), v_scr[adj],
                      preferred_element_type=jnp.float32)               # (TQ, Ck)
        matching = matching + (jnp.dot(ctx.astype(jnp.bfloat16), ow[...],
                                       preferred_element_type=jnp.float32) + ob[...])

        @pl.when(i == 0)                                                # maps only for view 0
        def _():
            attn_ref[slot] = attn
        return matching

    # fori_loop (not unrolled) bounds the live ranges of the two slots' (TQ, N) temporaries.
    matching = lax.fori_loop(0, 2, slot_body, jnp.zeros_like(xr))

    # fuse_layer on the (virtual) concat(ref, matching): two accumulated matmuls
    fuse = (jnp.dot(xrb, fwr[...], preferred_element_type=jnp.float32)
            + jnp.dot(matching.astype(jnp.bfloat16), fwm[...],
                      preferred_element_type=jnp.float32)
            + fb[...])
    out_ref[...] = xr + fuse                                            # fused residual


# ------------------------------- wrappers ------------------------------------

def spatial_attn_fused(x, dist, p, row_tile):
    """x: (B, V, N, C) channel-last f32, dist: (B, V, N, N)."""
    B, V, N, C = x.shape
    TJ = _pick_tile(N, row_tile)
    NJ = N // TJ
    bf = lambda a: a.astype(jnp.bfloat16)
    row = lambda a: a.reshape(1, -1)
    wspec = lambda r, c: pl.BlockSpec((r, c), lambda b, v, j: (0, 0))

    kernel = functools.partial(_spatial_kernel, 1.0 / (2.0 * SIGMA_3D), TJ)
    out = pl.pallas_call(
        kernel,
        out_shape=jax.ShapeDtypeStruct((B, V, N, C), jnp.bfloat16),   # bf16 to temp kernel
        grid=(B, V, NJ),
        in_specs=[
            pl.BlockSpec((None, None, N, C), lambda b, v, j: (b, v, 0, 0)),    # cf (full view)
            pl.BlockSpec((None, None, N, TJ), lambda b, v, j: (b, v, 0, j)),   # distance tile
            wspec(C, C), wspec(1, C),                        # value_w, value_b
            wspec(C, C), wspec(1, C), wspec(1, C),           # ca_w, ca_scale, ca_shift
            wspec(C, C), wspec(1, C), wspec(1, C),           # ctx_w, ctx_scale, ctx_shift
            wspec(C, C), wspec(C, C), wspec(1, C), wspec(1, C),  # conv1 halves + BN
            pl.BlockSpec(memory_space=pltpu.MemorySpace.SMEM),   # gamma scalar
        ],
        out_specs=pl.BlockSpec((None, None, TJ, C), lambda b, v, j: (b, v, j, 0)),
        scratch_shapes=[pltpu.VMEM((N, C), jnp.bfloat16)],   # value_conv(x), once per (b, v)
        compiler_params=pltpu.CompilerParams(
            dimension_semantics=("parallel", "parallel", "arbitrary"),
            vmem_limit_bytes=VMEM_LIMIT),
    )(x, dist,
      bf(p['value_w']), row(p['value_b']),
      bf(p['ca_w']), row(p['ca_scale']), row(p['ca_shift']),
      bf(p['ctx_w']), row(p['ctx_scale']), row(p['ctx_shift']),
      bf(p['conv1_w_ca']), bf(p['conv1_w_ctx']),
      row(p['conv1_scale']), row(p['conv1_shift']),
      p['gamma'])

    # Raw attention map (view 0 only) in a tiny separate tiled pass -> never a full-(N,N)
    # resident block inside the fused kernel.
    attn = pl.pallas_call(
        functools.partial(_spatial_map_kernel, 1.0 / (2.0 * SIGMA_3D)),
        out_shape=jax.ShapeDtypeStruct((B, N, N), jnp.float32),
        grid=(B, NJ),
        in_specs=[pl.BlockSpec((None, None, TJ, N), lambda b, r: (b, 0, r, 0))],
        out_specs=pl.BlockSpec((None, TJ, N), lambda b, r: (b, r, 0)),
        compiler_params=pltpu.CompilerParams(
            dimension_semantics=("parallel", "parallel")),
    )(dist)
    return out, attn


def temp_attn_fused(x, p, scale, row_tile):
    """x: (B, V=3, N, C) channel-last (bf16 from the spatial kernel)."""
    B, V, N, C = x.shape
    Ck = C // scale
    TQ = _pick_tile(N, row_tile)
    NQ = N // TQ
    bf = lambda a: a.astype(jnp.bfloat16)
    row = lambda a: a.reshape(1, -1)
    wspec = lambda r, c: pl.BlockSpec((r, c), lambda b, q, i: (0, 0))

    kernel = functools.partial(_temp_kernel, float(Ck) ** (-0.5), TQ)
    out, attn = pl.pallas_call(
        kernel,
        out_shape=(jax.ShapeDtypeStruct((B, V, N, C), jnp.float32),
                   jax.ShapeDtypeStruct((B, 2, N, N), jnp.float32)),
        grid=(B, NQ, V),
        in_specs=[
            pl.BlockSpec((None, V, N, C), lambda b, q, i: (b, 0, 0, 0)),   # all 3 views / batch
            pl.BlockSpec((None, None, TQ, C), lambda b, q, i: (b, i, q, 0)),  # ref-view row tile
            wspec(C, Ck), wspec(1, Ck), wspec(1, Ck),   # key_w, key_scale, key_shift
            wspec(C, Ck), wspec(1, Ck),                 # value_w, value_b
            wspec(Ck, C), wspec(1, C),                  # out_w, out_b
            wspec(C, C), wspec(C, C), wspec(1, C),      # fuse halves, fuse_b
        ],
        out_specs=(pl.BlockSpec((None, None, TQ, C), lambda b, q, i: (b, i, q, 0)),
                   pl.BlockSpec((None, 2, TQ, N), lambda b, q, i: (b, 0, q, 0))),
        scratch_shapes=[pltpu.VMEM((V, N, Ck), jnp.bfloat16),   # K projections, once / batch
                        pltpu.VMEM((V, N, Ck), jnp.bfloat16)],  # V projections, once / batch
        compiler_params=pltpu.CompilerParams(
            dimension_semantics=("parallel", "arbitrary", "arbitrary"),
            vmem_limit_bytes=VMEM_LIMIT),
    )(x, x,
      bf(p['key_w']), row(p['key_scale']), row(p['key_shift']),
      bf(p['value_w']), row(p['value_b']),
      bf(p['out_w']), row(p['out_b']),
      bf(p['fuse_w_ref']), bf(p['fuse_w_match']), row(p['fuse_b']))
    return out, attn


def spatial_temp_attn_fwd(context_feature, distance, params, scale=2, row_tile=384):
    """Spatial_Temp_Attn.forward.

    context_feature: (B, V, C, H, W)   distance: (B, V, N, N) with N = H*W.
    returns: out (B, V, C, H, W), spatial_attn (B, N, N), temp_attn (B, 2, N, N)
    """
    B, V, C, H, W = context_feature.shape
    N = H * W
    # TODO(synk): keep the surrounding model channel-last to avoid this HBM round trip.
    x = context_feature.reshape(B, V, C, N).transpose(0, 1, 3, 2)      # channel-last
    sp_out, spatial_attn = spatial_attn_fused(
        x, distance.reshape(B, V, N, N), params['spatial'], row_tile)
    out, temp_attn = temp_attn_fused(sp_out, params['temp'], scale, row_tile)
    out = out.transpose(0, 1, 3, 2).reshape(B, V, C, H, W)
    return out, spatial_attn, temp_attn


# ----------------------------- parameter init --------------------------------

def init_params(key, C, scale):
    """Synthetic parameters for one Spatial_Temp_Attn layer.

    Eval-mode BatchNorm2d (running_mean=0, running_var=1) is folded into a per-channel
    scale/shift applied right after the corresponding 1x1 conv.  Concat-consuming convs
    (conv1, fuse_layer) are stored as two half weights.
    """
    Ck = C // scale
    keys = iter(jax.random.split(key, 64))

    def w(shape, s=0.05):
        return s * jax.random.normal(next(keys), shape, jnp.float32)

    def bn(c):
        gamma = 1.0 + 0.1 * jax.random.normal(next(keys), (c,), jnp.float32)
        beta = 0.1 * jax.random.normal(next(keys), (c,), jnp.float32)
        s = gamma / jnp.sqrt(jnp.float32(1.0 + 1e-5))     # running_var = 1
        return s, beta                                    # running_mean = 0

    sp = {}
    sp['value_w'] = w((C, C)); sp['value_b'] = w((C,))
    ca_s, ca_t = bn(C); sp['ca_w'] = w((C, C)); ca_b = w((C,))
    sp['ca_scale'] = ca_s; sp['ca_shift'] = ca_b * ca_s + ca_t
    ctx_s, ctx_t = bn(C); sp['ctx_w'] = w((C, C)); ctx_b = w((C,))
    sp['ctx_scale'] = ctx_s; sp['ctx_shift'] = ctx_b * ctx_s + ctx_t
    c1_s, c1_t = bn(C); conv1_w = w((2 * C, C)); c1_b = w((C,))
    sp['conv1_w_ca'] = conv1_w[:C]; sp['conv1_w_ctx'] = conv1_w[C:]
    sp['conv1_scale'] = c1_s; sp['conv1_shift'] = c1_b * c1_s + c1_t
    sp['gamma'] = jnp.full((1,), 0.7, jnp.float32)

    tp = {}
    k_s, k_t = bn(Ck); tp['key_w'] = w((C, Ck)); k_b = w((Ck,))
    tp['key_scale'] = k_s; tp['key_shift'] = k_b * k_s + k_t
    tp['value_w'] = w((C, Ck)); tp['value_b'] = w((Ck,))
    tp['out_w'] = w((Ck, C)); tp['out_b'] = w((C,))
    fuse_w = w((2 * C, C))
    tp['fuse_w_ref'] = fuse_w[:C]; tp['fuse_w_match'] = fuse_w[C:]
    tp['fuse_b'] = w((C,))
    return {'spatial': sp, 'temp': tp}


# ----------------------------------- main -------------------------------------

if __name__ == "__main__":
    # Small shapes that still exercise the row-tiling path (N=256, tile=128 -> 2 tiles).
    B, V, C, H, W = 2, 3, 64, 8, 32     # num_view must be 3; C divisible by scale
    SCALE = 2
    N = H * W                           # 256

    key = jax.random.PRNGKey(0)
    k1, k2 = jax.random.split(key)
    context_feature = jax.random.normal(k1, (B, V, C, H, W), jnp.float32)
    # pair-wise euclidean distances of synthetic 3-D points (B, V, N, N)
    pts = jax.random.normal(k2, (B, V, N, 3), jnp.float32)
    diff = pts[..., :, None, :] - pts[..., None, :, :]
    distance = jnp.sqrt(jnp.sum(diff * diff, axis=-1) + 1e-12)

    params = init_params(jax.random.PRNGKey(1), C, SCALE)

    fwd = jax.jit(functools.partial(spatial_temp_attn_fwd, scale=SCALE, row_tile=128))
    out, spatial_attn, temp_attn = fwd(context_feature, distance, params)
    jax.block_until_ready((out, spatial_attn, temp_attn))

    assert out.shape == (B, V, C, H, W)
    assert spatial_attn.shape == (B, N, N)
    assert temp_attn.shape == (B, 2, N, N)
    assert bool(jnp.all(jnp.isfinite(out)))
    assert bool(jnp.all(jnp.isfinite(spatial_attn)))
    assert bool(jnp.all(jnp.isfinite(temp_attn)))
    print("KERNEL_OK")
</pallas_src>

<mosaic_0001>
module attributes {stable_mosaic.version = 11 : i64} {
  func.func @_spatial_kernel(%arg0: i32, %arg1: i32, %arg2: i32, %arg3: memref<1x1x256x64xf32, #tpu.memory_space<vmem>>, %arg4: memref<1x1x256x128xf32, #tpu.memory_space<vmem>>, %arg5: memref<64x64xbf16, #tpu.memory_space<vmem>>, %arg6: memref<1x64xf32, #tpu.memory_space<vmem>>, %arg7: memref<64x64xbf16, #tpu.memory_space<vmem>>, %arg8: memref<1x64xf32, #tpu.memory_space<vmem>>, %arg9: memref<1x64xf32, #tpu.memory_space<vmem>>, %arg10: memref<64x64xbf16, #tpu.memory_space<vmem>>, %arg11: memref<1x64xf32, #tpu.memory_space<vmem>>, %arg12: memref<1x64xf32, #tpu.memory_space<vmem>>, %arg13: memref<64x64xbf16, #tpu.memory_space<vmem>>, %arg14: memref<64x64xbf16, #tpu.memory_space<vmem>>, %arg15: memref<1x64xf32, #tpu.memory_space<vmem>>, %arg16: memref<1x64xf32, #tpu.memory_space<vmem>>, %arg17: memref<1xf32, #tpu.memory_space<smem>>, %arg18: memref<1x1x128x64xbf16, #tpu.memory_space<vmem>>, %arg19: memref<256x64xbf16, #tpu.memory_space<vmem>>) attributes {dimension_semantics = [#tpu.dimension_semantics<parallel>, #tpu.dimension_semantics<parallel>, #tpu.dimension_semantics<arbitrary>], iteration_bounds = array<i64: 2, 3, 2>, scalar_prefetch = 0 : i64, scratch_operands = 1 : i64, tpu.core_type = #tpu.core_type<tc>, window_params = [{transform_indices = @transform_0, window_bounds = array<i64: 1, 1, 256, 64>}, {transform_indices = @transform_1, window_bounds = array<i64: 1, 1, 256, 128>}, {pipeline_mode = #tpu.pipeline_mode<synchronous>, transform_indices = @transform_2, window_bounds = array<i64: 64, 64>}, {pipeline_mode = #tpu.pipeline_mode<synchronous>, transform_indices = @transform_3, window_bounds = array<i64: 1, 64>}, {pipeline_mode = #tpu.pipeline_mode<synchronous>, transform_indices = @transform_4, window_bounds = array<i64: 64, 64>}, {pipeline_mode = #tpu.pipeline_mode<synchronous>, transform_indices = @transform_5, window_bounds = array<i64: 1, 64>}, {pipeline_mode = #tpu.pipeline_mode<synchronous>, transform_indices = @transform_6, window_bounds = array<i64: 1, 64>}, {pipeline_mode = #tpu.pipeline_mode<synchronous>, transform_indices = @transform_7, window_bounds = array<i64: 64, 64>}, {pipeline_mode = #tpu.pipeline_mode<synchronous>, transform_indices = @transform_8, window_bounds = array<i64: 1, 64>}, {pipeline_mode = #tpu.pipeline_mode<synchronous>, transform_indices = @transform_9, window_bounds = array<i64: 1, 64>}, {pipeline_mode = #tpu.pipeline_mode<synchronous>, transform_indices = @transform_10, window_bounds = array<i64: 64, 64>}, {pipeline_mode = #tpu.pipeline_mode<synchronous>, transform_indices = @transform_11, window_bounds = array<i64: 64, 64>}, {pipeline_mode = #tpu.pipeline_mode<synchronous>, transform_indices = @transform_12, window_bounds = array<i64: 1, 64>}, {pipeline_mode = #tpu.pipeline_mode<synchronous>, transform_indices = @transform_13, window_bounds = array<i64: 1, 64>}, {transform_indices = @transform_14, window_bounds = array<i64: 1>}, {transform_indices = @transform_15, window_bounds = array<i64: 1, 1, 128, 64>}]} {
    %c0_i32 = arith.constant 0 : i32
    %0 = arith.cmpi eq, %arg2, %c0_i32 : i32
    %1 = arith.extui %0 : i1 to i32
    %c0_i32_0 = arith.constant 0 : i32
    %2 = arith.cmpi ne, %1, %c0_i32_0 : i32
    scf.if %2 {
      %c0_40 = arith.constant 0 : index
      %c0_41 = arith.constant 0 : index
      %c0_42 = arith.constant 0 : index
      %c0_43 = arith.constant 0 : index
      %60 = vector.load %arg3[%c0_40, %c0_41, %c0_42, %c0_43] : memref<1x1x256x64xf32, #tpu.memory_space<vmem>>, vector<1x1x256x64xf32>
      %61 = vector.shape_cast %60 : vector<1x1x256x64xf32> to vector<256x64xf32>
      %62 = arith.truncf %61 : vector<256x64xf32> to vector<256x64xbf16>
      %c0_44 = arith.constant 0 : index
      %c0_45 = arith.constant 0 : index
      %63 = vector.load %arg5[%c0_44, %c0_45] : memref<64x64xbf16, #tpu.memory_space<vmem>>, vector<64x64xbf16>
      %cst_46 = arith.constant dense<0.000000e+00> : vector<256x64xf32>
      %64 = tpu.matmul %62, %63, %cst_46 {dimension_numbers = #tpu.dot_dimension_numbers<[1], [0], [0], [1], [0, 0, 1, 1], [], []>} : vector<256x64xbf16>, vector<64x64xbf16>, vector<256x64xf32> -> vector<256x64xf32>
      %c0_47 = arith.constant 0 : index
      %c0_48 = arith.constant 0 : index
      %65 = vector.load %arg6[%c0_47, %c0_48] : memref<1x64xf32, #tpu.memory_space<vmem>>, vector<1x64xf32>
      %66 = vector.broadcast %65 : vector<1x64xf32> to vector<256x64xf32>
      %67 = arith.addf %64, %66 : vector<256x64xf32>
      %68 = arith.truncf %67 : vector<256x64xf32> to vector<256x64xbf16>
      %c0_49 = arith.constant 0 : index
      %c0_50 = arith.constant 0 : index
      %69 = vector.load %arg19[%c0_49, %c0_50] : memref<256x64xbf16, #tpu.memory_space<vmem>>, vector<256x64xbf16>
      tpu.vector_store %arg19[%c0_49, %c0_50], %68 {strides = array<i32>} : memref<256x64xbf16, #tpu.memory_space<vmem>>, vector<256x64xbf16>,
    } else {
    }
    %c0 = arith.constant 0 : index
    %c0_1 = arith.constant 0 : index
    %c0_2 = arith.constant 0 : index
    %c0_3 = arith.constant 0 : index
    %3 = vector.load %arg4[%c0, %c0_1, %c0_2, %c0_3] : memref<1x1x256x128xf32, #tpu.memory_space<vmem>>, vector<1x1x256x128xf32>
    %4 = vector.shape_cast %3 : vector<1x1x256x128xf32> to vector<256x128xf32>
    %cst = arith.constant -2.000000e+00 : f32
    %5 = vector.broadcast %cst : f32 to vector<256x128xf32>
    %6 = arith.mulf %4, %5 : vector<256x128xf32>
    %7 = math.exp %6 : vector<256x128xf32>
    %cst_4 = arith.constant dense<0.000000e+00> : vector<128xf32>
    %8 = vector.multi_reduction <add>, %7, %cst_4 [0] : vector<256x128xf32> to vector<128xf32>
    %9 = vector.shape_cast %8 : vector<128xf32> to vector<1x128xf32>
    %10 = tpu.reciprocal %9 {approx = true} : vector<1x128xf32> -> vector<1x128xf32>
    %11 = vector.broadcast %10 : vector<1x128xf32> to vector<256x128xf32>
    %12 = arith.mulf %7, %11 : vector<256x128xf32>
    %13 = arith.truncf %12 : vector<256x128xf32> to vector<256x128xbf16>
    %c0_5 = arith.constant 0 : index
    %c0_6 = arith.constant 0 : index
    %14 = vector.load %arg19[%c0_5, %c0_6] : memref<256x64xbf16, #tpu.memory_space<vmem>>, vector<256x64xbf16>
    %cst_7 = arith.constant dense<0.000000e+00> : vector<128x64xf32>
    %15 = tpu.matmul %13, %14, %cst_7 {dimension_numbers = #tpu.dot_dimension_numbers<[0], [0], [1], [1], [0, 1, 1, 1], [], []>} : vector<256x128xbf16>, vector<256x64xbf16>, vector<128x64xf32> -> vector<128x64xf32>
    %c128_i32 = arith.constant 128 : i32
    %16 = arith.muli %arg2, %c128_i32 : i32
    %17 = tpu.assume_multiple %16, 128 : i32
    %c0_8 = arith.constant 0 : index
    %c0_9 = arith.constant 0 : index
    %18 = arith.index_cast %17 : i32 to index
    %c0_10 = arith.constant 0 : index
    %19 = vector.load %arg3[%c0_8, %c0_9, %18, %c0_10] : memref<1x1x256x64xf32, #tpu.memory_space<vmem>>, vector<1x1x128x64xf32>
    %20 = vector.shape_cast %19 : vector<1x1x128x64xf32> to vector<128x64xf32>
    %21 = arith.truncf %20 : vector<128x64xf32> to vector<128x64xbf16>
    %22 = arith.truncf %15 : vector<128x64xf32> to vector<128x64xbf16>
    %c0_11 = arith.constant 0 : index
    %c0_12 = arith.constant 0 : index
    %23 = vector.load %arg7[%c0_11, %c0_12] : memref<64x64xbf16, #tpu.memory_space<vmem>>, vector<64x64xbf16>
    %cst_13 = arith.constant dense<0.000000e+00> : vector<128x64xf32>
    %24 = tpu.matmul %22, %23, %cst_13 {dimension_numbers = #tpu.dot_dimension_numbers<[1], [0], [0], [1], [0, 0, 1, 1], [], []>} : vector<128x64xbf16>, vector<64x64xbf16>, vector<128x64xf32> -> vector<128x64xf32>
    %c0_14 = arith.constant 0 : index
    %c0_15 = arith.constant 0 : index
    %25 = vector.load %arg8[%c0_14, %c0_15] : memref<1x64xf32, #tpu.memory_space<vmem>>, vector<1x64xf32>
    %26 = vector.broadcast %25 : vector<1x64xf32> to vector<128x64xf32>
    %27 = arith.mulf %24, %26 : vector<128x64xf32>
    %c0_16 = arith.constant 0 : index
    %c0_17 = arith.constant 0 : index
    %28 = vector.load %arg9[%c0_16, %c0_17] : memref<1x64xf32, #tpu.memory_space<vmem>>, vector<1x64xf32>
    %29 = vector.broadcast %28 : vector<1x64xf32> to vector<128x64xf32>
    %30 = arith.addf %27, %29 : vector<128x64xf32>
    %c0_18 = arith.constant 0 : index
    %c0_19 = arith.constant 0 : index
    %31 = vector.load %arg10[%c0_18, %c0_19] : memref<64x64xbf16, #tpu.memory_space<vmem>>, vector<64x64xbf16>
    %cst_20 = arith.constant dense<0.000000e+00> : vector<128x64xf32>
    %32 = tpu.matmul %21, %31, %cst_20 {dimension_numbers = #tpu.dot_dimension_numbers<[1], [0], [0], [1], [0, 0, 1, 1], [], []>} : vector<128x64xbf16>, vector<64x64xbf16>, vector<128x64xf32> -> vector<128x64xf32>
    %c0_21 = arith.constant 0 : index
    %c0_22 = arith.constant 0 : index
    %33 = vector.load %arg11[%c0_21, %c0_22] : memref<1x64xf32, #tpu.memory_space<vmem>>, vector<1x64xf32>
    %34 = vector.broadcast %33 : vector<1x64xf32> to vector<128x64xf32>
    %35 = arith.mulf %32, %34 : vector<128x64xf32>
    %c0_23 = arith.constant 0 : index
    %c0_24 = arith.constant 0 : index
    %36 = vector.load %arg12[%c0_23, %c0_24] : memref<1x64xf32, #tpu.memory_space<vmem>>, vector<1x64xf32>
    %37 = vector.broadcast %36 : vector<1x64xf32> to vector<128x64xf32>
    %38 = arith.addf %35, %37 : vector<128x64xf32>
    %39 = arith.truncf %30 : vector<128x64xf32> to vector<128x64xbf16>
    %c0_25 = arith.constant 0 : index
    %c0_26 = arith.constant 0 : index
    %40 = vector.load %arg13[%c0_25, %c0_26] : memref<64x64xbf16, #tpu.memory_space<vmem>>, vector<64x64xbf16>
    %cst_27 = arith.constant dense<0.000000e+00> : vector<128x64xf32>
    %41 = tpu.matmul %39, %40, %cst_27 {dimension_numbers = #tpu.dot_dimension_numbers<[1], [0], [0], [1], [0, 0, 1, 1], [], []>} : vector<128x64xbf16>, vector<64x64xbf16>, vector<128x64xf32> -> vector<128x64xf32>
    %42 = arith.truncf %38 : vector<128x64xf32> to vector<128x64xbf16>
    %c0_28 = arith.constant 0 : index
    %c0_29 = arith.constant 0 : index
    %43 = vector.load %arg14[%c0_28, %c0_29] : memref<64x64xbf16, #tpu.memory_space<vmem>>, vector<64x64xbf16>
    %cst_30 = arith.constant dense<0.000000e+00> : vector<128x64xf32>
    %44 = tpu.matmul %42, %43, %cst_30 {dimension_numbers = #tpu.dot_dimension_numbers<[1], [0], [0], [1], [0, 0, 1, 1], [], []>} : vector<128x64xbf16>, vector<64x64xbf16>, vector<128x64xf32> -> vector<128x64xf32>
    %45 = arith.addf %41, %44 : vector<128x64xf32>
    %c0_31 = arith.constant 0 : index
    %c0_32 = arith.constant 0 : index
    %46 = vector.load %arg15[%c0_31, %c0_32] : memref<1x64xf32, #tpu.memory_space<vmem>>, vector<1x64xf32>
    %47 = vector.broadcast %46 : vector<1x64xf32> to vector<128x64xf32>
    %48 = arith.mulf %45, %47 : vector<128x64xf32>
    %c0_33 = arith.constant 0 : index
    %c0_34 = arith.constant 0 : index
    %49 = vector.load %arg16[%c0_33, %c0_34] : memref<1x64xf32, #tpu.memory_space<vmem>>, vector<1x64xf32>
    %50 = vector.broadcast %49 : vector<1x64xf32> to vector<128x64xf32>
    %51 = arith.addf %48, %50 : vector<128x64xf32>
    %c0_35 = arith.constant 0 : index
    %52 = memref.load %arg17[%c0_35] : memref<1xf32, #tpu.memory_space<smem>>
    %53 = vector.broadcast %52 : f32 to vector<128x64xf32>
    %54 = arith.mulf %53, %51 : vector<128x64xf32>
    %55 = arith.addf %54, %20 : vector<128x64xf32>
    %56 = arith.truncf %55 : vector<128x64xf32> to vector<128x64xbf16>
    %c0_36 = arith.constant 0 : index
    %c0_37 = arith.constant 0 : index
    %c0_38 = arith.constant 0 : index
    %c0_39 = arith.constant 0 : index
    %57 = vector.load %arg18[%c0_36, %c0_37, %c0_38, %c0_39] : memref<1x1x128x64xbf16, #tpu.memory_space<vmem>>, vector<1x1x128x64xbf16>
    %58 = vector.shape_cast %57 : vector<1x1x128x64xbf16> to vector<128x64xbf16>
    %59 = vector.shape_cast %56 : vector<128x64xbf16> to vector<1x1x128x64xbf16>
    tpu.vector_store %arg18[%c0_36, %c0_37, %c0_38, %c0_39], %59 {strides = array<i32>} : memref<1x1x128x64xbf16, #tpu.memory_space<vmem>>, vector<1x1x128x64xbf16>,
    return
  }
  func.func @transform_0(%arg0: i32, %arg1: i32, %arg2: i32) -> (i32, i32, i32, i32) {
    %c0_i32 = arith.constant 0 : i32
    %c0_i32_0 = arith.constant 0 : i32
    %c0_i32_1 = arith.constant 0 : i32
    return %arg0, %arg1, %c0_i32, %c0_i32_0 : i32, i32, i32, i32
  }
  func.func @transform_1(%arg0: i32, %arg1: i32, %arg2: i32) -> (i32, i32, i32, i32) {
    %c0_i32 = arith.constant 0 : i32
    %c0_i32_0 = arith.constant 0 : i32
    return %arg0, %arg1, %c0_i32, %arg2 : i32, i32, i32, i32
  }
  func.func @transform_2(%arg0: i32, %arg1: i32, %arg2: i32) -> (i32, i32) {
    %c0_i32 = arith.constant 0 : i32
    %c0_i32_0 = arith.constant 0 : i32
    %c0_i32_1 = arith.constant 0 : i32
    return %c0_i32, %c0_i32_0 : i32, i32
  }
  func.func @transform_3(%arg0: i32, %arg1: i32, %arg2: i32) -> (i32, i32) {
    %c0_i32 = arith.constant 0 : i32
    %c0_i32_0 = arith.constant 0 : i32
    %c0_i32_1 = arith.constant 0 : i32
    return %c0_i32, %c0_i32_0 : i32, i32
  }
  func.func @transform_4(%arg0: i32, %arg1: i32, %arg2: i32) -> (i32, i32) {
    %c0_i32 = arith.constant 0 : i32
    %c0_i32_0 = arith.constant 0 : i32
    %c0_i32_1 = arith.constant 0 : i32
    return %c0_i32, %c0_i32_0 : i32, i32
  }
  func.func @transform_5(%arg0: i32, %arg1: i32, %arg2: i32) -> (i32, i32) {
    %c0_i32 = arith.constant 0 : i32
    %c0_i32_0 = arith.constant 0 : i32
    %c0_i32_1 = arith.constant 0 : i32
    return %c0_i32, %c0_i32_0 : i32, i32
  }
  func.func @transform_6(%arg0: i32, %arg1: i32, %arg2: i32) -> (i32, i32) {
    %c0_i32 = arith.constant 0 : i32
    %c0_i32_0 = arith.constant 0 : i32
    %c0_i32_1 = arith.constant 0 : i32
    return %c0_i32, %c0_i32_0 : i32, i32
  }
  func.func @transform_7(%arg0: i32, %arg1: i32, %arg2: i32) -> (i32, i32) {
    %c0_i32 = arith.constant 0 : i32
    %c0_i32_0 = arith.constant 0 : i32
    %c0_i32_1 = arith.constant 0 : i32
    return %c0_i32, %c0_i32_0 : i32, i32
  }
  func.func @transform_8(%arg0: i32, %arg1: i32, %arg2: i32) -> (i32, i32) {
    %c0_i32 = arith.constant 0 : i32
    %c0_i32_0 = arith.constant 0 : i32
    %c0_i32_1 = arith.constant 0 : i32
    return %c0_i32, %c0_i32_0 : i32, i32
  }
  func.func @transform_9(%arg0: i32, %arg1: i32, %arg2: i32) -> (i32, i32) {
    %c0_i32 = arith.constant 0 : i32
    %c0_i32_0 = arith.constant 0 : i32
    %c0_i32_1 = arith.constant 0 : i32
    return %c0_i32, %c0_i32_0 : i32, i32
  }
  func.func @transform_10(%arg0: i32, %arg1: i32, %arg2: i32) -> (i32, i32) {
    %c0_i32 = arith.constant 0 : i32
    %c0_i32_0 = arith.constant 0 : i32
    %c0_i32_1 = arith.constant 0 : i32
    return %c0_i32, %c0_i32_0 : i32, i32
  }
  func.func @transform_11(%arg0: i32, %arg1: i32, %arg2: i32) -> (i32, i32) {
    %c0_i32 = arith.constant 0 : i32
    %c0_i32_0 = arith.constant 0 : i32
    %c0_i32_1 = arith.constant 0 : i32
    return %c0_i32, %c0_i32_0 : i32, i32
  }
  func.func @transform_12(%arg0: i32, %arg1: i32, %arg2: i32) -> (i32, i32) {
    %c0_i32 = arith.constant 0 : i32
    %c0_i32_0 = arith.constant 0 : i32
    %c0_i32_1 = arith.constant 0 : i32
    return %c0_i32, %c0_i32_0 : i32, i32
  }
  func.func @transform_13(%arg0: i32, %arg1: i32, %arg2: i32) -> (i32, i32) {
    %c0_i32 = arith.constant 0 : i32
    %c0_i32_0 = arith.constant 0 : i32
    %c0_i32_1 = arith.constant 0 : i32
    return %c0_i32, %c0_i32_0 : i32, i32
  }
  func.func @transform_14(%arg0: i32, %arg1: i32, %arg2: i32) -> i32 {
    %c0_i32 = arith.constant 0 : i32
    %c0_i32_0 = arith.constant 0 : i32
    return %c0_i32 : i32
  }
  func.func @transform_15(%arg0: i32, %arg1: i32, %arg2: i32) -> (i32, i32, i32, i32) {
    %c0_i32 = arith.constant 0 : i32
    %c0_i32_0 = arith.constant 0 : i32
    return %arg0, %arg1, %arg2, %c0_i32 : i32, i32, i32, i32
  }
}

module attributes {stable_mosaic.version = 11 : i64} {
  func.func @_temp_kernel(%arg0: i32, %arg1: i32, %arg2: i32, %arg3: memref<1x3x256x64xbf16, #tpu.memory_space<vmem>>, %arg4: memref<1x1x128x64xbf16, #tpu.memory_space<vmem>>, %arg5: memref<64x32xbf16, #tpu.memory_space<vmem>>, %arg6: memref<1x32xf32, #tpu.memory_space<vmem>>, %arg7: memref<1x32xf32, #tpu.memory_space<vmem>>, %arg8: memref<64x32xbf16, #tpu.memory_space<vmem>>, %arg9: memref<1x32xf32, #tpu.memory_space<vmem>>, %arg10: memref<32x64xbf16, #tpu.memory_space<vmem>>, %arg11: memref<1x64xf32, #tpu.memory_space<vmem>>, %arg12: memref<64x64xbf16, #tpu.memory_space<vmem>>, %arg13: memref<64x64xbf16, #tpu.memory_space<vmem>>, %arg14: memref<1x64xf32, #tpu.memory_space<vmem>>, %arg15: memref<1x1x128x64xf32, #tpu.memory_space<vmem>>, %arg16: memref<1x2x128x256xf32, #tpu.memory_space<vmem>>, %arg17: memref<3x256x32xbf16, #tpu.memory_space<vmem>>, %arg18: memref<3x256x32xbf16, #tpu.memory_space<vmem>>) attributes {dimension_semantics = [#tpu.dimension_semantics<parallel>, #tpu.dimension_semantics<arbitrary>, #tpu.dimension_semantics<arbitrary>], iteration_bounds = array<i64: 2, 2, 3>, scalar_prefetch = 0 : i64, scratch_operands = 2 : i64, tpu.core_type = #tpu.core_type<tc>, window_params = [{transform_indices = @transform_0, window_bounds = array<i64: 1, 3, 256, 64>}, {transform_indices = @transform_1, window_bounds = array<i64: 1, 1, 128, 64>}, {pipeline_mode = #tpu.pipeline_mode<synchronous>, transform_indices = @transform_2, window_bounds = array<i64: 64, 32>}, {pipeline_mode = #tpu.pipeline_mode<synchronous>, transform_indices = @transform_3, window_bounds = array<i64: 1, 32>}, {pipeline_mode = #tpu.pipeline_mode<synchronous>, transform_indices = @transform_4, window_bounds = array<i64: 1, 32>}, {pipeline_mode = #tpu.pipeline_mode<synchronous>, transform_indices = @transform_5, window_bounds = array<i64: 64, 32>}, {pipeline_mode = #tpu.pipeline_mode<synchronous>, transform_indices = @transform_6, window_bounds = array<i64: 1, 32>}, {pipeline_mode = #tpu.pipeline_mode<synchronous>, transform_indices = @transform_7, window_bounds = array<i64: 32, 64>}, {pipeline_mode = #tpu.pipeline_mode<synchronous>, transform_indices = @transform_8, window_bounds = array<i64: 1, 64>}, {pipeline_mode = #tpu.pipeline_mode<synchronous>, transform_indices = @transform_9, window_bounds = array<i64: 64, 64>}, {pipeline_mode = #tpu.pipeline_mode<synchronous>, transform_indices = @transform_10, window_bounds = array<i64: 64, 64>}, {pipeline_mode = #tpu.pipeline_mode<synchronous>, transform_indices = @transform_11, window_bounds = array<i64: 1, 64>}, {transform_indices = @transform_12, window_bounds = array<i64: 1, 1, 128, 64>}, {transform_indices = @transform_13, window_bounds = array<i64: 1, 2, 128, 256>}]} {
    %c0_i32 = arith.constant 0 : i32
    %0 = arith.cmpi eq, %arg1, %c0_i32 : i32
    %c0_i32_0 = arith.constant 0 : i32
    %1 = arith.cmpi eq, %arg2, %c0_i32_0 : i32
    %2 = arith.andi %0, %1 : i1
    %3 = arith.extui %2 : i1 to i32
    %c0_i32_1 = arith.constant 0 : i32
    %4 = arith.cmpi ne, %3, %c0_i32_1 : i32
    scf.if %4 {
      %c0_26 = arith.constant 0 : index
      %c0_27 = arith.constant 0 : index
      %c0_28 = arith.constant 0 : index
      %c0_29 = arith.constant 0 : index
      %34 = vector.load %arg3[%c0_26, %c0_27, %c0_28, %c0_29] : memref<1x3x256x64xbf16, #tpu.memory_space<vmem>>, vector<1x1x256x64xbf16>
      %35 = vector.shape_cast %34 : vector<1x1x256x64xbf16> to vector<256x64xbf16>
      %c0_30 = arith.constant 0 : index
      %c0_31 = arith.constant 0 : index
      %36 = vector.load %arg5[%c0_30, %c0_31] : memref<64x32xbf16, #tpu.memory_space<vmem>>, vector<64x32xbf16>
      %cst_32 = arith.constant dense<0.000000e+00> : vector<256x32xf32>
      %37 = tpu.matmul %35, %36, %cst_32 {dimension_numbers = #tpu.dot_dimension_numbers<[1], [0], [0], [1], [0, 0, 1, 1], [], []>} : vector<256x64xbf16>, vector<64x32xbf16>, vector<256x32xf32> -> vector<256x32xf32>
      %c0_33 = arith.constant 0 : index
      %c0_34 = arith.constant 0 : index
      %38 = vector.load %arg6[%c0_33, %c0_34] : memref<1x32xf32, #tpu.memory_space<vmem>>, vector<1x32xf32>
      %39 = vector.broadcast %38 : vector<1x32xf32> to vector<256x32xf32>
      %40 = arith.mulf %37, %39 : vector<256x32xf32>
      %c0_35 = arith.constant 0 : index
      %c0_36 = arith.constant 0 : index
      %41 = vector.load %arg7[%c0_35, %c0_36] : memref<1x32xf32, #tpu.memory_space<vmem>>, vector<1x32xf32>
      %42 = vector.broadcast %41 : vector<1x32xf32> to vector<256x32xf32>
      %43 = arith.addf %40, %42 : vector<256x32xf32>
      %44 = arith.truncf %43 : vector<256x32xf32> to vector<256x32xbf16>
      %c0_37 = arith.constant 0 : index
      %c0_38 = arith.constant 0 : index
      %c0_39 = arith.constant 0 : index
      %45 = vector.load %arg17[%c0_37, %c0_38, %c0_39] : memref<3x256x32xbf16, #tpu.memory_space<vmem>>, vector<1x256x32xbf16>
      %46 = vector.shape_cast %45 : vector<1x256x32xbf16> to vector<256x32xbf16>
      %47 = vector.shape_cast %44 : vector<256x32xbf16> to vector<1x256x32xbf16>
      tpu.vector_store %arg17[%c0_37, %c0_38, %c0_39], %47 {strides = array<i32>} : memref<3x256x32xbf16, #tpu.memory_space<vmem>>, vector<1x256x32xbf16>,
      %c0_40 = arith.constant 0 : index
      %c0_41 = arith.constant 0 : index
      %48 = vector.load %arg8[%c0_40, %c0_41] : memref<64x32xbf16, #tpu.memory_space<vmem>>, vector<64x32xbf16>
      %cst_42 = arith.constant dense<0.000000e+00> : vector<256x32xf32>
      %49 = tpu.matmul %35, %48, %cst_42 {dimension_numbers = #tpu.dot_dimension_numbers<[1], [0], [0], [1], [0, 0, 1, 1], [], []>} : vector<256x64xbf16>, vector<64x32xbf16>, vector<256x32xf32> -> vector<256x32xf32>
      %c0_43 = arith.constant 0 : index
      %c0_44 = arith.constant 0 : index
      %50 = vector.load %arg9[%c0_43, %c0_44] : memref<1x32xf32, #tpu.memory_space<vmem>>, vector<1x32xf32>
      %51 = vector.broadcast %50 : vector<1x32xf32> to vector<256x32xf32>
      %52 = arith.addf %49, %51 : vector<256x32xf32>
      %53 = arith.truncf %52 : vector<256x32xf32> to vector<256x32xbf16>
      %c0_45 = arith.constant 0 : index
      %c0_46 = arith.constant 0 : index
      %c0_47 = arith.constant 0 : index
      %54 = vector.load %arg18[%c0_45, %c0_46, %c0_47] : memref<3x256x32xbf16, #tpu.memory_space<vmem>>, vector<1x256x32xbf16>
      %55 = vector.shape_cast %54 : vector<1x256x32xbf16> to vector<256x32xbf16>
      %56 = vector.shape_cast %53 : vector<256x32xbf16> to vector<1x256x32xbf16>
      tpu.vector_store %arg18[%c0_45, %c0_46, %c0_47], %56 {strides = array<i32>} : memref<3x256x32xbf16, #tpu.memory_space<vmem>>, vector<1x256x32xbf16>,
      %c0_48 = arith.constant 0 : index
      %c1 = arith.constant 1 : index
      %c0_49 = arith.constant 0 : index
      %c0_50 = arith.constant 0 : index
      %57 = vector.load %arg3[%c0_48, %c1, %c0_49, %c0_50] : memref<1x3x256x64xbf16, #tpu.memory_space<vmem>>, vector<1x1x256x64xbf16>
      %58 = vector.shape_cast %57 : vector<1x1x256x64xbf16> to vector<256x64xbf16>
      %c0_51 = arith.constant 0 : index
      %c0_52 = arith.constant 0 : index
      %59 = vector.load %arg5[%c0_51, %c0_52] : memref<64x32xbf16, #tpu.memory_space<vmem>>, vector<64x32xbf16>
      %cst_53 = arith.constant dense<0.000000e+00> : vector<256x32xf32>
      %60 = tpu.matmul %58, %59, %cst_53 {dimension_numbers = #tpu.dot_dimension_numbers<[1], [0], [0], [1], [0, 0, 1, 1], [], []>} : vector<256x64xbf16>, vector<64x32xbf16>, vector<256x32xf32> -> vector<256x32xf32>
      %c0_54 = arith.constant 0 : index
      %c0_55 = arith.constant 0 : index
      %61 = vector.load %arg6[%c0_54, %c0_55] : memref<1x32xf32, #tpu.memory_space<vmem>>, vector<1x32xf32>
      %62 = vector.broadcast %61 : vector<1x32xf32> to vector<256x32xf32>
      %63 = arith.mulf %60, %62 : vector<256x32xf32>
      %c0_56 = arith.constant 0 : index
      %c0_57 = arith.constant 0 : index
      %64 = vector.load %arg7[%c0_56, %c0_57] : memref<1x32xf32, #tpu.memory_space<vmem>>, vector<1x32xf32>
      %65 = vector.broadcast %64 : vector<1x32xf32> to vector<256x32xf32>
      %66 = arith.addf %63, %65 : vector<256x32xf32>
      %67 = arith.truncf %66 : vector<256x32xf32> to vector<256x32xbf16>
      %c1_58 = arith.constant 1 : index
      %c0_59 = arith.constant 0 : index
      %c0_60 = arith.constant 0 : index
      %68 = vector.load %arg17[%c1_58, %c0_59, %c0_60] : memref<3x256x32xbf16, #tpu.memory_space<vmem>>, vector<1x256x32xbf16>
      %69 = vector.shape_cast %68 : vector<1x256x32xbf16> to vector<256x32xbf16>
      %70 = vector.shape_cast %67 : vector<256x32xbf16> to vector<1x256x32xbf16>
      tpu.vector_store %arg17[%c1_58, %c0_59, %c0_60], %70 {strides = array<i32>} : memref<3x256x32xbf16, #tpu.memory_space<vmem>>, vector<1x256x32xbf16>,
      %c0_61 = arith.constant 0 : index
      %c0_62 = arith.constant 0 : index
      %71 = vector.load %arg8[%c0_61, %c0_62] : memref<64x32xbf16, #tpu.memory_space<vmem>>, vector<64x32xbf16>
      %cst_63 = arith.constant dense<0.000000e+00> : vector<256x32xf32>
      %72 = tpu.matmul %58, %71, %cst_63 {dimension_numbers = #tpu.dot_dimension_numbers<[1], [0], [0], [1], [0, 0, 1, 1], [], []>} : vector<256x64xbf16>, vector<64x32xbf16>, vector<256x32xf32> -> vector<256x32xf32>
      %c0_64 = arith.constant 0 : index
      %c0_65 = arith.constant 0 : index
      %73 = vector.load %arg9[%c0_64, %c0_65] : memref<1x32xf32, #tpu.memory_space<vmem>>, vector<1x32xf32>
      %74 = vector.broadcast %73 : vector<1x32xf32> to vector<256x32xf32>
      %75 = arith.addf %72, %74 : vector<256x32xf32>
      %76 = arith.truncf %75 : vector<256x32xf32> to vector<256x32xbf16>
      %c1_66 = arith.constant 1 : index
      %c0_67 = arith.constant 0 : index
      %c0_68 = arith.constant 0 : index
      %77 = vector.load %arg18[%c1_66, %c0_67, %c0_68] : memref<3x256x32xbf16, #tpu.memory_space<vmem>>, vector<1x256x32xbf16>
      %78 = vector.shape_cast %77 : vector<1x256x32xbf16> to vector<256x32xbf16>
      %79 = vector.shape_cast %76 : vector<256x32xbf16> to vector<1x256x32xbf16>
      tpu.vector_store %arg18[%c1_66, %c0_67, %c0_68], %79 {strides = array<i32>} : memref<3x256x32xbf16, #tpu.memory_space<vmem>>, vector<1x256x32xbf16>,
      %c0_69 = arith.constant 0 : index
      %c2 = arith.constant 2 : index
      %c0_70 = arith.constant 0 : index
      %c0_71 = arith.constant 0 : index
      %80 = vector.load %arg3[%c0_69, %c2, %c0_70, %c0_71] : memref<1x3x256x64xbf16, #tpu.memory_space<vmem>>, vector<1x1x256x64xbf16>
      %81 = vector.shape_cast %80 : vector<1x1x256x64xbf16> to vector<256x64xbf16>
      %c0_72 = arith.constant 0 : index
      %c0_73 = arith.constant 0 : index
      %82 = vector.load %arg5[%c0_72, %c0_73] : memref<64x32xbf16, #tpu.memory_space<vmem>>, vector<64x32xbf16>
      %cst_74 = arith.constant dense<0.000000e+00> : vector<256x32xf32>
      %83 = tpu.matmul %81, %82, %cst_74 {dimension_numbers = #tpu.dot_dimension_numbers<[1], [0], [0], [1], [0, 0, 1, 1], [], []>} : vector<256x64xbf16>, vector<64x32xbf16>, vector<256x32xf32> -> vector<256x32xf32>
      %c0_75 = arith.constant 0 : index
      %c0_76 = arith.constant 0 : index
      %84 = vector.load %arg6[%c0_75, %c0_76] : memref<1x32xf32, #tpu.memory_space<vmem>>, vector<1x32xf32>
      %85 = vector.broadcast %84 : vector<1x32xf32> to vector<256x32xf32>
      %86 = arith.mulf %83, %85 : vector<256x32xf32>
      %c0_77 = arith.constant 0 : index
      %c0_78 = arith.constant 0 : index
      %87 = vector.load %arg7[%c0_77, %c0_78] : memref<1x32xf32, #tpu.memory_space<vmem>>, vector<1x32xf32>
      %88 = vector.broadcast %87 : vector<1x32xf32> to vector<256x32xf32>
      %89 = arith.addf %86, %88 : vector<256x32xf32>
      %90 = arith.truncf %89 : vector<256x32xf32> to vector<256x32xbf16>
      %c2_79 = arith.constant 2 : index
      %c0_80 = arith.constant 0 : index
      %c0_81 = arith.constant 0 : index
      %91 = vector.load %arg17[%c2_79, %c0_80, %c0_81] : memref<3x256x32xbf16, #tpu.memory_space<vmem>>, vector<1x256x32xbf16>
      %92 = vector.shape_cast %91 : vector<1x256x32xbf16> to vector<256x32xbf16>
      %93 = vector.shape_cast %90 : vector<256x32xbf16> to vector<1x256x32xbf16>
      tpu.vector_store %arg17[%c2_79, %c0_80, %c0_81], %93 {strides = array<i32>} : memref<3x256x32xbf16, #tpu.memory_space<vmem>>, vector<1x256x32xbf16>,
      %c0_82 = arith.constant 0 : index
      %c0_83 = arith.constant 0 : index
      %94 = vector.load %arg8[%c0_82, %c0_83] : memref<64x32xbf16, #tpu.memory_space<vmem>>, vector<64x32xbf16>
      %cst_84 = arith.constant dense<0.000000e+00> : vector<256x32xf32>
      %95 = tpu.matmul %81, %94, %cst_84 {dimension_numbers = #tpu.dot_dimension_numbers<[1], [0], [0], [1], [0, 0, 1, 1], [], []>} : vector<256x64xbf16>, vector<64x32xbf16>, vector<256x32xf32> -> vector<256x32xf32>
      %c0_85 = arith.constant 0 : index
      %c0_86 = arith.constant 0 : index
      %96 = vector.load %arg9[%c0_85, %c0_86] : memref<1x32xf32, #tpu.memory_space<vmem>>, vector<1x32xf32>
      %97 = vector.broadcast %96 : vector<1x32xf32> to vector<256x32xf32>
      %98 = arith.addf %95, %97 : vector<256x32xf32>
      %99 = arith.truncf %98 : vector<256x32xf32> to vector<256x32xbf16>
      %c2_87 = arith.constant 2 : index
      %c0_88 = arith.constant 0 : index
      %c0_89 = arith.constant 0 : index
      %100 = vector.load %arg18[%c2_87, %c0_88, %c0_89] : memref<3x256x32xbf16, #tpu.memory_space<vmem>>, vector<1x256x32xbf16>
      %101 = vector.shape_cast %100 : vector<1x256x32xbf16> to vector<256x32xbf16>
      %102 = vector.shape_cast %99 : vector<256x32xbf16> to vector<1x256x32xbf16>
      tpu.vector_store %arg18[%c2_87, %c0_88, %c0_89], %102 {strides = array<i32>} : memref<3x256x32xbf16, #tpu.memory_space<vmem>>, vector<1x256x32xbf16>,
    } else {
    }
    %c0 = arith.constant 0 : index
    %c0_2 = arith.constant 0 : index
    %c0_3 = arith.constant 0 : index
    %c0_4 = arith.constant 0 : index
    %5 = vector.load %arg4[%c0, %c0_2, %c0_3, %c0_4] : memref<1x1x128x64xbf16, #tpu.memory_space<vmem>>, vector<1x1x128x64xbf16>
    %6 = vector.shape_cast %5 : vector<1x1x128x64xbf16> to vector<128x64xbf16>
    %7 = arith.extf %6 : vector<128x64xbf16> to vector<128x64xf32>
    %8 = arith.truncf %7 : vector<128x64xf32> to vector<128x64xbf16>
    %c0_5 = arith.constant 0 : index
    %c0_6 = arith.constant 0 : index
    %9 = vector.load %arg5[%c0_5, %c0_6] : memref<64x32xbf16, #tpu.memory_space<vmem>>, vector<64x32xbf16>
    %cst = arith.constant dense<0.000000e+00> : vector<128x32xf32>
    %10 = tpu.matmul %8, %9, %cst {dimension_numbers = #tpu.dot_dimension_numbers<[1], [0], [0], [1], [0, 0, 1, 1], [], []>} : vector<128x64xbf16>, vector<64x32xbf16>, vector<128x32xf32> -> vector<128x32xf32>
    %c0_7 = arith.constant 0 : index
    %c0_8 = arith.constant 0 : index
    %11 = vector.load %arg6[%c0_7, %c0_8] : memref<1x32xf32, #tpu.memory_space<vmem>>, vector<1x32xf32>
    %12 = vector.broadcast %11 : vector<1x32xf32> to vector<128x32xf32>
    %13 = arith.mulf %10, %12 : vector<128x32xf32>
    %c0_9 = arith.constant 0 : index
    %c0_10 = arith.constant 0 : index
    %14 = vector.load %arg7[%c0_9, %c0_10] : memref<1x32xf32, #tpu.memory_space<vmem>>, vector<1x32xf32>
    %15 = vector.broadcast %14 : vector<1x32xf32> to vector<128x32xf32>
    %16 = arith.addf %13, %15 : vector<128x32xf32>
    %17 = arith.truncf %16 : vector<128x32xf32> to vector<128x32xbf16>
    %cst_11 = arith.constant 0.000000e+00 : f32
    %18 = vector.broadcast %cst_11 : f32 to vector<128x64xf32>
    %c0_i32_12 = arith.constant 0 : i32
    %c2_i32 = arith.constant 2 : i32
    %19 = arith.addi %c0_i32_12, %c2_i32 : i32
    %c1_i32 = arith.constant 1 : i32
    %20 = scf.for %arg19 = %c0_i32_12 to %19 step %c1_i32 iter_args(%arg20 = %18) -> (vector<128x64xf32>)  : i32 {
      %34 = arith.addi %arg2, %arg19 : i32
      %c1_i32_26 = arith.constant 1 : i32
      %35 = arith.addi %34, %c1_i32_26 : i32
      %c3_i32 = arith.constant 3 : i32
      %36 = arith.remsi %35, %c3_i32 : i32
      %37 = arith.index_cast %36 : i32 to index
      %c0_27 = arith.constant 0 : index
      %c0_28 = arith.constant 0 : index
      %38 = vector.load %arg17[%37, %c0_27, %c0_28] : memref<3x256x32xbf16, #tpu.memory_space<vmem>>, vector<1x256x32xbf16>
      %39 = vector.shape_cast %38 : vector<1x256x32xbf16> to vector<256x32xbf16>
      %cst_29 = arith.constant dense<0.000000e+00> : vector<128x256xf32>
      %40 = tpu.matmul %17, %39, %cst_29 {dimension_numbers = #tpu.dot_dimension_numbers<[1], [1], [0], [0], [0, 0, 1, 0], [], []>} : vector<128x32xbf16>, vector<256x32xbf16>, vector<128x256xf32> -> vector<128x256xf32>
      %cst_30 = arith.constant 0.176776692 : f32
      %41 = vector.broadcast %cst_30 : f32 to vector<128x256xf32>
      %42 = arith.mulf %40, %41 : vector<128x256xf32>
      %cst_31 = arith.constant dense<0xFF800000> : vector<128xf32>
      %43 = vector.multi_reduction <maximumf>, %42, %cst_31 [1] : vector<128x256xf32> to vector<128xf32>
      %44 = vector.shape_cast %43 : vector<128xf32> to vector<128x1xf32>
      %45 = vector.broadcast %44 : vector<128x1xf32> to vector<128x256xf32>
      %46 = arith.subf %42, %45 : vector<128x256xf32>
      %47 = math.exp %46 : vector<128x256xf32>
      %cst_32 = arith.constant dense<0.000000e+00> : vector<128xf32>
      %48 = vector.multi_reduction <add>, %47, %cst_32 [1] : vector<128x256xf32> to vector<128xf32>
      %49 = vector.shape_cast %48 : vector<128xf32> to vector<128x1xf32>
      %50 = tpu.reciprocal %49 {approx = true} : vector<128x1xf32> -> vector<128x1xf32>
      %51 = vector.broadcast %50 : vector<128x1xf32> to vector<128x256xf32>
      %52 = arith.mulf %47, %51 : vector<128x256xf32>
      %53 = arith.truncf %52 : vector<128x256xf32> to vector<128x256xbf16>
      %54 = arith.index_cast %36 : i32 to index
      %c0_33 = arith.constant 0 : index
      %c0_34 = arith.constant 0 : index
      %55 = vector.load %arg18[%54, %c0_33, %c0_34] : memref<3x256x32xbf16, #tpu.memory_space<vmem>>, vector<1x256x32xbf16>
      %56 = vector.shape_cast %55 : vector<1x256x32xbf16> to vector<256x32xbf16>
      %cst_35 = arith.constant dense<0.000000e+00> : vector<128x32xf32>
      %57 = tpu.matmul %53, %56, %cst_35 {dimension_numbers = #tpu.dot_dimension_numbers<[1], [0], [0], [1], [0, 0, 1, 1], [], []>} : vector<128x256xbf16>, vector<256x32xbf16>, vector<128x32xf32> -> vector<128x32xf32>
      %58 = arith.truncf %57 : vector<128x32xf32> to vector<128x32xbf16>
      %c0_36 = arith.constant 0 : index
      %c0_37 = arith.constant 0 : index
      %59 = vector.load %arg10[%c0_36, %c0_37] : memref<32x64xbf16, #tpu.memory_space<vmem>>, vector<32x64xbf16>
      %cst_38 = arith.constant dense<0.000000e+00> : vector<128x64xf32>
      %60 = tpu.matmul %58, %59, %cst_38 {dimension_numbers = #tpu.dot_dimension_numbers<[1], [0], [0], [1], [0, 0, 1, 1], [], []>} : vector<128x32xbf16>, vector<32x64xbf16>, vector<128x64xf32> -> vector<128x64xf32>
      %c0_39 = arith.constant 0 : index
      %c0_40 = arith.constant 0 : index
      %61 = vector.load %arg11[%c0_39, %c0_40] : memref<1x64xf32, #tpu.memory_space<vmem>>, vector<1x64xf32>
      %62 = vector.broadcast %61 : vector<1x64xf32> to vector<128x64xf32>
      %63 = arith.addf %60, %62 : vector<128x64xf32>
      %64 = arith.addf %arg20, %63 : vector<128x64xf32>
      %c0_i32_41 = arith.constant 0 : i32
      %65 = arith.cmpi eq, %arg2, %c0_i32_41 : i32
      %66 = arith.extui %65 : i1 to i32
      %c0_i32_42 = arith.constant 0 : i32
      %67 = arith.cmpi ne, %66, %c0_i32_42 : i32
      scf.if %67 {
        %c0_43 = arith.constant 0 : index
        %68 = arith.index_cast %arg19 : i32 to index
        %c0_44 = arith.constant 0 : index
        %c0_45 = arith.constant 0 : index
        %69 = vector.load %arg16[%c0_43, %68, %c0_44, %c0_45] : memref<1x2x128x256xf32, #tpu.memory_space<vmem>>, vector<1x1x128x256xf32>
        %70 = vector.shape_cast %69 : vector<1x1x128x256xf32> to vector<128x256xf32>
        %71 = vector.shape_cast %52 : vector<128x256xf32> to vector<1x1x128x256xf32>
        tpu.vector_store %arg16[%c0_43, %68, %c0_44, %c0_45], %71 {strides = array<i32>} : memref<1x2x128x256xf32, #tpu.memory_space<vmem>>, vector<1x1x128x256xf32>,
      } else {
      }
      scf.yield %64 : vector<128x64xf32>
    }
    %c2_i32_13 = arith.constant 2 : i32
    %c0_14 = arith.constant 0 : index
    %c0_15 = arith.constant 0 : index
    %21 = vector.load %arg12[%c0_14, %c0_15] : memref<64x64xbf16, #tpu.memory_space<vmem>>, vector<64x64xbf16>
    %cst_16 = arith.constant dense<0.000000e+00> : vector<128x64xf32>
    %22 = tpu.matmul %8, %21, %cst_16 {dimension_numbers = #tpu.dot_dimension_numbers<[1], [0], [0], [1], [0, 0, 1, 1], [], []>} : vector<128x64xbf16>, vector<64x64xbf16>, vector<128x64xf32> -> vector<128x64xf32>
    %23 = arith.truncf %20 : vector<128x64xf32> to vector<128x64xbf16>
    %c0_17 = arith.constant 0 : index
    %c0_18 = arith.constant 0 : index
    %24 = vector.load %arg13[%c0_17, %c0_18] : memref<64x64xbf16, #tpu.memory_space<vmem>>, vector<64x64xbf16>
    %cst_19 = arith.constant dense<0.000000e+00> : vector<128x64xf32>
    %25 = tpu.matmul %23, %24, %cst_19 {dimension_numbers = #tpu.dot_dimension_numbers<[1], [0], [0], [1], [0, 0, 1, 1], [], []>} : vector<128x64xbf16>, vector<64x64xbf16>, vector<128x64xf32> -> vector<128x64xf32>
    %26 = arith.addf %22, %25 : vector<128x64xf32>
    %c0_20 = arith.constant 0 : index
    %c0_21 = arith.constant 0 : index
    %27 = vector.load %arg14[%c0_20, %c0_21] : memref<1x64xf32, #tpu.memory_space<vmem>>, vector<1x64xf32>
    %28 = vector.broadcast %27 : vector<1x64xf32> to vector<128x64xf32>
    %29 = arith.addf %26, %28 : vector<128x64xf32>
    %30 = arith.addf %7, %29 : vector<128x64xf32>
    %c0_22 = arith.constant 0 : index
    %c0_23 = arith.constant 0 : index
    %c0_24 = arith.constant 0 : index
    %c0_25 = arith.constant 0 : index
    %31 = vector.load %arg15[%c0_22, %c0_23, %c0_24, %c0_25] : memref<1x1x128x64xf32, #tpu.memory_space<vmem>>, vector<1x1x128x64xf32>
    %32 = vector.shape_cast %31 : vector<1x1x128x64xf32> to vector<128x64xf32>
    %33 = vector.shape_cast %30 : vector<128x64xf32> to vector<1x1x128x64xf32>
    tpu.vector_store %arg15[%c0_22, %c0_23, %c0_24, %c0_25], %33 {strides = array<i32>} : memref<1x1x128x64xf32, #tpu.memory_space<vmem>>, vector<1x1x128x64xf32>,
    return
  }
  func.func @transform_0(%arg0: i32, %arg1: i32, %arg2: i32) -> (i32, i32, i32, i32) {
    %c0_i32 = arith.constant 0 : i32
    %c0_i32_0 = arith.constant 0 : i32
    %c0_i32_1 = arith.constant 0 : i32
    %c0_i32_2 = arith.constant 0 : i32
    return %arg0, %c0_i32, %c0_i32_0, %c0_i32_1 : i32, i32, i32, i32
  }
  func.func @transform_1(%arg0: i32, %arg1: i32, %arg2: i32) -> (i32, i32, i32, i32) {
    %c0_i32 = arith.constant 0 : i32
    %c0_i32_0 = arith.constant 0 : i32
    return %arg0, %arg2, %arg1, %c0_i32 : i32, i32, i32, i32
  }
  func.func @transform_2(%arg0: i32, %arg1: i32, %arg2: i32) -> (i32, i32) {
    %c0_i32 = arith.constant 0 : i32
    %c0_i32_0 = arith.constant 0 : i32
    %c0_i32_1 = arith.constant 0 : i32
    return %c0_i32, %c0_i32_0 : i32, i32
  }
  func.func @transform_3(%arg0: i32, %arg1: i32, %arg2: i32) -> (i32, i32) {
    %c0_i32 = arith.constant 0 : i32
    %c0_i32_0 = arith.constant 0 : i32
    %c0_i32_1 = arith.constant 0 : i32
    return %c0_i32, %c0_i32_0 : i32, i32
  }
  func.func @transform_4(%arg0: i32, %arg1: i32, %arg2: i32) -> (i32, i32) {
    %c0_i32 = arith.constant 0 : i32
    %c0_i32_0 = arith.constant 0 : i32
    %c0_i32_1 = arith.constant 0 : i32
    return %c0_i32, %c0_i32_0 : i32, i32
  }
  func.func @transform_5(%arg0: i32, %arg1: i32, %arg2: i32) -> (i32, i32) {
    %c0_i32 = arith.constant 0 : i32
    %c0_i32_0 = arith.constant 0 : i32
    %c0_i32_1 = arith.constant 0 : i32
    return %c0_i32, %c0_i32_0 : i32, i32
  }
  func.func @transform_6(%arg0: i32, %arg1: i32, %arg2: i32) -> (i32, i32) {
    %c0_i32 = arith.constant 0 : i32
    %c0_i32_0 = arith.constant 0 : i32
    %c0_i32_1 = arith.constant 0 : i32
    return %c0_i32, %c0_i32_0 : i32, i32
  }
  func.func @transform_7(%arg0: i32, %arg1: i32, %arg2: i32) -> (i32, i32) {
    %c0_i32 = arith.constant 0 : i32
    %c0_i32_0 = arith.constant 0 : i32
    %c0_i32_1 = arith.constant 0 : i32
    return %c0_i32, %c0_i32_0 : i32, i32
  }
  func.func @transform_8(%arg0: i32, %arg1: i32, %arg2: i32) -> (i32, i32) {
    %c0_i32 = arith.constant 0 : i32
    %c0_i32_0 = arith.constant 0 : i32
    %c0_i32_1 = arith.constant 0 : i32
    return %c0_i32, %c0_i32_0 : i32, i32
  }
  func.func @transform_9(%arg0: i32, %arg1: i32, %arg2: i32) -> (i32, i32) {
    %c0_i32 = arith.constant 0 : i32
    %c0_i32_0 = arith.constant 0 : i32
    %c0_i32_1 = arith.constant 0 : i32
    return %c0_i32, %c0_i32_0 : i32, i32
  }
  func.func @transform_10(%arg0: i32, %arg1: i32, %arg2: i32) -> (i32, i32) {
    %c0_i32 = arith.constant 0 : i32
    %c0_i32_0 = arith.constant 0 : i32
    %c0_i32_1 = arith.constant 0 : i32
    return %c0_i32, %c0_i32_0 : i32, i32
  }
  func.func @transform_11(%arg0: i32, %arg1: i32, %arg2: i32) -> (i32, i32) {
    %c0_i32 = arith.constant 0 : i32
    %c0_i32_0 = arith.constant 0 : i32
    %c0_i32_1 = arith.constant 0 : i32
    return %c0_i32, %c0_i32_0 : i32, i32
  }
  func.func @transform_12(%arg0: i32, %arg1: i32, %arg2: i32) -> (i32, i32, i32, i32) {
    %c0_i32 = arith.constant 0 : i32
    %c0_i32_0 = arith.constant 0 : i32
    return %arg0, %arg2, %arg1, %c0_i32 : i32, i32, i32, i32
  }
  func.func @transform_13(%arg0: i32, %arg1: i32, %arg2: i32) -> (i32, i32, i32, i32) {
    %c0_i32 = arith.constant 0 : i32
    %c0_i32_0 = arith.constant 0 : i32
    %c0_i32_1 = arith.constant 0 : i32
    return %arg0, %c0_i32, %arg1, %c0_i32_0 : i32, i32, i32, i32
  }
}

module attributes {stable_mosaic.version = 11 : i64} {
  func.func @_spatial_map_kernel(%arg0: i32, %arg1: i32, %arg2: memref<1x1x128x256xf32, #tpu.memory_space<vmem>>, %arg3: memref<1x128x256xf32, #tpu.memory_space<vmem>>) attributes {dimension_semantics = [#tpu.dimension_semantics<parallel>, #tpu.dimension_semantics<parallel>], iteration_bounds = array<i64: 2, 2>, scalar_prefetch = 0 : i64, scratch_operands = 0 : i64, tpu.core_type = #tpu.core_type<tc>, window_params = [{transform_indices = @transform_0, window_bounds = array<i64: 1, 1, 128, 256>}, {transform_indices = @transform_1, window_bounds = array<i64: 1, 128, 256>}]} {
    %c0 = arith.constant 0 : index
    %c0_0 = arith.constant 0 : index
    %c0_1 = arith.constant 0 : index
    %c0_2 = arith.constant 0 : index
    %0 = vector.load %arg2[%c0, %c0_0, %c0_1, %c0_2] : memref<1x1x128x256xf32, #tpu.memory_space<vmem>>, vector<1x1x128x256xf32>
    %1 = vector.shape_cast %0 : vector<1x1x128x256xf32> to vector<128x256xf32>
    %cst = arith.constant -2.000000e+00 : f32
    %2 = vector.broadcast %cst : f32 to vector<128x256xf32>
    %3 = arith.mulf %1, %2 : vector<128x256xf32>
    %4 = math.exp %3 : vector<128x256xf32>
    %c0_3 = arith.constant 0 : index
    %c0_4 = arith.constant 0 : index
    %c0_5 = arith.constant 0 : index
    %5 = vector.load %arg3[%c0_3, %c0_4, %c0_5] : memref<1x128x256xf32, #tpu.memory_space<vmem>>, vector<1x128x256xf32>
    %6 = vector.shape_cast %5 : vector<1x128x256xf32> to vector<128x256xf32>
    %7 = vector.shape_cast %4 : vector<128x256xf32> to vector<1x128x256xf32>
    tpu.vector_store %arg3[%c0_3, %c0_4, %c0_5], %7 {strides = array<i32>} : memref<1x128x256xf32, #tpu.memory_space<vmem>>, vector<1x128x256xf32>,
    return
  }
  func.func @transform_0(%arg0: i32, %arg1: i32) -> (i32, i32, i32, i32) {
    %c0_i32 = arith.constant 0 : i32
    %c0_i32_0 = arith.constant 0 : i32
    %c0_i32_1 = arith.constant 0 : i32
    return %arg0, %c0_i32, %arg1, %c0_i32_0 : i32, i32, i32, i32
  }
  func.func @transform_1(%arg0: i32, %arg1: i32) -> (i32, i32, i32) {
    %c0_i32 = arith.constant 0 : i32
    %c0_i32_0 = arith.constant 0 : i32
    return %arg0, %arg1, %c0_i32 : i32, i32, i32
  }
}

</mosaic_0001>

<llo_original>
// kernel: spatial_temp_attn_fwd.4
$region0: #{spatial_temp_attn_fwd.4}
  #allocation0 [shape = 'u32[]', space=smem, size = 0x4, offset = 0x4, fixed_abs, tag = 'smem constant byte address 0x4 - core index']
  #allocation1 [shape = 'u32[144,128]{1,0:T(1,128)}', space=vmem, size = 0x12000, scoped, tag = 'internal scratch']
  %s0 = inlined_call_operand.hbm [shape: f32[2,3,256,256], index: 0, kind: input, shape index: {}]
  %s1 = inlined_call_operand.hbm [shape: f32[2,256,256], index: 1, kind: output, shape index: {}]
  %s2 = sld [smem:[#allocation0]]
  $region41: #{spatial_temp_attn_fwd.4} parent=0
    _
  %s4 = ssub.s32 1, %s2
  %s5 = scalar_select 0, %s4, %s2
  $region1: #{spatial_temp_attn_fwd.4} parent=0
    #allocation2 [shape = 'u8[262144]{0}', space=vmem, size = 0x40000, scoped, tag = 'input window, operand 0']
    #allocation3 [shape = 's32[2]{0}', space=sflag, size = 0x8, scoped, tag = 'scoped memory for spatial_temp_attn_fwd.4']
    #allocation4 [shape = 's32[2]{0}', space=sflag, size = 0x8, scoped, tag = 'scoped memory for spatial_temp_attn_fwd.4']
    #allocation5 [shape = 'u8[262144]{0}', space=vmem, size = 0x40000, scoped, tag = 'output window, operand 0']
    %6 = vsyncpa [#allocation3], 0
    %s7 = scalar_lea.sflag [#allocation3], 1
    %8 = vsyncpa %s7, 0
    %9 = vsyncpa [#allocation4], 0
    %s10 = scalar_lea.sflag [#allocation4], 1
    %11 = vsyncpa %s10, 0
    loop: start=0, step=1, limit=6
    $region2: #{spatial_temp_attn_fwd.4} parent=1 // loop_pre_header
      _
    $region3: #{spatial_temp_attn_fwd.4} parent=1 // loop_header
      %s13 = sphi 0, %s17
      %p14 = scmp.ge.s32.totalorder %s13, 6
      %s20 = sphi 0, %s32
      %s21 = sphi 0, %s28
      %s22 = sphi 0, %s20
      %s23 = sphi 0, %s21
      %s24 = sphi 0, %s22
      %s25 = sphi 0, %s23
      %s37 = sphi 0, %s39
      %s40 = sphi 0, %s37
      %s41 = sphi 0, %s40
      %s57 = sphi 0, %s41
      %s65 = sphi 0, %s67
      %s68 = sphi 0, %s65
      %s69 = sphi 0, %s68
      %s85 = sphi 0, %s69
    $region4: #{spatial_temp_attn_fwd.4} parent=1 // loop_header_branch
      %16 = sbr.rel (%p14) target = $region8
    $region5: #{spatial_temp_attn_fwd.4} parent=1 // loop_body
      %s18 = ssub.s32 %s13, 1
      %s19 = ssub.s32 %s13, 2
      %s26 = sadd.s32 1, %s21
      %p27 = scmp.ge.s32.totalorder %s26, 2
      %s28 = scalar_select %p27, 0, %s26
      %s29 = sadd.s32 1, %s20
      %s30 = scalar_select %p27, %s29, %s20
      %p31 = scmp.ge.s32.totalorder %s30, 2
      %s32 = scalar_select %p31, 0, %s30
      %s33 = ssub.s32 %s20, %s32
      %s34 = ssub.s32 %s21, %s28
      %s35 = sor.u32 %s33, %s34
      %p36 = scmp.eq.s32.totalorder %s35, 0
      %s38 = sadd.s32 %s37, 1
      %s39 = scalar_select %p36, %s37, %s38
      %p42 = pneg %p36
      %p43 = scmp.eq.s32.totalorder %s13, 3
      %p44 = por %p42, %p43
      %p45 = scmp.ne.s32.totalorder %s37, %s40
      %p46 = scmp.eq.s32.totalorder %s13, 0
      %p47 = por %p45, %p46
      %p48 = scmp.ne.s32.totalorder %s37, %s40
      %p49 = scmp.eq.s32.totalorder %s18, 3
      %p50 = por %p48, %p49
      %p51 = scmp.ne.s32.totalorder %s40, %s41
      %p52 = scmp.eq.s32.totalorder %s18, 0
      %p53 = por %p51, %p52
      %p54 = scmp.ne.s32.totalorder %s40, %s41
      %p55 = scmp.eq.s32.totalorder %s19, 3
      %p56 = por %p54, %p55
      %p58 = scmp.ne.s32.totalorder %s41, %s57
      %p59 = scmp.eq.s32.totalorder %s19, 0
      %p60 = por %p58, %p59
      %s61 = ssub.s32 %s20, %s32
      %s62 = ssub.s32 %s21, %s28
      %s63 = sor.u32 %s61, %s62
      %p64 = scmp.eq.s32.totalorder %s63, 0
      %s66 = sadd.s32 %s65, 1
      %s67 = scalar_select %p64, %s65, %s66
      %p70 = pneg %p64
      %p71 = scmp.eq.s32.totalorder %s13, 3
      %p72 = por %p70, %p71
      %p73 = scmp.ne.s32.totalorder %s65, %s68
      %p74 = scmp.eq.s32.totalorder %s13, 0
      %p75 = por %p73, %p74
      %p76 = scmp.ne.s32.totalorder %s65, %s68
      %p77 = scmp.eq.s32.totalorder %s18, 3
      %p78 = por %p76, %p77
      %p79 = scmp.ne.s32.totalorder %s68, %s69
      %p80 = scmp.eq.s32.totalorder %s18, 0
      %p81 = por %p79, %p80
      %p82 = scmp.ne.s32.totalorder %s68, %s69
      %p83 = scmp.eq.s32.totalorder %s19, 3
      %p84 = por %p82, %p83
      %p86 = scmp.ne.s32.totalorder %s69, %s85
      %p87 = scmp.eq.s32.totalorder %s19, 0
      %p88 = por %p86, %p87
      %p89 = scmp.le.s32.totalorder 1, %s13
      %p90 = scmp.lt.s32.totalorder %s13, 5
      %p91 = pnand %p89, %p90
      %p92 = pneg %p91
      // Predicated region
      $region9: #{spatial_temp_attn_fwd.4} parent=5 // pred_check
        _
      $region10: #{spatial_temp_attn_fwd.4} parent=5 // pred_check_branch
        %94 = sbr.rel (%p91) target = $region12
      $region11: #{spatial_temp_attn_fwd.4} parent=5 // pred_region
        %s95 = ssub.s32 %s13, 1
      $region12: #{spatial_temp_attn_fwd.4} parent=5 // pred_fallthru
        _
      %p96 = scmp.lt.s32.totalorder %s13, 4
      // Predicated region
      $region13: #{spatial_temp_attn_fwd.4} parent=5 // pred_check
        %p97 = pneg %p96
      $region14: #{spatial_temp_attn_fwd.4} parent=5 // pred_check_branch
        %99 = sbr.rel (%p97) target = $region16
      $region15: #{spatial_temp_attn_fwd.4} parent=5 // pred_region
        // Predicated region
        $region17: #{spatial_temp_attn_fwd.4} parent=15 // pred_check
          %p100 = pneg %p47
        $region18: #{spatial_temp_attn_fwd.4} parent=15 // pred_check_branch
          %102 = sbr.rel (%p100) target = $region20
        $region19: #{spatial_temp_attn_fwd.4} parent=15 // pred_region
          %s103 = sand.u32 %s37, 1
          %s104 = scalar_lea.sflag [#allocation3], %s103
          %s105 = sand.u32 %s37, 1
          %s106 = smul.addr %s105, 256
          %s107 = scalar_lea.vmem [#allocation2], %s106
          %s108 = smul.u32 16, %s21
          %s110 = ssub.s32 4096, 4096
          %111 = vsyncadd %s104, %s110
          %s112 = smul.addr %s108, 2
          %s113 = smul.addr %s20, 192
          %s114 = sadd.s32 %s112, %s113
          %s115 = smul.addr %s114, 128
          %s116 = scalar_lea.hbm %s0, %s115
          %s117 = sshll.u32 %s107, 4
          %s118 = int_to_ptr.vmem [resolvable:$true] %s117
          %123 = dma.hbm_to_vmem [thread:$0]  %s116, 4096, %s118, %s104, 256, 256, 16
        $region20: #{spatial_temp_attn_fwd.4} parent=15 // pred_fallthru
          _
      $region16: #{spatial_temp_attn_fwd.4} parent=5 // pred_fallthru
        _
      %p124 = scmp.le.s32.totalorder 1, %s13
      %p125 = scmp.lt.s32.totalorder %s13, 5
      %p126 = pnand %p124, %p125
      %p127 = pneg %p126
      // Predicated region
      $region21: #{spatial_temp_attn_fwd.4} parent=5 // pred_check
        _
      $region22: #{spatial_temp_attn_fwd.4} parent=5 // pred_check_branch
        %129 = sbr.rel (%p126) target = $region24
      $region23: #{spatial_temp_attn_fwd.4} parent=5 // pred_region
        %s130 = ssub.s32 %s13, 1
        %s131 = sand.u32 %s40, 1
        %s132 = scalar_lea.sflag [#allocation3], %s131
        %s133 = sand.u32 %s40, 1
        %s134 = smul.addr %s133, 256
        %s135 = scalar_lea.vmem [#allocation2], %s134
        // Predicated region
        $region25: #{spatial_temp_attn_fwd.4} parent=23 // pred_check
          %p136 = pneg %p53
        $region26: #{spatial_temp_attn_fwd.4} parent=23 // pred_check_branch
          %138 = sbr.rel (%p136) target = $region28
        $region27: #{spatial_temp_attn_fwd.4} parent=23 // pred_region
          %139 = dma.done %s132, 4096
        $region28: #{spatial_temp_attn_fwd.4} parent=23 // pred_fallthru
          _
        %s140 = sand.u32 %s40, 1
        %s141 = scalar_lea.sflag [#allocation3], %s140
        %s142 = sand.u32 %s40, 1
        %s143 = smul.addr %s142, 256
        %s144 = scalar_lea.vmem [#allocation2], %s143
        %p145 = pneg %p53
        %p146 = pneg %p50
        %p147 = pneg %p81
        %p148 = pneg %p78
        %s149 = sand.u32 %s68, 1
        %s150 = scalar_lea.sflag [#allocation4], %s149
        %s151 = sand.u32 %s68, 1
        %s152 = smul.addr %s151, 256
        %s153 = scalar_lea.vmem [#allocation5], %s152
        %s154 = smul.u32 16, %s23
        %s155 = smul.u32 16, %s23
        %v156 = vld [vmem:[%s135] sm:$0xff]
        %v157 = vld [vmem:[%s135 + $0x8] sm:$0xff]
        %v158 = vld [vmem:[%s135 + $0x10] sm:$0xff]
        %v159 = vld [vmem:[%s135 + $0x18] sm:$0xff]
        %v160 = vld [vmem:[%s135 + $0x20] sm:$0xff]
        %v161 = vld [vmem:[%s135 + $0x28] sm:$0xff]
        %v162 = vld [vmem:[%s135 + $0x30] sm:$0xff]
        %v163 = vld [vmem:[%s135 + $0x38] sm:$0xff]
        %v164 = vld [vmem:[%s135 + $0x40] sm:$0xff]
        %v165 = vld [vmem:[%s135 + $0x48] sm:$0xff]
        %v166 = vld [vmem:[%s135 + $0x50] sm:$0xff]
        %v167 = vld [vmem:[%s135 + $0x58] sm:$0xff]
        %v168 = vld [vmem:[%s135 + $0x60] sm:$0xff]
        %v169 = vld [vmem:[%s135 + $0x68] sm:$0xff]
        %v170 = vld [vmem:[%s135 + $0x70] sm:$0xff]
        %v171 = vld [vmem:[%s135 + $0x78] sm:$0xff]
        %v172 = vld [vmem:[%s135 + $0x80] sm:$0xff]
        %v173 = vld [vmem:[%s135 + $0x88] sm:$0xff]
        %v174 = vld [vmem:[%s135 + $0x90] sm:$0xff]
        %v175 = vld [vmem:[%s135 + $0x98] sm:$0xff]
        %v176 = vld [vmem:[%s135 + $0xa0] sm:$0xff]
        %v177 = vld [vmem:[%s135 + $0xa8] sm:$0xff]
        %v178 = vld [vmem:[%s135 + $0xb0] sm:$0xff]
        %v179 = vld [vmem:[%s135 + $0xb8] sm:$0xff]
        %v180 = vld [vmem:[%s135 + $0xc0] sm:$0xff]
        %v181 = vld [vmem:[%s135 + $0xc8] sm:$0xff]
        %v182 = vld [vmem:[%s135 + $0xd0] sm:$0xff]
        %v183 = vld [vmem:[%s135 + $0xd8] sm:$0xff]
        %v184 = vld [vmem:[%s135 + $0xe0] sm:$0xff]
        %v185 = vld [vmem:[%s135 + $0xe8] sm:$0xff]
        %v186 = vld [vmem:[%s135 + $0xf0] sm:$0xff]
        %v187 = vld [vmem:[%s135 + $0xf8] sm:$0xff]
        %v188 = vmul.f32 %v156, -2.0
        %v189 = vmul.f32 %v157, -2.0
        %v190 = vmul.f32 %v158, -2.0
        %v191 = vmul.f32 %v159, -2.0
        %v192 = vmul.f32 %v160, -2.0
        %v193 = vmul.f32 %v161, -2.0
        %v194 = vmul.f32 %v162, -2.0
        %v195 = vmul.f32 %v163, -2.0
        %v196 = vmul.f32 %v164, -2.0
        %v197 = vmul.f32 %v165, -2.0
        %v198 = vmul.f32 %v166, -2.0
        %v199 = vmul.f32 %v167, -2.0
        %v200 = vmul.f32 %v168, -2.0
        %v201 = vmul.f32 %v169, -2.0
        %v202 = vmul.f32 %v170, -2.0
        %v203 = vmul.f32 %v171, -2.0
        %v204 = vmul.f32 %v172, -2.0
        %v205 = vmul.f32 %v173, -2.0
        %v206 = vmul.f32 %v174, -2.0
        %v207 = vmul.f32 %v175, -2.0
        %v208 = vmul.f32 %v176, -2.0
        %v209 = vmul.f32 %v177, -2.0
        %v210 = vmul.f32 %v178, -2.0
        %v211 = vmul.f32 %v179, -2.0
        %v212 = vmul.f32 %v180, -2.0
        %v213 = vmul.f32 %v181, -2.0
        %v214 = vmul.f32 %v182, -2.0
        %v215 = vmul.f32 %v183, -2.0
        %v216 = vmul.f32 %v184, -2.0
        %v217 = vmul.f32 %v185, -2.0
        %v218 = vmul.f32 %v186, -2.0
        %v219 = vmul.f32 %v187, -2.0
        %v220 = vmul.f32 %v188, 1.442695
        %v221 = vpow.pop %v220
        %v222 = vmul.f32 %v189, 1.442695
        %v223 = vpow.pop %v222
        %v224 = vmul.f32 %v190, 1.442695
        %v225 = vpow.pop %v224
        %v226 = vmul.f32 %v191, 1.442695
        %v227 = vpow.pop %v226
        %v228 = vmul.f32 %v192, 1.442695
        %v229 = vpow.pop %v228
        %v230 = vmul.f32 %v193, 1.442695
        %v231 = vpow.pop %v230
        %v232 = vmul.f32 %v194, 1.442695
        %v233 = vpow.pop %v232
        %v234 = vmul.f32 %v195, 1.442695
        %v235 = vpow.pop %v234
        %v236 = vmul.f32 %v196, 1.442695
        %v237 = vpow.pop %v236
        %v238 = vmul.f32 %v197, 1.442695
        %v239 = vpow.pop %v238
        %v240 = vmul.f32 %v198, 1.442695
        %v241 = vpow.pop %v240
        %v242 = vmul.f32 %v199, 1.442695
        %v243 = vpow.pop %v242
        %v244 = vmul.f32 %v200, 1.442695
        %v245 = vpow.pop %v244
        %v246 = vmul.f32 %v201, 1.442695
        %v247 = vpow.pop %v246
        %v248 = vmul.f32 %v202, 1.442695
        %v249 = vpow.pop %v248
        %v250 = vmul.f32 %v203, 1.442695
        %v251 = vpow.pop %v250
        %v252 = vmul.f32 %v204, 1.442695
        %v253 = vpow.pop %v252
        %v254 = vmul.f32 %v205, 1.442695
        %v255 = vpow.pop %v254
        %v256 = vmul.f32 %v206, 1.442695
        %v257 = vpow.pop %v256
        %v258 = vmul.f32 %v207, 1.442695
        %v259 = vpow.pop %v258
        %v260 = vmul.f32 %v208, 1.442695
        %v261 = vpow.pop %v260
        %v262 = vmul.f32 %v209, 1.442695
        %v263 = vpow.pop %v262
        %v264 = vmul.f32 %v210, 1.442695
        %v265 = vpow.pop %v264
        %v266 = vmul.f32 %v211, 1.442695
        %v267 = vpow.pop %v266
        %v268 = vmul.f32 %v212, 1.442695
        %v269 = vpow.pop %v268
        %v270 = vmul.f32 %v213, 1.442695
        %v271 = vpow.pop %v270
        %v272 = vmul.f32 %v214, 1.442695
        %v273 = vpow.pop %v272
        %v274 = vmul.f32 %v215, 1.442695
        %v275 = vpow.pop %v274
        %v276 = vmul.f32 %v216, 1.442695
        %v277 = vpow.pop %v276
        %v278 = vmul.f32 %v217, 1.442695
        %v279 = vpow.pop %v278
        %v280 = vmul.f32 %v218, 1.442695
        %v281 = vpow.pop %v280
        %v282 = vmul.f32 %v219, 1.442695
        %v283 = vpow.pop %v282
        %284 = vst [vmem:[%s153] sm:$0xff] %v221
        %285 = vst [vmem:[%s153 + $0x8] sm:$0xff] %v223
        %286 = vst [vmem:[%s153 + $0x10] sm:$0xff] %v225
        %287 = vst [vmem:[%s153 + $0x18] sm:$0xff] %v227
        %288 = vst [vmem:[%s153 + $0x20] sm:$0xff] %v229
        %289 = vst [vmem:[%s153 + $0x28] sm:$0xff] %v231
        %290 = vst [vmem:[%s153 + $0x30] sm:$0xff] %v233
        %291 = vst [vmem:[%s153 + $0x38] sm:$0xff] %v235
        %292 = vst [vmem:[%s153 + $0x40] sm:$0xff] %v237
        %293 = vst [vmem:[%s153 + $0x48] sm:$0xff] %v239
        %294 = vst [vmem:[%s153 + $0x50] sm:$0xff] %v241
        %295 = vst [vmem:[%s153 + $0x58] sm:$0xff] %v243
        %296 = vst [vmem:[%s153 + $0x60] sm:$0xff] %v245
        %297 = vst [vmem:[%s153 + $0x68] sm:$0xff] %v247
        %298 = vst [vmem:[%s153 + $0x70] sm:$0xff] %v249
        %299 = vst [vmem:[%s153 + $0x78] sm:$0xff] %v251
        %300 = vst [vmem:[%s153 + $0x80] sm:$0xff] %v253
        %301 = vst [vmem:[%s153 + $0x88] sm:$0xff] %v255
        %302 = vst [vmem:[%s153 + $0x90] sm:$0xff] %v257
        %303 = vst [vmem:[%s153 + $0x98] sm:$0xff] %v259
        %304 = vst [vmem:[%s153 + $0xa0] sm:$0xff] %v261
        %305 = vst [vmem:[%s153 + $0xa8] sm:$0xff] %v263
        %306 = vst [vmem:[%s153 + $0xb0] sm:$0xff] %v265
        %307 = vst [vmem:[%s153 + $0xb8] sm:$0xff] %v267
        %308 = vst [vmem:[%s153 + $0xc0] sm:$0xff] %v269
        %309 = vst [vmem:[%s153 + $0xc8] sm:$0xff] %v271
        %310 = vst [vmem:[%s153 + $0xd0] sm:$0xff] %v273
        %311 = vst [vmem:[%s153 + $0xd8] sm:$0xff] %v275
        %312 = vst [vmem:[%s153 + $0xe0] sm:$0xff] %v277
        %313 = vst [vmem:[%s153 + $0xe8] sm:$0xff] %v279
        %314 = vst [vmem:[%s153 + $0xf0] sm:$0xff] %v281
        %315 = vst [vmem:[%s153 + $0xf8] sm:$0xff] %v283
        %s316 = sand.u32 %s68, 1
        %s317 = scalar_lea.sflag [#allocation4], %s316
        %s318 = sand.u32 %s68, 1
        %s319 = smul.addr %s318, 256
        %s320 = scalar_lea.vmem [#allocation5], %s319
        // Predicated region
        $region29: #{spatial_temp_attn_fwd.4} parent=23 // pred_check
          %p321 = pneg %p78
        $region30: #{spatial_temp_attn_fwd.4} parent=23 // pred_check_branch
          %323 = sbr.rel (%p321) target = $region32
        $region31: #{spatial_temp_attn_fwd.4} parent=23 // pred_region
          %s324 = smul.u32 16, %s23
          %s326 = ssub.s32 4096, 4096
          %327 = vsyncadd %s317, %s326
          %s328 = smul.addr %s324, 2
          %s329 = smul.addr %s22, 64
          %s330 = sadd.s32 %s328, %s329
          %s331 = smul.addr %s330, 128
          %s332 = scalar_lea.hbm %s1, %s331
          %s333 = sshll.u32 %s320, 4
          %s334 = int_to_ptr.vmem [resolvable:$true] %s333
          %339 = dma.vmem_to_hbm [thread:$0]  %s334, 4096, %s332, %s317, 256, 256, 16
        $region32: #{spatial_temp_attn_fwd.4} parent=23 // pred_fallthru
          _
      $region24: #{spatial_temp_attn_fwd.4} parent=5 // pred_fallthru
        _
      %p340 = scmp.le.s32.totalorder 2, %s13
      // Predicated region
      $region33: #{spatial_temp_attn_fwd.4} parent=5 // pred_check
        %p341 = pneg %p340
      $region34: #{spatial_temp_attn_fwd.4} parent=5 // pred_check_branch
        %343 = sbr.rel (%p341) target = $region36
      $region35: #{spatial_temp_attn_fwd.4} parent=5 // pred_region
        %s344 = ssub.s32 %s13, 2
        // Predicated region
        $region37: #{spatial_temp_attn_fwd.4} parent=35 // pred_check
          %p345 = pneg %p84
        $region38: #{spatial_temp_attn_fwd.4} parent=35 // pred_check_branch
          %347 = sbr.rel (%p345) target = $region40
        $region39: #{spatial_temp_attn_fwd.4} parent=35 // pred_region
          %s348 = sand.u32 %s69, 1
          %s349 = scalar_lea.sflag [#allocation4], %s348
          %s350 = sand.u32 %s69, 1
          %s351 = smul.addr %s350, 256
          %s352 = scalar_lea.vmem [#allocation5], %s351
          %353 = dma.done %s349, 4096
        $region40: #{spatial_temp_attn_fwd.4} parent=35 // pred_fallthru
          _
      $region36: #{spatial_temp_attn_fwd.4} parent=5 // pred_fallthru
        _
    $region6: #{spatial_temp_attn_fwd.4} parent=1 // loop_footer
      %s17 = sadd.s32 1, %s13
    $region7: #{spatial_temp_attn_fwd.4} parent=1 // loop_footer_branch
      %12 = sbr.rel target = $region3
    $region8: #{spatial_temp_attn_fwd.4} parent=1 // loop_exit
      _
    %354 = vsyncpa [#allocation3], 1
    %s355 = scalar_lea.sflag [#allocation3], 1
    %356 = vsyncpa %s355, 1
    %357 = vsyncpa [#allocation4], 1
    %s358 = scalar_lea.sflag [#allocation4], 1
    %359 = vsyncpa %s358, 1

// kernel: spatial_temp_attn_fwd.3
$region0: #{spatial_temp_attn_fwd.3}
  #allocation0 [shape = 'u32[]', space=smem, size = 0x4, offset = 0x4, fixed_abs, tag = 'smem constant byte address 0x4 - core index']
  #allocation1 [shape = 'u32[144,128]{1,0:T(1,128)}', space=vmem, size = 0x12000, scoped, tag = 'internal scratch']
  #allocation2 [shape = 'bf16[256,64]{1,0:T(16,128)(2,1)}', space=vmem, size = 0x10000, scoped, tag = 'scratch operand']
  #allocation3 [shape = 'f32[1]{0:T(128)S(6)}', space=smem, size = 0x200, scoped, tag = 'scoped memory for spatial_temp_attn_fwd.3']
  %s0 = inlined_call_operand.hbm [shape: f32[2,3,256,64], index: 0, kind: input, shape index: {}]
  %s1 = inlined_call_operand.hbm [shape: f32[2,3,256,256], index: 1, kind: input, shape index: {}]
  %s2 = inlined_call_operand.hbm [shape: bf16[64,64], index: 2, kind: input, shape index: {}]
  %s3 = inlined_call_operand.hbm [shape: f32[1,64], index: 3, kind: input, shape index: {}]
  %s4 = inlined_call_operand.hbm [shape: bf16[64,64], index: 4, kind: input, shape index: {}]
  %s5 = inlined_call_operand.hbm [shape: f32[1,64], index: 5, kind: input, shape index: {}]
  %s6 = inlined_call_operand.hbm [shape: f32[1,64], index: 6, kind: input, shape index: {}]
  %s7 = inlined_call_operand.hbm [shape: bf16[64,64], index: 7, kind: input, shape index: {}]
  %s8 = inlined_call_operand.hbm [shape: f32[1,64], index: 8, kind: input, shape index: {}]
  %s9 = inlined_call_operand.hbm [shape: f32[1,64], index: 9, kind: input, shape index: {}]
  %s10 = inlined_call_operand.hbm [shape: bf16[64,64], index: 10, kind: input, shape index: {}]
  %s11 = inlined_call_operand.hbm [shape: bf16[64,64], index: 11, kind: input, shape index: {}]
  %s12 = inlined_call_operand.hbm [shape: f32[1,64], index: 12, kind: input, shape index: {}]
  %s13 = inlined_call_operand.hbm [shape: f32[1,64], index: 13, kind: input, shape index: {}]
  %s14 = inlined_call_operand.<no memory space> [shape: f32[1], index: 14, kind: input, shape index: {}]
  %s15 = inlined_call_operand.hbm [shape: bf16[2,3,256,64], index: 15, kind: output, shape index: {}]
  %s16 = sld [smem:[#allocation0]]
  $region153: #{spatial_temp_attn_fwd.3} parent=0
    _
  %s18 = ssub.s32 1, %s16
  %s19 = scalar_select 0, %s18, %s16
  %20 = sst [smem:[#allocation3]] %s14
  $region1: #{spatial_temp_attn_fwd.3} parent=0
    #allocation4 [shape = 'u8[262144]{0}', space=vmem, size = 0x40000, scoped, tag = 'input window, operand 0']
    #allocation5 [shape = 's32[2]{0}', space=sflag, size = 0x8, scoped, tag = 'scoped memory for spatial_temp_attn_fwd.3']
    #allocation6 [shape = 's32[2]{0}', space=sflag, size = 0x8, scoped, tag = 'scoped memory for spatial_temp_attn_fwd.3']
    #allocation7 [shape = 'u8[262144]{0}', space=vmem, size = 0x40000, scoped, tag = 'input window, operand 1']
    #allocation8 [shape = 's32[2]{0}', space=sflag, size = 0x8, scoped, tag = 'scoped memory for spatial_temp_attn_fwd.3']
    #allocation9 [shape = 'u8[16384]{0}', space=vmem, size = 0x4000, scoped, tag = 'input window, operand 2, single buffered']
    #allocation10 [shape = 'u8[512]{0}', space=vmem, size = 0x400, scoped, tag = 'input window, operand 3, single buffered']
    #allocation11 [shape = 's32[1]{0}', space=sflag, size = 0x4, scoped, tag = 'scoped memory for spatial_temp_attn_fwd.3']
    #allocation12 [shape = 'u8[16384]{0}', space=vmem, size = 0x4000, scoped, tag = 'input window, operand 4, single buffered']
    #allocation13 [shape = 'u8[512]{0}', space=vmem, size = 0x400, scoped, tag = 'input window, operand 5, single buffered']
    #allocation14 [shape = 's32[1]{0}', space=sflag, size = 0x4, scoped, tag = 'scoped memory for spatial_temp_attn_fwd.3']
    #allocation15 [shape = 'u8[512]{0}', space=vmem, size = 0x400, scoped, tag = 'input window, operand 6, single buffered']
    #allocation16 [shape = 'u8[16384]{0}', space=vmem, size = 0x4000, scoped, tag = 'input window, operand 7, single buffered']
    #allocation17 [shape = 's32[1]{0}', space=sflag, size = 0x4, scoped, tag = 'scoped memory for spatial_temp_attn_fwd.3']
    #allocation18 [shape = 'u8[512]{0}', space=vmem, size = 0x400, scoped, tag = 'input window, operand 8, single buffered']
    #allocation19 [shape = 'u8[512]{0}', space=vmem, size = 0x400, scoped, tag = 'input window, operand 9, single buffered']
    #allocation20 [shape = 's32[1]{0}', space=sflag, size = 0x4, scoped, tag = 'scoped memory for spatial_temp_attn_fwd.3']
    #allocation21 [shape = 'u8[16384]{0}', space=vmem, size = 0x4000, scoped, tag = 'input window, operand 10, single buffered']
    #allocation22 [shape = 'u8[16384]{0}', space=vmem, size = 0x4000, scoped, tag = 'input window, operand 11, single buffered']
    #allocation23 [shape = 's32[1]{0}', space=sflag, size = 0x4, scoped, tag = 'scoped memory for spatial_temp_attn_fwd.3']
    #allocation24 [shape = 'u8[512]{0}', space=vmem, size = 0x400, scoped, tag = 'input window, operand 12, single buffered']
    #allocation25 [shape = 'u8[512]{0}', space=vmem, size = 0x400, scoped, tag = 'input window, operand 13, single buffered']
    #allocation26 [shape = 's32[1]{0}', space=sflag, size = 0x4, scoped, tag = 'scoped memory for spatial_temp_attn_fwd.3']
    #allocation27 [shape = 'u8[65536]{0}', space=vmem, size = 0x10000, scoped, tag = 'output window, operand 0']
    %21 = vsyncpa [#allocation5], 0
    %s22 = scalar_lea.sflag [#allocation5], 1
    %23 = vsyncpa %s22, 0
    %24 = vsyncpa [#allocation8], 0
    %s25 = scalar_lea.sflag [#allocation8], 1
    %26 = vsyncpa %s25, 0
    %27 = vsyncpa [#allocation11], 0
    %28 = vsyncpa [#allocation14], 0
    %29 = vsyncpa [#allocation17], 0
    %30 = vsyncpa [#allocation20], 0
    %31 = vsyncpa [#allocation23], 0
    %32 = vsyncpa [#allocation26], 0
    %33 = vsyncpa [#allocation6], 0
    %s34 = scalar_lea.sflag [#allocation6], 1
    %35 = vsyncpa %s34, 0
    loop: start=0, step=1, limit=14
    $region2: #{spatial_temp_attn_fwd.3} parent=1 // loop_pre_header
      _
    $region3: #{spatial_temp_attn_fwd.3} parent=1 // loop_header
      %s37 = sphi 0, %s41
      %p38 = scmp.ge.s32.totalorder %s37, 14
      %s44 = sphi 0, %s63
      %s45 = sphi 0, %s59
      %s46 = sphi 0, %s55
      %s47 = sphi 0, %s44
      %s48 = sphi 0, %s45
      %s49 = sphi 0, %s46
      %s50 = sphi 0, %s47
      %s51 = sphi 0, %s48
      %s52 = sphi 0, %s49
      %s68 = sphi 0, %s70
      %s71 = sphi 0, %s68
      %s72 = sphi 0, %s71
      %s88 = sphi 0, %s72
      %s98 = sphi 0, %s100
      %s101 = sphi 0, %s98
      %s102 = sphi 0, %s101
      %s118 = sphi 0, %s102
      %s122 = sphi 0, %s122
      %s124 = sphi 0, %s122
      %s125 = sphi 0, %s124
      %s139 = sphi 0, %s125
      %s143 = sphi 0, %s143
      %s145 = sphi 0, %s143
      %s146 = sphi 0, %s145
      %s160 = sphi 0, %s146
      %s164 = sphi 0, %s164
      %s166 = sphi 0, %s164
      %s167 = sphi 0, %s166
      %s181 = sphi 0, %s167
      %s185 = sphi 0, %s185
      %s187 = sphi 0, %s185
      %s188 = sphi 0, %s187
      %s202 = sphi 0, %s188
      %s206 = sphi 0, %s206
      %s208 = sphi 0, %s206
      %s209 = sphi 0, %s208
      %s223 = sphi 0, %s209
      %s227 = sphi 0, %s227
      %s229 = sphi 0, %s227
      %s230 = sphi 0, %s229
      %s244 = sphi 0, %s230
      %s248 = sphi 0, %s248
      %s250 = sphi 0, %s248
      %s251 = sphi 0, %s250
      %s265 = sphi 0, %s251
      %s269 = sphi 0, %s269
      %s271 = sphi 0, %s269
      %s272 = sphi 0, %s271
      %s286 = sphi 0, %s272
      %s290 = sphi 0, %s290
      %s292 = sphi 0, %s290
      %s293 = sphi 0, %s292
      %s307 = sphi 0, %s293
      %s311 = sphi 0, %s311
      %s313 = sphi 0, %s311
      %s314 = sphi 0, %s313
      %s328 = sphi 0, %s314
      %s332 = sphi 0, %s332
      %s334 = sphi 0, %s332
      %s335 = sphi 0, %s334
      %s349 = sphi 0, %s335
      %s353 = sphi 0, %s353
      %s355 = sphi 0, %s353
      %s356 = sphi 0, %s355
      %s370 = sphi 0, %s356
      %s374 = sphi 0, %s374
      %s376 = sphi 0, %s374
      %s377 = sphi 0, %s376
      %s391 = sphi 0, %s377
      %s401 = sphi 0, %s403
      %s404 = sphi 0, %s401
      %s405 = sphi 0, %s404
      %s421 = sphi 0, %s405
    $region4: #{spatial_temp_attn_fwd.3} parent=1 // loop_header_branch
      %40 = sbr.rel (%p38) target = $region8
    $region5: #{spatial_temp_attn_fwd.3} parent=1 // loop_body
      %s42 = ssub.s32 %s37, 1
      %s43 = ssub.s32 %s37, 2
      %s53 = sadd.s32 1, %s46
      %p54 = scmp.ge.s32.totalorder %s53, 2
      %s55 = scalar_select %p54, 0, %s53
      %s56 = sadd.s32 1, %s45
      %s57 = scalar_select %p54, %s56, %s45
      %p58 = scmp.ge.s32.totalorder %s57, 3
      %s59 = scalar_select %p58, 0, %s57
      %s60 = sadd.s32 1, %s44
      %s61 = scalar_select %p58, %s60, %s44
      %p62 = scmp.ge.s32.totalorder %s61, 2
      %s63 = scalar_select %p62, 0, %s61
      %s64 = ssub.s32 %s44, %s63
      %s65 = ssub.s32 %s45, %s59
      %s66 = sor.u32 %s64, %s65
      %p67 = scmp.eq.s32.totalorder %s66, 0
      %s69 = sadd.s32 %s68, 1
      %s70 = scalar_select %p67, %s68, %s69
      %p73 = pneg %p67
      %p74 = scmp.eq.s32.totalorder %s37, 11
      %p75 = por %p73, %p74
      %p76 = scmp.ne.s32.totalorder %s68, %s71
      %p77 = scmp.eq.s32.totalorder %s37, 0
      %p78 = por %p76, %p77
      %p79 = scmp.ne.s32.totalorder %s68, %s71
      %p80 = scmp.eq.s32.totalorder %s42, 11
      %p81 = por %p79, %p80
      %p82 = scmp.ne.s32.totalorder %s71, %s72
      %p83 = scmp.eq.s32.totalorder %s42, 0
      %p84 = por %p82, %p83
      %p85 = scmp.ne.s32.totalorder %s71, %s72
      %p86 = scmp.eq.s32.totalorder %s43, 11
      %p87 = por %p85, %p86
      %p89 = scmp.ne.s32.totalorder %s72, %s88
      %p90 = scmp.eq.s32.totalorder %s43, 0
      %p91 = por %p89, %p90
      %s92 = ssub.s32 %s44, %s63
      %s93 = ssub.s32 %s45, %s59
      %s94 = sor.u32 %s92, %s93
      %s95 = ssub.s32 %s46, %s55
      %s96 = sor.u32 %s94, %s95
      %p97 = scmp.eq.s32.totalorder %s96, 0
      %s99 = sadd.s32 %s98, 1
      %s100 = scalar_select %p97, %s98, %s99
      %p103 = pneg %p97
      %p104 = scmp.eq.s32.totalorder %s37, 11
      %p105 = por %p103, %p104
      %p106 = scmp.ne.s32.totalorder %s98, %s101
      %p107 = scmp.eq.s32.totalorder %s37, 0
      %p108 = por %p106, %p107
      %p109 = scmp.ne.s32.totalorder %s98, %s101
      %p110 = scmp.eq.s32.totalorder %s42, 11
      %p111 = por %p109, %p110
      %p112 = scmp.ne.s32.totalorder %s101, %s102
      %p113 = scmp.eq.s32.totalorder %s42, 0
      %p114 = por %p112, %p113
      %p115 = scmp.ne.s32.totalorder %s101, %s102
      %p116 = scmp.eq.s32.totalorder %s43, 11
      %p117 = por %p115, %p116
      %p119 = scmp.ne.s32.totalorder %s102, %s118
      %p120 = scmp.eq.s32.totalorder %s43, 0
      %p121 = por %p119, %p120
      %s123 = sadd.s32 %s122, 1
      %p126 = scmp.eq.s32.totalorder %s37, 11
      %p127 = scmp.ne.s32.totalorder %s122, %s124
      %p128 = scmp.eq.s32.totalorder %s37, 0
      %p129 = por %p127, %p128
      %p130 = scmp.ne.s32.totalorder %s122, %s124
      %p131 = scmp.eq.s32.totalorder %s42, 11
      %p132 = por %p130, %p131
      %p133 = scmp.ne.s32.totalorder %s124, %s125
      %p134 = scmp.eq.s32.totalorder %s42, 0
      %p135 = por %p133, %p134
      %p136 = scmp.ne.s32.totalorder %s124, %s125
      %p137 = scmp.eq.s32.totalorder %s43, 11
      %p138 = por %p136, %p137
      %p140 = scmp.ne.s32.totalorder %s125, %s139
      %p141 = scmp.eq.s32.totalorder %s43, 0
      %p142 = por %p140, %p141
      %s144 = sadd.s32 %s143, 1
      %p147 = scmp.eq.s32.totalorder %s37, 11
      %p148 = scmp.ne.s32.totalorder %s143, %s145
      %p149 = scmp.eq.s32.totalorder %s37, 0
      %p150 = por %p148, %p149
      %p151 = scmp.ne.s32.totalorder %s143, %s145
      %p152 = scmp.eq.s32.totalorder %s42, 11
      %p153 = por %p151, %p152
      %p154 = scmp.ne.s32.totalorder %s145, %s146
      %p155 = scmp.eq.s32.totalorder %s42, 0
      %p156 = por %p154, %p155
      %p157 = scmp.ne.s32.totalorder %s145, %s146
      %p158 = scmp.eq.s32.totalorder %s43, 11
      %p159 = por %p157, %p158
      %p161 = scmp.ne.s32.totalorder %s146, %s160
      %p162 = scmp.eq.s32.totalorder %s43, 0
      %p163 = por %p161, %p162
      %s165 = sadd.s32 %s164, 1
      %p168 = scmp.eq.s32.totalorder %s37, 11
      %p169 = scmp.ne.s32.totalorder %s164, %s166
      %p170 = scmp.eq.s32.totalorder %s37, 0
      %p171 = por %p169, %p170
      %p172 = scmp.ne.s32.totalorder %s164, %s166
      %p173 = scmp.eq.s32.totalorder %s42, 11
      %p174 = por %p172, %p173
      %p175 = scmp.ne.s32.totalorder %s166, %s167
      %p176 = scmp.eq.s32.totalorder %s42, 0
      %p177 = por %p175, %p176
      %p178 = scmp.ne.s32.totalorder %s166, %s167
      %p179 = scmp.eq.s32.totalorder %s43, 11
      %p180 = por %p178, %p179
      %p182 = scmp.ne.s32.totalorder %s167, %s181
      %p183 = scmp.eq.s32.totalorder %s43, 0
      %p184 = por %p182, %p183
      %s186 = sadd.s32 %s185, 1
      %p189 = scmp.eq.s32.totalorder %s37, 11
      %p190 = scmp.ne.s32.totalorder %s185, %s187
      %p191 = scmp.eq.s32.totalorder %s37, 0
      %p192 = por %p190, %p191
      %p193 = scmp.ne.s32.totalorder %s185, %s187
      %p194 = scmp.eq.s32.totalorder %s42, 11
      %p195 = por %p193, %p194
      %p196 = scmp.ne.s32.totalorder %s187, %s188
      %p197 = scmp.eq.s32.totalorder %s42, 0
      %p198 = por %p196, %p197
      %p199 = scmp.ne.s32.totalorder %s187, %s188
      %p200 = scmp.eq.s32.totalorder %s43, 11
      %p201 = por %p199, %p200
      %p203 = scmp.ne.s32.totalorder %s188, %s202
      %p204 = scmp.eq.s32.totalorder %s43, 0
      %p205 = por %p203, %p204
      %s207 = sadd.s32 %s206, 1
      %p210 = scmp.eq.s32.totalorder %s37, 11
      %p211 = scmp.ne.s32.totalorder %s206, %s208
      %p212 = scmp.eq.s32.totalorder %s37, 0
      %p213 = por %p211, %p212
      %p214 = scmp.ne.s32.totalorder %s206, %s208
      %p215 = scmp.eq.s32.totalorder %s42, 11
      %p216 = por %p214, %p215
      %p217 = scmp.ne.s32.totalorder %s208, %s209
      %p218 = scmp.eq.s32.totalorder %s42, 0
      %p219 = por %p217, %p218
      %p220 = scmp.ne.s32.totalorder %s208, %s209
      %p221 = scmp.eq.s32.totalorder %s43, 11
      %p222 = por %p220, %p221
      %p224 = scmp.ne.s32.totalorder %s209, %s223
      %p225 = scmp.eq.s32.totalorder %s43, 0
      %p226 = por %p224, %p225
      %s228 = sadd.s32 %s227, 1
      %p231 = scmp.eq.s32.totalorder %s37, 11
      %p232 = scmp.ne.s32.totalorder %s227, %s229
      %p233 = scmp.eq.s32.totalorder %s37, 0
      %p234 = por %p232, %p233
      %p235 = scmp.ne.s32.totalorder %s227, %s229
      %p236 = scmp.eq.s32.totalorder %s42, 11
      %p237 = por %p235, %p236
      %p238 = scmp.ne.s32.totalorder %s229, %s230
      %p239 = scmp.eq.s32.totalorder %s42, 0
      %p240 = por %p238, %p239
      %p241 = scmp.ne.s32.totalorder %s229, %s230
      %p242 = scmp.eq.s32.totalorder %s43, 11
      %p243 = por %p241, %p242
      %p245 = scmp.ne.s32.totalorder %s230, %s244
      %p246 = scmp.eq.s32.totalorder %s43, 0
      %p247 = por %p245, %p246
      %s249 = sadd.s32 %s248, 1
      %p252 = scmp.eq.s32.totalorder %s37, 11
      %p253 = scmp.ne.s32.totalorder %s248, %s250
      %p254 = scmp.eq.s32.totalorder %s37, 0
      %p255 = por %p253, %p254
      %p256 = scmp.ne.s32.totalorder %s248, %s250
      %p257 = scmp.eq.s32.totalorder %s42, 11
      %p258 = por %p256, %p257
      %p259 = scmp.ne.s32.totalorder %s250, %s251
      %p260 = scmp.eq.s32.totalorder %s42, 0
      %p261 = por %p259, %p260
      %p262 = scmp.ne.s32.totalorder %s250, %s251
      %p263 = scmp.eq.s32.totalorder %s43, 11
      %p264 = por %p262, %p263
      %p266 = scmp.ne.s32.totalorder %s251, %s265
      %p267 = scmp.eq.s32.totalorder %s43, 0
      %p268 = por %p266, %p267
      %s270 = sadd.s32 %s269, 1
      %p273 = scmp.eq.s32.totalorder %s37, 11
      %p274 = scmp.ne.s32.totalorder %s269, %s271
      %p275 = scmp.eq.s32.totalorder %s37, 0
      %p276 = por %p274, %p275
      %p277 = scmp.ne.s32.totalorder %s269, %s271
      %p278 = scmp.eq.s32.totalorder %s42, 11
      %p279 = por %p277, %p278
      %p280 = scmp.ne.s32.totalorder %s271, %s272
      %p281 = scmp.eq.s32.totalorder %s42, 0
      %p282 = por %p280, %p281
      %p283 = scmp.ne.s32.totalorder %s271, %s272
      %p284 = scmp.eq.s32.totalorder %s43, 11
      %p285 = por %p283, %p284
      %p287 = scmp.ne.s32.totalorder %s272, %s286
      %p288 = scmp.eq.s32.totalorder %s43, 0
      %p289 = por %p287, %p288
      %s291 = sadd.s32 %s290, 1
      %p294 = scmp.eq.s32.totalorder %s37, 11
      %p295 = scmp.ne.s32.totalorder %s290, %s292
      %p296 = scmp.eq.s32.totalorder %s37, 0
      %p297 = por %p295, %p296
      %p298 = scmp.ne.s32.totalorder %s290, %s292
      %p299 = scmp.eq.s32.totalorder %s42, 11
      %p300 = por %p298, %p299
      %p301 = scmp.ne.s32.totalorder %s292, %s293
      %p302 = scmp.eq.s32.totalorder %s42, 0
      %p303 = por %p301, %p302
      %p304 = scmp.ne.s32.totalorder %s292, %s293
      %p305 = scmp.eq.s32.totalorder %s43, 11
      %p306 = por %p304, %p305
      %p308 = scmp.ne.s32.totalorder %s293, %s307
      %p309 = scmp.eq.s32.totalorder %s43, 0
      %p310 = por %p308, %p309
      %s312 = sadd.s32 %s311, 1
      %p315 = scmp.eq.s32.totalorder %s37, 11
      %p316 = scmp.ne.s32.totalorder %s311, %s313
      %p317 = scmp.eq.s32.totalorder %s37, 0
      %p318 = por %p316, %p317
      %p319 = scmp.ne.s32.totalorder %s311, %s313
      %p320 = scmp.eq.s32.totalorder %s42, 11
      %p321 = por %p319, %p320
      %p322 = scmp.ne.s32.totalorder %s313, %s314
      %p323 = scmp.eq.s32.totalorder %s42, 0
      %p324 = por %p322, %p323
      %p325 = scmp.ne.s32.totalorder %s313, %s314
      %p326 = scmp.eq.s32.totalorder %s43, 11
      %p327 = por %p325, %p326
      %p329 = scmp.ne.s32.totalorder %s314, %s328
      %p330 = scmp.eq.s32.totalorder %s43, 0
      %p331 = por %p329, %p330
      %s333 = sadd.s32 %s332, 1
      %p336 = scmp.eq.s32.totalorder %s37, 11
      %p337 = scmp.ne.s32.totalorder %s332, %s334
      %p338 = scmp.eq.s32.totalorder %s37, 0
      %p339 = por %p337, %p338
      %p340 = scmp.ne.s32.totalorder %s332, %s334
      %p341 = scmp.eq.s32.totalorder %s42, 11
      %p342 = por %p340, %p341
      %p343 = scmp.ne.s32.totalorder %s334, %s335
      %p344 = scmp.eq.s32.totalorder %s42, 0
      %p345 = por %p343, %p344
      %p346 = scmp.ne.s32.totalorder %s334, %s335
      %p347 = scmp.eq.s32.totalorder %s43, 11
      %p348 = por %p346, %p347
      %p350 = scmp.ne.s32.totalorder %s335, %s349
      %p351 = scmp.eq.s32.totalorder %s43, 0
      %p352 = por %p350, %p351
      %s354 = sadd.s32 %s353, 1
      %p357 = scmp.eq.s32.totalorder %s37, 11
      %p358 = scmp.ne.s32.totalorder %s353, %s355
      %p359 = scmp.eq.s32.totalorder %s37, 0
      %p360 = por %p358, %p359
      %p361 = scmp.ne.s32.totalorder %s353, %s355
      %p362 = scmp.eq.s32.totalorder %s42, 11
      %p363 = por %p361, %p362
      %p364 = scmp.ne.s32.totalorder %s355, %s356
      %p365 = scmp.eq.s32.totalorder %s42, 0
      %p366 = por %p364, %p365
      %p367 = scmp.ne.s32.totalorder %s355, %s356
      %p368 = scmp.eq.s32.totalorder %s43, 11
      %p369 = por %p367, %p368
      %p371 = scmp.ne.s32.totalorder %s356, %s370
      %p372 = scmp.eq.s32.totalorder %s43, 0
      %p373 = por %p371, %p372
      %s375 = sadd.s32 %s374, 1
      %p378 = scmp.eq.s32.totalorder %s37, 11
      %p379 = scmp.ne.s32.totalorder %s374, %s376
      %p380 = scmp.eq.s32.totalorder %s37, 0
      %p381 = por %p379, %p380
      %p382 = scmp.ne.s32.totalorder %s374, %s376
      %p383 = scmp.eq.s32.totalorder %s42, 11
      %p384 = por %p382, %p383
      %p385 = scmp.ne.s32.totalorder %s376, %s377
      %p386 = scmp.eq.s32.totalorder %s42, 0
      %p387 = por %p385, %p386
      %p388 = scmp.ne.s32.totalorder %s376, %s377
      %p389 = scmp.eq.s32.totalorder %s43, 11
      %p390 = por %p388, %p389
      %p392 = scmp.ne.s32.totalorder %s377, %s391
      %p393 = scmp.eq.s32.totalorder %s43, 0
      %p394 = por %p392, %p393
      %s395 = ssub.s32 %s44, %s63
      %s396 = ssub.s32 %s45, %s59
      %s397 = sor.u32 %s395, %s396
      %s398 = ssub.s32 %s46, %s55
      %s399 = sor.u32 %s397, %s398
      %p400 = scmp.eq.s32.totalorder %s399, 0
      %s402 = sadd.s32 %s401, 1
      %s403 = scalar_select %p400, %s401, %s402
      %p406 = pneg %p400
      %p407 = scmp.eq.s32.totalorder %s37, 11
      %p408 = por %p406, %p407
      %p409 = scmp.ne.s32.totalorder %s401, %s404
      %p410 = scmp.eq.s32.totalorder %s37, 0
      %p411 = por %p409, %p410
      %p412 = scmp.ne.s32.totalorder %s401, %s404
      %p413 = scmp.eq.s32.totalorder %s42, 11
      %p414 = por %p412, %p413
      %p415 = scmp.ne.s32.totalorder %s404, %s405
      %p416 = scmp.eq.s32.totalorder %s42, 0
      %p417 = por %p415, %p416
      %p418 = scmp.ne.s32.totalorder %s404, %s405
      %p419 = scmp.eq.s32.totalorder %s43, 11
      %p420 = por %p418, %p419
      %p422 = scmp.ne.s32.totalorder %s405, %s421
      %p423 = scmp.eq.s32.totalorder %s43, 0
      %p424 = por %p422, %p423
      %p425 = scmp.le.s32.totalorder 1, %s37
      %p426 = scmp.lt.s32.totalorder %s37, 13
      %p427 = pnand %p425, %p426
      %p428 = pneg %p427
      // Predicated region
      $region9: #{spatial_temp_attn_fwd.3} parent=5 // pred_check
        _
      $region10: #{spatial_temp_attn_fwd.3} parent=5 // pred_check_branch
        %430 = sbr.rel (%p427) target = $region12
      $region11: #{spatial_temp_attn_fwd.3} parent=5 // pred_region
        %s431 = ssub.s32 %s37, 1
        // Predicated region
        $region13: #{spatial_temp_attn_fwd.3} parent=11 // pred_check
          %p432 = pneg %p135
        $region14: #{spatial_temp_attn_fwd.3} parent=11 // pred_check_branch
          %434 = sbr.rel (%p432) target = $region16
        $region15: #{spatial_temp_attn_fwd.3} parent=11 // pred_region
          %s436 = ssub.s32 512, 512
          %437 = vsyncadd [#allocation8], %s436
          %s438 = sshll.u32 [#allocation9], 4
          %s439 = int_to_ptr.vmem [resolvable:$true] %s438
          %444 = dma.hbm_to_vmem [thread:$0]  %s2, 512, %s439, [#allocation8], 64, 64, 4
        $region16: #{spatial_temp_attn_fwd.3} parent=11 // pred_fallthru
          _
        // Predicated region
        $region17: #{spatial_temp_attn_fwd.3} parent=11 // pred_check
          %p445 = pneg %p156
        $region18: #{spatial_temp_attn_fwd.3} parent=11 // pred_check_branch
          %447 = sbr.rel (%p445) target = $region20
        $region19: #{spatial_temp_attn_fwd.3} parent=11 // pred_region
          %s449 = ssub.s32 16, 16
          %450 = vsyncadd [#allocation11], %s449
          %s452 = sshll.u32 [#allocation10], 4
          %s453 = int_to_ptr.vmem [resolvable:$true] %s452
          %455 = dma.hbm_to_vmem [thread:$0]  %s3, 16, %s453, [#allocation11]
        $region20: #{spatial_temp_attn_fwd.3} parent=11 // pred_fallthru
          _
        // Predicated region
        $region21: #{spatial_temp_attn_fwd.3} parent=11 // pred_check
          %p456 = pneg %p177
        $region22: #{spatial_temp_attn_fwd.3} parent=11 // pred_check_branch
          %458 = sbr.rel (%p456) target = $region24
        $region23: #{spatial_temp_attn_fwd.3} parent=11 // pred_region
          %s460 = ssub.s32 512, 512
          %461 = vsyncadd [#allocation11], %s460
          %s462 = sshll.u32 [#allocation12], 4
          %s463 = int_to_ptr.vmem [resolvable:$true] %s462
          %468 = dma.hbm_to_vmem [thread:$0]  %s4, 512, %s463, [#allocation11], 64, 64, 4
        $region24: #{spatial_temp_attn_fwd.3} parent=11 // pred_fallthru
          _
        // Predicated region
        $region25: #{spatial_temp_attn_fwd.3} parent=11 // pred_check
          %p469 = pneg %p198
        $region26: #{spatial_temp_attn_fwd.3} parent=11 // pred_check_branch
          %471 = sbr.rel (%p469) target = $region28
        $region27: #{spatial_temp_attn_fwd.3} parent=11 // pred_region
          %s473 = ssub.s32 16, 16
          %474 = vsyncadd [#allocation14], %s473
          %s476 = sshll.u32 [#allocation13], 4
          %s477 = int_to_ptr.vmem [resolvable:$true] %s476
          %479 = dma.hbm_to_vmem [thread:$0]  %s5, 16, %s477, [#allocation14]
        $region28: #{spatial_temp_attn_fwd.3} parent=11 // pred_fallthru
          _
        // Predicated region
        $region29: #{spatial_temp_attn_fwd.3} parent=11 // pred_check
          %p480 = pneg %p219
        $region30: #{spatial_temp_attn_fwd.3} parent=11 // pred_check_branch
          %482 = sbr.rel (%p480) target = $region32
        $region31: #{spatial_temp_attn_fwd.3} parent=11 // pred_region
          %s484 = ssub.s32 16, 16
          %485 = vsyncadd [#allocation14], %s484
          %s487 = sshll.u32 [#allocation15], 4
          %s488 = int_to_ptr.vmem [resolvable:$true] %s487
          %490 = dma.hbm_to_vmem [thread:$0]  %s6, 16, %s488, [#allocation14]
        $region32: #{spatial_temp_attn_fwd.3} parent=11 // pred_fallthru
          _
        // Predicated region
        $region33: #{spatial_temp_attn_fwd.3} parent=11 // pred_check
          %p491 = pneg %p240
        $region34: #{spatial_temp_attn_fwd.3} parent=11 // pred_check_branch
          %493 = sbr.rel (%p491) target = $region36
        $region35: #{spatial_temp_attn_fwd.3} parent=11 // pred_region
          %s495 = ssub.s32 512, 512
          %496 = vsyncadd [#allocation17], %s495
          %s497 = sshll.u32 [#allocation16], 4
          %s498 = int_to_ptr.vmem [resolvable:$true] %s497
          %503 = dma.hbm_to_vmem [thread:$0]  %s7, 512, %s498, [#allocation17], 64, 64, 4
        $region36: #{spatial_temp_attn_fwd.3} parent=11 // pred_fallthru
          _
        // Predicated region
        $region37: #{spatial_temp_attn_fwd.3} parent=11 // pred_check
          %p504 = pneg %p261
        $region38: #{spatial_temp_attn_fwd.3} parent=11 // pred_check_branch
          %506 = sbr.rel (%p504) target = $region40
        $region39: #{spatial_temp_attn_fwd.3} parent=11 // pred_region
          %s508 = ssub.s32 16, 16
          %509 = vsyncadd [#allocation17], %s508
          %s511 = sshll.u32 [#allocation18], 4
          %s512 = int_to_ptr.vmem [resolvable:$true] %s511
          %514 = dma.hbm_to_vmem [thread:$0]  %s8, 16, %s512, [#allocation17]
        $region40: #{spatial_temp_attn_fwd.3} parent=11 // pred_fallthru
          _
        // Predicated region
        $region41: #{spatial_temp_attn_fwd.3} parent=11 // pred_check
          %p515 = pneg %p282
        $region42: #{spatial_temp_attn_fwd.3} parent=11 // pred_check_branch
          %517 = sbr.rel (%p515) target = $region44
        $region43: #{spatial_temp_attn_fwd.3} parent=11 // pred_region
          %s519 = ssub.s32 16, 16
          %520 = vsyncadd [#allocation20], %s519
          %s522 = sshll.u32 [#allocation19], 4
          %s523 = int_to_ptr.vmem [resolvable:$true] %s522
          %525 = dma.hbm_to_vmem [thread:$0]  %s9, 16, %s523, [#allocation20]
        $region44: #{spatial_temp_attn_fwd.3} parent=11 // pred_fallthru
          _
        // Predicated region
        $region45: #{spatial_temp_attn_fwd.3} parent=11 // pred_check
          %p526 = pneg %p303
        $region46: #{spatial_temp_attn_fwd.3} parent=11 // pred_check_branch
          %528 = sbr.rel (%p526) target = $region48
        $region47: #{spatial_temp_attn_fwd.3} parent=11 // pred_region
          %s530 = ssub.s32 512, 512
          %531 = vsyncadd [#allocation20], %s530
          %s532 = sshll.u32 [#allocation21], 4
          %s533 = int_to_ptr.vmem [resolvable:$true] %s532
          %538 = dma.hbm_to_vmem [thread:$0]  %s10, 512, %s533, [#allocation20], 64, 64, 4
        $region48: #{spatial_temp_attn_fwd.3} parent=11 // pred_fallthru
          _
        // Predicated region
        $region49: #{spatial_temp_attn_fwd.3} parent=11 // pred_check
          %p539 = pneg %p324
        $region50: #{spatial_temp_attn_fwd.3} parent=11 // pred_check_branch
          %541 = sbr.rel (%p539) target = $region52
        $region51: #{spatial_temp_attn_fwd.3} parent=11 // pred_region
          %s543 = ssub.s32 512, 512
          %544 = vsyncadd [#allocation23], %s543
          %s545 = sshll.u32 [#allocation22], 4
          %s546 = int_to_ptr.vmem [resolvable:$true] %s545
          %551 = dma.hbm_to_vmem [thread:$0]  %s11, 512, %s546, [#allocation23], 64, 64, 4
        $region52: #{spatial_temp_attn_fwd.3} parent=11 // pred_fallthru
          _
        // Predicated region
        $region53: #{spatial_temp_attn_fwd.3} parent=11 // pred_check
          %p552 = pneg %p345
        $region54: #{spatial_temp_attn_fwd.3} parent=11 // pred_check_branch
          %554 = sbr.rel (%p552) target = $region56
        $region55: #{spatial_temp_attn_fwd.3} parent=11 // pred_region
          %s556 = ssub.s32 16, 16
          %557 = vsyncadd [#allocation23], %s556
          %s559 = sshll.u32 [#allocation24], 4
          %s560 = int_to_ptr.vmem [resolvable:$true] %s559
          %562 = dma.hbm_to_vmem [thread:$0]  %s12, 16, %s560, [#allocation23]
        $region56: #{spatial_temp_attn_fwd.3} parent=11 // pred_fallthru
          _
        // Predicated region
        $region57: #{spatial_temp_attn_fwd.3} parent=11 // pred_check
          %p563 = pneg %p366
        $region58: #{spatial_temp_attn_fwd.3} parent=11 // pred_check_branch
          %565 = sbr.rel (%p563) target = $region60
        $region59: #{spatial_temp_attn_fwd.3} parent=11 // pred_region
          %s567 = ssub.s32 16, 16
          %568 = vsyncadd [#allocation26], %s567
          %s570 = sshll.u32 [#allocation25], 4
          %s571 = int_to_ptr.vmem [resolvable:$true] %s570
          %573 = dma.hbm_to_vmem [thread:$0]  %s13, 16, %s571, [#allocation26]
        $region60: #{spatial_temp_attn_fwd.3} parent=11 // pred_fallthru
          _
        // Predicated region
        $region61: #{spatial_temp_attn_fwd.3} parent=11 // pred_check
          %p574 = pneg %p387
        $region62: #{spatial_temp_attn_fwd.3} parent=11 // pred_check_branch
          %576 = sbr.rel (%p574) target = $region64
        $region63: #{spatial_temp_attn_fwd.3} parent=11 // pred_region
          _
        $region64: #{spatial_temp_attn_fwd.3} parent=11 // pred_fallthru
          _
      $region12: #{spatial_temp_attn_fwd.3} parent=5 // pred_fallthru
        _
      %p577 = scmp.lt.s32.totalorder %s37, 12
      // Predicated region
      $region65: #{spatial_temp_attn_fwd.3} parent=5 // pred_check
        %p578 = pneg %p577
      $region66: #{spatial_temp_attn_fwd.3} parent=5 // pred_check_branch
        %580 = sbr.rel (%p578) target = $region68
      $region67: #{spatial_temp_attn_fwd.3} parent=5 // pred_region
        // Predicated region
        $region69: #{spatial_temp_attn_fwd.3} parent=67 // pred_check
          %p581 = pneg %p78
        $region70: #{spatial_temp_attn_fwd.3} parent=67 // pred_check_branch
          %583 = sbr.rel (%p581) target = $region72
        $region71: #{spatial_temp_attn_fwd.3} parent=67 // pred_region
          %s584 = sand.u32 %s68, 1
          %s585 = scalar_lea.sflag [#allocation5], %s584
          %s586 = sand.u32 %s68, 1
          %s587 = smul.addr %s586, 256
          %s588 = scalar_lea.vmem [#allocation4], %s587
          %s590 = ssub.s32 4096, 4096
          %591 = vsyncadd %s585, %s590
          %s592 = smul.addr %s45, 32
          %s593 = smul.addr %s44, 96
          %s594 = sadd.s32 %s592, %s593
          %s595 = smul.addr %s594, 128
          %s596 = scalar_lea.hbm %s0, %s595
          %s597 = sshll.u32 %s588, 4
          %s598 = int_to_ptr.vmem [resolvable:$true] %s597
          %603 = dma.hbm_to_vmem [thread:$0]  %s596, 4096, %s598, %s585, 128, 128, 8
        $region72: #{spatial_temp_attn_fwd.3} parent=67 // pred_fallthru
          _
        // Predicated region
        $region73: #{spatial_temp_attn_fwd.3} parent=67 // pred_check
          %p604 = pneg %p108
        $region74: #{spatial_temp_attn_fwd.3} parent=67 // pred_check_branch
          %606 = sbr.rel (%p604) target = $region76
        $region75: #{spatial_temp_attn_fwd.3} parent=67 // pred_region
          %s607 = sand.u32 %s37, 1
          %s608 = scalar_lea.sflag [#allocation8], %s607
          %s609 = sand.u32 %s98, 1
          %s610 = smul.addr %s609, 256
          %s611 = scalar_lea.vmem [#allocation7], %s610
          %s613 = ssub.s32 4096, 4096
          %614 = vsyncadd %s608, %s613
          %s615 = smul.addr %s45, 64
          %s616 = sadd.s32 %s46, %s615
          %s617 = smul.addr %s44, 192
          %s618 = sadd.s32 %s616, %s617
          %s619 = smul.addr %s618, 128
          %s620 = scalar_lea.hbm %s1, %s619
          %s621 = sshll.u32 %s611, 4
          %s622 = int_to_ptr.vmem [resolvable:$true] %s621
          %627 = dma.hbm_to_vmem [thread:$0]  %s620, 4096, %s622, %s608, 256, 128, 8
        $region76: #{spatial_temp_attn_fwd.3} parent=67 // pred_fallthru
          _
      $region68: #{spatial_temp_attn_fwd.3} parent=5 // pred_fallthru
        _
      %p628 = scmp.le.s32.totalorder 1, %s37
      %p629 = scmp.lt.s32.totalorder %s37, 13
      %p630 = pnand %p628, %p629
      %p631 = pneg %p630
      // Predicated region
      $region77: #{spatial_temp_attn_fwd.3} parent=5 // pred_check
        _
      $region78: #{spatial_temp_attn_fwd.3} parent=5 // pred_check_branch
        %633 = sbr.rel (%p630) target = $region80
      $region79: #{spatial_temp_attn_fwd.3} parent=5 // pred_region
        %s634 = ssub.s32 %s37, 1
        %s635 = sand.u32 %s71, 1
        %s636 = scalar_lea.sflag [#allocation5], %s635
        %s637 = sand.u32 %s71, 1
        %s638 = smul.addr %s637, 256
        %s639 = scalar_lea.vmem [#allocation4], %s638
        // Predicated region
        $region81: #{spatial_temp_attn_fwd.3} parent=79 // pred_check
          %p640 = pneg %p84
        $region82: #{spatial_temp_attn_fwd.3} parent=79 // pred_check_branch
          %642 = sbr.rel (%p640) target = $region84
        $region83: #{spatial_temp_attn_fwd.3} parent=79 // pred_region
          %643 = dma.done %s636, 4096
        $region84: #{spatial_temp_attn_fwd.3} parent=79 // pred_fallthru
          _
        %s644 = sand.u32 %s42, 1
        %s645 = scalar_lea.sflag [#allocation8], %s644
        %s646 = sand.u32 %s101, 1
        %s647 = smul.addr %s646, 256
        %s648 = scalar_lea.vmem [#allocation7], %s647
        // Predicated region
        $region85: #{spatial_temp_attn_fwd.3} parent=79 // pred_check
          %p649 = pneg %p114
        $region86: #{spatial_temp_attn_fwd.3} parent=79 // pred_check_branch
          %651 = sbr.rel (%p649) target = $region88
        $region87: #{spatial_temp_attn_fwd.3} parent=79 // pred_region
          %652 = dma.done %s645, 4096
        $region88: #{spatial_temp_attn_fwd.3} parent=79 // pred_fallthru
          _
        // Predicated region
        $region89: #{spatial_temp_attn_fwd.3} parent=79 // pred_check
          %p653 = pneg %p135
        $region90: #{spatial_temp_attn_fwd.3} parent=79 // pred_check_branch
          %655 = sbr.rel (%p653) target = $region92
        $region91: #{spatial_temp_attn_fwd.3} parent=79 // pred_region
          %656 = dma.done [#allocation8], 512
        $region92: #{spatial_temp_attn_fwd.3} parent=79 // pred_fallthru
          _
        // Predicated region
        $region93: #{spatial_temp_attn_fwd.3} parent=79 // pred_check
          %p657 = pneg %p156
        $region94: #{spatial_temp_attn_fwd.3} parent=79 // pred_check_branch
          %659 = sbr.rel (%p657) target = $region96
        $region95: #{spatial_temp_attn_fwd.3} parent=79 // pred_region
          %660 = dma.done [#allocation11], 16
        $region96: #{spatial_temp_attn_fwd.3} parent=79 // pred_fallthru
          _
        // Predicated region
        $region97: #{spatial_temp_attn_fwd.3} parent=79 // pred_check
          %p661 = pneg %p177
        $region98: #{spatial_temp_attn_fwd.3} parent=79 // pred_check_branch
          %663 = sbr.rel (%p661) target = $region100
        $region99: #{spatial_temp_attn_fwd.3} parent=79 // pred_region
          %664 = dma.done [#allocation11], 512
        $region100: #{spatial_temp_attn_fwd.3} parent=79 // pred_fallthru
          _
        // Predicated region
        $region101: #{spatial_temp_attn_fwd.3} parent=79 // pred_check
          %p665 = pneg %p198
        $region102: #{spatial_temp_attn_fwd.3} parent=79 // pred_check_branch
          %667 = sbr.rel (%p665) target = $region104
        $region103: #{spatial_temp_attn_fwd.3} parent=79 // pred_region
          %668 = dma.done [#allocation14], 16
        $region104: #{spatial_temp_attn_fwd.3} parent=79 // pred_fallthru
          _
        // Predicated region
        $region105: #{spatial_temp_attn_fwd.3} parent=79 // pred_check
          %p669 = pneg %p219
        $region106: #{spatial_temp_attn_fwd.3} parent=79 // pred_check_branch
          %671 = sbr.rel (%p669) target = $region108
        $region107: #{spatial_temp_attn_fwd.3} parent=79 // pred_region
          %672 = dma.done [#allocation14], 16
        $region108: #{spatial_temp_attn_fwd.3} parent=79 // pred_fallthru
          _
        // Predicated region
        $region109: #{spatial_temp_attn_fwd.3} parent=79 // pred_check
          %p673 = pneg %p240
        $region110: #{spatial_temp_attn_fwd.3} parent=79 // pred_check_branch
          %675 = sbr.rel (%p673) target = $region112
        $region111: #{spatial_temp_attn_fwd.3} parent=79 // pred_region
          %676 = dma.done [#allocation17], 512
        $region112: #{spatial_temp_attn_fwd.3} parent=79 // pred_fallthru
          _
        // Predicated region
        $region113: #{spatial_temp_attn_fwd.3} parent=79 // pred_check
          %p677 = pneg %p261
        $region114: #{spatial_temp_attn_fwd.3} parent=79 // pred_check_branch
          %679 = sbr.rel (%p677) target = $region116
        $region115: #{spatial_temp_attn_fwd.3} parent=79 // pred_region
          %680 = dma.done [#allocation17], 16
        $region116: #{spatial_temp_attn_fwd.3} parent=79 // pred_fallthru
          _
        // Predicated region
        $region117: #{spatial_temp_attn_fwd.3} parent=79 // pred_check
          %p681 = pneg %p282
        $region118: #{spatial_temp_attn_fwd.3} parent=79 // pred_check_branch
          %683 = sbr.rel (%p681) target = $region120
        $region119: #{spatial_temp_attn_fwd.3} parent=79 // pred_region
          %684 = dma.done [#allocation20], 16
        $region120: #{spatial_temp_attn_fwd.3} parent=79 // pred_fallthru
          _
        // Predicated region
        $region121: #{spatial_temp_attn_fwd.3} parent=79 // pred_check
          %p685 = pneg %p303
        $region122: #{spatial_temp_attn_fwd.3} parent=79 // pred_check_branch
          %687 = sbr.rel (%p685) target = $region124
        $region123: #{spatial_temp_attn_fwd.3} parent=79 // pred_region
          %688 = dma.done [#allocation20], 512
        $region124: #{spatial_temp_attn_fwd.3} parent=79 // pred_fallthru
          _
        // Predicated region
        $region125: #{spatial_temp_attn_fwd.3} parent=79 // pred_check
          %p689 = pneg %p324
        $region126: #{spatial_temp_attn_fwd.3} parent=79 // pred_check_branch
          %691 = sbr.rel (%p689) target = $region128
        $region127: #{spatial_temp_attn_fwd.3} parent=79 // pred_region
          %692 = dma.done [#allocation23], 512
        $region128: #{spatial_temp_attn_fwd.3} parent=79 // pred_fallthru
          _
        // Predicated region
        $region129: #{spatial_temp_attn_fwd.3} parent=79 // pred_check
          %p693 = pneg %p345
        $region130: #{spatial_temp_attn_fwd.3} parent=79 // pred_check_branch
          %695 = sbr.rel (%p693) target = $region132
        $region131: #{spatial_temp_attn_fwd.3} parent=79 // pred_region
          %696 = dma.done [#allocation23], 16
        $region132: #{spatial_temp_attn_fwd.3} parent=79 // pred_fallthru
          _
        // Predicated region
        $region133: #{spatial_temp_attn_fwd.3} parent=79 // pred_check
          %p697 = pneg %p366
        $region134: #{spatial_temp_attn_fwd.3} parent=79 // pred_check_branch
          %699 = sbr.rel (%p697) target = $region136
        $region135: #{spatial_temp_attn_fwd.3} parent=79 // pred_region
          %700 = dma.done [#allocation26], 16
        $region136: #{spatial_temp_attn_fwd.3} parent=79 // pred_fallthru
          _
        %s701 = sand.u32 %s71, 1
        %s702 = scalar_lea.sflag [#allocation5], %s701
        %s703 = sand.u32 %s71, 1
        %s704 = smul.addr %s703, 256
        %s705 = scalar_lea.vmem [#allocation4], %s704
        %p706 = pneg %p84
        %p707 = pneg %p81
        %s708 = sand.u32 %s42, 1
        %s709 = scalar_lea.sflag [#allocation8], %s708
        %s710 = sand.u32 %s101, 1
        %s711 = smul.addr %s710, 256
        %s712 = scalar_lea.vmem [#allocation7], %s711
        %p713 = pneg %p114
        %p714 = pneg %p111
        %p715 = pneg %p135
        %p716 = pneg %p132
        %p717 = pneg %p156
        %p718 = pneg %p153
        %p719 = pneg %p177
        %p720 = pneg %p174
        %p721 = pneg %p198
        %p722 = pneg %p195
        %p723 = pneg %p219
        %p724 = pneg %p216
        %p725 = pneg %p240
        %p726 = pneg %p237
        %p727 = pneg %p261
        %p728 = pneg %p258
        %p729 = pneg %p282
        %p730 = pneg %p279
        %p731 = pneg %p303
        %p732 = pneg %p300
        %p733 = pneg %p324
        %p734 = pneg %p321
        %p735 = pneg %p345
        %p736 = pneg %p342
        %p737 = pneg %p366
        %p738 = pneg %p363
        %p739 = pneg %p387
        %p740 = pneg %p384
        %p741 = pneg %p417
        %p742 = pneg %p414
        %s743 = sand.u32 %s404, 1
        %s744 = scalar_lea.sflag [#allocation6], %s743
        %s745 = sand.u32 %s404, 1
        %s746 = smul.addr %s745, 64
        %s747 = scalar_lea.vmem [#allocation27], %s746
        %s748 = smul.u32 16, %s49
        %p750 = scmp.eq.s32.totalorder %s49, 0
        // Predicated region
        $region137: #{spatial_temp_attn_fwd.3} parent=79 // pred_check
          %p751 = pneg %p750
        $region138: #{spatial_temp_attn_fwd.3} parent=79 // pred_check_branch
          %753 = sbr.rel (%p751) target = $region140
        $region139: #{spatial_temp_attn_fwd.3} parent=79 // pred_region
          %v754 = vld [vmem:[%s639] sm:$0xff]
          %v755 = vld [vmem:[%s639 + $0x8] sm:$0xff]
          %v756 = vld [vmem:[%s639 + $0x10] sm:$0xff]
          %v757 = vld [vmem:[%s639 + $0x18] sm:$0xff]
          %v758 = vld [vmem:[%s639 + $0x20] sm:$0xff]
          %v759 = vld [vmem:[%s639 + $0x28] sm:$0xff]
          %v760 = vld [vmem:[%s639 + $0x30] sm:$0xff]
          %v761 = vld [vmem:[%s639 + $0x38] sm:$0xff]
          %v762 = vld [vmem:[%s639 + $0x40] sm:$0xff]
          %v763 = vld [vmem:[%s639 + $0x48] sm:$0xff]
          %v764 = vld [vmem:[%s639 + $0x50] sm:$0xff]
          %v765 = vld [vmem:[%s639 + $0x58] sm:$0xff]
          %v766 = vld [vmem:[%s639 + $0x60] sm:$0xff]
          %v767 = vld [vmem:[%s639 + $0x68] sm:$0xff]
          %v768 = vld [vmem:[%s639 + $0x70] sm:$0xff]
          %v769 = vld [vmem:[%s639 + $0x78] sm:$0xff]
          %v770 = vld [vmem:[%s639 + $0x80] sm:$0xff]
          %v771 = vld [vmem:[%s639 + $0x88] sm:$0xff]
          %v772 = vld [vmem:[%s639 + $0x90] sm:$0xff]
          %v773 = vld [vmem:[%s639 + $0x98] sm:$0xff]
          %v774 = vld [vmem:[%s639 + $0xa0] sm:$0xff]
          %v775 = vld [vmem:[%s639 + $0xa8] sm:$0xff]
          %v776 = vld [vmem:[%s639 + $0xb0] sm:$0xff]
          %v777 = vld [vmem:[%s639 + $0xb8] sm:$0xff]
          %v778 = vld [vmem:[%s639 + $0xc0] sm:$0xff]
          %v779 = vld [vmem:[%s639 + $0xc8] sm:$0xff]
          %v780 = vld [vmem:[%s639 + $0xd0] sm:$0xff]
          %v781 = vld [vmem:[%s639 + $0xd8] sm:$0xff]
          %v782 = vld [vmem:[%s639 + $0xe0] sm:$0xff]
          %v783 = vld [vmem:[%s639 + $0xe8] sm:$0xff]
          %v784 = vld [vmem:[%s639 + $0xf0] sm:$0xff]
          %v785 = vld [vmem:[%s639 + $0xf8] sm:$0xff]
          %v786 = vpack.c.bf16 %v755, %v754
          %v787 = vpack.c.bf16 %v757, %v756
          %v788 = vpack.c.bf16 %v759, %v758
          %v789 = vpack.c.bf16 %v761, %v760
          %v790 = vpack.c.bf16 %v763, %v762
          %v791 = vpack.c.bf16 %v765, %v764
          %v792 = vpack.c.bf16 %v767, %v766
          %v793 = vpack.c.bf16 %v769, %v768
          %v794 = vpack.c.bf16 %v771, %v770
          %v795 = vpack.c.bf16 %v773, %v772
          %v796 = vpack.c.bf16 %v775, %v774
          %v797 = vpack.c.bf16 %v777, %v776
          %v798 = vpack.c.bf16 %v779, %v778
          %v799 = vpack.c.bf16 %v781, %v780
          %v800 = vpack.c.bf16 %v783, %v782
          %v801 = vpack.c.bf16 %v785, %v784
          %v802 = vld [vmem:[#allocation9] sm:$0xf]
          %v803 = vld [vmem:[#allocation9 + $0x4] sm:$0xf]
          %v804 = vld [vmem:[#allocation9 + $0x8] sm:$0xf]
          %v805 = vld [vmem:[#allocation9 + $0xc] sm:$0xf]
          %v806 = vld [vmem:[#allocation9 + $0x10] sm:$0xf]
          %v807 = vld [vmem:[#allocation9 + $0x14] sm:$0xf]
          %v808 = vld [vmem:[#allocation9 + $0x18] sm:$0xf]
          %v809 = vld [vmem:[#allocation9 + $0x1c] sm:$0xf]
          %v810 = vld [vmem:[#allocation10] sm:$0x1]
          %v812 = vlaneseq
          %v813 = vshrl.u32 %v812, 7
          %v814 = vsub.s32 0, %v813
          %v815 = vrot.slane %v810, %v814
          %v825 = vunpack.c.l.b16 %v802
          %v826 = vunpack.c.l.b16 %v803
          %v827 = vunpack.c.l.b16 %v804
          %v828 = vunpack.c.l.b16 %v805
          %v829 = vunpack.c.l.b16 %v806
          %v830 = vunpack.c.l.b16 %v807
          %v831 = vunpack.c.l.b16 %v808
          %v832 = vunpack.c.l.b16 %v809
          %v833 = vpack.c.b16 %v826, %v825
          %v834 = vpack.c.b16 %v828, %v827
          %v835 = vpack.c.b16 %v830, %v829
          %v836 = vpack.c.b16 %v832, %v831
          %vm841 = vcmask 523264
          %v843 = vsel %vm841, %v786, 0
          %v846 = vsel %vm841, %v787, 0
          %v849 = vsel %vm841, %v788, 0
          %v852 = vsel %vm841, %v789, 0
          %v855 = vsel %vm841, %v790, 0
          %v858 = vsel %vm841, %v791, 0
          %v861 = vsel %vm841, %v792, 0
          %v864 = vsel %vm841, %v793, 0
          %v867 = vsel %vm841, %v794, 0
          %v870 = vsel %vm841, %v795, 0
          %v873 = vsel %vm841, %v796, 0
          %v876 = vsel %vm841, %v797, 0
          %v879 = vsel %vm841, %v798, 0
          %v882 = vsel %vm841, %v799, 0
          %v885 = vsel %vm841, %v800, 0
          %v888 = vsel %vm841, %v801, 0
          %890 = vmatprep.subr.bf16.mxu0 0
          %891 = vmatpush1.bf16.msra.mxu0 %v833
          %892 = vmatprep.subr.bf16.mxu0 0
          %893 = vmatpush1.bf16.msra.mxu0 %v834
          %894 = vmatprep.subr.bf16.mxu0 0
          %895 = vmatpush1.bf16.msra.mxu0 %v835
          %896 = vmatprep.subr.bf16.mxu0 0
          %897 = vmatpush1.bf16.msra.mxu0 %v836
          %898 = vmatprep.subr.bf16.mxu0 0
          %899 = vmatpush1.bf16.msra.mxu0 0
          %900 = vmatprep.subr.bf16.mxu0 0
          %901 = vmatpush1.bf16.msra.mxu0 0
          %902 = vmatprep.subr.bf16.mxu0 0
          %903 = vmatpush1.bf16.msra.mxu0 0
          %904 = vmatprep.subr.bf16.mxu0 0
          %905 = vmatpush1.bf16.msra.mxu0 0
          %906 = vmatprep.subr.bf16.mxu0 0
          %907 = vmatpush1.bf16.msra.mxu0 0
          %908 = vmatprep.subr.bf16.mxu0 0
          %909 = vmatpush1.bf16.msra.mxu0 0
          %910 = vmatprep.subr.bf16.mxu0 0
          %911 = vmatpush1.bf16.msra.mxu0 0
          %912 = vmatprep.subr.bf16.mxu0 0
          %913 = vmatpush1.bf16.msra.mxu0 0
          %914 = vmatprep.subr.bf16.mxu0 0
          %915 = vmatpush1.bf16.msra.mxu0 0
          %916 = vmatprep.subr.bf16.mxu0 0
          %917 = vmatpush1.bf16.msra.mxu0 0
          %918 = vmatprep.subr.bf16.mxu0 0
          %919 = vmatpush1.bf16.msra.mxu0 0
          %920 = vmatprep.subr.bf16.mxu0 0
          %921 = vmatpush1.bf16.msra.mxu0 0
          %922 = vmatprep.mubr.bf16.mxu0 0
          %923 = vmatmul.mubr.bf16.gmra.mrb[0].mxu0 %v843
          %v924 = vpop.f32.mrb[0].mxu0
          %v925 = vadd.f32 %v815, %v924
          %v926 = vpop.f32.mrb[0].mxu0
          %v927 = vpop.f32.mrb[0].mxu0
          %v928 = vadd.f32 %v815, %v927
          %v929 = vpop.f32.mrb[0].mxu0
          %930 = vmatprep.mubr.bf16.mxu0 0
          %931 = vmatmul.mubr.bf16.gmra.mrb[0].mxu0 %v846
          %v932 = vpop.f32.mrb[0].mxu0
          %v933 = vadd.f32 %v815, %v932
          %v934 = vpop.f32.mrb[0].mxu0
          %v935 = vpop.f32.mrb[0].mxu0
          %v936 = vadd.f32 %v815, %v935
          %v937 = vpop.f32.mrb[0].mxu0
          %938 = vmatprep.mubr.bf16.mxu0 0
          %939 = vmatmul.mubr.bf16.gmra.mrb[0].mxu0 %v849
          %v940 = vpop.f32.mrb[0].mxu0
          %v941 = vadd.f32 %v815, %v940
          %v942 = vpop.f32.mrb[0].mxu0
          %v943 = vpop.f32.mrb[0].mxu0
          %v944 = vadd.f32 %v815, %v943
          %v945 = vpop.f32.mrb[0].mxu0
          %946 = vmatprep.mubr.bf16.mxu0 0
          %947 = vmatmul.mubr.bf16.gmra.mrb[0].mxu0 %v852
          %v948 = vpop.f32.mrb[0].mxu0
          %v949 = vadd.f32 %v815, %v948
          %v950 = vpop.f32.mrb[0].mxu0
          %v951 = vpop.f32.mrb[0].mxu0
          %v952 = vadd.f32 %v815, %v951
          %v953 = vpop.f32.mrb[0].mxu0
          %954 = vmatprep.mubr.bf16.mxu0 0
          %955 = vmatmul.mubr.bf16.gmra.mrb[0].mxu0 %v855
          %v956 = vpop.f32.mrb[0].mxu0
          %v957 = vadd.f32 %v815, %v956
          %v958 = vpop.f32.mrb[0].mxu0
          %v959 = vpop.f32.mrb[0].mxu0
          %v960 = vadd.f32 %v815, %v959
          %v961 = vpop.f32.mrb[0].mxu0
          %962 = vmatprep.mubr.bf16.mxu0 0
          %963 = vmatmul.mubr.bf16.gmra.mrb[0].mxu0 %v858
          %v964 = vpop.f32.mrb[0].mxu0
          %v965 = vadd.f32 %v815, %v964
          %v966 = vpop.f32.mrb[0].mxu0
          %v967 = vpop.f32.mrb[0].mxu0
          %v968 = vadd.f32 %v815, %v967
          %v969 = vpop.f32.mrb[0].mxu0
          %970 = vmatprep.mubr.bf16.mxu0 0
          %971 = vmatmul.mubr.bf16.gmra.mrb[0].mxu0 %v861
          %v972 = vpop.f32.mrb[0].mxu0
          %v973 = vadd.f32 %v815, %v972
          %v974 = vpop.f32.mrb[0].mxu0
          %v975 = vpop.f32.mrb[0].mxu0
          %v976 = vadd.f32 %v815, %v975
          %v977 = vpop.f32.mrb[0].mxu0
          %978 = vmatprep.mubr.bf16.mxu0 0
          %979 = vmatmul.mubr.bf16.gmra.mrb[0].mxu0 %v864
          %v980 = vpop.f32.mrb[0].mxu0
          %v981 = vadd.f32 %v815, %v980
          %v982 = vpop.f32.mrb[0].mxu0
          %v983 = vpop.f32.mrb[0].mxu0
          %v984 = vadd.f32 %v815, %v983
          %v985 = vpop.f32.mrb[0].mxu0
          %986 = vmatprep.mubr.bf16.mxu0 0
          %987 = vmatmul.mubr.bf16.gmra.mrb[0].mxu0 %v867
          %v988 = vpop.f32.mrb[0].mxu0
          %v989 = vadd.f32 %v815, %v988
          %v990 = vpop.f32.mrb[0].mxu0
          %v991 = vpop.f32.mrb[0].mxu0
          %v992 = vadd.f32 %v815, %v991
          %v993 = vpop.f32.mrb[0].mxu0
          %994 = vmatprep.mubr.bf16.mxu0 0
          %995 = vmatmul.mubr.bf16.gmra.mrb[0].mxu0 %v870
          %v996 = vpop.f32.mrb[0].mxu0
          %v997 = vadd.f32 %v815, %v996
          %v998 = vpop.f32.mrb[0].mxu0
          %v999 = vpop.f32.mrb[0].mxu0
          %v1000 = vadd.f32 %v815, %v999
          %v1001 = vpop.f32.mrb[0].mxu0
          %1002 = vmatprep.mubr.bf16.mxu0 0
          %1003 = vmatmul.mubr.bf16.gmra.mrb[0].mxu0 %v873
          %v1004 = vpop.f32.mrb[0].mxu0
          %v1005 = vadd.f32 %v815, %v1004
          %v1006 = vpop.f32.mrb[0].mxu0
          %v1007 = vpop.f32.mrb[0].mxu0
          %v1008 = vadd.f32 %v815, %v1007
          %v1009 = vpop.f32.mrb[0].mxu0
          %1010 = vmatprep.mubr.bf16.mxu0 0
          %1011 = vmatmul.mubr.bf16.gmra.mrb[0].mxu0 %v876
          %v1012 = vpop.f32.mrb[0].mxu0
          %v1013 = vadd.f32 %v815, %v1012
          %v1014 = vpop.f32.mrb[0].mxu0
          %v1015 = vpop.f32.mrb[0].mxu0
          %v1016 = vadd.f32 %v815, %v1015
          %v1017 = vpop.f32.mrb[0].mxu0
          %1018 = vmatprep.mubr.bf16.mxu0 0
          %1019 = vmatmul.mubr.bf16.gmra.mrb[0].mxu0 %v879
          %v1020 = vpop.f32.mrb[0].mxu0
          %v1021 = vadd.f32 %v815, %v1020
          %v1022 = vpop.f32.mrb[0].mxu0
          %v1023 = vpop.f32.mrb[0].mxu0
          %v1024 = vadd.f32 %v815, %v1023
          %v1025 = vpop.f32.mrb[0].mxu0
          %1026 = vmatprep.mubr.bf16.mxu0 0
          %1027 = vmatmul.mubr.bf16.gmra.mrb[0].mxu0 %v882
          %v1028 = vpop.f32.mrb[0].mxu0
          %v1029 = vadd.f32 %v815, %v1028
          %v1030 = vpop.f32.mrb[0].mxu0
          %v1031 = vpop.f32.mrb[0].mxu0
          %v1032 = vadd.f32 %v815, %v1031
          %v1033 = vpop.f32.mrb[0].mxu0
          %1034 = vmatprep.mubr.bf16.mxu0 0
          %1035 = vmatmul.mubr.bf16.gmra.mrb[0].mxu0 %v885
          %v1036 = vpop.f32.mrb[0].mxu0
          %v1037 = vadd.f32 %v815, %v1036
          %v1038 = vpop.f32.mrb[0].mxu0
          %v1039 = vpop.f32.mrb[0].mxu0
          %v1040 = vadd.f32 %v815, %v1039
          %v1041 = vpop.f32.mrb[0].mxu0
          %1042 = vmatprep.mubr.bf16.mxu0 0
          %1043 = vmatmul.mubr.bf16.gmra.mrb[0].mxu0 %v888
          %v1044 = vpop.f32.mrb[0].mxu0
          %v1045 = vadd.f32 %v815, %v1044
          %v1046 = vpop.f32.mrb[0].mxu0
          %v1047 = vpop.f32.mrb[0].mxu0
          %v1048 = vadd.f32 %v815, %v1047
          %v1049 = vpop.f32.mrb[0].mxu0
          %1050 = vdwg.mxu0
          %v1051 = vpack.c.bf16 %v928, %v925
          %v1052 = vpack.c.bf16 %v936, %v933
          %v1053 = vpack.c.bf16 %v944, %v941
          %v1054 = vpack.c.bf16 %v952, %v949
          %v1055 = vpack.c.bf16 %v960, %v957
          %v1056 = vpack.c.bf16 %v968, %v965
          %v1057 = vpack.c.bf16 %v976, %v973
          %v1058 = vpack.c.bf16 %v984, %v981
          %v1059 = vpack.c.bf16 %v992, %v989
          %v1060 = vpack.c.bf16 %v1000, %v997
          %v1061 = vpack.c.bf16 %v1008, %v1005
          %v1062 = vpack.c.bf16 %v1016, %v1013
          %v1063 = vpack.c.bf16 %v1024, %v1021
          %v1064 = vpack.c.bf16 %v1032, %v1029
          %v1065 = vpack.c.bf16 %v1040, %v1037
          %v1066 = vpack.c.bf16 %v1048, %v1045
          %1067 = vst.msk [vmem:[#allocation2] sm:$0xff] %vm841, %v1051
          %1068 = vst.msk [vmem:[#allocation2 + $0x8] sm:$0xff] %vm841, %v1052
          %1069 = vst.msk [vmem:[#allocation2 + $0x10] sm:$0xff] %vm841, %v1053
          %1070 = vst.msk [vmem:[#allocation2 + $0x18] sm:$0xff] %vm841, %v1054
          %1071 = vst.msk [vmem:[#allocation2 + $0x20] sm:$0xff] %vm841, %v1055
          %1072 = vst.msk [vmem:[#allocation2 + $0x28] sm:$0xff] %vm841, %v1056
          %1073 = vst.msk [vmem:[#allocation2 + $0x30] sm:$0xff] %vm841, %v1057
          %1074 = vst.msk [vmem:[#allocation2 + $0x38] sm:$0xff] %vm841, %v1058
          %1075 = vst.msk [vmem:[#allocation2 + $0x40] sm:$0xff] %vm841, %v1059
          %1076 = vst.msk [vmem:[#allocation2 + $0x48] sm:$0xff] %vm841, %v1060
          %1077 = vst.msk [vmem:[#allocation2 + $0x50] sm:$0xff] %vm841, %v1061
          %1078 = vst.msk [vmem:[#allocation2 + $0x58] sm:$0xff] %vm841, %v1062
          %1079 = vst.msk [vmem:[#allocation2 + $0x60] sm:$0xff] %vm841, %v1063
          %1080 = vst.msk [vmem:[#allocation2 + $0x68] sm:$0xff] %vm841, %v1064
          %1081 = vst.msk [vmem:[#allocation2 + $0x70] sm:$0xff] %vm841, %v1065
          %1082 = vst.msk [vmem:[#allocation2 + $0x78] sm:$0xff] %vm841, %v1066
        $region140: #{spatial_temp_attn_fwd.3} parent=79 // pred_fallthru
          _
        %v1083 = vld [vmem:[%s648] sm:$0xff]
        %v1084 = vld [vmem:[%s648 + $0x8] sm:$0xff]
        %v1085 = vld [vmem:[%s648 + $0x10] sm:$0xff]
        %v1086 = vld [vmem:[%s648 + $0x18] sm:$0xff]
        %v1087 = vld [vmem:[%s648 + $0x20] sm:$0xff]
        %v1088 = vld [vmem:[%s648 + $0x28] sm:$0xff]
        %v1089 = vld [vmem:[%s648 + $0x30] sm:$0xff]
        %v1090 = vld [vmem:[%s648 + $0x38] sm:$0xff]
        %v1091 = vld [vmem:[%s648 + $0x40] sm:$0xff]
        %v1092 = vld [vmem:[%s648 + $0x48] sm:$0xff]
        %v1093 = vld [vmem:[%s648 + $0x50] sm:$0xff]
        %v1094 = vld [vmem:[%s648 + $0x58] sm:$0xff]
        %v1095 = vld [vmem:[%s648 + $0x60] sm:$0xff]
        %v1096 = vld [vmem:[%s648 + $0x68] sm:$0xff]
        %v1097 = vld [vmem:[%s648 + $0x70] sm:$0xff]
        %v1098 = vld [vmem:[%s648 + $0x78] sm:$0xff]
        %v1099 = vld [vmem:[%s648 + $0x80] sm:$0xff]
        %v1100 = vld [vmem:[%s648 + $0x88] sm:$0xff]
        %v1101 = vld [vmem:[%s648 + $0x90] sm:$0xff]
        %v1102 = vld [vmem:[%s648 + $0x98] sm:$0xff]
        %v1103 = vld [vmem:[%s648 + $0xa0] sm:$0xff]
        %v1104 = vld [vmem:[%s648 + $0xa8] sm:$0xff]
        %v1105 = vld [vmem:[%s648 + $0xb0] sm:$0xff]
        %v1106 = vld [vmem:[%s648 + $0xb8] sm:$0xff]
        %v1107 = vld [vmem:[%s648 + $0xc0] sm:$0xff]
        %v1108 = vld [vmem:[%s648 + $0xc8] sm:$0xff]
        %v1109 = vld [vmem:[%s648 + $0xd0] sm:$0xff]
        %v1110 = vld [vmem:[%s648 + $0xd8] sm:$0xff]
        %v1111 = vld [vmem:[%s648 + $0xe0] sm:$0xff]
        %v1112 = vld [vmem:[%s648 + $0xe8] sm:$0xff]
        %v1113 = vld [vmem:[%s648 + $0xf0] sm:$0xff]
        %v1114 = vld [vmem:[%s648 + $0xf8] sm:$0xff]
        %v1115 = vmul.f32 %v1083, -2.0
        %v1116 = vmul.f32 %v1084, -2.0
        %v1117 = vmul.f32 %v1085, -2.0
        %v1118 = vmul.f32 %v1086, -2.0
        %v1119 = vmul.f32 %v1087, -2.0
        %v1120 = vmul.f32 %v1088, -2.0
        %v1121 = vmul.f32 %v1089, -2.0
        %v1122 = vmul.f32 %v1090, -2.0
        %v1123 = vmul.f32 %v1091, -2.0
        %v1124 = vmul.f32 %v1092, -2.0
        %v1125 = vmul.f32 %v1093, -2.0
        %v1126 = vmul.f32 %v1094, -2.0
        %v1127 = vmul.f32 %v1095, -2.0
        %v1128 = vmul.f32 %v1096, -2.0
        %v1129 = vmul.f32 %v1097, -2.0
        %v1130 = vmul.f32 %v1098, -2.0
        %v1131 = vmul.f32 %v1099, -2.0
        %v1132 = vmul.f32 %v1100, -2.0
        %v1133 = vmul.f32 %v1101, -2.0
        %v1134 = vmul.f32 %v1102, -2.0
        %v1135 = vmul.f32 %v1103, -2.0
        %v1136 = vmul.f32 %v1104, -2.0
        %v1137 = vmul.f32 %v1105, -2.0
        %v1138 = vmul.f32 %v1106, -2.0
        %v1139 = vmul.f32 %v1107, -2.0
        %v1140 = vmul.f32 %v1108, -2.0
        %v1141 = vmul.f32 %v1109, -2.0
        %v1142 = vmul.f32 %v1110, -2.0
        %v1143 = vmul.f32 %v1111, -2.0
        %v1144 = vmul.f32 %v1112, -2.0
        %v1145 = vmul.f32 %v1113, -2.0
        %v1146 = vmul.f32 %v1114, -2.0
        %v1147 = vmul.f32 %v1115, 1.442695
        %v1148 = vpow.pop %v1147
        %v1149 = vmul.f32 %v1116, 1.442695
        %v1150 = vpow.pop %v1149
        %v1151 = vmul.f32 %v1117, 1.442695
        %v1152 = vpow.pop %v1151
        %v1153 = vmul.f32 %v1118, 1.442695
        %v1154 = vpow.pop %v1153
        %v1155 = vmul.f32 %v1119, 1.442695
        %v1156 = vpow.pop %v1155
        %v1157 = vmul.f32 %v1120, 1.442695
        %v1158 = vpow.pop %v1157
        %v1159 = vmul.f32 %v1121, 1.442695
        %v1160 = vpow.pop %v1159
        %v1161 = vmul.f32 %v1122, 1.442695
        %v1162 = vpow.pop %v1161
        %v1163 = vmul.f32 %v1123, 1.442695
        %v1164 = vpow.pop %v1163
        %v1165 = vmul.f32 %v1124, 1.442695
        %v1166 = vpow.pop %v1165
        %v1167 = vmul.f32 %v1125, 1.442695
        %v1168 = vpow.pop %v1167
        %v1169 = vmul.f32 %v1126, 1.442695
        %v1170 = vpow.pop %v1169
        %v1171 = vmul.f32 %v1127, 1.442695
        %v1172 = vpow.pop %v1171
        %v1173 = vmul.f32 %v1128, 1.442695
        %v1174 = vpow.pop %v1173
        %v1175 = vmul.f32 %v1129, 1.442695
        %v1176 = vpow.pop %v1175
        %v1177 = vmul.f32 %v1130, 1.442695
        %v1178 = vpow.pop %v1177
        %v1179 = vmul.f32 %v1131, 1.442695
        %v1180 = vpow.pop %v1179
        %v1181 = vmul.f32 %v1132, 1.442695
        %v1182 = vpow.pop %v1181
        %v1183 = vmul.f32 %v1133, 1.442695
        %v1184 = vpow.pop %v1183
        %v1185 = vmul.f32 %v1134, 1.442695
        %v1186 = vpow.pop %v1185
        %v1187 = vmul.f32 %v1135, 1.442695
        %v1188 = vpow.pop %v1187
        %v1189 = vmul.f32 %v1136, 1.442695
        %v1190 = vpow.pop %v1189
        %v1191 = vmul.f32 %v1137, 1.442695
        %v1192 = vpow.pop %v1191
        %v1193 = vmul.f32 %v1138, 1.442695
        %v1194 = vpow.pop %v1193
        %v1195 = vmul.f32 %v1139, 1.442695
        %v1196 = vpow.pop %v1195
        %v1197 = vmul.f32 %v1140, 1.442695
        %v1198 = vpow.pop %v1197
        %v1199 = vmul.f32 %v1141, 1.442695
        %v1200 = vpow.pop %v1199
        %v1201 = vmul.f32 %v1142, 1.442695
        %v1202 = vpow.pop %v1201
        %v1203 = vmul.f32 %v1143, 1.442695
        %v1204 = vpow.pop %v1203
        %v1205 = vmul.f32 %v1144, 1.442695
        %v1206 = vpow.pop %v1205
        %v1207 = vmul.f32 %v1145, 1.442695
        %v1208 = vpow.pop %v1207
        %v1209 = vmul.f32 %v1146, 1.442695
        %v1210 = vpow.pop %v1209
        %v1211 = vadd.f32 %v1148, %v1150
        %v1212 = vadd.f32 %v1211, %v1152
        %v1213 = vadd.f32 %v1212, %v1154
        %v1214 = vadd.f32 %v1213, %v1156
        %v1215 = vadd.f32 %v1214, %v1158
        %v1216 = vadd.f32 %v1215, %v1160
        %v1217 = vadd.f32 %v1216, %v1162
        %v1218 = vadd.f32 %v1217, %v1164
        %v1219 = vadd.f32 %v1218, %v1166
        %v1220 = vadd.f32 %v1219, %v1168
        %v1221 = vadd.f32 %v1220, %v1170
        %v1222 = vadd.f32 %v1221, %v1172
        %v1223 = vadd.f32 %v1222, %v1174
        %v1224 = vadd.f32 %v1223, %v1176
        %v1225 = vadd.f32 %v1224, %v1178
        %v1226 = vadd.f32 %v1225, %v1180
        %v1227 = vadd.f32 %v1226, %v1182
        %v1228 = vadd.f32 %v1227, %v1184
        %v1229 = vadd.f32 %v1228, %v1186
        %v1230 = vadd.f32 %v1229, %v1188
        %v1231 = vadd.f32 %v1230, %v1190
        %v1232 = vadd.f32 %v1231, %v1192
        %v1233 = vadd.f32 %v1232, %v1194
        %v1234 = vadd.f32 %v1233, %v1196
        %v1235 = vadd.f32 %v1234, %v1198
        %v1236 = vadd.f32 %v1235, %v1200
        %v1237 = vadd.f32 %v1236, %v1202
        %v1238 = vadd.f32 %v1237, %v1204
        %v1239 = vadd.f32 %v1238, %v1206
        %v1240 = vadd.f32 %v1239, %v1208
        %v1241 = vadd.f32 %v1240, %v1210
        %v1242 = vrot.slane %v1241, 4
        %v1243 = vadd.f32 %v1241, %v1242
        %v1244 = vrot.slane %v1243, 2
        %v1245 = vadd.f32 %v1243, %v1244
        %v1246 = vrot.slane %v1245, 1
        %v1247 = vadd.f32 %v1245, %v1246
        %v1248 = vrcp.pop %v1247
        %v1249 = vmul.f32 %v1148, %v1248
        %v1250 = vmul.f32 %v1150, %v1248
        %v1251 = vmul.f32 %v1152, %v1248
        %v1252 = vmul.f32 %v1154, %v1248
        %v1253 = vmul.f32 %v1156, %v1248
        %v1254 = vmul.f32 %v1158, %v1248
        %v1255 = vmul.f32 %v1160, %v1248
        %v1256 = vmul.f32 %v1162, %v1248
        %v1257 = vmul.f32 %v1164, %v1248
        %v1258 = vmul.f32 %v1166, %v1248
        %v1259 = vmul.f32 %v1168, %v1248
        %v1260 = vmul.f32 %v1170, %v1248
        %v1261 = vmul.f32 %v1172, %v1248
        %v1262 = vmul.f32 %v1174, %v1248
        %v1263 = vmul.f32 %v1176, %v1248
        %v1264 = vmul.f32 %v1178, %v1248
        %v1265 = vmul.f32 %v1180, %v1248
        %v1266 = vmul.f32 %v1182, %v1248
        %v1267 = vmul.f32 %v1184, %v1248
        %v1268 = vmul.f32 %v1186, %v1248
        %v1269 = vmul.f32 %v1188, %v1248
        %v1270 = vmul.f32 %v1190, %v1248
        %v1271 = vmul.f32 %v1192, %v1248
        %v1272 = vmul.f32 %v1194, %v1248
        %v1273 = vmul.f32 %v1196, %v1248
        %v1274 = vmul.f32 %v1198, %v1248
        %v1275 = vmul.f32 %v1200, %v1248
        %v1276 = vmul.f32 %v1202, %v1248
        %v1277 = vmul.f32 %v1204, %v1248
        %v1278 = vmul.f32 %v1206, %v1248
        %v1279 = vmul.f32 %v1208, %v1248
        %v1280 = vmul.f32 %v1210, %v1248
        %v1281 = vpack.c.bf16 %v1250, %v1249
        %v1282 = vpack.c.bf16 %v1252, %v1251
        %v1283 = vpack.c.bf16 %v1254, %v1253
        %v1284 = vpack.c.bf16 %v1256, %v1255
        %v1285 = vpack.c.bf16 %v1258, %v1257
        %v1286 = vpack.c.bf16 %v1260, %v1259
        %v1287 = vpack.c.bf16 %v1262, %v1261
        %v1288 = vpack.c.bf16 %v1264, %v1263
        %v1289 = vpack.c.bf16 %v1266, %v1265
        %v1290 = vpack.c.bf16 %v1268, %v1267
        %v1291 = vpack.c.bf16 %v1270, %v1269
        %v1292 = vpack.c.bf16 %v1272, %v1271
        %v1293 = vpack.c.bf16 %v1274, %v1273
        %v1294 = vpack.c.bf16 %v1276, %v1275
        %v1295 = vpack.c.bf16 %v1278, %v1277
        %v1296 = vpack.c.bf16 %v1280, %v1279
        %v1297 = vld [vmem:[#allocation2] sm:$0xff]
        %v1298 = vld [vmem:[#allocation2 + $0x8] sm:$0xff]
        %v1299 = vld [vmem:[#allocation2 + $0x10] sm:$0xff]
        %v1300 = vld [vmem:[#allocation2 + $0x18] sm:$0xff]
        %v1301 = vld [vmem:[#allocation2 + $0x20] sm:$0xff]
        %v1302 = vld [vmem:[#allocation2 + $0x28] sm:$0xff]
        %v1303 = vld [vmem:[#allocation2 + $0x30] sm:$0xff]
        %v1304 = vld [vmem:[#allocation2 + $0x38] sm:$0xff]
        %v1305 = vld [vmem:[#allocation2 + $0x40] sm:$0xff]
        %v1306 = vld [vmem:[#allocation2 + $0x48] sm:$0xff]
        %v1307 = vld [vmem:[#allocation2 + $0x50] sm:$0xff]
        %v1308 = vld [vmem:[#allocation2 + $0x58] sm:$0xff]
        %v1309 = vld [vmem:[#allocation2 + $0x60] sm:$0xff]
        %v1310 = vld [vmem:[#allocation2 + $0x68] sm:$0xff]
        %v1311 = vld [vmem:[#allocation2 + $0x70] sm:$0xff]
        %v1312 = vld [vmem:[#allocation2 + $0x78] sm:$0xff]
        %1313 = vxpose.xlu0.c.b16.start [1/8] %v1281, 128
        %1314 = vxpose.xlu0.c.b16.cont [2/8] %v1282, 128
        %1315 = vxpose.xlu0.c.b16.cont [3/8] %v1283, 128
        %1316 = vxpose.xlu0.c.b16.cont [4/8] %v1284, 128
        %1317 = vxpose.xlu0.c.b16.cont [5/8] %v1285, 128
        %1318 = vxpose.xlu0.c.b16.cont [6/8] %v1286, 128
        %1319 = vxpose.xlu0.c.b16.cont [7/8] %v1287, 128
        %1320 = vxpose.xlu0.c.b16.end [8/8] %v1288, 128
        %v1321 = vpop.trf.xlu0
        %v1322 = vpop.trf.xlu0
        %v1323 = vpop.trf.xlu0
        %v1324 = vpop.trf.xlu0
        %v1325 = vpop.trf.xlu0
        %v1326 = vpop.trf.xlu0
        %v1327 = vpop.trf.xlu0
        %v1328 = vpop.trf.xlu0
        %1329 = vxpose.xlu0.c.b16.start [1/8] %v1289, 128
        %1330 = vxpose.xlu0.c.b16.cont [2/8] %v1290, 128
        %1331 = vxpose.xlu0.c.b16.cont [3/8] %v1291, 128
        %1332 = vxpose.xlu0.c.b16.cont [4/8] %v1292, 128
        %1333 = vxpose.xlu0.c.b16.cont [5/8] %v1293, 128
        %1334 = vxpose.xlu0.c.b16.cont [6/8] %v1294, 128
        %1335 = vxpose.xlu0.c.b16.cont [7/8] %v1295, 128
        %1336 = vxpose.xlu0.c.b16.end [8/8] %v1296, 128
        %v1337 = vpop.trf.xlu0
        %v1338 = vpop.trf.xlu0
        %v1339 = vpop.trf.xlu0
        %v1340 = vpop.trf.xlu0
        %v1341 = vpop.trf.xlu0
        %v1342 = vpop.trf.xlu0
        %v1343 = vpop.trf.xlu0
        %v1344 = vpop.trf.xlu0
        %1345 = vmatprep.subr.bf16.mxu0 0
        %1346 = vmatpush1.bf16.msra.mxu0 %v1297
        %1347 = vmatprep.subr.bf16.mxu0 0
        %1348 = vmatpush1.bf16.msra.mxu0 %v1298
        %1349 = vmatprep.subr.bf16.mxu0 0
        %1350 = vmatpush1.bf16.msra.mxu0 %v1299
        %1351 = vmatprep.subr.bf16.mxu0 0
        %1352 = vmatpush1.bf16.msra.mxu0 %v1300
        %1353 = vmatprep.subr.bf16.mxu0 0
        %1354 = vmatpush1.bf16.msra.mxu0 %v1301
        %1355 = vmatprep.subr.bf16.mxu0 0
        %1356 = vmatpush1.bf16.msra.mxu0 %v1302
        %1357 = vmatprep.subr.bf16.mxu0 0
        %1358 = vmatpush1.bf16.msra.mxu0 %v1303
        %1359 = vmatprep.subr.bf16.mxu0 0
        %1360 = vmatpush1.bf16.msra.mxu0 %v1304
        %1361 = vmatprep.subr.bf16.mxu0 0
        %1362 = vmatpush1.bf16.msra.mxu0 %v1305
        %1363 = vmatprep.subr.bf16.mxu0 0
        %1364 = vmatpush1.bf16.msra.mxu0 %v1306
        %1365 = vmatprep.subr.bf16.mxu0 0
        %1366 = vmatpush1.bf16.msra.mxu0 %v1307
        %1367 = vmatprep.subr.bf16.mxu0 0
        %1368 = vmatpush1.bf16.msra.mxu0 %v1308
        %1369 = vmatprep.subr.bf16.mxu0 0
        %1370 = vmatpush1.bf16.msra.mxu0 %v1309
        %1371 = vmatprep.subr.bf16.mxu0 0
        %1372 = vmatpush1.bf16.msra.mxu0 %v1310
        %1373 = vmatprep.subr.bf16.mxu0 0
        %1374 = vmatpush1.bf16.msra.mxu0 %v1311
        %1375 = vmatprep.subr.bf16.mxu0 0
        %1376 = vmatpush1.bf16.msra.mxu0 %v1312
        %1377 = vmatprep.mubr.bf16.mxu0 %v1337
        %1378 = vmatmul.mubr.bf16.gmra.mrb[0].mxu0 %v1321
        %v1379 = vpop.f32.mrb[0].mxu0
        %v1380 = vadd.f32 0.0, %v1379
        %v1381 = vpop.f32.mrb[0].mxu0
        %v1382 = vpop.f32.mrb[0].mxu0
        %v1383 = vadd.f32 0.0, %v1382
        %v1384 = vpop.f32.mrb[0].mxu0
        %1385 = vmatprep.mubr.bf16.mxu0 %v1338
        %1386 = vmatmul.mubr.bf16.gmra.mrb[0].mxu0 %v1322
        %v1387 = vpop.f32.mrb[0].mxu0
        %v1388 = vadd.f32 0.0, %v1387
        %v1389 = vpop.f32.mrb[0].mxu0
        %v1390 = vpop.f32.mrb[0].mxu0
        %v1391 = vadd.f32 0.0, %v1390
        %v1392 = vpop.f32.mrb[0].mxu0
        %1393 = vmatprep.mubr.bf16.mxu0 %v1339
        %1394 = vmatmul.mubr.bf16.gmra.mrb[0].mxu0 %v1323
        %v1395 = vpop.f32.mrb[0].mxu0
        %v1396 = vadd.f32 0.0, %v1395
        %v1397 = vpop.f32.mrb[0].mxu0
        %v1398 = vpop.f32.mrb[0].mxu0
        %v1399 = vadd.f32 0.0, %v1398
        %v1400 = vpop.f32.mrb[0].mxu0
        %1401 = vmatprep.mubr.bf16.mxu0 %v1340
        %1402 = vmatmul.mubr.bf16.gmra.mrb[0].mxu0 %v1324
        %v1403 = vpop.f32.mrb[0].mxu0
        %v1404 = vadd.f32 0.0, %v1403
        %v1405 = vpop.f32.mrb[0].mxu0
        %v1406 = vpop.f32.mrb[0].mxu0
        %v1407 = vadd.f32 0.0, %v1406
        %v1408 = vpop.f32.mrb[0].mxu0
        %1409 = vmatprep.mubr.bf16.mxu0 %v1341
        %1410 = vmatmul.mubr.bf16.gmra.mrb[0].mxu0 %v1325
        %v1411 = vpop.f32.mrb[0].mxu0
        %v1412 = vadd.f32 0.0, %v1411
        %v1413 = vpop.f32.mrb[0].mxu0
        %v1414 = vpop.f32.mrb[0].mxu0
        %v1415 = vadd.f32 0.0, %v1414
        %v1416 = vpop.f32.mrb[0].mxu0
        %1417 = vmatprep.mubr.bf16.mxu0 %v1342
        %1418 = vmatmul.mubr.bf16.gmra.mrb[0].mxu0 %v1326
        %v1419 = vpop.f32.mrb[0].mxu0
        %v1420 = vadd.f32 0.0, %v1419
        %v1421 = vpop.f32.mrb[0].mxu0
        %v1422 = vpop.f32.mrb[0].mxu0
        %v1423 = vadd.f32 0.0, %v1422
        %v1424 = vpop.f32.mrb[0].mxu0
        %1425 = vmatprep.mubr.bf16.mxu0 %v1343
        %1426 = vmatmul.mubr.bf16.gmra.mrb[0].mxu0 %v1327
        %v1427 = vpop.f32.mrb[0].mxu0
        %v1428 = vadd.f32 0.0, %v1427
        %v1429 = vpop.f32.mrb[0].mxu0
        %v1430 = vpop.f32.mrb[0].mxu0
        %v1431 = vadd.f32 0.0, %v1430
        %v1432 = vpop.f32.mrb[0].mxu0
        %1433 = vmatprep.mubr.bf16.mxu0 %v1344
        %1434 = vmatmul.mubr.bf16.gmra.mrb[0].mxu0 %v1328
        %v1435 = vpop.f32.mrb[0].mxu0
        %v1436 = vadd.f32 0.0, %v1435
        %v1437 = vpop.f32.mrb[0].mxu0
        %v1438 = vpop.f32.mrb[0].mxu0
        %v1439 = vadd.f32 0.0, %v1438
        %v1440 = vpop.f32.mrb[0].mxu0
        %1441 = vdwg.mxu0
        %s1442 = smul.u32 %s49, 128
        %s1443 = scalar_lea.vmem %s639, %s1442 [#allocation4]
        %v1444 = vld [vmem:[%s1443] sm:$0xff]
        %v1445 = vld [vmem:[%s1443 + $0x8] sm:$0xff]
        %v1446 = vld [vmem:[%s1443 + $0x10] sm:$0xff]
        %v1447 = vld [vmem:[%s1443 + $0x18] sm:$0xff]
        %v1448 = vld [vmem:[%s1443 + $0x20] sm:$0xff]
        %v1449 = vld [vmem:[%s1443 + $0x28] sm:$0xff]
        %v1450 = vld [vmem:[%s1443 + $0x30] sm:$0xff]
        %v1451 = vld [vmem:[%s1443 + $0x38] sm:$0xff]
        %v1452 = vld [vmem:[%s1443 + $0x40] sm:$0xff]
        %v1453 = vld [vmem:[%s1443 + $0x48] sm:$0xff]
        %v1454 = vld [vmem:[%s1443 + $0x50] sm:$0xff]
        %v1455 = vld [vmem:[%s1443 + $0x58] sm:$0xff]
        %v1456 = vld [vmem:[%s1443 + $0x60] sm:$0xff]
        %v1457 = vld [vmem:[%s1443 + $0x68] sm:$0xff]
        %v1458 = vld [vmem:[%s1443 + $0x70] sm:$0xff]
        %v1459 = vld [vmem:[%s1443 + $0x78] sm:$0xff]
        %v1460 = vpack.c.bf16 %v1445, %v1444
        %v1461 = vpack.c.bf16 %v1447, %v1446
        %v1462 = vpack.c.bf16 %v1449, %v1448
        %v1463 = vpack.c.bf16 %v1451, %v1450
        %v1464 = vpack.c.bf16 %v1453, %v1452
        %v1465 = vpack.c.bf16 %v1455, %v1454
        %v1466 = vpack.c.bf16 %v1457, %v1456
        %v1467 = vpack.c.bf16 %v1459, %v1458
        %v1468 = vpack.c.bf16 %v1383, %v1380
        %v1469 = vpack.c.bf16 %v1391, %v1388
        %v1470 = vpack.c.bf16 %v1399, %v1396
        %v1471 = vpack.c.bf16 %v1407, %v1404
        %v1472 = vpack.c.bf16 %v1415, %v1412
        %v1473 = vpack.c.bf16 %v1423, %v1420
        %v1474 = vpack.c.bf16 %v1431, %v1428
        %v1475 = vpack.c.bf16 %v1439, %v1436
        %v1476 = vld [vmem:[#allocation12] sm:$0xf]
        %v1477 = vld [vmem:[#allocation12 + $0x4] sm:$0xf]
        %v1478 = vld [vmem:[#allocation12 + $0x8] sm:$0xf]
        %v1479 = vld [vmem:[#allocation12 + $0xc] sm:$0xf]
        %v1480 = vld [vmem:[#allocation12 + $0x10] sm:$0xf]
        %v1481 = vld [vmem:[#allocation12 + $0x14] sm:$0xf]
        %v1482 = vld [vmem:[#allocation12 + $0x18] sm:$0xf]
        %v1483 = vld [vmem:[#allocation12 + $0x1c] sm:$0xf]
        %v1492 = vunpack.c.l.b16 %v1476
        %v1493 = vunpack.c.l.b16 %v1477
        %v1494 = vunpack.c.l.b16 %v1478
        %v1495 = vunpack.c.l.b16 %v1479
        %v1496 = vunpack.c.l.b16 %v1480
        %v1497 = vunpack.c.l.b16 %v1481
        %v1498 = vunpack.c.l.b16 %v1482
        %v1499 = vunpack.c.l.b16 %v1483
        %v1500 = vpack.c.b16 %v1493, %v1492
        %v1501 = vpack.c.b16 %v1495, %v1494
        %v1502 = vpack.c.b16 %v1497, %v1496
        %v1503 = vpack.c.b16 %v1499, %v1498
        %vm1508 = vcmask 523264
        %v1510 = vsel %vm1508, %v1468, 0
        %v1513 = vsel %vm1508, %v1469, 0
        %v1516 = vsel %vm1508, %v1470, 0
        %v1519 = vsel %vm1508, %v1471, 0
        %v1522 = vsel %vm1508, %v1472, 0
        %v1525 = vsel %vm1508, %v1473, 0
        %v1528 = vsel %vm1508, %v1474, 0
        %v1531 = vsel %vm1508, %v1475, 0
        %1533 = vmatprep.subr.bf16.mxu0 0
        %1534 = vmatpush1.bf16.msra.mxu0 %v1500
        %1535 = vmatprep.subr.bf16.mxu0 0
        %1536 = vmatpush1.bf16.msra.mxu0 %v1501
        %1537 = vmatprep.subr.bf16.mxu0 0
        %1538 = vmatpush1.bf16.msra.mxu0 %v1502
        %1539 = vmatprep.subr.bf16.mxu0 0
        %1540 = vmatpush1.bf16.msra.mxu0 %v1503
        %1541 = vmatprep.subr.bf16.mxu0 0
        %1542 = vmatpush1.bf16.msra.mxu0 0
        %1543 = vmatprep.subr.bf16.mxu0 0
        %1544 = vmatpush1.bf16.msra.mxu0 0
        %1545 = vmatprep.subr.bf16.mxu0 0
        %1546 = vmatpush1.bf16.msra.mxu0 0
        %1547 = vmatprep.subr.bf16.mxu0 0
        %1548 = vmatpush1.bf16.msra.mxu0 0
        %1549 = vmatprep.subr.bf16.mxu0 0
        %1550 = vmatpush1.bf16.msra.mxu0 0
        %1551 = vmatprep.subr.bf16.mxu0 0
        %1552 = vmatpush1.bf16.msra.mxu0 0
        %1553 = vmatprep.subr.bf16.mxu0 0
        %1554 = vmatpush1.bf16.msra.mxu0 0
        %1555 = vmatprep.subr.bf16.mxu0 0
        %1556 = vmatpush1.bf16.msra.mxu0 0
        %1557 = vmatprep.subr.bf16.mxu0 0
        %1558 = vmatpush1.bf16.msra.mxu0 0
        %1559 = vmatprep.subr.bf16.mxu0 0
        %1560 = vmatpush1.bf16.msra.mxu0 0
        %1561 = vmatprep.subr.bf16.mxu0 0
        %1562 = vmatpush1.bf16.msra.mxu0 0
        %1563 = vmatprep.subr.bf16.mxu0 0
        %1564 = vmatpush1.bf16.msra.mxu0 0
        %1565 = vmatprep.mubr.bf16.mxu0 0
        %1566 = vmatmul.mubr.bf16.gmra.mrb[0].mxu0 %v1510
        %v1567 = vpop.f32.mrb[0].mxu0
        %v1568 = vadd.f32 0.0, %v1567
        %v1569 = vpop.f32.mrb[0].mxu0
        %v1570 = vpop.f32.mrb[0].mxu0
        %v1571 = vadd.f32 0.0, %v1570
        %v1572 = vpop.f32.mrb[0].mxu0
        %1573 = vmatprep.mubr.bf16.mxu0 0
        %1574 = vmatmul.mubr.bf16.gmra.mrb[0].mxu0 %v1513
        %v1575 = vpop.f32.mrb[0].mxu0
        %v1576 = vadd.f32 0.0, %v1575
        %v1577 = vpop.f32.mrb[0].mxu0
        %v1578 = vpop.f32.mrb[0].mxu0
        %v1579 = vadd.f32 0.0, %v1578
        %v1580 = vpop.f32.mrb[0].mxu0
        %1581 = vmatprep.mubr.bf16.mxu0 0
        %1582 = vmatmul.mubr.bf16.gmra.mrb[0].mxu0 %v1516
        %v1583 = vpop.f32.mrb[0].mxu0
        %v1584 = vadd.f32 0.0, %v1583
        %v1585 = vpop.f32.mrb[0].mxu0
        %v1586 = vpop.f32.mrb[0].mxu0
        %v1587 = vadd.f32 0.0, %v1586
        %v1588 = vpop.f32.mrb[0].mxu0
        %1589 = vmatprep.mubr.bf16.mxu0 0
        %1590 = vmatmul.mubr.bf16.gmra.mrb[0].mxu0 %v1519
        %v1591 = vpop.f32.mrb[0].mxu0
        %v1592 = vadd.f32 0.0, %v1591
        %v1593 = vpop.f32.mrb[0].mxu0
        %v1594 = vpop.f32.mrb[0].mxu0
        %v1595 = vadd.f32 0.0, %v1594
        %v1596 = vpop.f32.mrb[0].mxu0
        %1597 = vmatprep.mubr.bf16.mxu0 0
        %1598 = vmatmul.mubr.bf16.gmra.mrb[0].mxu0 %v1522
        %v1599 = vpop.f32.mrb[0].mxu0
        %v1600 = vadd.f32 0.0, %v1599
        %v1601 = vpop.f32.mrb[0].mxu0
        %v1602 = vpop.f32.mrb[0].mxu0
        %v1603 = vadd.f32 0.0, %v1602
        %v1604 = vpop.f32.mrb[0].mxu0
        %1605 = vmatprep.mubr.bf16.mxu0 0
        %1606 = vmatmul.mubr.bf16.gmra.mrb[0].mxu0 %v1525
        %v1607 = vpop.f32.mrb[0].mxu0
        %v1608 = vadd.f32 0.0, %v1607
        %v1609 = vpop.f32.mrb[0].mxu0
        %v1610 = vpop.f32.mrb[0].mxu0
        %v1611 = vadd.f32 0.0, %v1610
        %v1612 = vpop.f32.mrb[0].mxu0
        %1613 = vmatprep.mubr.bf16.mxu0 0
        %1614 = vmatmul.mubr.bf16.gmra.mrb[0].mxu0 %v1528
        %v1615 = vpop.f32.mrb[0].mxu0
        %v1616 = vadd.f32 0.0, %v1615
        %v1617 = vpop.f32.mrb[0].mxu0
        %v1618 = vpop.f32.mrb[0].mxu0
        %v1619 = vadd.f32 0.0, %v1618
        %v1620 = vpop.f32.mrb[0].mxu0
        %1621 = vmatprep.mubr.bf16.mxu0 0
        %1622 = vmatmul.mubr.bf16.gmra.mrb[0].mxu0 %v1531
        %v1623 = vpop.f32.mrb[0].mxu0
        %v1624 = vadd.f32 0.0, %v1623
        %v1625 = vpop.f32.mrb[0].mxu0
        %v1626 = vpop.f32.mrb[0].mxu0
        %v1627 = vadd.f32 0.0, %v1626
        %v1628 = vpop.f32.mrb[0].mxu0
        %1629 = vdwg.mxu0
        %v1630 = vld [vmem:[#allocation13] sm:$0x1]
        %v1632 = vlaneseq
        %v1633 = vshrl.u32 %v1632, 7
        %v1634 = vsub.s32 0, %v1633
        %v1635 = vrot.slane %v1630, %v1634
        %v1637 = vmul.f32 %v1568, %v1635
        %v1638 = vmul.f32 %v1571, %v1635
        %v1639 = vmul.f32 %v1576, %v1635
        %v1640 = vmul.f32 %v1579, %v1635
        %v1641 = vmul.f32 %v1584, %v1635
        %v1642 = vmul.f32 %v1587, %v1635
        %v1643 = vmul.f32 %v1592, %v1635
        %v1644 = vmul.f32 %v1595, %v1635
        %v1645 = vmul.f32 %v1600, %v1635
        %v1646 = vmul.f32 %v1603, %v1635
        %v1647 = vmul.f32 %v1608, %v1635
        %v1648 = vmul.f32 %v1611, %v1635
        %v1649 = vmul.f32 %v1616, %v1635
        %v1650 = vmul.f32 %v1619, %v1635
        %v1651 = vmul.f32 %v1624, %v1635
        %v1652 = vmul.f32 %v1627, %v1635
        %v1653 = vld [vmem:[#allocation15] sm:$0x1]
        %v1655 = vlaneseq
        %v1656 = vshrl.u32 %v1655, 7
        %v1657 = vsub.s32 0, %v1656
        %v1658 = vrot.slane %v1653, %v1657
        %v1660 = vadd.f32 %v1637, %v1658
        %v1661 = vadd.f32 %v1638, %v1658
        %v1662 = vadd.f32 %v1639, %v1658
        %v1663 = vadd.f32 %v1640, %v1658
        %v1664 = vadd.f32 %v1641, %v1658
        %v1665 = vadd.f32 %v1642, %v1658
        %v1666 = vadd.f32 %v1643, %v1658
        %v1667 = vadd.f32 %v1644, %v1658
        %v1668 = vadd.f32 %v1645, %v1658
        %v1669 = vadd.f32 %v1646, %v1658
        %v1670 = vadd.f32 %v1647, %v1658
        %v1671 = vadd.f32 %v1648, %v1658
        %v1672 = vadd.f32 %v1649, %v1658
        %v1673 = vadd.f32 %v1650, %v1658
        %v1674 = vadd.f32 %v1651, %v1658
        %v1675 = vadd.f32 %v1652, %v1658
        %v1676 = vld [vmem:[#allocation16] sm:$0xf]
        %v1677 = vld [vmem:[#allocation16 + $0x4] sm:$0xf]
        %v1678 = vld [vmem:[#allocation16 + $0x8] sm:$0xf]
        %v1679 = vld [vmem:[#allocation16 + $0xc] sm:$0xf]
        %v1680 = vld [vmem:[#allocation16 + $0x10] sm:$0xf]
        %v1681 = vld [vmem:[#allocation16 + $0x14] sm:$0xf]
        %v1682 = vld [vmem:[#allocation16 + $0x18] sm:$0xf]
        %v1683 = vld [vmem:[#allocation16 + $0x1c] sm:$0xf]
        %v1692 = vunpack.c.l.b16 %v1676
        %v1693 = vunpack.c.l.b16 %v1677
        %v1694 = vunpack.c.l.b16 %v1678
        %v1695 = vunpack.c.l.b16 %v1679
        %v1696 = vunpack.c.l.b16 %v1680
        %v1697 = vunpack.c.l.b16 %v1681
        %v1698 = vunpack.c.l.b16 %v1682
        %v1699 = vunpack.c.l.b16 %v1683
        %v1700 = vpack.c.b16 %v1693, %v1692
        %v1701 = vpack.c.b16 %v1695, %v1694
        %v1702 = vpack.c.b16 %v1697, %v1696
        %v1703 = vpack.c.b16 %v1699, %v1698
        %v1709 = vsel %vm1508, %v1460, 0
        %v1712 = vsel %vm1508, %v1461, 0
        %v1715 = vsel %vm1508, %v1462, 0
        %v1718 = vsel %vm1508, %v1463, 0
        %v1721 = vsel %vm1508, %v1464, 0
        %v1724 = vsel %vm1508, %v1465, 0
        %v1727 = vsel %vm1508, %v1466, 0
        %v1730 = vsel %vm1508, %v1467, 0
        %1732 = vmatprep.subr.bf16.mxu0 0
        %1733 = vmatpush1.bf16.msra.mxu0 %v1700
        %1734 = vmatprep.subr.bf16.mxu0 0
        %1735 = vmatpush1.bf16.msra.mxu0 %v1701
        %1736 = vmatprep.subr.bf16.mxu0 0
        %1737 = vmatpush1.bf16.msra.mxu0 %v1702
        %1738 = vmatprep.subr.bf16.mxu0 0
        %1739 = vmatpush1.bf16.msra.mxu0 %v1703
        %1740 = vmatprep.subr.bf16.mxu0 0
        %1741 = vmatpush1.bf16.msra.mxu0 0
        %1742 = vmatprep.subr.bf16.mxu0 0
        %1743 = vmatpush1.bf16.msra.mxu0 0
        %1744 = vmatprep.subr.bf16.mxu0 0
        %1745 = vmatpush1.bf16.msra.mxu0 0
        %1746 = vmatprep.subr.bf16.mxu0 0
        %1747 = vmatpush1.bf16.msra.mxu0 0
        %1748 = vmatprep.subr.bf16.mxu0 0
        %1749 = vmatpush1.bf16.msra.mxu0 0
        %1750 = vmatprep.subr.bf16.mxu0 0
        %1751 = vmatpush1.bf16.msra.mxu0 0
        %1752 = vmatprep.subr.bf16.mxu0 0
        %1753 = vmatpush1.bf16.msra.mxu0 0
        %1754 = vmatprep.subr.bf16.mxu0 0
        %1755 = vmatpush1.bf16.msra.mxu0 0
        %1756 = vmatprep.subr.bf16.mxu0 0
        %1757 = vmatpush1.bf16.msra.mxu0 0
        %1758 = vmatprep.subr.bf16.mxu0 0
        %1759 = vmatpush1.bf16.msra.mxu0 0
        %1760 = vmatprep.subr.bf16.mxu0 0
        %1761 = vmatpush1.bf16.msra.mxu0 0
        %1762 = vmatprep.subr.bf16.mxu0 0
        %1763 = vmatpush1.bf16.msra.mxu0 0
        %1764 = vmatprep.mubr.bf16.mxu0 0
        %1765 = vmatmul.mubr.bf16.gmra.mrb[0].mxu0 %v1709
        %v1766 = vpop.f32.mrb[0].mxu0
        %v1767 = vadd.f32 0.0, %v1766
        %v1768 = vpop.f32.mrb[0].mxu0
        %v1769 = vpop.f32.mrb[0].mxu0
        %v1770 = vadd.f32 0.0, %v1769
        %v1771 = vpop.f32.mrb[0].mxu0
        %1772 = vmatprep.mubr.bf16.mxu0 0
        %1773 = vmatmul.mubr.bf16.gmra.mrb[0].mxu0 %v1712
        %v1774 = vpop.f32.mrb[0].mxu0
        %v1775 = vadd.f32 0.0, %v1774
        %v1776 = vpop.f32.mrb[0].mxu0
        %v1777 = vpop.f32.mrb[0].mxu0
        %v1778 = vadd.f32 0.0, %v1777
        %v1779 = vpop.f32.mrb[0].mxu0
        %1780 = vmatprep.mubr.bf16.mxu0 0
        %1781 = vmatmul.mubr.bf16.gmra.mrb[0].mxu0 %v1715
        %v1782 = vpop.f32.mrb[0].mxu0
        %v1783 = vadd.f32 0.0, %v1782
        %v1784 = vpop.f32.mrb[0].mxu0
        %v1785 = vpop.f32.mrb[0].mxu0
        %v1786 = vadd.f32 0.0, %v1785
        %v1787 = vpop.f32.mrb[0].mxu0
        %1788 = vmatprep.mubr.bf16.mxu0 0
        %1789 = vmatmul.mubr.bf16.gmra.mrb[0].mxu0 %v1718
        %v1790 = vpop.f32.mrb[0].mxu0
        %v1791 = vadd.f32 0.0, %v1790
        %v1792 = vpop.f32.mrb[0].mxu0
        %v1793 = vpop.f32.mrb[0].mxu0
        %v1794 = vadd.f32 0.0, %v1793
        %v1795 = vpop.f32.mrb[0].mxu0
        %1796 = vmatprep.mubr.bf16.mxu0 0
        %1797 = vmatmul.mubr.bf16.gmra.mrb[0].mxu0 %v1721
        %v1798 = vpop.f32.mrb[0].mxu0
        %v1799 = vadd.f32 0.0, %v1798
        %v1800 = vpop.f32.mrb[0].mxu0
        %v1801 = vpop.f32.mrb[0].mxu0
        %v1802 = vadd.f32 0.0, %v1801
        %v1803 = vpop.f32.mrb[0].mxu0
        %1804 = vmatprep.mubr.bf16.mxu0 0
        %1805 = vmatmul.mubr.bf16.gmra.mrb[0].mxu0 %v1724
        %v1806 = vpop.f32.mrb[0].mxu0
        %v1807 = vadd.f32 0.0, %v1806
        %v1808 = vpop.f32.mrb[0].mxu0
        %v1809 = vpop.f32.mrb[0].mxu0
        %v1810 = vadd.f32 0.0, %v1809
        %v1811 = vpop.f32.mrb[0].mxu0
        %1812 = vmatprep.mubr.bf16.mxu0 0
        %1813 = vmatmul.mubr.bf16.gmra.mrb[0].mxu0 %v1727
        %v1814 = vpop.f32.mrb[0].mxu0
        %v1815 = vadd.f32 0.0, %v1814
        %v1816 = vpop.f32.mrb[0].mxu0
        %v1817 = vpop.f32.mrb[0].mxu0
        %v1818 = vadd.f32 0.0, %v1817
        %v1819 = vpop.f32.mrb[0].mxu0
        %1820 = vmatprep.mubr.bf16.mxu0 0
        %1821 = vmatmul.mubr.bf16.gmra.mrb[0].mxu0 %v1730
        %v1822 = vpop.f32.mrb[0].mxu0
        %v1823 = vadd.f32 0.0, %v1822
        %v1824 = vpop.f32.mrb[0].mxu0
        %v1825 = vpop.f32.mrb[0].mxu0
        %v1826 = vadd.f32 0.0, %v1825
        %v1827 = vpop.f32.mrb[0].mxu0
        %1828 = vdwg.mxu0
        %v1829 = vld [vmem:[#allocation18] sm:$0x1]
        %v1831 = vlaneseq
        %v1832 = vshrl.u32 %v1831, 7
        %v1833 = vsub.s32 0, %v1832
        %v1834 = vrot.slane %v1829, %v1833
        %v1836 = vmul.f32 %v1767, %v1834
        %v1837 = vmul.f32 %v1770, %v1834
        %v1838 = vmul.f32 %v1775, %v1834
        %v1839 = vmul.f32 %v1778, %v1834
        %v1840 = vmul.f32 %v1783, %v1834
        %v1841 = vmul.f32 %v1786, %v1834
        %v1842 = vmul.f32 %v1791, %v1834
        %v1843 = vmul.f32 %v1794, %v1834
        %v1844 = vmul.f32 %v1799, %v1834
        %v1845 = vmul.f32 %v1802, %v1834
        %v1846 = vmul.f32 %v1807, %v1834
        %v1847 = vmul.f32 %v1810, %v1834
        %v1848 = vmul.f32 %v1815, %v1834
        %v1849 = vmul.f32 %v1818, %v1834
        %v1850 = vmul.f32 %v1823, %v1834
        %v1851 = vmul.f32 %v1826, %v1834
        %v1852 = vld [vmem:[#allocation19] sm:$0x1]
        %v1854 = vlaneseq
        %v1855 = vshrl.u32 %v1854, 7
        %v1856 = vsub.s32 0, %v1855
        %v1857 = vrot.slane %v1852, %v1856
        %v1859 = vadd.f32 %v1836, %v1857
        %v1860 = vadd.f32 %v1837, %v1857
        %v1861 = vadd.f32 %v1838, %v1857
        %v1862 = vadd.f32 %v1839, %v1857
        %v1863 = vadd.f32 %v1840, %v1857
        %v1864 = vadd.f32 %v1841, %v1857
        %v1865 = vadd.f32 %v1842, %v1857
        %v1866 = vadd.f32 %v1843, %v1857
        %v1867 = vadd.f32 %v1844, %v1857
        %v1868 = vadd.f32 %v1845, %v1857
        %v1869 = vadd.f32 %v1846, %v1857
        %v1870 = vadd.f32 %v1847, %v1857
        %v1871 = vadd.f32 %v1848, %v1857
        %v1872 = vadd.f32 %v1849, %v1857
        %v1873 = vadd.f32 %v1850, %v1857
        %v1874 = vadd.f32 %v1851, %v1857
        %v1875 = vpack.c.bf16 %v1661, %v1660
        %v1876 = vpack.c.bf16 %v1663, %v1662
        %v1877 = vpack.c.bf16 %v1665, %v1664
        %v1878 = vpack.c.bf16 %v1667, %v1666
        %v1879 = vpack.c.bf16 %v1669, %v1668
        %v1880 = vpack.c.bf16 %v1671, %v1670
        %v1881 = vpack.c.bf16 %v1673, %v1672
        %v1882 = vpack.c.bf16 %v1675, %v1674
        %v1883 = vld [vmem:[#allocation21] sm:$0xf]
        %v1884 = vld [vmem:[#allocation21 + $0x4] sm:$0xf]
        %v1885 = vld [vmem:[#allocation21 + $0x8] sm:$0xf]
        %v1886 = vld [vmem:[#allocation21 + $0xc] sm:$0xf]
        %v1887 = vld [vmem:[#allocation21 + $0x10] sm:$0xf]
        %v1888 = vld [vmem:[#allocation21 + $0x14] sm:$0xf]
        %v1889 = vld [vmem:[#allocation21 + $0x18] sm:$0xf]
        %v1890 = vld [vmem:[#allocation21 + $0x1c] sm:$0xf]
        %v1891 = vpack.c.bf16 %v1860, %v1859
        %v1892 = vpack.c.bf16 %v1862, %v1861
        %v1893 = vpack.c.bf16 %v1864, %v1863
        %v1894 = vpack.c.bf16 %v1866, %v1865
        %v1895 = vpack.c.bf16 %v1868, %v1867
        %v1896 = vpack.c.bf16 %v1870, %v1869
        %v1897 = vpack.c.bf16 %v1872, %v1871
        %v1898 = vpack.c.bf16 %v1874, %v1873
        %v1899 = vld [vmem:[#allocation22] sm:$0xf]
        %v1900 = vld [vmem:[#allocation22 + $0x4] sm:$0xf]
        %v1901 = vld [vmem:[#allocation22 + $0x8] sm:$0xf]
        %v1902 = vld [vmem:[#allocation22 + $0xc] sm:$0xf]
        %v1903 = vld [vmem:[#allocation22 + $0x10] sm:$0xf]
        %v1904 = vld [vmem:[#allocation22 + $0x14] sm:$0xf]
        %v1905 = vld [vmem:[#allocation22 + $0x18] sm:$0xf]
        %v1906 = vld [vmem:[#allocation22 + $0x1c] sm:$0xf]
        %v1915 = vunpack.c.l.b16 %v1899
        %v1916 = vunpack.c.l.b16 %v1900
        %v1917 = vunpack.c.l.b16 %v1901
        %v1918 = vunpack.c.l.b16 %v1902
        %v1919 = vunpack.c.l.b16 %v1903
        %v1920 = vunpack.c.l.b16 %v1904
        %v1921 = vunpack.c.l.b16 %v1905
        %v1922 = vunpack.c.l.b16 %v1906
        %v1923 = vpack.c.b16 %v1916, %v1915
        %v1924 = vpack.c.b16 %v1918, %v1917
        %v1925 = vpack.c.b16 %v1920, %v1919
        %v1926 = vpack.c.b16 %v1922, %v1921
        %v1932 = vsel %vm1508, %v1891, 0
        %v1935 = vsel %vm1508, %v1892, 0
        %v1938 = vsel %vm1508, %v1893, 0
        %v1941 = vsel %vm1508, %v1894, 0
        %v1944 = vsel %vm1508, %v1895, 0
        %v1947 = vsel %vm1508, %v1896, 0
        %v1950 = vsel %vm1508, %v1897, 0
        %v1953 = vsel %vm1508, %v1898, 0
        %1955 = vmatprep.subr.bf16.mxu0 0
        %1956 = vmatpush1.bf16.msra.mxu0 %v1923
        %1957 = vmatprep.subr.bf16.mxu0 0
        %1958 = vmatpush1.bf16.msra.mxu0 %v1924
        %1959 = vmatprep.subr.bf16.mxu0 0
        %1960 = vmatpush1.bf16.msra.mxu0 %v1925
        %1961 = vmatprep.subr.bf16.mxu0 0
        %1962 = vmatpush1.bf16.msra.mxu0 %v1926
        %1963 = vmatprep.subr.bf16.mxu0 0
        %1964 = vmatpush1.bf16.msra.mxu0 0
        %1965 = vmatprep.subr.bf16.mxu0 0
        %1966 = vmatpush1.bf16.msra.mxu0 0
        %1967 = vmatprep.subr.bf16.mxu0 0
        %1968 = vmatpush1.bf16.msra.mxu0 0
        %1969 = vmatprep.subr.bf16.mxu0 0
        %1970 = vmatpush1.bf16.msra.mxu0 0
        %1971 = vmatprep.subr.bf16.mxu0 0
        %1972 = vmatpush1.bf16.msra.mxu0 0
        %1973 = vmatprep.subr.bf16.mxu0 0
        %1974 = vmatpush1.bf16.msra.mxu0 0
        %1975 = vmatprep.subr.bf16.mxu0 0
        %1976 = vmatpush1.bf16.msra.mxu0 0
        %1977 = vmatprep.subr.bf16.mxu0 0
        %1978 = vmatpush1.bf16.msra.mxu0 0
        %1979 = vmatprep.subr.bf16.mxu0 0
        %1980 = vmatpush1.bf16.msra.mxu0 0
        %1981 = vmatprep.subr.bf16.mxu0 0
        %1982 = vmatpush1.bf16.msra.mxu0 0
        %1983 = vmatprep.subr.bf16.mxu0 0
        %1984 = vmatpush1.bf16.msra.mxu0 0
        %1985 = vmatprep.subr.bf16.mxu0 0
        %1986 = vmatpush1.bf16.msra.mxu0 0
        %1987 = vmatprep.mubr.bf16.mxu0 0
        %1988 = vmatmul.mubr.bf16.gmra.mrb[0].mxu0 %v1932
        %v1989 = vpop.f32.mrb[0].mxu0
        %v1990 = vadd.f32 0.0, %v1989
        %v1991 = vpop.f32.mrb[0].mxu0
        %v1992 = vpop.f32.mrb[0].mxu0
        %v1993 = vadd.f32 0.0, %v1992
        %v1994 = vpop.f32.mrb[0].mxu0
        %1995 = vmatprep.mubr.bf16.mxu0 0
        %1996 = vmatmul.mubr.bf16.gmra.mrb[0].mxu0 %v1935
        %v1997 = vpop.f32.mrb[0].mxu0
        %v1998 = vadd.f32 0.0, %v1997
        %v1999 = vpop.f32.mrb[0].mxu0
        %v2000 = vpop.f32.mrb[0].mxu0
        %v2001 = vadd.f32 0.0, %v2000
        %v2002 = vpop.f32.mrb[0].mxu0
        %2003 = vmatprep.mubr.bf16.mxu0 0
        %2004 = vmatmul.mubr.bf16.gmra.mrb[0].mxu0 %v1938
        %v2005 = vpop.f32.mrb[0].mxu0
        %v2006 = vadd.f32 0.0, %v2005
        %v2007 = vpop.f32.mrb[0].mxu0
        %v2008 = vpop.f32.mrb[0].mxu0
        %v2009 = vadd.f32 0.0, %v2008
        %v2010 = vpop.f32.mrb[0].mxu0
        %2011 = vmatprep.mubr.bf16.mxu0 0
        %2012 = vmatmul.mubr.bf16.gmra.mrb[0].mxu0 %v1941
        %v2013 = vpop.f32.mrb[0].mxu0
        %v2014 = vadd.f32 0.0, %v2013
        %v2015 = vpop.f32.mrb[0].mxu0
        %v2016 = vpop.f32.mrb[0].mxu0
        %v2017 = vadd.f32 0.0, %v2016
        %v2018 = vpop.f32.mrb[0].mxu0
        %2019 = vmatprep.mubr.bf16.mxu0 0
        %2020 = vmatmul.mubr.bf16.gmra.mrb[0].mxu0 %v1944
        %v2021 = vpop.f32.mrb[0].mxu0
        %v2022 = vadd.f32 0.0, %v2021
        %v2023 = vpop.f32.mrb[0].mxu0
        %v2024 = vpop.f32.mrb[0].mxu0
        %v2025 = vadd.f32 0.0, %v2024
        %v2026 = vpop.f32.mrb[0].mxu0
        %2027 = vmatprep.mubr.bf16.mxu0 0
        %2028 = vmatmul.mubr.bf16.gmra.mrb[0].mxu0 %v1947
        %v2029 = vpop.f32.mrb[0].mxu0
        %v2030 = vadd.f32 0.0, %v2029
        %v2031 = vpop.f32.mrb[0].mxu0
        %v2032 = vpop.f32.mrb[0].mxu0
        %v2033 = vadd.f32 0.0, %v2032
        %v2034 = vpop.f32.mrb[0].mxu0
        %2035 = vmatprep.mubr.bf16.mxu0 0
        %2036 = vmatmul.mubr.bf16.gmra.mrb[0].mxu0 %v1950
        %v2037 = vpop.f32.mrb[0].mxu0
        %v2038 = vadd.f32 0.0, %v2037
        %v2039 = vpop.f32.mrb[0].mxu0
        %v2040 = vpop.f32.mrb[0].mxu0
        %v2041 = vadd.f32 0.0, %v2040
        %v2042 = vpop.f32.mrb[0].mxu0
        %2043 = vmatprep.mubr.bf16.mxu0 0
        %2044 = vmatmul.mubr.bf16.gmra.mrb[0].mxu0 %v1953
        %v2045 = vpop.f32.mrb[0].mxu0
        %v2046 = vadd.f32 0.0, %v2045
        %v2047 = vpop.f32.mrb[0].mxu0
        %v2048 = vpop.f32.mrb[0].mxu0
        %v2049 = vadd.f32 0.0, %v2048
        %v2050 = vpop.f32.mrb[0].mxu0
        %2051 = vdwg.mxu0
        %v2060 = vunpack.c.l.b16 %v1883
        %v2061 = vunpack.c.l.b16 %v1884
        %v2062 = vunpack.c.l.b16 %v1885
        %v2063 = vunpack.c.l.b16 %v1886
        %v2064 = vunpack.c.l.b16 %v1887
        %v2065 = vunpack.c.l.b16 %v1888
        %v2066 = vunpack.c.l.b16 %v1889
        %v2067 = vunpack.c.l.b16 %v1890
        %v2068 = vpack.c.b16 %v2061, %v2060
        %v2069 = vpack.c.b16 %v2063, %v2062
        %v2070 = vpack.c.b16 %v2065, %v2064
        %v2071 = vpack.c.b16 %v2067, %v2066
        %v2077 = vsel %vm1508, %v1875, 0
        %v2080 = vsel %vm1508, %v1876, 0
        %v2083 = vsel %vm1508, %v1877, 0
        %v2086 = vsel %vm1508, %v1878, 0
        %v2089 = vsel %vm1508, %v1879, 0
        %v2092 = vsel %vm1508, %v1880, 0
        %v2095 = vsel %vm1508, %v1881, 0
        %v2098 = vsel %vm1508, %v1882, 0
        %2100 = vmatprep.subr.bf16.mxu0 0
        %2101 = vmatpush1.bf16.msra.mxu0 %v2068
        %2102 = vmatprep.subr.bf16.mxu0 0
        %2103 = vmatpush1.bf16.msra.mxu0 %v2069
        %2104 = vmatprep.subr.bf16.mxu0 0
        %2105 = vmatpush1.bf16.msra.mxu0 %v2070
        %2106 = vmatprep.subr.bf16.mxu0 0
        %2107 = vmatpush1.bf16.msra.mxu0 %v2071
        %2108 = vmatprep.subr.bf16.mxu0 0
        %2109 = vmatpush1.bf16.msra.mxu0 0
        %2110 = vmatprep.subr.bf16.mxu0 0
        %2111 = vmatpush1.bf16.msra.mxu0 0
        %2112 = vmatprep.subr.bf16.mxu0 0
        %2113 = vmatpush1.bf16.msra.mxu0 0
        %2114 = vmatprep.subr.bf16.mxu0 0
        %2115 = vmatpush1.bf16.msra.mxu0 0
        %2116 = vmatprep.subr.bf16.mxu0 0
        %2117 = vmatpush1.bf16.msra.mxu0 0
        %2118 = vmatprep.subr.bf16.mxu0 0
        %2119 = vmatpush1.bf16.msra.mxu0 0
        %2120 = vmatprep.subr.bf16.mxu0 0
        %2121 = vmatpush1.bf16.msra.mxu0 0
        %2122 = vmatprep.subr.bf16.mxu0 0
        %2123 = vmatpush1.bf16.msra.mxu0 0
        %2124 = vmatprep.subr.bf16.mxu0 0
        %2125 = vmatpush1.bf16.msra.mxu0 0
        %2126 = vmatprep.subr.bf16.mxu0 0
        %2127 = vmatpush1.bf16.msra.mxu0 0
        %2128 = vmatprep.subr.bf16.mxu0 0
        %2129 = vmatpush1.bf16.msra.mxu0 0
        %2130 = vmatprep.subr.bf16.mxu0 0
        %2131 = vmatpush1.bf16.msra.mxu0 0
        %2132 = vmatprep.mubr.bf16.mxu0 0
        %2133 = vmatmul.mubr.bf16.gmra.mrb[0].mxu0 %v2077
        %v2134 = vpop.f32.mrb[0].mxu0
        %v2135 = vadd.f32 %v1990, %v2134
        %v2136 = vpop.f32.mrb[0].mxu0
        %v2137 = vpop.f32.mrb[0].mxu0
        %v2138 = vadd.f32 %v1993, %v2137
        %v2139 = vpop.f32.mrb[0].mxu0
        %2140 = vmatprep.mubr.bf16.mxu0 0
        %2141 = vmatmul.mubr.bf16.gmra.mrb[0].mxu0 %v2080
        %v2142 = vpop.f32.mrb[0].mxu0
        %v2143 = vadd.f32 %v1998, %v2142
        %v2144 = vpop.f32.mrb[0].mxu0
        %v2145 = vpop.f32.mrb[0].mxu0
        %v2146 = vadd.f32 %v2001, %v2145
        %v2147 = vpop.f32.mrb[0].mxu0
        %2148 = vmatprep.mubr.bf16.mxu0 0
        %2149 = vmatmul.mubr.bf16.gmra.mrb[0].mxu0 %v2083
        %v2150 = vpop.f32.mrb[0].mxu0
        %v2151 = vadd.f32 %v2006, %v2150
        %v2152 = vpop.f32.mrb[0].mxu0
        %v2153 = vpop.f32.mrb[0].mxu0
        %v2154 = vadd.f32 %v2009, %v2153
        %v2155 = vpop.f32.mrb[0].mxu0
        %2156 = vmatprep.mubr.bf16.mxu0 0
        %2157 = vmatmul.mubr.bf16.gmra.mrb[0].mxu0 %v2086
        %v2158 = vpop.f32.mrb[0].mxu0
        %v2159 = vadd.f32 %v2014, %v2158
        %v2160 = vpop.f32.mrb[0].mxu0
        %v2161 = vpop.f32.mrb[0].mxu0
        %v2162 = vadd.f32 %v2017, %v2161
        %v2163 = vpop.f32.mrb[0].mxu0
        %2164 = vmatprep.mubr.bf16.mxu0 0
        %2165 = vmatmul.mubr.bf16.gmra.mrb[0].mxu0 %v2089
        %v2166 = vpop.f32.mrb[0].mxu0
        %v2167 = vadd.f32 %v2022, %v2166
        %v2168 = vpop.f32.mrb[0].mxu0
        %v2169 = vpop.f32.mrb[0].mxu0
        %v2170 = vadd.f32 %v2025, %v2169
        %v2171 = vpop.f32.mrb[0].mxu0
        %2172 = vmatprep.mubr.bf16.mxu0 0
        %2173 = vmatmul.mubr.bf16.gmra.mrb[0].mxu0 %v2092
        %v2174 = vpop.f32.mrb[0].mxu0
        %v2175 = vadd.f32 %v2030, %v2174
        %v2176 = vpop.f32.mrb[0].mxu0
        %v2177 = vpop.f32.mrb[0].mxu0
        %v2178 = vadd.f32 %v2033, %v2177
        %v2179 = vpop.f32.mrb[0].mxu0
        %2180 = vmatprep.mubr.bf16.mxu0 0
        %2181 = vmatmul.mubr.bf16.gmra.mrb[0].mxu0 %v2095
        %v2182 = vpop.f32.mrb[0].mxu0
        %v2183 = vadd.f32 %v2038, %v2182
        %v2184 = vpop.f32.mrb[0].mxu0
        %v2185 = vpop.f32.mrb[0].mxu0
        %v2186 = vadd.f32 %v2041, %v2185
        %v2187 = vpop.f32.mrb[0].mxu0
        %2188 = vmatprep.mubr.bf16.mxu0 0
        %2189 = vmatmul.mubr.bf16.gmra.mrb[0].mxu0 %v2098
        %v2190 = vpop.f32.mrb[0].mxu0
        %v2191 = vadd.f32 %v2046, %v2190
        %v2192 = vpop.f32.mrb[0].mxu0
        %v2193 = vpop.f32.mrb[0].mxu0
        %v2194 = vadd.f32 %v2049, %v2193
        %v2195 = vpop.f32.mrb[0].mxu0
        %2196 = vdwg.mxu0
        %v2197 = vld [vmem:[#allocation24] sm:$0x1]
        %v2199 = vlaneseq
        %v2200 = vshrl.u32 %v2199, 7
        %v2201 = vsub.s32 0, %v2200
        %v2202 = vrot.slane %v2197, %v2201
        %v2204 = vmul.f32 %v2135, %v2202
        %v2205 = vmul.f32 %v2138, %v2202
        %v2206 = vmul.f32 %v2143, %v2202
        %v2207 = vmul.f32 %v2146, %v2202
        %v2208 = vmul.f32 %v2151, %v2202
        %v2209 = vmul.f32 %v2154, %v2202
        %v2210 = vmul.f32 %v2159, %v2202
        %v2211 = vmul.f32 %v2162, %v2202
        %v2212 = vmul.f32 %v2167, %v2202
        %v2213 = vmul.f32 %v2170, %v2202
        %v2214 = vmul.f32 %v2175, %v2202
        %v2215 = vmul.f32 %v2178, %v2202
        %v2216 = vmul.f32 %v2183, %v2202
        %v2217 = vmul.f32 %v2186, %v2202
        %v2218 = vmul.f32 %v2191, %v2202
        %v2219 = vmul.f32 %v2194, %v2202
        %v2220 = vld [vmem:[#allocation25] sm:$0x1]
        %v2222 = vlaneseq
        %v2223 = vshrl.u32 %v2222, 7
        %v2224 = vsub.s32 0, %v2223
        %v2225 = vrot.slane %v2220, %v2224
        %v2227 = vadd.f32 %v2204, %v2225
        %v2228 = vadd.f32 %v2205, %v2225
        %v2229 = vadd.f32 %v2206, %v2225
        %v2230 = vadd.f32 %v2207, %v2225
        %v2231 = vadd.f32 %v2208, %v2225
        %v2232 = vadd.f32 %v2209, %v2225
        %v2233 = vadd.f32 %v2210, %v2225
        %v2234 = vadd.f32 %v2211, %v2225
        %v2235 = vadd.f32 %v2212, %v2225
        %v2236 = vadd.f32 %v2213, %v2225
        %v2237 = vadd.f32 %v2214, %v2225
        %v2238 = vadd.f32 %v2215, %v2225
        %v2239 = vadd.f32 %v2216, %v2225
        %v2240 = vadd.f32 %v2217, %v2225
        %v2241 = vadd.f32 %v2218, %v2225
        %v2242 = vadd.f32 %v2219, %v2225
        %s2243 = sld [smem:[#allocation3]]
        %v2244 = vstv %s2243
        %v2245 = vmul.f32 %v2244, %v2227
        %v2246 = vmul.f32 %v2244, %v2228
        %v2247 = vmul.f32 %v2244, %v2229
        %v2248 = vmul.f32 %v2244, %v2230
        %v2249 = vmul.f32 %v2244, %v2231
        %v2250 = vmul.f32 %v2244, %v2232
        %v2251 = vmul.f32 %v2244, %v2233
        %v2252 = vmul.f32 %v2244, %v2234
        %v2253 = vmul.f32 %v2244, %v2235
        %v2254 = vmul.f32 %v2244, %v2236
        %v2255 = vmul.f32 %v2244, %v2237
        %v2256 = vmul.f32 %v2244, %v2238
        %v2257 = vmul.f32 %v2244, %v2239
        %v2258 = vmul.f32 %v2244, %v2240
        %v2259 = vmul.f32 %v2244, %v2241
        %v2260 = vmul.f32 %v2244, %v2242
        %v2261 = vadd.f32 %v2245, %v1444
        %v2262 = vadd.f32 %v2246, %v1445
        %v2263 = vadd.f32 %v2247, %v1446
        %v2264 = vadd.f32 %v2248, %v1447
        %v2265 = vadd.f32 %v2249, %v1448
        %v2266 = vadd.f32 %v2250, %v1449
        %v2267 = vadd.f32 %v2251, %v1450
        %v2268 = vadd.f32 %v2252, %v1451
        %v2269 = vadd.f32 %v2253, %v1452
        %v2270 = vadd.f32 %v2254, %v1453
        %v2271 = vadd.f32 %v2255, %v1454
        %v2272 = vadd.f32 %v2256, %v1455
        %v2273 = vadd.f32 %v2257, %v1456
        %v2274 = vadd.f32 %v2258, %v1457
        %v2275 = vadd.f32 %v2259, %v1458
        %v2276 = vadd.f32 %v2260, %v1459
        %v2277 = vpack.c.bf16 %v2262, %v2261
        %v2278 = vpack.c.bf16 %v2264, %v2263
        %v2279 = vpack.c.bf16 %v2266, %v2265
        %v2280 = vpack.c.bf16 %v2268, %v2267
        %v2281 = vpack.c.bf16 %v2270, %v2269
        %v2282 = vpack.c.bf16 %v2272, %v2271
        %v2283 = vpack.c.bf16 %v2274, %v2273
        %v2284 = vpack.c.bf16 %v2276, %v2275
        %v2293 = vunpack.c.l.b16 %v2277
        %v2294 = vunpack.c.h.b16 %v2277
        %v2295 = vunpack.c.l.b16 %v2278
        %v2296 = vunpack.c.h.b16 %v2278
        %v2297 = vunpack.c.l.b16 %v2279
        %v2298 = vunpack.c.h.b16 %v2279
        %v2299 = vunpack.c.l.b16 %v2280
        %v2300 = vunpack.c.h.b16 %v2280
        %v2301 = vunpack.c.l.b16 %v2281
        %v2302 = vunpack.c.h.b16 %v2281
        %v2303 = vunpack.c.l.b16 %v2282
        %v2304 = vunpack.c.h.b16 %v2282
        %v2305 = vunpack.c.l.b16 %v2283
        %v2306 = vunpack.c.h.b16 %v2283
        %v2307 = vunpack.c.l.b16 %v2284
        %v2308 = vunpack.c.h.b16 %v2284
        %v2309 = vpack.c.b16 %v2293, %v2293
        %v2310 = vpack.c.b16 %v2294, %v2294
        %v2311 = vpack.c.b16 %v2295, %v2295
        %v2312 = vpack.c.b16 %v2296, %v2296
        %v2313 = vpack.c.b16 %v2297, %v2297
        %v2314 = vpack.c.b16 %v2298, %v2298
        %v2315 = vpack.c.b16 %v2299, %v2299
        %v2316 = vpack.c.b16 %v2300, %v2300
        %v2317 = vpack.c.b16 %v2301, %v2301
        %v2318 = vpack.c.b16 %v2302, %v2302
        %v2319 = vpack.c.b16 %v2303, %v2303
        %v2320 = vpack.c.b16 %v2304, %v2304
        %v2321 = vpack.c.b16 %v2305, %v2305
        %v2322 = vpack.c.b16 %v2306, %v2306
        %v2323 = vpack.c.b16 %v2307, %v2307
        %v2324 = vpack.c.b16 %v2308, %v2308
        %vm2341 = vcmask 519168
        %2342 = vst.msk [vmem:[%s747] sm:$0xf] %vm2341, %v2309
        %2343 = vst.msk [vmem:[%s747 + $0x4] sm:$0xf] %vm2341, %v2310
        %2344 = vst.msk [vmem:[%s747 + $0x8] sm:$0xf] %vm2341, %v2311
        %2345 = vst.msk [vmem:[%s747 + $0xc] sm:$0xf] %vm2341, %v2312
        %2346 = vst.msk [vmem:[%s747 + $0x10] sm:$0xf] %vm2341, %v2313
        %2347 = vst.msk [vmem:[%s747 + $0x14] sm:$0xf] %vm2341, %v2314
        %2348 = vst.msk [vmem:[%s747 + $0x18] sm:$0xf] %vm2341, %v2315
        %2349 = vst.msk [vmem:[%s747 + $0x1c] sm:$0xf] %vm2341, %v2316
        %2350 = vst.msk [vmem:[%s747 + $0x20] sm:$0xf] %vm2341, %v2317
        %2351 = vst.msk [vmem:[%s747 + $0x24] sm:$0xf] %vm2341, %v2318
        %2352 = vst.msk [vmem:[%s747 + $0x28] sm:$0xf] %vm2341, %v2319
        %2353 = vst.msk [vmem:[%s747 + $0x2c] sm:$0xf] %vm2341, %v2320
        %2354 = vst.msk [vmem:[%s747 + $0x30] sm:$0xf] %vm2341, %v2321
        %2355 = vst.msk [vmem:[%s747 + $0x34] sm:$0xf] %vm2341, %v2322
        %2356 = vst.msk [vmem:[%s747 + $0x38] sm:$0xf] %vm2341, %v2323
        %2357 = vst.msk [vmem:[%s747 + $0x3c] sm:$0xf] %vm2341, %v2324
        %s2358 = sand.u32 %s404, 1
        %s2359 = scalar_lea.sflag [#allocation6], %s2358
        %s2360 = sand.u32 %s404, 1
        %s2361 = smul.addr %s2360, 64
        %s2362 = scalar_lea.vmem [#allocation27], %s2361
        // Predicated region
        $region141: #{spatial_temp_attn_fwd.3} parent=79 // pred_check
          %p2363 = pneg %p414
        $region142: #{spatial_temp_attn_fwd.3} parent=79 // pred_check_branch
          %2365 = sbr.rel (%p2363) target = $region144
        $region143: #{spatial_temp_attn_fwd.3} parent=79 // pred_region
          %s2366 = smul.u32 16, %s49
          %s2368 = ssub.s32 1024, 1024
          %2369 = vsyncadd %s2359, %s2368
          %s2370 = smul.addr %s48, 32
          %s2371 = sadd.s32 %s2366, %s2370
          %s2372 = smul.addr %s47, 96
          %s2373 = sadd.s32 %s2371, %s2372
          %s2374 = smul.addr %s2373, 64
          %s2375 = scalar_lea.hbm %s15, %s2374
          %s2376 = sshll.u32 %s2362, 4
          %s2377 = int_to_ptr.vmem [resolvable:$true] %s2376
          %2382 = dma.vmem_to_hbm [thread:$0]  %s2377, 1024, %s2375, %s2359, 64, 64, 4
        $region144: #{spatial_temp_attn_fwd.3} parent=79 // pred_fallthru
          _
      $region80: #{spatial_temp_attn_fwd.3} parent=5 // pred_fallthru
        _
      %p2383 = scmp.le.s32.totalorder 2, %s37
      // Predicated region
      $region145: #{spatial_temp_attn_fwd.3} parent=5 // pred_check
        %p2384 = pneg %p2383
      $region146: #{spatial_temp_attn_fwd.3} parent=5 // pred_check_branch
        %2386 = sbr.rel (%p2384) target = $region148
      $region147: #{spatial_temp_attn_fwd.3} parent=5 // pred_region
        %s2387 = ssub.s32 %s37, 2
        // Predicated region
        $region149: #{spatial_temp_attn_fwd.3} parent=147 // pred_check
          %p2388 = pneg %p420
        $region150: #{spatial_temp_attn_fwd.3} parent=147 // pred_check_branch
          %2390 = sbr.rel (%p2388) target = $region152
        $region151: #{spatial_temp_attn_fwd.3} parent=147 // pred_region
          %s2391 = sand.u32 %s405, 1
          %s2392 = scalar_lea.sflag [#allocation6], %s2391
          %s2393 = sand.u32 %s405, 1
          %s2394 = smul.addr %s2393, 64
          %s2395 = scalar_lea.vmem [#allocation27], %s2394
          %2396 = dma.done %s2392, 1024
        $region152: #{spatial_temp_attn_fwd.3} parent=147 // pred_fallthru
          _
      $region148: #{spatial_temp_attn_fwd.3} parent=5 // pred_fallthru
        _
    $region6: #{spatial_temp_attn_fwd.3} parent=1 // loop_footer
      %s41 = sadd.s32 1, %s37
    $region7: #{spatial_temp_attn_fwd.3} parent=1 // loop_footer_branch
      %36 = sbr.rel target = $region3
    $region8: #{spatial_temp_attn_fwd.3} parent=1 // loop_exit
      _
    %2397 = vsyncpa [#allocation5], 1
    %s2398 = scalar_lea.sflag [#allocation5], 1
    %2399 = vsyncpa %s2398, 1
    %2400 = vsyncpa [#allocation8], 1
    %s2401 = scalar_lea.sflag [#allocation8], 1
    %2402 = vsyncpa %s2401, 1
    %2403 = vsyncpa [#allocation11], 1
    %2404 = vsyncpa [#allocation14], 1
    %2405 = vsyncpa [#allocation17], 1
    %2406 = vsyncpa [#allocation20], 1
    %2407 = vsyncpa [#allocation23], 1
    %2408 = vsyncpa [#allocation26], 1
    %2409 = vsyncpa [#allocation6], 1
    %s2410 = scalar_lea.sflag [#allocation6], 1
    %2411 = vsyncpa %s2410, 1

// kernel: spatial_temp_attn_fwd.5
$region0: #{spatial_temp_attn_fwd.5}
  #allocation0 [shape = 'u32[]', space=smem, size = 0x4, offset = 0x4, fixed_abs, tag = 'smem constant byte address 0x4 - core index']
  #allocation1 [shape = 'u32[144,128]{1,0:T(1,128)}', space=vmem, size = 0x12000, scoped, tag = 'internal scratch']
  #allocation2 [shape = 'bf16[3,256,32]{2,1,0:T(16,128)(2,1)}', space=vmem, size = 0x30000, scoped, tag = 'scratch operand']
  #allocation3 [shape = 'bf16[3,256,32]{2,1,0:T(16,128)(2,1)}', space=vmem, size = 0x30000, scoped, tag = 'scratch operand']
  #allocation27 [shape = 's32[]', space=sflag, size = 0x4, offset = 0, fixed_abs, tag = 'sflag constant byte address 0x0 - dummy sync flag']
  %s0 = inlined_call_operand.hbm [shape: bf16[2,3,256,64], index: 0, kind: input, shape index: {}, may-alias: {0,1}]
  %s1 = inlined_call_operand.hbm [shape: bf16[2,3,256,64], index: 1, kind: input, shape index: {}, may-alias: {0,1}]
  %s2 = inlined_call_operand.hbm [shape: bf16[64,32], index: 2, kind: input, shape index: {}]
  %s3 = inlined_call_operand.hbm [shape: f32[1,32], index: 3, kind: input, shape index: {}]
  %s4 = inlined_call_operand.hbm [shape: f32[1,32], index: 4, kind: input, shape index: {}]
  %s5 = inlined_call_operand.hbm [shape: bf16[64,32], index: 5, kind: input, shape index: {}]
  %s6 = inlined_call_operand.hbm [shape: f32[1,32], index: 6, kind: input, shape index: {}]
  %s7 = inlined_call_operand.hbm [shape: bf16[32,64], index: 7, kind: input, shape index: {}]
  %s8 = inlined_call_operand.hbm [shape: f32[1,64], index: 8, kind: input, shape index: {}]
  %s9 = inlined_call_operand.hbm [shape: bf16[64,64], index: 9, kind: input, shape index: {}]
  %s10 = inlined_call_operand.hbm [shape: bf16[64,64], index: 10, kind: input, shape index: {}]
  %s11 = inlined_call_operand.hbm [shape: f32[1,64], index: 11, kind: input, shape index: {}]
  %s12 = inlined_call_operand.hbm [shape: f32[2,3,256,64], index: 12, kind: output, shape index: {0}]
  %s13 = inlined_call_operand.hbm [shape: f32[2,2,256,256], index: 13, kind: output, shape index: {1}]
  %14 = xla_tuple %s12, %s13
  %s15 = sld [smem:[#allocation0]]
  $region152: #{spatial_temp_attn_fwd.5} parent=0
    _
  %s17 = ssub.s32 1, %s15
  %s18 = scalar_select 0, %s17, %s15
  $region1: #{spatial_temp_attn_fwd.5} parent=0
    #allocation4 [shape = 'u8[393216]{0}', space=vmem, size = 0x60000, scoped, tag = 'input window, operand 0']
    #allocation5 [shape = 's32[2]{0}', space=sflag, size = 0x8, scoped, tag = 'scoped memory for spatial_temp_attn_fwd.5']
    #allocation6 [shape = 's32[2]{0}', space=sflag, size = 0x8, scoped, tag = 'scoped memory for spatial_temp_attn_fwd.5']
    #allocation7 [shape = 'u8[65536]{0}', space=vmem, size = 0x10000, scoped, tag = 'input window, operand 1']
    #allocation8 [shape = 's32[2]{0}', space=sflag, size = 0x8, scoped, tag = 'scoped memory for spatial_temp_attn_fwd.5']
    #allocation9 [shape = 'u8[16384]{0}', space=vmem, size = 0x4000, scoped, tag = 'input window, operand 2, single buffered']
    #allocation10 [shape = 'u8[512]{0}', space=vmem, size = 0x400, scoped, tag = 'input window, operand 3, single buffered']
    #allocation11 [shape = 's32[1]{0}', space=sflag, size = 0x4, scoped, tag = 'scoped memory for spatial_temp_attn_fwd.5']
    #allocation12 [shape = 'u8[512]{0}', space=vmem, size = 0x400, scoped, tag = 'input window, operand 4, single buffered']
    #allocation13 [shape = 'u8[16384]{0}', space=vmem, size = 0x4000, scoped, tag = 'input window, operand 5, single buffered']
    #allocation14 [shape = 's32[1]{0}', space=sflag, size = 0x4, scoped, tag = 'scoped memory for spatial_temp_attn_fwd.5']
    #allocation15 [shape = 'u8[512]{0}', space=vmem, size = 0x400, scoped, tag = 'input window, operand 6, single buffered']
    #allocation16 [shape = 'u8[8192]{0}', space=vmem, size = 0x2000, scoped, tag = 'input window, operand 7, single buffered']
    #allocation17 [shape = 's32[1]{0}', space=sflag, size = 0x4, scoped, tag = 'scoped memory for spatial_temp_attn_fwd.5']
    #allocation18 [shape = 'u8[512]{0}', space=vmem, size = 0x400, scoped, tag = 'input window, operand 8, single buffered']
    #allocation19 [shape = 'u8[16384]{0}', space=vmem, size = 0x4000, scoped, tag = 'input window, operand 9, single buffered']
    #allocation20 [shape = 's32[1]{0}', space=sflag, size = 0x4, scoped, tag = 'scoped memory for spatial_temp_attn_fwd.5']
    #allocation21 [shape = 'u8[16384]{0}', space=vmem, size = 0x4000, scoped, tag = 'input window, operand 10, single buffered']
    #allocation22 [shape = 'u8[512]{0}', space=vmem, size = 0x400, scoped, tag = 'input window, operand 11, single buffered']
    #allocation23 [shape = 's32[1]{0}', space=sflag, size = 0x4, scoped, tag = 'scoped memory for spatial_temp_attn_fwd.5']
    #allocation24 [shape = 'u8[131072]{0}', space=vmem, size = 0x20000, scoped, tag = 'output window, operand 0']
    #allocation25 [shape = 'u8[524288]{0}', space=vmem, size = 0x80000, scoped, tag = 'output window, operand 1']
    #allocation26 [shape = 's32[2]{0}', space=sflag, size = 0x8, scoped, tag = 'scoped memory for spatial_temp_attn_fwd.5']
    %19 = vsyncpa [#allocation5], 0
    %s20 = scalar_lea.sflag [#allocation5], 1
    %21 = vsyncpa %s20, 0
    %22 = vsyncpa [#allocation8], 0
    %s23 = scalar_lea.sflag [#allocation8], 1
    %24 = vsyncpa %s23, 0
    %25 = vsyncpa [#allocation11], 0
    %26 = vsyncpa [#allocation14], 0
    %27 = vsyncpa [#allocation17], 0
    %28 = vsyncpa [#allocation20], 0
    %29 = vsyncpa [#allocation23], 0
    %30 = vsyncpa [#allocation6], 0
    %s31 = scalar_lea.sflag [#allocation6], 1
    %32 = vsyncpa %s31, 0
    %33 = vsyncpa [#allocation26], 0
    %s34 = scalar_lea.sflag [#allocation26], 1
    %35 = vsyncpa %s34, 0
    loop: start=0, step=1, limit=14
    $region2: #{spatial_temp_attn_fwd.5} parent=1 // loop_pre_header
      _
    $region3: #{spatial_temp_attn_fwd.5} parent=1 // loop_header
      %s37 = sphi 0, %s41
      %p38 = scmp.ge.s32.totalorder %s37, 14
      %s44 = sphi 0, %s63
      %s45 = sphi 0, %s59
      %s46 = sphi 0, %s55
      %s47 = sphi 0, %s44
      %s48 = sphi 0, %s45
      %s49 = sphi 0, %s46
      %s50 = sphi 0, %s47
      %s51 = sphi 0, %s48
      %s52 = sphi 0, %s49
      %s66 = sphi 0, %s68
      %s69 = sphi 0, %s66
      %s70 = sphi 0, %s69
      %s86 = sphi 0, %s70
      %s96 = sphi 0, %s98
      %s99 = sphi 0, %s96
      %s100 = sphi 0, %s99
      %s116 = sphi 0, %s100
      %s120 = sphi 0, %s120
      %s122 = sphi 0, %s120
      %s123 = sphi 0, %s122
      %s137 = sphi 0, %s123
      %s141 = sphi 0, %s141
      %s143 = sphi 0, %s141
      %s144 = sphi 0, %s143
      %s158 = sphi 0, %s144
      %s162 = sphi 0, %s162
      %s164 = sphi 0, %s162
      %s165 = sphi 0, %s164
      %s179 = sphi 0, %s165
      %s183 = sphi 0, %s183
      %s185 = sphi 0, %s183
      %s186 = sphi 0, %s185
      %s200 = sphi 0, %s186
      %s204 = sphi 0, %s204
      %s206 = sphi 0, %s204
      %s207 = sphi 0, %s206
      %s221 = sphi 0, %s207
      %s225 = sphi 0, %s225
      %s227 = sphi 0, %s225
      %s228 = sphi 0, %s227
      %s242 = sphi 0, %s228
      %s246 = sphi 0, %s246
      %s248 = sphi 0, %s246
      %s249 = sphi 0, %s248
      %s263 = sphi 0, %s249
      %s267 = sphi 0, %s267
      %s269 = sphi 0, %s267
      %s270 = sphi 0, %s269
      %s284 = sphi 0, %s270
      %s288 = sphi 0, %s288
      %s290 = sphi 0, %s288
      %s291 = sphi 0, %s290
      %s305 = sphi 0, %s291
      %s309 = sphi 0, %s309
      %s311 = sphi 0, %s309
      %s312 = sphi 0, %s311
      %s326 = sphi 0, %s312
      %s336 = sphi 0, %s338
      %s339 = sphi 0, %s336
      %s340 = sphi 0, %s339
      %s356 = sphi 0, %s340
      %s364 = sphi 0, %s366
      %s367 = sphi 0, %s364
      %s368 = sphi 0, %s367
      %s384 = sphi 0, %s368
    $region4: #{spatial_temp_attn_fwd.5} parent=1 // loop_header_branch
      %40 = sbr.rel (%p38) target = $region8
    $region5: #{spatial_temp_attn_fwd.5} parent=1 // loop_body
      %s42 = ssub.s32 %s37, 1
      %s43 = ssub.s32 %s37, 2
      %s53 = sadd.s32 1, %s46
      %p54 = scmp.ge.s32.totalorder %s53, 3
      %s55 = scalar_select %p54, 0, %s53
      %s56 = sadd.s32 1, %s45
      %s57 = scalar_select %p54, %s56, %s45
      %p58 = scmp.ge.s32.totalorder %s57, 2
      %s59 = scalar_select %p58, 0, %s57
      %s60 = sadd.s32 1, %s44
      %s61 = scalar_select %p58, %s60, %s44
      %p62 = scmp.ge.s32.totalorder %s61, 2
      %s63 = scalar_select %p62, 0, %s61
      %s64 = ssub.s32 %s44, %s63
      %p65 = scmp.eq.s32.totalorder %s64, 0
      %s67 = sadd.s32 %s66, 1
      %s68 = scalar_select %p65, %s66, %s67
      %p71 = pneg %p65
      %p72 = scmp.eq.s32.totalorder %s37, 11
      %p73 = por %p71, %p72
      %p74 = scmp.ne.s32.totalorder %s66, %s69
      %p75 = scmp.eq.s32.totalorder %s37, 0
      %p76 = por %p74, %p75
      %p77 = scmp.ne.s32.totalorder %s66, %s69
      %p78 = scmp.eq.s32.totalorder %s42, 11
      %p79 = por %p77, %p78
      %p80 = scmp.ne.s32.totalorder %s69, %s70
      %p81 = scmp.eq.s32.totalorder %s42, 0
      %p82 = por %p80, %p81
      %p83 = scmp.ne.s32.totalorder %s69, %s70
      %p84 = scmp.eq.s32.totalorder %s43, 11
      %p85 = por %p83, %p84
      %p87 = scmp.ne.s32.totalorder %s70, %s86
      %p88 = scmp.eq.s32.totalorder %s43, 0
      %p89 = por %p87, %p88
      %s90 = ssub.s32 %s44, %s63
      %s91 = ssub.s32 %s46, %s55
      %s92 = sor.u32 %s90, %s91
      %s93 = ssub.s32 %s45, %s59
      %s94 = sor.u32 %s92, %s93
      %p95 = scmp.eq.s32.totalorder %s94, 0
      %s97 = sadd.s32 %s96, 1
      %s98 = scalar_select %p95, %s96, %s97
      %p101 = pneg %p95
      %p102 = scmp.eq.s32.totalorder %s37, 11
      %p103 = por %p101, %p102
      %p104 = scmp.ne.s32.totalorder %s96, %s99
      %p105 = scmp.eq.s32.totalorder %s37, 0
      %p106 = por %p104, %p105
      %p107 = scmp.ne.s32.totalorder %s96, %s99
      %p108 = scmp.eq.s32.totalorder %s42, 11
      %p109 = por %p107, %p108
      %p110 = scmp.ne.s32.totalorder %s99, %s100
      %p111 = scmp.eq.s32.totalorder %s42, 0
      %p112 = por %p110, %p111
      %p113 = scmp.ne.s32.totalorder %s99, %s100
      %p114 = scmp.eq.s32.totalorder %s43, 11
      %p115 = por %p113, %p114
      %p117 = scmp.ne.s32.totalorder %s100, %s116
      %p118 = scmp.eq.s32.totalorder %s43, 0
      %p119 = por %p117, %p118
      %s121 = sadd.s32 %s120, 1
      %p124 = scmp.eq.s32.totalorder %s37, 11
      %p125 = scmp.ne.s32.totalorder %s120, %s122
      %p126 = scmp.eq.s32.totalorder %s37, 0
      %p127 = por %p125, %p126
      %p128 = scmp.ne.s32.totalorder %s120, %s122
      %p129 = scmp.eq.s32.totalorder %s42, 11
      %p130 = por %p128, %p129
      %p131 = scmp.ne.s32.totalorder %s122, %s123
      %p132 = scmp.eq.s32.totalorder %s42, 0
      %p133 = por %p131, %p132
      %p134 = scmp.ne.s32.totalorder %s122, %s123
      %p135 = scmp.eq.s32.totalorder %s43, 11
      %p136 = por %p134, %p135
      %p138 = scmp.ne.s32.totalorder %s123, %s137
      %p139 = scmp.eq.s32.totalorder %s43, 0
      %p140 = por %p138, %p139
      %s142 = sadd.s32 %s141, 1
      %p145 = scmp.eq.s32.totalorder %s37, 11
      %p146 = scmp.ne.s32.totalorder %s141, %s143
      %p147 = scmp.eq.s32.totalorder %s37, 0
      %p148 = por %p146, %p147
      %p149 = scmp.ne.s32.totalorder %s141, %s143
      %p150 = scmp.eq.s32.totalorder %s42, 11
      %p151 = por %p149, %p150
      %p152 = scmp.ne.s32.totalorder %s143, %s144
      %p153 = scmp.eq.s32.totalorder %s42, 0
      %p154 = por %p152, %p153
      %p155 = scmp.ne.s32.totalorder %s143, %s144
      %p156 = scmp.eq.s32.totalorder %s43, 11
      %p157 = por %p155, %p156
      %p159 = scmp.ne.s32.totalorder %s144, %s158
      %p160 = scmp.eq.s32.totalorder %s43, 0
      %p161 = por %p159, %p160
      %s163 = sadd.s32 %s162, 1
      %p166 = scmp.eq.s32.totalorder %s37, 11
      %p167 = scmp.ne.s32.totalorder %s162, %s164
      %p168 = scmp.eq.s32.totalorder %s37, 0
      %p169 = por %p167, %p168
      %p170 = scmp.ne.s32.totalorder %s162, %s164
      %p171 = scmp.eq.s32.totalorder %s42, 11
      %p172 = por %p170, %p171
      %p173 = scmp.ne.s32.totalorder %s164, %s165
      %p174 = scmp.eq.s32.totalorder %s42, 0
      %p175 = por %p173, %p174
      %p176 = scmp.ne.s32.totalorder %s164, %s165
      %p177 = scmp.eq.s32.totalorder %s43, 11
      %p178 = por %p176, %p177
      %p180 = scmp.ne.s32.totalorder %s165, %s179
      %p181 = scmp.eq.s32.totalorder %s43, 0
      %p182 = por %p180, %p181
      %s184 = sadd.s32 %s183, 1
      %p187 = scmp.eq.s32.totalorder %s37, 11
      %p188 = scmp.ne.s32.totalorder %s183, %s185
      %p189 = scmp.eq.s32.totalorder %s37, 0
      %p190 = por %p188, %p189
      %p191 = scmp.ne.s32.totalorder %s183, %s185
      %p192 = scmp.eq.s32.totalorder %s42, 11
      %p193 = por %p191, %p192
      %p194 = scmp.ne.s32.totalorder %s185, %s186
      %p195 = scmp.eq.s32.totalorder %s42, 0
      %p196 = por %p194, %p195
      %p197 = scmp.ne.s32.totalorder %s185, %s186
      %p198 = scmp.eq.s32.totalorder %s43, 11
      %p199 = por %p197, %p198
      %p201 = scmp.ne.s32.totalorder %s186, %s200
      %p202 = scmp.eq.s32.totalorder %s43, 0
      %p203 = por %p201, %p202
      %s205 = sadd.s32 %s204, 1
      %p208 = scmp.eq.s32.totalorder %s37, 11
      %p209 = scmp.ne.s32.totalorder %s204, %s206
      %p210 = scmp.eq.s32.totalorder %s37, 0
      %p211 = por %p209, %p210
      %p212 = scmp.ne.s32.totalorder %s204, %s206
      %p213 = scmp.eq.s32.totalorder %s42, 11
      %p214 = por %p212, %p213
      %p215 = scmp.ne.s32.totalorder %s206, %s207
      %p216 = scmp.eq.s32.totalorder %s42, 0
      %p217 = por %p215, %p216
      %p218 = scmp.ne.s32.totalorder %s206, %s207
      %p219 = scmp.eq.s32.totalorder %s43, 11
      %p220 = por %p218, %p219
      %p222 = scmp.ne.s32.totalorder %s207, %s221
      %p223 = scmp.eq.s32.totalorder %s43, 0
      %p224 = por %p222, %p223
      %s226 = sadd.s32 %s225, 1
      %p229 = scmp.eq.s32.totalorder %s37, 11
      %p230 = scmp.ne.s32.totalorder %s225, %s227
      %p231 = scmp.eq.s32.totalorder %s37, 0
      %p232 = por %p230, %p231
      %p233 = scmp.ne.s32.totalorder %s225, %s227
      %p234 = scmp.eq.s32.totalorder %s42, 11
      %p235 = por %p233, %p234
      %p236 = scmp.ne.s32.totalorder %s227, %s228
      %p237 = scmp.eq.s32.totalorder %s42, 0
      %p238 = por %p236, %p237
      %p239 = scmp.ne.s32.totalorder %s227, %s228
      %p240 = scmp.eq.s32.totalorder %s43, 11
      %p241 = por %p239, %p240
      %p243 = scmp.ne.s32.totalorder %s228, %s242
      %p244 = scmp.eq.s32.totalorder %s43, 0
      %p245 = por %p243, %p244
      %s247 = sadd.s32 %s246, 1
      %p250 = scmp.eq.s32.totalorder %s37, 11
      %p251 = scmp.ne.s32.totalorder %s246, %s248
      %p252 = scmp.eq.s32.totalorder %s37, 0
      %p253 = por %p251, %p252
      %p254 = scmp.ne.s32.totalorder %s246, %s248
      %p255 = scmp.eq.s32.totalorder %s42, 11
      %p256 = por %p254, %p255
      %p257 = scmp.ne.s32.totalorder %s248, %s249
      %p258 = scmp.eq.s32.totalorder %s42, 0
      %p259 = por %p257, %p258
      %p260 = scmp.ne.s32.totalorder %s248, %s249
      %p261 = scmp.eq.s32.totalorder %s43, 11
      %p262 = por %p260, %p261
      %p264 = scmp.ne.s32.totalorder %s249, %s263
      %p265 = scmp.eq.s32.totalorder %s43, 0
      %p266 = por %p264, %p265
      %s268 = sadd.s32 %s267, 1
      %p271 = scmp.eq.s32.totalorder %s37, 11
      %p272 = scmp.ne.s32.totalorder %s267, %s269
      %p273 = scmp.eq.s32.totalorder %s37, 0
      %p274 = por %p272, %p273
      %p275 = scmp.ne.s32.totalorder %s267, %s269
      %p276 = scmp.eq.s32.totalorder %s42, 11
      %p277 = por %p275, %p276
      %p278 = scmp.ne.s32.totalorder %s269, %s270
      %p279 = scmp.eq.s32.totalorder %s42, 0
      %p280 = por %p278, %p279
      %p281 = scmp.ne.s32.totalorder %s269, %s270
      %p282 = scmp.eq.s32.totalorder %s43, 11
      %p283 = por %p281, %p282
      %p285 = scmp.ne.s32.totalorder %s270, %s284
      %p286 = scmp.eq.s32.totalorder %s43, 0
      %p287 = por %p285, %p286
      %s289 = sadd.s32 %s288, 1
      %p292 = scmp.eq.s32.totalorder %s37, 11
      %p293 = scmp.ne.s32.totalorder %s288, %s290
      %p294 = scmp.eq.s32.totalorder %s37, 0
      %p295 = por %p293, %p294
      %p296 = scmp.ne.s32.totalorder %s288, %s290
      %p297 = scmp.eq.s32.totalorder %s42, 11
      %p298 = por %p296, %p297
      %p299 = scmp.ne.s32.totalorder %s290, %s291
      %p300 = scmp.eq.s32.totalorder %s42, 0
      %p301 = por %p299, %p300
      %p302 = scmp.ne.s32.totalorder %s290, %s291
      %p303 = scmp.eq.s32.totalorder %s43, 11
      %p304 = por %p302, %p303
      %p306 = scmp.ne.s32.totalorder %s291, %s305
      %p307 = scmp.eq.s32.totalorder %s43, 0
      %p308 = por %p306, %p307
      %s310 = sadd.s32 %s309, 1
      %p313 = scmp.eq.s32.totalorder %s37, 11
      %p314 = scmp.ne.s32.totalorder %s309, %s311
      %p315 = scmp.eq.s32.totalorder %s37, 0
      %p316 = por %p314, %p315
      %p317 = scmp.ne.s32.totalorder %s309, %s311
      %p318 = scmp.eq.s32.totalorder %s42, 11
      %p319 = por %p317, %p318
      %p320 = scmp.ne.s32.totalorder %s311, %s312
      %p321 = scmp.eq.s32.totalorder %s42, 0
      %p322 = por %p320, %p321
      %p323 = scmp.ne.s32.totalorder %s311, %s312
      %p324 = scmp.eq.s32.totalorder %s43, 11
      %p325 = por %p323, %p324
      %p327 = scmp.ne.s32.totalorder %s312, %s326
      %p328 = scmp.eq.s32.totalorder %s43, 0
      %p329 = por %p327, %p328
      %s330 = ssub.s32 %s44, %s63
      %s331 = ssub.s32 %s46, %s55
      %s332 = sor.u32 %s330, %s331
      %s333 = ssub.s32 %s45, %s59
      %s334 = sor.u32 %s332, %s333
      %p335 = scmp.eq.s32.totalorder %s334, 0
      %s337 = sadd.s32 %s336, 1
      %s338 = scalar_select %p335, %s336, %s337
      %p341 = pneg %p335
      %p342 = scmp.eq.s32.totalorder %s37, 11
      %p343 = por %p341, %p342
      %p344 = scmp.ne.s32.totalorder %s336, %s339
      %p345 = scmp.eq.s32.totalorder %s37, 0
      %p346 = por %p344, %p345
      %p347 = scmp.ne.s32.totalorder %s336, %s339
      %p348 = scmp.eq.s32.totalorder %s42, 11
      %p349 = por %p347, %p348
      %p350 = scmp.ne.s32.totalorder %s339, %s340
      %p351 = scmp.eq.s32.totalorder %s42, 0
      %p352 = por %p350, %p351
      %p353 = scmp.ne.s32.totalorder %s339, %s340
      %p354 = scmp.eq.s32.totalorder %s43, 11
      %p355 = por %p353, %p354
      %p357 = scmp.ne.s32.totalorder %s340, %s356
      %p358 = scmp.eq.s32.totalorder %s43, 0
      %p359 = por %p357, %p358
      %s360 = ssub.s32 %s44, %s63
      %s361 = ssub.s32 %s45, %s59
      %s362 = sor.u32 %s360, %s361
      %p363 = scmp.eq.s32.totalorder %s362, 0
      %s365 = sadd.s32 %s364, 1
      %s366 = scalar_select %p363, %s364, %s365
      %p369 = pneg %p363
      %p370 = scmp.eq.s32.totalorder %s37, 11
      %p371 = por %p369, %p370
      %p372 = scmp.ne.s32.totalorder %s364, %s367
      %p373 = scmp.eq.s32.totalorder %s37, 0
      %p374 = por %p372, %p373
      %p375 = scmp.ne.s32.totalorder %s364, %s367
      %p376 = scmp.eq.s32.totalorder %s42, 11
      %p377 = por %p375, %p376
      %p378 = scmp.ne.s32.totalorder %s367, %s368
      %p379 = scmp.eq.s32.totalorder %s42, 0
      %p380 = por %p378, %p379
      %p381 = scmp.ne.s32.totalorder %s367, %s368
      %p382 = scmp.eq.s32.totalorder %s43, 11
      %p383 = por %p381, %p382
      %p385 = scmp.ne.s32.totalorder %s368, %s384
      %p386 = scmp.eq.s32.totalorder %s43, 0
      %p387 = por %p385, %p386
      %p388 = scmp.le.s32.totalorder 1, %s37
      %p389 = scmp.lt.s32.totalorder %s37, 13
      %p390 = pnand %p388, %p389
      %p391 = pneg %p390
      // Predicated region
      $region9: #{spatial_temp_attn_fwd.5} parent=5 // pred_check
        _
      $region10: #{spatial_temp_attn_fwd.5} parent=5 // pred_check_branch
        %393 = sbr.rel (%p390) target = $region12
      $region11: #{spatial_temp_attn_fwd.5} parent=5 // pred_region
        %s394 = ssub.s32 %s37, 1
        // Predicated region
        $region13: #{spatial_temp_attn_fwd.5} parent=11 // pred_check
          %p395 = pneg %p133
        $region14: #{spatial_temp_attn_fwd.5} parent=11 // pred_check_branch
          %397 = sbr.rel (%p395) target = $region16
        $region15: #{spatial_temp_attn_fwd.5} parent=11 // pred_region
          %s399 = ssub.s32 512, 512
          %400 = vsyncadd [#allocation8], %s399
          %s401 = sshll.u32 [#allocation9], 4
          %s402 = int_to_ptr.vmem [resolvable:$true] %s401
          %407 = dma.hbm_to_vmem [thread:$0]  %s2, 512, %s402, [#allocation8], 64, 64, 4
        $region16: #{spatial_temp_attn_fwd.5} parent=11 // pred_fallthru
          _
        // Predicated region
        $region17: #{spatial_temp_attn_fwd.5} parent=11 // pred_check
          %p408 = pneg %p154
        $region18: #{spatial_temp_attn_fwd.5} parent=11 // pred_check_branch
          %410 = sbr.rel (%p408) target = $region20
        $region19: #{spatial_temp_attn_fwd.5} parent=11 // pred_region
          %s412 = ssub.s32 16, 16
          %413 = vsyncadd [#allocation11], %s412
          %s415 = sshll.u32 [#allocation10], 4
          %s416 = int_to_ptr.vmem [resolvable:$true] %s415
          %418 = dma.hbm_to_vmem [thread:$0]  %s3, 16, %s416, [#allocation11]
        $region20: #{spatial_temp_attn_fwd.5} parent=11 // pred_fallthru
          _
        // Predicated region
        $region21: #{spatial_temp_attn_fwd.5} parent=11 // pred_check
          %p419 = pneg %p175
        $region22: #{spatial_temp_attn_fwd.5} parent=11 // pred_check_branch
          %421 = sbr.rel (%p419) target = $region24
        $region23: #{spatial_temp_attn_fwd.5} parent=11 // pred_region
          %s423 = ssub.s32 16, 16
          %424 = vsyncadd [#allocation11], %s423
          %s426 = sshll.u32 [#allocation12], 4
          %s427 = int_to_ptr.vmem [resolvable:$true] %s426
          %429 = dma.hbm_to_vmem [thread:$0]  %s4, 16, %s427, [#allocation11]
        $region24: #{spatial_temp_attn_fwd.5} parent=11 // pred_fallthru
          _
        // Predicated region
        $region25: #{spatial_temp_attn_fwd.5} parent=11 // pred_check
          %p430 = pneg %p196
        $region26: #{spatial_temp_attn_fwd.5} parent=11 // pred_check_branch
          %432 = sbr.rel (%p430) target = $region28
        $region27: #{spatial_temp_attn_fwd.5} parent=11 // pred_region
          %s434 = ssub.s32 512, 512
          %435 = vsyncadd [#allocation14], %s434
          %s436 = sshll.u32 [#allocation13], 4
          %s437 = int_to_ptr.vmem [resolvable:$true] %s436
          %442 = dma.hbm_to_vmem [thread:$0]  %s5, 512, %s437, [#allocation14], 64, 64, 4
        $region28: #{spatial_temp_attn_fwd.5} parent=11 // pred_fallthru
          _
        // Predicated region
        $region29: #{spatial_temp_attn_fwd.5} parent=11 // pred_check
          %p443 = pneg %p217
        $region30: #{spatial_temp_attn_fwd.5} parent=11 // pred_check_branch
          %445 = sbr.rel (%p443) target = $region32
        $region31: #{spatial_temp_attn_fwd.5} parent=11 // pred_region
          %s447 = ssub.s32 16, 16
          %448 = vsyncadd [#allocation14], %s447
          %s450 = sshll.u32 [#allocation15], 4
          %s451 = int_to_ptr.vmem [resolvable:$true] %s450
          %453 = dma.hbm_to_vmem [thread:$0]  %s6, 16, %s451, [#allocation14]
        $region32: #{spatial_temp_attn_fwd.5} parent=11 // pred_fallthru
          _
        // Predicated region
        $region33: #{spatial_temp_attn_fwd.5} parent=11 // pred_check
          %p454 = pneg %p238
        $region34: #{spatial_temp_attn_fwd.5} parent=11 // pred_check_branch
          %456 = sbr.rel (%p454) target = $region36
        $region35: #{spatial_temp_attn_fwd.5} parent=11 // pred_region
          %s458 = ssub.s32 256, 256
          %459 = vsyncadd [#allocation17], %s458
          %s460 = sshll.u32 [#allocation16], 4
          %s461 = int_to_ptr.vmem [resolvable:$true] %s460
          %466 = dma.hbm_to_vmem [thread:$0]  %s7, 256, %s461, [#allocation17], 64, 64, 4
        $region36: #{spatial_temp_attn_fwd.5} parent=11 // pred_fallthru
          _
        // Predicated region
        $region37: #{spatial_temp_attn_fwd.5} parent=11 // pred_check
          %p467 = pneg %p259
        $region38: #{spatial_temp_attn_fwd.5} parent=11 // pred_check_branch
          %469 = sbr.rel (%p467) target = $region40
        $region39: #{spatial_temp_attn_fwd.5} parent=11 // pred_region
          %s471 = ssub.s32 16, 16
          %472 = vsyncadd [#allocation17], %s471
          %s474 = sshll.u32 [#allocation18], 4
          %s475 = int_to_ptr.vmem [resolvable:$true] %s474
          %477 = dma.hbm_to_vmem [thread:$0]  %s8, 16, %s475, [#allocation17]
        $region40: #{spatial_temp_attn_fwd.5} parent=11 // pred_fallthru
          _
        // Predicated region
        $region41: #{spatial_temp_attn_fwd.5} parent=11 // pred_check
          %p478 = pneg %p280
        $region42: #{spatial_temp_attn_fwd.5} parent=11 // pred_check_branch
          %480 = sbr.rel (%p478) target = $region44
        $region43: #{spatial_temp_attn_fwd.5} parent=11 // pred_region
          %s482 = ssub.s32 512, 512
          %483 = vsyncadd [#allocation20], %s482
          %s484 = sshll.u32 [#allocation19], 4
          %s485 = int_to_ptr.vmem [resolvable:$true] %s484
          %490 = dma.hbm_to_vmem [thread:$0]  %s9, 512, %s485, [#allocation20], 64, 64, 4
        $region44: #{spatial_temp_attn_fwd.5} parent=11 // pred_fallthru
          _
        // Predicated region
        $region45: #{spatial_temp_attn_fwd.5} parent=11 // pred_check
          %p491 = pneg %p301
        $region46: #{spatial_temp_attn_fwd.5} parent=11 // pred_check_branch
          %493 = sbr.rel (%p491) target = $region48
        $region47: #{spatial_temp_attn_fwd.5} parent=11 // pred_region
          %s495 = ssub.s32 512, 512
          %496 = vsyncadd [#allocation20], %s495
          %s497 = sshll.u32 [#allocation21], 4
          %s498 = int_to_ptr.vmem [resolvable:$true] %s497
          %503 = dma.hbm_to_vmem [thread:$0]  %s10, 512, %s498, [#allocation20], 64, 64, 4
        $region48: #{spatial_temp_attn_fwd.5} parent=11 // pred_fallthru
          _
        // Predicated region
        $region49: #{spatial_temp_attn_fwd.5} parent=11 // pred_check
          %p504 = pneg %p322
        $region50: #{spatial_temp_attn_fwd.5} parent=11 // pred_check_branch
          %506 = sbr.rel (%p504) target = $region52
        $region51: #{spatial_temp_attn_fwd.5} parent=11 // pred_region
          %s508 = ssub.s32 16, 16
          %509 = vsyncadd [#allocation23], %s508
          %s511 = sshll.u32 [#allocation22], 4
          %s512 = int_to_ptr.vmem [resolvable:$true] %s511
          %514 = dma.hbm_to_vmem [thread:$0]  %s11, 16, %s512, [#allocation23]
        $region52: #{spatial_temp_attn_fwd.5} parent=11 // pred_fallthru
          _
      $region12: #{spatial_temp_attn_fwd.5} parent=5 // pred_fallthru
        _
      %p515 = scmp.lt.s32.totalorder %s37, 12
      // Predicated region
      $region53: #{spatial_temp_attn_fwd.5} parent=5 // pred_check
        %p516 = pneg %p515
      $region54: #{spatial_temp_attn_fwd.5} parent=5 // pred_check_branch
        %518 = sbr.rel (%p516) target = $region56
      $region55: #{spatial_temp_attn_fwd.5} parent=5 // pred_region
        // Predicated region
        $region57: #{spatial_temp_attn_fwd.5} parent=55 // pred_check
          %p519 = pneg %p76
        $region58: #{spatial_temp_attn_fwd.5} parent=55 // pred_check_branch
          %521 = sbr.rel (%p519) target = $region60
        $region59: #{spatial_temp_attn_fwd.5} parent=55 // pred_region
          %s522 = sand.u32 %s66, 1
          %s523 = scalar_lea.sflag [#allocation5], %s522
          %s524 = sand.u32 %s66, 1
          %s525 = smul.addr %s524, 384
          %s526 = scalar_lea.vmem [#allocation4], %s525
          %s528 = ssub.s32 6144, 6144
          %529 = vsyncadd %s523, %s528
          %s530 = smul.addr %s44, 96
          %s531 = smul.addr %s530, 64
          %s532 = scalar_lea.hbm %s0, %s531
          %s533 = sshll.u32 %s526, 4
          %s534 = int_to_ptr.vmem [resolvable:$true] %s533
          %539 = dma.hbm_to_vmem [thread:$0]  %s532, 6144, %s534, %s523, 64, 64, 4
        $region60: #{spatial_temp_attn_fwd.5} parent=55 // pred_fallthru
          _
        // Predicated region
        $region61: #{spatial_temp_attn_fwd.5} parent=55 // pred_check
          %p540 = pneg %p106
        $region62: #{spatial_temp_attn_fwd.5} parent=55 // pred_check_branch
          %542 = sbr.rel (%p540) target = $region64
        $region63: #{spatial_temp_attn_fwd.5} parent=55 // pred_region
          %s543 = sand.u32 %s37, 1
          %s544 = scalar_lea.sflag [#allocation8], %s543
          %s545 = sand.u32 %s96, 1
          %s546 = smul.addr %s545, 64
          %s547 = scalar_lea.vmem [#allocation7], %s546
          %s548 = smul.u32 16, %s45
          %s550 = ssub.s32 1024, 1024
          %551 = vsyncadd %s544, %s550
          %s552 = smul.addr %s46, 32
          %s553 = sadd.s32 %s548, %s552
          %s554 = smul.addr %s44, 96
          %s555 = sadd.s32 %s553, %s554
          %s556 = smul.addr %s555, 64
          %s557 = scalar_lea.hbm %s1, %s556
          %s558 = sshll.u32 %s547, 4
          %s559 = int_to_ptr.vmem [resolvable:$true] %s558
          %564 = dma.hbm_to_vmem [thread:$0]  %s557, 1024, %s559, %s544, 64, 64, 4
        $region64: #{spatial_temp_attn_fwd.5} parent=55 // pred_fallthru
          _
      $region56: #{spatial_temp_attn_fwd.5} parent=5 // pred_fallthru
        _
      %p565 = scmp.le.s32.totalorder 1, %s37
      %p566 = scmp.lt.s32.totalorder %s37, 13
      %p567 = pnand %p565, %p566
      %p568 = pneg %p567
      // Predicated region
      $region65: #{spatial_temp_attn_fwd.5} parent=5 // pred_check
        _
      $region66: #{spatial_temp_attn_fwd.5} parent=5 // pred_check_branch
        %570 = sbr.rel (%p567) target = $region68
      $region67: #{spatial_temp_attn_fwd.5} parent=5 // pred_region
        %s571 = ssub.s32 %s37, 1
        %s572 = sand.u32 %s69, 1
        %s573 = scalar_lea.sflag [#allocation5], %s572
        %s574 = sand.u32 %s69, 1
        %s575 = smul.addr %s574, 384
        %s576 = scalar_lea.vmem [#allocation4], %s575
        // Predicated region
        $region69: #{spatial_temp_attn_fwd.5} parent=67 // pred_check
          %p577 = pneg %p82
        $region70: #{spatial_temp_attn_fwd.5} parent=67 // pred_check_branch
          %579 = sbr.rel (%p577) target = $region72
        $region71: #{spatial_temp_attn_fwd.5} parent=67 // pred_region
          %580 = dma.done %s573, 6144
        $region72: #{spatial_temp_attn_fwd.5} parent=67 // pred_fallthru
          _
        %s581 = sand.u32 %s42, 1
        %s582 = scalar_lea.sflag [#allocation8], %s581
        %s583 = sand.u32 %s99, 1
        %s584 = smul.addr %s583, 64
        %s585 = scalar_lea.vmem [#allocation7], %s584
        // Predicated region
        $region73: #{spatial_temp_attn_fwd.5} parent=67 // pred_check
          %p586 = pneg %p112
        $region74: #{spatial_temp_attn_fwd.5} parent=67 // pred_check_branch
          %588 = sbr.rel (%p586) target = $region76
        $region75: #{spatial_temp_attn_fwd.5} parent=67 // pred_region
          %589 = dma.done %s582, 1024
        $region76: #{spatial_temp_attn_fwd.5} parent=67 // pred_fallthru
          _
        // Predicated region
        $region77: #{spatial_temp_attn_fwd.5} parent=67 // pred_check
          %p590 = pneg %p133
        $region78: #{spatial_temp_attn_fwd.5} parent=67 // pred_check_branch
          %592 = sbr.rel (%p590) target = $region80
        $region79: #{spatial_temp_attn_fwd.5} parent=67 // pred_region
          %593 = dma.done [#allocation8], 512
        $region80: #{spatial_temp_attn_fwd.5} parent=67 // pred_fallthru
          _
        // Predicated region
        $region81: #{spatial_temp_attn_fwd.5} parent=67 // pred_check
          %p594 = pneg %p154
        $region82: #{spatial_temp_attn_fwd.5} parent=67 // pred_check_branch
          %596 = sbr.rel (%p594) target = $region84
        $region83: #{spatial_temp_attn_fwd.5} parent=67 // pred_region
          %597 = dma.done [#allocation11], 16
        $region84: #{spatial_temp_attn_fwd.5} parent=67 // pred_fallthru
          _
        // Predicated region
        $region85: #{spatial_temp_attn_fwd.5} parent=67 // pred_check
          %p598 = pneg %p175
        $region86: #{spatial_temp_attn_fwd.5} parent=67 // pred_check_branch
          %600 = sbr.rel (%p598) target = $region88
        $region87: #{spatial_temp_attn_fwd.5} parent=67 // pred_region
          %601 = dma.done [#allocation11], 16
        $region88: #{spatial_temp_attn_fwd.5} parent=67 // pred_fallthru
          _
        // Predicated region
        $region89: #{spatial_temp_attn_fwd.5} parent=67 // pred_check
          %p602 = pneg %p196
        $region90: #{spatial_temp_attn_fwd.5} parent=67 // pred_check_branch
          %604 = sbr.rel (%p602) target = $region92
        $region91: #{spatial_temp_attn_fwd.5} parent=67 // pred_region
          %605 = dma.done [#allocation14], 512
        $region92: #{spatial_temp_attn_fwd.5} parent=67 // pred_fallthru
          _
        // Predicated region
        $region93: #{spatial_temp_attn_fwd.5} parent=67 // pred_check
          %p606 = pneg %p217
        $region94: #{spatial_temp_attn_fwd.5} parent=67 // pred_check_branch
          %608 = sbr.rel (%p606) target = $region96
        $region95: #{spatial_temp_attn_fwd.5} parent=67 // pred_region
          %609 = dma.done [#allocation14], 16
        $region96: #{spatial_temp_attn_fwd.5} parent=67 // pred_fallthru
          _
        // Predicated region
        $region97: #{spatial_temp_attn_fwd.5} parent=67 // pred_check
          %p610 = pneg %p238
        $region98: #{spatial_temp_attn_fwd.5} parent=67 // pred_check_branch
          %612 = sbr.rel (%p610) target = $region100
        $region99: #{spatial_temp_attn_fwd.5} parent=67 // pred_region
          %613 = dma.done [#allocation17], 256
        $region100: #{spatial_temp_attn_fwd.5} parent=67 // pred_fallthru
          _
        // Predicated region
        $region101: #{spatial_temp_attn_fwd.5} parent=67 // pred_check
          %p614 = pneg %p259
        $region102: #{spatial_temp_attn_fwd.5} parent=67 // pred_check_branch
          %616 = sbr.rel (%p614) target = $region104
        $region103: #{spatial_temp_attn_fwd.5} parent=67 // pred_region
          %617 = dma.done [#allocation17], 16
        $region104: #{spatial_temp_attn_fwd.5} parent=67 // pred_fallthru
          _
        // Predicated region
        $region105: #{spatial_temp_attn_fwd.5} parent=67 // pred_check
          %p618 = pneg %p280
        $region106: #{spatial_temp_attn_fwd.5} parent=67 // pred_check_branch
          %620 = sbr.rel (%p618) target = $region108
        $region107: #{spatial_temp_attn_fwd.5} parent=67 // pred_region
          %621 = dma.done [#allocation20], 512
        $region108: #{spatial_temp_attn_fwd.5} parent=67 // pred_fallthru
          _
        // Predicated region
        $region109: #{spatial_temp_attn_fwd.5} parent=67 // pred_check
          %p622 = pneg %p301
        $region110: #{spatial_temp_attn_fwd.5} parent=67 // pred_check_branch
          %624 = sbr.rel (%p622) target = $region112
        $region111: #{spatial_temp_attn_fwd.5} parent=67 // pred_region
          %625 = dma.done [#allocation20], 512
        $region112: #{spatial_temp_attn_fwd.5} parent=67 // pred_fallthru
          _
        // Predicated region
        $region113: #{spatial_temp_attn_fwd.5} parent=67 // pred_check
          %p626 = pneg %p322
        $region114: #{spatial_temp_attn_fwd.5} parent=67 // pred_check_branch
          %628 = sbr.rel (%p626) target = $region116
        $region115: #{spatial_temp_attn_fwd.5} parent=67 // pred_region
          %629 = dma.done [#allocation23], 16
        $region116: #{spatial_temp_attn_fwd.5} parent=67 // pred_fallthru
          _
        %s630 = sand.u32 %s69, 1
        %s631 = scalar_lea.sflag [#allocation5], %s630
        %s632 = sand.u32 %s69, 1
        %s633 = smul.addr %s632, 384
        %s634 = scalar_lea.vmem [#allocation4], %s633
        %p635 = pneg %p82
        %p636 = pneg %p79
        %s637 = sand.u32 %s42, 1
        %s638 = scalar_lea.sflag [#allocation8], %s637
        %s639 = sand.u32 %s99, 1
        %s640 = smul.addr %s639, 64
        %s641 = scalar_lea.vmem [#allocation7], %s640
        %p642 = pneg %p112
        %p643 = pneg %p109
        %p644 = pneg %p133
        %p645 = pneg %p130
        %p646 = pneg %p154
        %p647 = pneg %p151
        %p648 = pneg %p175
        %p649 = pneg %p172
        %p650 = pneg %p196
        %p651 = pneg %p193
        %p652 = pneg %p217
        %p653 = pneg %p214
        %p654 = pneg %p238
        %p655 = pneg %p235
        %p656 = pneg %p259
        %p657 = pneg %p256
        %p658 = pneg %p280
        %p659 = pneg %p277
        %p660 = pneg %p301
        %p661 = pneg %p298
        %p662 = pneg %p322
        %p663 = pneg %p319
        %p664 = pneg %p352
        %p665 = pneg %p349
        %s666 = sand.u32 %s339, 1
        %s667 = scalar_lea.sflag [#allocation6], %s666
        %s668 = sand.u32 %s339, 1
        %s669 = smul.addr %s668, 128
        %s670 = scalar_lea.vmem [#allocation24], %s669
        %p671 = pneg %p380
        %p672 = pneg %p377
        %s673 = sand.u32 %s367, 1
        %s674 = scalar_lea.sflag [#allocation26], %s673
        %s675 = sand.u32 %s367, 1
        %s676 = smul.addr %s675, 512
        %s677 = scalar_lea.vmem [#allocation25], %s676
        %s678 = smul.u32 16, %s48
        %s679 = smul.u32 16, %s48
        %s680 = smul.u32 16, %s48
        %p682 = scmp.eq.s32.totalorder %s48, 0
        %p683 = scmp.eq.s32.totalorder %s49, 0
        %p684 = pnand %p682, %p683
        %p685 = pneg %p684
        // Predicated region
        $region117: #{spatial_temp_attn_fwd.5} parent=67 // pred_check
          _
        $region118: #{spatial_temp_attn_fwd.5} parent=67 // pred_check_branch
          %687 = sbr.rel (%p684) target = $region120
        $region119: #{spatial_temp_attn_fwd.5} parent=67 // pred_region
          %v688 = vld [vmem:[%s576] sm:$0xf]
          %v689 = vld [vmem:[%s576 + $0x4] sm:$0xf]
          %v690 = vld [vmem:[%s576 + $0x8] sm:$0xf]
          %v691 = vld [vmem:[%s576 + $0xc] sm:$0xf]
          %v692 = vld [vmem:[%s576 + $0x10] sm:$0xf]
          %v693 = vld [vmem:[%s576 + $0x14] sm:$0xf]
          %v694 = vld [vmem:[%s576 + $0x18] sm:$0xf]
          %v695 = vld [vmem:[%s576 + $0x1c] sm:$0xf]
          %v696 = vld [vmem:[%s576 + $0x20] sm:$0xf]
          %v697 = vld [vmem:[%s576 + $0x24] sm:$0xf]
          %v698 = vld [vmem:[%s576 + $0x28] sm:$0xf]
          %v699 = vld [vmem:[%s576 + $0x2c] sm:$0xf]
          %v700 = vld [vmem:[%s576 + $0x30] sm:$0xf]
          %v701 = vld [vmem:[%s576 + $0x34] sm:$0xf]
          %v702 = vld [vmem:[%s576 + $0x38] sm:$0xf]
          %v703 = vld [vmem:[%s576 + $0x3c] sm:$0xf]
          %v704 = vld [vmem:[%s576 + $0x40] sm:$0xf]
          %v705 = vld [vmem:[%s576 + $0x44] sm:$0xf]
          %v706 = vld [vmem:[%s576 + $0x48] sm:$0xf]
          %v707 = vld [vmem:[%s576 + $0x4c] sm:$0xf]
          %v708 = vld [vmem:[%s576 + $0x50] sm:$0xf]
          %v709 = vld [vmem:[%s576 + $0x54] sm:$0xf]
          %v710 = vld [vmem:[%s576 + $0x58] sm:$0xf]
          %v711 = vld [vmem:[%s576 + $0x5c] sm:$0xf]
          %v712 = vld [vmem:[%s576 + $0x60] sm:$0xf]
          %v713 = vld [vmem:[%s576 + $0x64] sm:$0xf]
          %v714 = vld [vmem:[%s576 + $0x68] sm:$0xf]
          %v715 = vld [vmem:[%s576 + $0x6c] sm:$0xf]
          %v716 = vld [vmem:[%s576 + $0x70] sm:$0xf]
          %v717 = vld [vmem:[%s576 + $0x74] sm:$0xf]
          %v718 = vld [vmem:[%s576 + $0x78] sm:$0xf]
          %v719 = vld [vmem:[%s576 + $0x7c] sm:$0xf]
          %v720 = vld [vmem:[#allocation9] sm:$0xf]
          %v721 = vld [vmem:[#allocation9 + $0x4] sm:$0xf]
          %v722 = vld [vmem:[#allocation9 + $0x8] sm:$0xf]
          %v723 = vld [vmem:[#allocation9 + $0xc] sm:$0xf]
          %v724 = vld [vmem:[#allocation9 + $0x10] sm:$0xf]
          %v725 = vld [vmem:[#allocation9 + $0x14] sm:$0xf]
          %v726 = vld [vmem:[#allocation9 + $0x18] sm:$0xf]
          %v727 = vld [vmem:[#allocation9 + $0x1c] sm:$0xf]
          %v760 = vunpack.c.l.b16 %v688
          %v761 = vunpack.c.l.b16 %v689
          %v762 = vunpack.c.l.b16 %v690
          %v763 = vunpack.c.l.b16 %v691
          %v764 = vunpack.c.l.b16 %v692
          %v765 = vunpack.c.l.b16 %v693
          %v766 = vunpack.c.l.b16 %v694
          %v767 = vunpack.c.l.b16 %v695
          %v768 = vunpack.c.l.b16 %v696
          %v769 = vunpack.c.l.b16 %v697
          %v770 = vunpack.c.l.b16 %v698
          %v771 = vunpack.c.l.b16 %v699
          %v772 = vunpack.c.l.b16 %v700
          %v773 = vunpack.c.l.b16 %v701
          %v774 = vunpack.c.l.b16 %v702
          %v775 = vunpack.c.l.b16 %v703
          %v776 = vunpack.c.l.b16 %v704
          %v777 = vunpack.c.l.b16 %v705
          %v778 = vunpack.c.l.b16 %v706
          %v779 = vunpack.c.l.b16 %v707
          %v780 = vunpack.c.l.b16 %v708
          %v781 = vunpack.c.l.b16 %v709
          %v782 = vunpack.c.l.b16 %v710
          %v783 = vunpack.c.l.b16 %v711
          %v784 = vunpack.c.l.b16 %v712
          %v785 = vunpack.c.l.b16 %v713
          %v786 = vunpack.c.l.b16 %v714
          %v787 = vunpack.c.l.b16 %v715
          %v788 = vunpack.c.l.b16 %v716
          %v789 = vunpack.c.l.b16 %v717
          %v790 = vunpack.c.l.b16 %v718
          %v791 = vunpack.c.l.b16 %v719
          %v792 = vpack.c.b16 %v761, %v760
          %v793 = vpack.c.b16 %v763, %v762
          %v794 = vpack.c.b16 %v765, %v764
          %v795 = vpack.c.b16 %v767, %v766
          %v796 = vpack.c.b16 %v769, %v768
          %v797 = vpack.c.b16 %v771, %v770
          %v798 = vpack.c.b16 %v773, %v772
          %v799 = vpack.c.b16 %v775, %v774
          %v800 = vpack.c.b16 %v777, %v776
          %v801 = vpack.c.b16 %v779, %v778
          %v802 = vpack.c.b16 %v781, %v780
          %v803 = vpack.c.b16 %v783, %v782
          %v804 = vpack.c.b16 %v785, %v784
          %v805 = vpack.c.b16 %v787, %v786
          %v806 = vpack.c.b16 %v789, %v788
          %v807 = vpack.c.b16 %v791, %v790
          %v816 = vunpack.c.l.b16 %v720
          %v817 = vunpack.c.l.b16 %v721
          %v818 = vunpack.c.l.b16 %v722
          %v819 = vunpack.c.l.b16 %v723
          %v820 = vunpack.c.l.b16 %v724
          %v821 = vunpack.c.l.b16 %v725
          %v822 = vunpack.c.l.b16 %v726
          %v823 = vunpack.c.l.b16 %v727
          %v824 = vpack.c.b16 %v817, %v816
          %v825 = vpack.c.b16 %v819, %v818
          %v826 = vpack.c.b16 %v821, %v820
          %v827 = vpack.c.b16 %v823, %v822
          %vm832 = vcmask 523264
          %v834 = vsel %vm832, %v792, 0
          %v837 = vsel %vm832, %v793, 0
          %v840 = vsel %vm832, %v794, 0
          %v843 = vsel %vm832, %v795, 0
          %v846 = vsel %vm832, %v796, 0
          %v849 = vsel %vm832, %v797, 0
          %v852 = vsel %vm832, %v798, 0
          %v855 = vsel %vm832, %v799, 0
          %v858 = vsel %vm832, %v800, 0
          %v861 = vsel %vm832, %v801, 0
          %v864 = vsel %vm832, %v802, 0
          %v867 = vsel %vm832, %v803, 0
          %v870 = vsel %vm832, %v804, 0
          %v873 = vsel %vm832, %v805, 0
          %v876 = vsel %vm832, %v806, 0
          %v879 = vsel %vm832, %v807, 0
          %881 = vmatprep.subr.bf16.mxu0 0
          %882 = vmatpush1.bf16.msra.mxu0 %v824
          %883 = vmatprep.subr.bf16.mxu0 0
          %884 = vmatpush1.bf16.msra.mxu0 %v825
          %885 = vmatprep.subr.bf16.mxu0 0
          %886 = vmatpush1.bf16.msra.mxu0 %v826
          %887 = vmatprep.subr.bf16.mxu0 0
          %888 = vmatpush1.bf16.msra.mxu0 %v827
          %889 = vmatprep.subr.bf16.mxu0 0
          %890 = vmatpush1.bf16.msra.mxu0 0
          %891 = vmatprep.subr.bf16.mxu0 0
          %892 = vmatpush1.bf16.msra.mxu0 0
          %893 = vmatprep.subr.bf16.mxu0 0
          %894 = vmatpush1.bf16.msra.mxu0 0
          %895 = vmatprep.subr.bf16.mxu0 0
          %896 = vmatpush1.bf16.msra.mxu0 0
          %897 = vmatprep.subr.bf16.mxu0 0
          %898 = vmatpush1.bf16.msra.mxu0 0
          %899 = vmatprep.subr.bf16.mxu0 0
          %900 = vmatpush1.bf16.msra.mxu0 0
          %901 = vmatprep.subr.bf16.mxu0 0
          %902 = vmatpush1.bf16.msra.mxu0 0
          %903 = vmatprep.subr.bf16.mxu0 0
          %904 = vmatpush1.bf16.msra.mxu0 0
          %905 = vmatprep.subr.bf16.mxu0 0
          %906 = vmatpush1.bf16.msra.mxu0 0
          %907 = vmatprep.subr.bf16.mxu0 0
          %908 = vmatpush1.bf16.msra.mxu0 0
          %909 = vmatprep.subr.bf16.mxu0 0
          %910 = vmatpush1.bf16.msra.mxu0 0
          %911 = vmatprep.subr.bf16.mxu0 0
          %912 = vmatpush1.bf16.msra.mxu0 0
          %913 = vmatprep.mubr.bf16.mxu0 0
          %914 = vmatmul.mubr.bf16.gmra.mrb[0].mxu0 %v834
          %v915 = vpop.f32.mrb[0].mxu0
          %v916 = vadd.f32 0.0, %v915
          %v917 = vpop.f32.mrb[0].mxu0
          %v918 = vpop.f32.mrb[0].mxu0
          %v919 = vadd.f32 0.0, %v918
          %v920 = vpop.f32.mrb[0].mxu0
          %921 = vmatprep.mubr.bf16.mxu0 0
          %922 = vmatmul.mubr.bf16.gmra.mrb[0].mxu0 %v837
          %v923 = vpop.f32.mrb[0].mxu0
          %v924 = vadd.f32 0.0, %v923
          %v925 = vpop.f32.mrb[0].mxu0
          %v926 = vpop.f32.mrb[0].mxu0
          %v927 = vadd.f32 0.0, %v926
          %v928 = vpop.f32.mrb[0].mxu0
          %929 = vmatprep.mubr.bf16.mxu0 0
          %930 = vmatmul.mubr.bf16.gmra.mrb[0].mxu0 %v840
          %v931 = vpop.f32.mrb[0].mxu0
          %v932 = vadd.f32 0.0, %v931
          %v933 = vpop.f32.mrb[0].mxu0
          %v934 = vpop.f32.mrb[0].mxu0
          %v935 = vadd.f32 0.0, %v934
          %v936 = vpop.f32.mrb[0].mxu0
          %937 = vmatprep.mubr.bf16.mxu0 0
          %938 = vmatmul.mubr.bf16.gmra.mrb[0].mxu0 %v843
          %v939 = vpop.f32.mrb[0].mxu0
          %v940 = vadd.f32 0.0, %v939
          %v941 = vpop.f32.mrb[0].mxu0
          %v942 = vpop.f32.mrb[0].mxu0
          %v943 = vadd.f32 0.0, %v942
          %v944 = vpop.f32.mrb[0].mxu0
          %945 = vmatprep.mubr.bf16.mxu0 0
          %946 = vmatmul.mubr.bf16.gmra.mrb[0].mxu0 %v846
          %v947 = vpop.f32.mrb[0].mxu0
          %v948 = vadd.f32 0.0, %v947
          %v949 = vpop.f32.mrb[0].mxu0
          %v950 = vpop.f32.mrb[0].mxu0
          %v951 = vadd.f32 0.0, %v950
          %v952 = vpop.f32.mrb[0].mxu0
          %953 = vmatprep.mubr.bf16.mxu0 0
          %954 = vmatmul.mubr.bf16.gmra.mrb[0].mxu0 %v849
          %v955 = vpop.f32.mrb[0].mxu0
          %v956 = vadd.f32 0.0, %v955
          %v957 = vpop.f32.mrb[0].mxu0
          %v958 = vpop.f32.mrb[0].mxu0
          %v959 = vadd.f32 0.0, %v958
          %v960 = vpop.f32.mrb[0].mxu0
          %961 = vmatprep.mubr.bf16.mxu0 0
          %962 = vmatmul.mubr.bf16.gmra.mrb[0].mxu0 %v852
          %v963 = vpop.f32.mrb[0].mxu0
          %v964 = vadd.f32 0.0, %v963
          %v965 = vpop.f32.mrb[0].mxu0
          %v966 = vpop.f32.mrb[0].mxu0
          %v967 = vadd.f32 0.0, %v966
          %v968 = vpop.f32.mrb[0].mxu0
          %969 = vmatprep.mubr.bf16.mxu0 0
          %970 = vmatmul.mubr.bf16.gmra.mrb[0].mxu0 %v855
          %v971 = vpop.f32.mrb[0].mxu0
          %v972 = vadd.f32 0.0, %v971
          %v973 = vpop.f32.mrb[0].mxu0
          %v974 = vpop.f32.mrb[0].mxu0
          %v975 = vadd.f32 0.0, %v974
          %v976 = vpop.f32.mrb[0].mxu0
          %977 = vmatprep.mubr.bf16.mxu0 0
          %978 = vmatmul.mubr.bf16.gmra.mrb[0].mxu0 %v858
          %v979 = vpop.f32.mrb[0].mxu0
          %v980 = vadd.f32 0.0, %v979
          %v981 = vpop.f32.mrb[0].mxu0
          %v982 = vpop.f32.mrb[0].mxu0
          %v983 = vadd.f32 0.0, %v982
          %v984 = vpop.f32.mrb[0].mxu0
          %985 = vmatprep.mubr.bf16.mxu0 0
          %986 = vmatmul.mubr.bf16.gmra.mrb[0].mxu0 %v861
          %v987 = vpop.f32.mrb[0].mxu0
          %v988 = vadd.f32 0.0, %v987
          %v989 = vpop.f32.mrb[0].mxu0
          %v990 = vpop.f32.mrb[0].mxu0
          %v991 = vadd.f32 0.0, %v990
          %v992 = vpop.f32.mrb[0].mxu0
          %993 = vmatprep.mubr.bf16.mxu0 0
          %994 = vmatmul.mubr.bf16.gmra.mrb[0].mxu0 %v864
          %v995 = vpop.f32.mrb[0].mxu0
          %v996 = vadd.f32 0.0, %v995
          %v997 = vpop.f32.mrb[0].mxu0
          %v998 = vpop.f32.mrb[0].mxu0
          %v999 = vadd.f32 0.0, %v998
          %v1000 = vpop.f32.mrb[0].mxu0
          %1001 = vmatprep.mubr.bf16.mxu0 0
          %1002 = vmatmul.mubr.bf16.gmra.mrb[0].mxu0 %v867
          %v1003 = vpop.f32.mrb[0].mxu0
          %v1004 = vadd.f32 0.0, %v1003
          %v1005 = vpop.f32.mrb[0].mxu0
          %v1006 = vpop.f32.mrb[0].mxu0
          %v1007 = vadd.f32 0.0, %v1006
          %v1008 = vpop.f32.mrb[0].mxu0
          %1009 = vmatprep.mubr.bf16.mxu0 0
          %1010 = vmatmul.mubr.bf16.gmra.mrb[0].mxu0 %v870
          %v1011 = vpop.f32.mrb[0].mxu0
          %v1012 = vadd.f32 0.0, %v1011
          %v1013 = vpop.f32.mrb[0].mxu0
          %v1014 = vpop.f32.mrb[0].mxu0
          %v1015 = vadd.f32 0.0, %v1014
          %v1016 = vpop.f32.mrb[0].mxu0
          %1017 = vmatprep.mubr.bf16.mxu0 0
          %1018 = vmatmul.mubr.bf16.gmra.mrb[0].mxu0 %v873
          %v1019 = vpop.f32.mrb[0].mxu0
          %v1020 = vadd.f32 0.0, %v1019
          %v1021 = vpop.f32.mrb[0].mxu0
          %v1022 = vpop.f32.mrb[0].mxu0
          %v1023 = vadd.f32 0.0, %v1022
          %v1024 = vpop.f32.mrb[0].mxu0
          %1025 = vmatprep.mubr.bf16.mxu0 0
          %1026 = vmatmul.mubr.bf16.gmra.mrb[0].mxu0 %v876
          %v1027 = vpop.f32.mrb[0].mxu0
          %v1028 = vadd.f32 0.0, %v1027
          %v1029 = vpop.f32.mrb[0].mxu0
          %v1030 = vpop.f32.mrb[0].mxu0
          %v1031 = vadd.f32 0.0, %v1030
          %v1032 = vpop.f32.mrb[0].mxu0
          %1033 = vmatprep.mubr.bf16.mxu0 0
          %1034 = vmatmul.mubr.bf16.gmra.mrb[0].mxu0 %v879
          %v1035 = vpop.f32.mrb[0].mxu0
          %v1036 = vadd.f32 0.0, %v1035
          %v1037 = vpop.f32.mrb[0].mxu0
          %v1038 = vpop.f32.mrb[0].mxu0
          %v1039 = vadd.f32 0.0, %v1038
          %v1040 = vpop.f32.mrb[0].mxu0
          %1041 = vdwg.mxu0
          %v1042 = vld [vmem:[#allocation10] sm:$0x1]
          %v1044 = vlaneseq
          %v1045 = vshrl.u32 %v1044, 7
          %v1046 = vsub.s32 0, %v1045
          %v1047 = vrot.slane %v1042, %v1046
          %v1049 = vmul.f32 %v916, %v1047
          %v1050 = vmul.f32 %v919, %v1047
          %v1051 = vmul.f32 %v924, %v1047
          %v1052 = vmul.f32 %v927, %v1047
          %v1053 = vmul.f32 %v932, %v1047
          %v1054 = vmul.f32 %v935, %v1047
          %v1055 = vmul.f32 %v940, %v1047
          %v1056 = vmul.f32 %v943, %v1047
          %v1057 = vmul.f32 %v948, %v1047
          %v1058 = vmul.f32 %v951, %v1047
          %v1059 = vmul.f32 %v956, %v1047
          %v1060 = vmul.f32 %v959, %v1047
          %v1061 = vmul.f32 %v964, %v1047
          %v1062 = vmul.f32 %v967, %v1047
          %v1063 = vmul.f32 %v972, %v1047
          %v1064 = vmul.f32 %v975, %v1047
          %v1065 = vmul.f32 %v980, %v1047
          %v1066 = vmul.f32 %v983, %v1047
          %v1067 = vmul.f32 %v988, %v1047
          %v1068 = vmul.f32 %v991, %v1047
          %v1069 = vmul.f32 %v996, %v1047
          %v1070 = vmul.f32 %v999, %v1047
          %v1071 = vmul.f32 %v1004, %v1047
          %v1072 = vmul.f32 %v1007, %v1047
          %v1073 = vmul.f32 %v1012, %v1047
          %v1074 = vmul.f32 %v1015, %v1047
          %v1075 = vmul.f32 %v1020, %v1047
          %v1076 = vmul.f32 %v1023, %v1047
          %v1077 = vmul.f32 %v1028, %v1047
          %v1078 = vmul.f32 %v1031, %v1047
          %v1079 = vmul.f32 %v1036, %v1047
          %v1080 = vmul.f32 %v1039, %v1047
          %v1081 = vld [vmem:[#allocation12] sm:$0x1]
          %v1083 = vlaneseq
          %v1084 = vshrl.u32 %v1083, 7
          %v1085 = vsub.s32 0, %v1084
          %v1086 = vrot.slane %v1081, %v1085
          %v1088 = vadd.f32 %v1049, %v1086
          %v1089 = vadd.f32 %v1050, %v1086
          %v1090 = vadd.f32 %v1051, %v1086
          %v1091 = vadd.f32 %v1052, %v1086
          %v1092 = vadd.f32 %v1053, %v1086
          %v1093 = vadd.f32 %v1054, %v1086
          %v1094 = vadd.f32 %v1055, %v1086
          %v1095 = vadd.f32 %v1056, %v1086
          %v1096 = vadd.f32 %v1057, %v1086
          %v1097 = vadd.f32 %v1058, %v1086
          %v1098 = vadd.f32 %v1059, %v1086
          %v1099 = vadd.f32 %v1060, %v1086
          %v1100 = vadd.f32 %v1061, %v1086
          %v1101 = vadd.f32 %v1062, %v1086
          %v1102 = vadd.f32 %v1063, %v1086
          %v1103 = vadd.f32 %v1064, %v1086
          %v1104 = vadd.f32 %v1065, %v1086
          %v1105 = vadd.f32 %v1066, %v1086
          %v1106 = vadd.f32 %v1067, %v1086
          %v1107 = vadd.f32 %v1068, %v1086
          %v1108 = vadd.f32 %v1069, %v1086
          %v1109 = vadd.f32 %v1070, %v1086
          %v1110 = vadd.f32 %v1071, %v1086
          %v1111 = vadd.f32 %v1072, %v1086
          %v1112 = vadd.f32 %v1073, %v1086
          %v1113 = vadd.f32 %v1074, %v1086
          %v1114 = vadd.f32 %v1075, %v1086
          %v1115 = vadd.f32 %v1076, %v1086
          %v1116 = vadd.f32 %v1077, %v1086
          %v1117 = vadd.f32 %v1078, %v1086
          %v1118 = vadd.f32 %v1079, %v1086
          %v1119 = vadd.f32 %v1080, %v1086
          %v1120 = vpack.c.bf16 %v1089, %v1088
          %v1121 = vpack.c.bf16 %v1091, %v1090
          %v1122 = vpack.c.bf16 %v1093, %v1092
          %v1123 = vpack.c.bf16 %v1095, %v1094
          %v1124 = vpack.c.bf16 %v1097, %v1096
          %v1125 = vpack.c.bf16 %v1099, %v1098
          %v1126 = vpack.c.bf16 %v1101, %v1100
          %v1127 = vpack.c.bf16 %v1103, %v1102
          %v1128 = vpack.c.bf16 %v1105, %v1104
          %v1129 = vpack.c.bf16 %v1107, %v1106
          %v1130 = vpack.c.bf16 %v1109, %v1108
          %v1131 = vpack.c.bf16 %v1111, %v1110
          %v1132 = vpack.c.bf16 %v1113, %v1112
          %v1133 = vpack.c.bf16 %v1115, %v1114
          %v1134 = vpack.c.bf16 %v1117, %v1116
          %v1135 = vpack.c.bf16 %v1119, %v1118
          %vm1136 = vcmask 261120
          %1137 = vst.msk [vmem:[#allocation2] sm:$0xff] %vm1136, %v1120
          %1138 = vst.msk [vmem:[#allocation2 + $0x8] sm:$0xff] %vm1136, %v1121
          %1139 = vst.msk [vmem:[#allocation2 + $0x10] sm:$0xff] %vm1136, %v1122
          %1140 = vst.msk [vmem:[#allocation2 + $0x18] sm:$0xff] %vm1136, %v1123
          %1141 = vst.msk [vmem:[#allocation2 + $0x20] sm:$0xff] %vm1136, %v1124
          %1142 = vst.msk [vmem:[#allocation2 + $0x28] sm:$0xff] %vm1136, %v1125
          %1143 = vst.msk [vmem:[#allocation2 + $0x30] sm:$0xff] %vm1136, %v1126
          %1144 = vst.msk [vmem:[#allocation2 + $0x38] sm:$0xff] %vm1136, %v1127
          %1145 = vst.msk [vmem:[#allocation2 + $0x40] sm:$0xff] %vm1136, %v1128
          %1146 = vst.msk [vmem:[#allocation2 + $0x48] sm:$0xff] %vm1136, %v1129
          %1147 = vst.msk [vmem:[#allocation2 + $0x50] sm:$0xff] %vm1136, %v1130
          %1148 = vst.msk [vmem:[#allocation2 + $0x58] sm:$0xff] %vm1136, %v1131
          %1149 = vst.msk [vmem:[#allocation2 + $0x60] sm:$0xff] %vm1136, %v1132
          %1150 = vst.msk [vmem:[#allocation2 + $0x68] sm:$0xff] %vm1136, %v1133
          %1151 = vst.msk [vmem:[#allocation2 + $0x70] sm:$0xff] %vm1136, %v1134
          %1152 = vst.msk [vmem:[#allocation2 + $0x78] sm:$0xff] %vm1136, %v1135
          %v1153 = vld [vmem:[#allocation13] sm:$0xf]
          %v1154 = vld [vmem:[#allocation13 + $0x4] sm:$0xf]
          %v1155 = vld [vmem:[#allocation13 + $0x8] sm:$0xf]
          %v1156 = vld [vmem:[#allocation13 + $0xc] sm:$0xf]
          %v1157 = vld [vmem:[#allocation13 + $0x10] sm:$0xf]
          %v1158 = vld [vmem:[#allocation13 + $0x14] sm:$0xf]
          %v1159 = vld [vmem:[#allocation13 + $0x18] sm:$0xf]
          %v1160 = vld [vmem:[#allocation13 + $0x1c] sm:$0xf]
          %v1161 = vld [vmem:[#allocation15] sm:$0x1]
          %v1163 = vlaneseq
          %v1164 = vshrl.u32 %v1163, 7
          %v1165 = vsub.s32 0, %v1164
          %v1166 = vrot.slane %v1161, %v1165
          %v1176 = vunpack.c.l.b16 %v1153
          %v1177 = vunpack.c.l.b16 %v1154
          %v1178 = vunpack.c.l.b16 %v1155
          %v1179 = vunpack.c.l.b16 %v1156
          %v1180 = vunpack.c.l.b16 %v1157
          %v1181 = vunpack.c.l.b16 %v1158
          %v1182 = vunpack.c.l.b16 %v1159
          %v1183 = vunpack.c.l.b16 %v1160
          %v1184 = vpack.c.b16 %v1177, %v1176
          %v1185 = vpack.c.b16 %v1179, %v1178
          %v1186 = vpack.c.b16 %v1181, %v1180
          %v1187 = vpack.c.b16 %v1183, %v1182
          %1192 = vmatprep.subr.bf16.mxu0 0
          %1193 = vmatpush1.bf16.msra.mxu0 %v1184
          %1194 = vmatprep.subr.bf16.mxu0 0
          %1195 = vmatpush1.bf16.msra.mxu0 %v1185
          %1196 = vmatprep.subr.bf16.mxu0 0
          %1197 = vmatpush1.bf16.msra.mxu0 %v1186
          %1198 = vmatprep.subr.bf16.mxu0 0
          %1199 = vmatpush1.bf16.msra.mxu0 %v1187
          %1200 = vmatprep.subr.bf16.mxu0 0
          %1201 = vmatpush1.bf16.msra.mxu0 0
          %1202 = vmatprep.subr.bf16.mxu0 0
          %1203 = vmatpush1.bf16.msra.mxu0 0
          %1204 = vmatprep.subr.bf16.mxu0 0
          %1205 = vmatpush1.bf16.msra.mxu0 0
          %1206 = vmatprep.subr.bf16.mxu0 0
          %1207 = vmatpush1.bf16.msra.mxu0 0
          %1208 = vmatprep.subr.bf16.mxu0 0
          %1209 = vmatpush1.bf16.msra.mxu0 0
          %1210 = vmatprep.subr.bf16.mxu0 0
          %1211 = vmatpush1.bf16.msra.mxu0 0
          %1212 = vmatprep.subr.bf16.mxu0 0
          %1213 = vmatpush1.bf16.msra.mxu0 0
          %1214 = vmatprep.subr.bf16.mxu0 0
          %1215 = vmatpush1.bf16.msra.mxu0 0
          %1216 = vmatprep.subr.bf16.mxu0 0
          %1217 = vmatpush1.bf16.msra.mxu0 0
          %1218 = vmatprep.subr.bf16.mxu0 0
          %1219 = vmatpush1.bf16.msra.mxu0 0
          %1220 = vmatprep.subr.bf16.mxu0 0
          %1221 = vmatpush1.bf16.msra.mxu0 0
          %1222 = vmatprep.subr.bf16.mxu0 0
          %1223 = vmatpush1.bf16.msra.mxu0 0
          %1224 = vmatprep.mubr.bf16.mxu0 0
          %1225 = vmatmul.mubr.bf16.gmra.mrb[0].mxu0 %v834
          %v1226 = vpop.f32.mrb[0].mxu0
          %v1227 = vadd.f32 %v1166, %v1226
          %v1228 = vpop.f32.mrb[0].mxu0
          %v1229 = vpop.f32.mrb[0].mxu0
          %v1230 = vadd.f32 %v1166, %v1229
          %v1231 = vpop.f32.mrb[0].mxu0
          %1232 = vmatprep.mubr.bf16.mxu0 0
          %1233 = vmatmul.mubr.bf16.gmra.mrb[0].mxu0 %v837
          %v1234 = vpop.f32.mrb[0].mxu0
          %v1235 = vadd.f32 %v1166, %v1234
          %v1236 = vpop.f32.mrb[0].mxu0
          %v1237 = vpop.f32.mrb[0].mxu0
          %v1238 = vadd.f32 %v1166, %v1237
          %v1239 = vpop.f32.mrb[0].mxu0
          %1240 = vmatprep.mubr.bf16.mxu0 0
          %1241 = vmatmul.mubr.bf16.gmra.mrb[0].mxu0 %v840
          %v1242 = vpop.f32.mrb[0].mxu0
          %v1243 = vadd.f32 %v1166, %v1242
          %v1244 = vpop.f32.mrb[0].mxu0
          %v1245 = vpop.f32.mrb[0].mxu0
          %v1246 = vadd.f32 %v1166, %v1245
          %v1247 = vpop.f32.mrb[0].mxu0
          %1248 = vmatprep.mubr.bf16.mxu0 0
          %1249 = vmatmul.mubr.bf16.gmra.mrb[0].mxu0 %v843
          %v1250 = vpop.f32.mrb[0].mxu0
          %v1251 = vadd.f32 %v1166, %v1250
          %v1252 = vpop.f32.mrb[0].mxu0
          %v1253 = vpop.f32.mrb[0].mxu0
          %v1254 = vadd.f32 %v1166, %v1253
          %v1255 = vpop.f32.mrb[0].mxu0
          %1256 = vmatprep.mubr.bf16.mxu0 0
          %1257 = vmatmul.mubr.bf16.gmra.mrb[0].mxu0 %v846
          %v1258 = vpop.f32.mrb[0].mxu0
          %v1259 = vadd.f32 %v1166, %v1258
          %v1260 = vpop.f32.mrb[0].mxu0
          %v1261 = vpop.f32.mrb[0].mxu0
          %v1262 = vadd.f32 %v1166, %v1261
          %v1263 = vpop.f32.mrb[0].mxu0
          %1264 = vmatprep.mubr.bf16.mxu0 0
          %1265 = vmatmul.mubr.bf16.gmra.mrb[0].mxu0 %v849
          %v1266 = vpop.f32.mrb[0].mxu0
          %v1267 = vadd.f32 %v1166, %v1266
          %v1268 = vpop.f32.mrb[0].mxu0
          %v1269 = vpop.f32.mrb[0].mxu0
          %v1270 = vadd.f32 %v1166, %v1269
          %v1271 = vpop.f32.mrb[0].mxu0
          %1272 = vmatprep.mubr.bf16.mxu0 0
          %1273 = vmatmul.mubr.bf16.gmra.mrb[0].mxu0 %v852
          %v1274 = vpop.f32.mrb[0].mxu0
          %v1275 = vadd.f32 %v1166, %v1274
          %v1276 = vpop.f32.mrb[0].mxu0
          %v1277 = vpop.f32.mrb[0].mxu0
          %v1278 = vadd.f32 %v1166, %v1277
          %v1279 = vpop.f32.mrb[0].mxu0
          %1280 = vmatprep.mubr.bf16.mxu0 0
          %1281 = vmatmul.mubr.bf16.gmra.mrb[0].mxu0 %v855
          %v1282 = vpop.f32.mrb[0].mxu0
          %v1283 = vadd.f32 %v1166, %v1282
          %v1284 = vpop.f32.mrb[0].mxu0
          %v1285 = vpop.f32.mrb[0].mxu0
          %v1286 = vadd.f32 %v1166, %v1285
          %v1287 = vpop.f32.mrb[0].mxu0
          %1288 = vmatprep.mubr.bf16.mxu0 0
          %1289 = vmatmul.mubr.bf16.gmra.mrb[0].mxu0 %v858
          %v1290 = vpop.f32.mrb[0].mxu0
          %v1291 = vadd.f32 %v1166, %v1290
          %v1292 = vpop.f32.mrb[0].mxu0
          %v1293 = vpop.f32.mrb[0].mxu0
          %v1294 = vadd.f32 %v1166, %v1293
          %v1295 = vpop.f32.mrb[0].mxu0
          %1296 = vmatprep.mubr.bf16.mxu0 0
          %1297 = vmatmul.mubr.bf16.gmra.mrb[0].mxu0 %v861
          %v1298 = vpop.f32.mrb[0].mxu0
          %v1299 = vadd.f32 %v1166, %v1298
          %v1300 = vpop.f32.mrb[0].mxu0
          %v1301 = vpop.f32.mrb[0].mxu0
          %v1302 = vadd.f32 %v1166, %v1301
          %v1303 = vpop.f32.mrb[0].mxu0
          %1304 = vmatprep.mubr.bf16.mxu0 0
          %1305 = vmatmul.mubr.bf16.gmra.mrb[0].mxu0 %v864
          %v1306 = vpop.f32.mrb[0].mxu0
          %v1307 = vadd.f32 %v1166, %v1306
          %v1308 = vpop.f32.mrb[0].mxu0
          %v1309 = vpop.f32.mrb[0].mxu0
          %v1310 = vadd.f32 %v1166, %v1309
          %v1311 = vpop.f32.mrb[0].mxu0
          %1312 = vmatprep.mubr.bf16.mxu0 0
          %1313 = vmatmul.mubr.bf16.gmra.mrb[0].mxu0 %v867
          %v1314 = vpop.f32.mrb[0].mxu0
          %v1315 = vadd.f32 %v1166, %v1314
          %v1316 = vpop.f32.mrb[0].mxu0
          %v1317 = vpop.f32.mrb[0].mxu0
          %v1318 = vadd.f32 %v1166, %v1317
          %v1319 = vpop.f32.mrb[0].mxu0
          %1320 = vmatprep.mubr.bf16.mxu0 0
          %1321 = vmatmul.mubr.bf16.gmra.mrb[0].mxu0 %v870
          %v1322 = vpop.f32.mrb[0].mxu0
          %v1323 = vadd.f32 %v1166, %v1322
          %v1324 = vpop.f32.mrb[0].mxu0
          %v1325 = vpop.f32.mrb[0].mxu0
          %v1326 = vadd.f32 %v1166, %v1325
          %v1327 = vpop.f32.mrb[0].mxu0
          %1328 = vmatprep.mubr.bf16.mxu0 0
          %1329 = vmatmul.mubr.bf16.gmra.mrb[0].mxu0 %v873
          %v1330 = vpop.f32.mrb[0].mxu0
          %v1331 = vadd.f32 %v1166, %v1330
          %v1332 = vpop.f32.mrb[0].mxu0
          %v1333 = vpop.f32.mrb[0].mxu0
          %v1334 = vadd.f32 %v1166, %v1333
          %v1335 = vpop.f32.mrb[0].mxu0
          %1336 = vmatprep.mubr.bf16.mxu0 0
          %1337 = vmatmul.mubr.bf16.gmra.mrb[0].mxu0 %v876
          %v1338 = vpop.f32.mrb[0].mxu0
          %v1339 = vadd.f32 %v1166, %v1338
          %v1340 = vpop.f32.mrb[0].mxu0
          %v1341 = vpop.f32.mrb[0].mxu0
          %v1342 = vadd.f32 %v1166, %v1341
          %v1343 = vpop.f32.mrb[0].mxu0
          %1344 = vmatprep.mubr.bf16.mxu0 0
          %1345 = vmatmul.mubr.bf16.gmra.mrb[0].mxu0 %v879
          %v1346 = vpop.f32.mrb[0].mxu0
          %v1347 = vadd.f32 %v1166, %v1346
          %v1348 = vpop.f32.mrb[0].mxu0
          %v1349 = vpop.f32.mrb[0].mxu0
          %v1350 = vadd.f32 %v1166, %v1349
          %v1351 = vpop.f32.mrb[0].mxu0
          %1352 = vdwg.mxu0
          %v1353 = vpack.c.bf16 %v1230, %v1227
          %v1354 = vpack.c.bf16 %v1238, %v1235
          %v1355 = vpack.c.bf16 %v1246, %v1243
          %v1356 = vpack.c.bf16 %v1254, %v1251
          %v1357 = vpack.c.bf16 %v1262, %v1259
          %v1358 = vpack.c.bf16 %v1270, %v1267
          %v1359 = vpack.c.bf16 %v1278, %v1275
          %v1360 = vpack.c.bf16 %v1286, %v1283
          %v1361 = vpack.c.bf16 %v1294, %v1291
          %v1362 = vpack.c.bf16 %v1302, %v1299
          %v1363 = vpack.c.bf16 %v1310, %v1307
          %v1364 = vpack.c.bf16 %v1318, %v1315
          %v1365 = vpack.c.bf16 %v1326, %v1323
          %v1366 = vpack.c.bf16 %v1334, %v1331
          %v1367 = vpack.c.bf16 %v1342, %v1339
          %v1368 = vpack.c.bf16 %v1350, %v1347
          %1369 = vst.msk [vmem:[#allocation3] sm:$0xff] %vm1136, %v1353
          %1370 = vst.msk [vmem:[#allocation3 + $0x8] sm:$0xff] %vm1136, %v1354
          %1371 = vst.msk [vmem:[#allocation3 + $0x10] sm:$0xff] %vm1136, %v1355
          %1372 = vst.msk [vmem:[#allocation3 + $0x18] sm:$0xff] %vm1136, %v1356
          %1373 = vst.msk [vmem:[#allocation3 + $0x20] sm:$0xff] %vm1136, %v1357
          %1374 = vst.msk [vmem:[#allocation3 + $0x28] sm:$0xff] %vm1136, %v1358
          %1375 = vst.msk [vmem:[#allocation3 + $0x30] sm:$0xff] %vm1136, %v1359
          %1376 = vst.msk [vmem:[#allocation3 + $0x38] sm:$0xff] %vm1136, %v1360
          %1377 = vst.msk [vmem:[#allocation3 + $0x40] sm:$0xff] %vm1136, %v1361
          %1378 = vst.msk [vmem:[#allocation3 + $0x48] sm:$0xff] %vm1136, %v1362
          %1379 = vst.msk [vmem:[#allocation3 + $0x50] sm:$0xff] %vm1136, %v1363
          %1380 = vst.msk [vmem:[#allocation3 + $0x58] sm:$0xff] %vm1136, %v1364
          %1381 = vst.msk [vmem:[#allocation3 + $0x60] sm:$0xff] %vm1136, %v1365
          %1382 = vst.msk [vmem:[#allocation3 + $0x68] sm:$0xff] %vm1136, %v1366
          %1383 = vst.msk [vmem:[#allocation3 + $0x70] sm:$0xff] %vm1136, %v1367
          %1384 = vst.msk [vmem:[#allocation3 + $0x78] sm:$0xff] %vm1136, %v1368
          %s1385 = scalar_lea.vmem %s576, 128 [#allocation4]
          %v1386 = vld [vmem:[%s1385] sm:$0xf]
          %v1387 = vld [vmem:[%s1385 + $0x4] sm:$0xf]
          %v1388 = vld [vmem:[%s1385 + $0x8] sm:$0xf]
          %v1389 = vld [vmem:[%s1385 + $0xc] sm:$0xf]
          %v1390 = vld [vmem:[%s1385 + $0x10] sm:$0xf]
          %v1391 = vld [vmem:[%s1385 + $0x14] sm:$0xf]
          %v1392 = vld [vmem:[%s1385 + $0x18] sm:$0xf]
          %v1393 = vld [vmem:[%s1385 + $0x1c] sm:$0xf]
          %v1394 = vld [vmem:[%s1385 + $0x20] sm:$0xf]
          %v1395 = vld [vmem:[%s1385 + $0x24] sm:$0xf]
          %v1396 = vld [vmem:[%s1385 + $0x28] sm:$0xf]
          %v1397 = vld [vmem:[%s1385 + $0x2c] sm:$0xf]
          %v1398 = vld [vmem:[%s1385 + $0x30] sm:$0xf]
          %v1399 = vld [vmem:[%s1385 + $0x34] sm:$0xf]
          %v1400 = vld [vmem:[%s1385 + $0x38] sm:$0xf]
          %v1401 = vld [vmem:[%s1385 + $0x3c] sm:$0xf]
          %v1402 = vld [vmem:[%s1385 + $0x40] sm:$0xf]
          %v1403 = vld [vmem:[%s1385 + $0x44] sm:$0xf]
          %v1404 = vld [vmem:[%s1385 + $0x48] sm:$0xf]
          %v1405 = vld [vmem:[%s1385 + $0x4c] sm:$0xf]
          %v1406 = vld [vmem:[%s1385 + $0x50] sm:$0xf]
          %v1407 = vld [vmem:[%s1385 + $0x54] sm:$0xf]
          %v1408 = vld [vmem:[%s1385 + $0x58] sm:$0xf]
          %v1409 = vld [vmem:[%s1385 + $0x5c] sm:$0xf]
          %v1410 = vld [vmem:[%s1385 + $0x60] sm:$0xf]
          %v1411 = vld [vmem:[%s1385 + $0x64] sm:$0xf]
          %v1412 = vld [vmem:[%s1385 + $0x68] sm:$0xf]
          %v1413 = vld [vmem:[%s1385 + $0x6c] sm:$0xf]
          %v1414 = vld [vmem:[%s1385 + $0x70] sm:$0xf]
          %v1415 = vld [vmem:[%s1385 + $0x74] sm:$0xf]
          %v1416 = vld [vmem:[%s1385 + $0x78] sm:$0xf]
          %v1417 = vld [vmem:[%s1385 + $0x7c] sm:$0xf]
          %v1418 = vld [vmem:[#allocation9] sm:$0xf]
          %v1419 = vld [vmem:[#allocation9 + $0x4] sm:$0xf]
          %v1420 = vld [vmem:[#allocation9 + $0x8] sm:$0xf]
          %v1421 = vld [vmem:[#allocation9 + $0xc] sm:$0xf]
          %v1422 = vld [vmem:[#allocation9 + $0x10] sm:$0xf]
          %v1423 = vld [vmem:[#allocation9 + $0x14] sm:$0xf]
          %v1424 = vld [vmem:[#allocation9 + $0x18] sm:$0xf]
          %v1425 = vld [vmem:[#allocation9 + $0x1c] sm:$0xf]
          %v1458 = vunpack.c.l.b16 %v1386
          %v1459 = vunpack.c.l.b16 %v1387
          %v1460 = vunpack.c.l.b16 %v1388
          %v1461 = vunpack.c.l.b16 %v1389
          %v1462 = vunpack.c.l.b16 %v1390
          %v1463 = vunpack.c.l.b16 %v1391
          %v1464 = vunpack.c.l.b16 %v1392
          %v1465 = vunpack.c.l.b16 %v1393
          %v1466 = vunpack.c.l.b16 %v1394
          %v1467 = vunpack.c.l.b16 %v1395
          %v1468 = vunpack.c.l.b16 %v1396
          %v1469 = vunpack.c.l.b16 %v1397
          %v1470 = vunpack.c.l.b16 %v1398
          %v1471 = vunpack.c.l.b16 %v1399
          %v1472 = vunpack.c.l.b16 %v1400
          %v1473 = vunpack.c.l.b16 %v1401
          %v1474 = vunpack.c.l.b16 %v1402
          %v1475 = vunpack.c.l.b16 %v1403
          %v1476 = vunpack.c.l.b16 %v1404
          %v1477 = vunpack.c.l.b16 %v1405
          %v1478 = vunpack.c.l.b16 %v1406
          %v1479 = vunpack.c.l.b16 %v1407
          %v1480 = vunpack.c.l.b16 %v1408
          %v1481 = vunpack.c.l.b16 %v1409
          %v1482 = vunpack.c.l.b16 %v1410
          %v1483 = vunpack.c.l.b16 %v1411
          %v1484 = vunpack.c.l.b16 %v1412
          %v1485 = vunpack.c.l.b16 %v1413
          %v1486 = vunpack.c.l.b16 %v1414
          %v1487 = vunpack.c.l.b16 %v1415
          %v1488 = vunpack.c.l.b16 %v1416
          %v1489 = vunpack.c.l.b16 %v1417
          %v1490 = vpack.c.b16 %v1459, %v1458
          %v1491 = vpack.c.b16 %v1461, %v1460
          %v1492 = vpack.c.b16 %v1463, %v1462
          %v1493 = vpack.c.b16 %v1465, %v1464
          %v1494 = vpack.c.b16 %v1467, %v1466
          %v1495 = vpack.c.b16 %v1469, %v1468
          %v1496 = vpack.c.b16 %v1471, %v1470
          %v1497 = vpack.c.b16 %v1473, %v1472
          %v1498 = vpack.c.b16 %v1475, %v1474
          %v1499 = vpack.c.b16 %v1477, %v1476
          %v1500 = vpack.c.b16 %v1479, %v1478
          %v1501 = vpack.c.b16 %v1481, %v1480
          %v1502 = vpack.c.b16 %v1483, %v1482
          %v1503 = vpack.c.b16 %v1485, %v1484
          %v1504 = vpack.c.b16 %v1487, %v1486
          %v1505 = vpack.c.b16 %v1489, %v1488
          %v1514 = vunpack.c.l.b16 %v1418
          %v1515 = vunpack.c.l.b16 %v1419
          %v1516 = vunpack.c.l.b16 %v1420
          %v1517 = vunpack.c.l.b16 %v1421
          %v1518 = vunpack.c.l.b16 %v1422
          %v1519 = vunpack.c.l.b16 %v1423
          %v1520 = vunpack.c.l.b16 %v1424
          %v1521 = vunpack.c.l.b16 %v1425
          %v1522 = vpack.c.b16 %v1515, %v1514
          %v1523 = vpack.c.b16 %v1517, %v1516
          %v1524 = vpack.c.b16 %v1519, %v1518
          %v1525 = vpack.c.b16 %v1521, %v1520
          %v1531 = vsel %vm832, %v1490, 0
          %v1534 = vsel %vm832, %v1491, 0
          %v1537 = vsel %vm832, %v1492, 0
          %v1540 = vsel %vm832, %v1493, 0
          %v1543 = vsel %vm832, %v1494, 0
          %v1546 = vsel %vm832, %v1495, 0
          %v1549 = vsel %vm832, %v1496, 0
          %v1552 = vsel %vm832, %v1497, 0
          %v1555 = vsel %vm832, %v1498, 0
          %v1558 = vsel %vm832, %v1499, 0
          %v1561 = vsel %vm832, %v1500, 0
          %v1564 = vsel %vm832, %v1501, 0
          %v1567 = vsel %vm832, %v1502, 0
          %v1570 = vsel %vm832, %v1503, 0
          %v1573 = vsel %vm832, %v1504, 0
          %v1576 = vsel %vm832, %v1505, 0
          %1578 = vmatprep.subr.bf16.mxu0 0
          %1579 = vmatpush1.bf16.msra.mxu0 %v1522
          %1580 = vmatprep.subr.bf16.mxu0 0
          %1581 = vmatpush1.bf16.msra.mxu0 %v1523
          %1582 = vmatprep.subr.bf16.mxu0 0
          %1583 = vmatpush1.bf16.msra.mxu0 %v1524
          %1584 = vmatprep.subr.bf16.mxu0 0
          %1585 = vmatpush1.bf16.msra.mxu0 %v1525
          %1586 = vmatprep.subr.bf16.mxu0 0
          %1587 = vmatpush1.bf16.msra.mxu0 0
          %1588 = vmatprep.subr.bf16.mxu0 0
          %1589 = vmatpush1.bf16.msra.mxu0 0
          %1590 = vmatprep.subr.bf16.mxu0 0
          %1591 = vmatpush1.bf16.msra.mxu0 0
          %1592 = vmatprep.subr.bf16.mxu0 0
          %1593 = vmatpush1.bf16.msra.mxu0 0
          %1594 = vmatprep.subr.bf16.mxu0 0
          %1595 = vmatpush1.bf16.msra.mxu0 0
          %1596 = vmatprep.subr.bf16.mxu0 0
          %1597 = vmatpush1.bf16.msra.mxu0 0
          %1598 = vmatprep.subr.bf16.mxu0 0
          %1599 = vmatpush1.bf16.msra.mxu0 0
          %1600 = vmatprep.subr.bf16.mxu0 0
          %1601 = vmatpush1.bf16.msra.mxu0 0
          %1602 = vmatprep.subr.bf16.mxu0 0
          %1603 = vmatpush1.bf16.msra.mxu0 0
          %1604 = vmatprep.subr.bf16.mxu0 0
          %1605 = vmatpush1.bf16.msra.mxu0 0
          %1606 = vmatprep.subr.bf16.mxu0 0
          %1607 = vmatpush1.bf16.msra.mxu0 0
          %1608 = vmatprep.subr.bf16.mxu0 0
          %1609 = vmatpush1.bf16.msra.mxu0 0
          %1610 = vmatprep.mubr.bf16.mxu0 0
          %1611 = vmatmul.mubr.bf16.gmra.mrb[0].mxu0 %v1531
          %v1612 = vpop.f32.mrb[0].mxu0
          %v1613 = vadd.f32 0.0, %v1612
          %v1614 = vpop.f32.mrb[0].mxu0
          %v1615 = vpop.f32.mrb[0].mxu0
          %v1616 = vadd.f32 0.0, %v1615
          %v1617 = vpop.f32.mrb[0].mxu0
          %1618 = vmatprep.mubr.bf16.mxu0 0
          %1619 = vmatmul.mubr.bf16.gmra.mrb[0].mxu0 %v1534
          %v1620 = vpop.f32.mrb[0].mxu0
          %v1621 = vadd.f32 0.0, %v1620
          %v1622 = vpop.f32.mrb[0].mxu0
          %v1623 = vpop.f32.mrb[0].mxu0
          %v1624 = vadd.f32 0.0, %v1623
          %v1625 = vpop.f32.mrb[0].mxu0
          %1626 = vmatprep.mubr.bf16.mxu0 0
          %1627 = vmatmul.mubr.bf16.gmra.mrb[0].mxu0 %v1537
          %v1628 = vpop.f32.mrb[0].mxu0
          %v1629 = vadd.f32 0.0, %v1628
          %v1630 = vpop.f32.mrb[0].mxu0
          %v1631 = vpop.f32.mrb[0].mxu0
          %v1632 = vadd.f32 0.0, %v1631
          %v1633 = vpop.f32.mrb[0].mxu0
          %1634 = vmatprep.mubr.bf16.mxu0 0
          %1635 = vmatmul.mubr.bf16.gmra.mrb[0].mxu0 %v1540
          %v1636 = vpop.f32.mrb[0].mxu0
          %v1637 = vadd.f32 0.0, %v1636
          %v1638 = vpop.f32.mrb[0].mxu0
          %v1639 = vpop.f32.mrb[0].mxu0
          %v1640 = vadd.f32 0.0, %v1639
          %v1641 = vpop.f32.mrb[0].mxu0
          %1642 = vmatprep.mubr.bf16.mxu0 0
          %1643 = vmatmul.mubr.bf16.gmra.mrb[0].mxu0 %v1543
          %v1644 = vpop.f32.mrb[0].mxu0
          %v1645 = vadd.f32 0.0, %v1644
          %v1646 = vpop.f32.mrb[0].mxu0
          %v1647 = vpop.f32.mrb[0].mxu0
          %v1648 = vadd.f32 0.0, %v1647
          %v1649 = vpop.f32.mrb[0].mxu0
          %1650 = vmatprep.mubr.bf16.mxu0 0
          %1651 = vmatmul.mubr.bf16.gmra.mrb[0].mxu0 %v1546
          %v1652 = vpop.f32.mrb[0].mxu0
          %v1653 = vadd.f32 0.0, %v1652
          %v1654 = vpop.f32.mrb[0].mxu0
          %v1655 = vpop.f32.mrb[0].mxu0
          %v1656 = vadd.f32 0.0, %v1655
          %v1657 = vpop.f32.mrb[0].mxu0
          %1658 = vmatprep.mubr.bf16.mxu0 0
          %1659 = vmatmul.mubr.bf16.gmra.mrb[0].mxu0 %v1549
          %v1660 = vpop.f32.mrb[0].mxu0
          %v1661 = vadd.f32 0.0, %v1660
          %v1662 = vpop.f32.mrb[0].mxu0
          %v1663 = vpop.f32.mrb[0].mxu0
          %v1664 = vadd.f32 0.0, %v1663
          %v1665 = vpop.f32.mrb[0].mxu0
          %1666 = vmatprep.mubr.bf16.mxu0 0
          %1667 = vmatmul.mubr.bf16.gmra.mrb[0].mxu0 %v1552
          %v1668 = vpop.f32.mrb[0].mxu0
          %v1669 = vadd.f32 0.0, %v1668
          %v1670 = vpop.f32.mrb[0].mxu0
          %v1671 = vpop.f32.mrb[0].mxu0
          %v1672 = vadd.f32 0.0, %v1671
          %v1673 = vpop.f32.mrb[0].mxu0
          %1674 = vmatprep.mubr.bf16.mxu0 0
          %1675 = vmatmul.mubr.bf16.gmra.mrb[0].mxu0 %v1555
          %v1676 = vpop.f32.mrb[0].mxu0
          %v1677 = vadd.f32 0.0, %v1676
          %v1678 = vpop.f32.mrb[0].mxu0
          %v1679 = vpop.f32.mrb[0].mxu0
          %v1680 = vadd.f32 0.0, %v1679
          %v1681 = vpop.f32.mrb[0].mxu0
          %1682 = vmatprep.mubr.bf16.mxu0 0
          %1683 = vmatmul.mubr.bf16.gmra.mrb[0].mxu0 %v1558
          %v1684 = vpop.f32.mrb[0].mxu0
          %v1685 = vadd.f32 0.0, %v1684
          %v1686 = vpop.f32.mrb[0].mxu0
          %v1687 = vpop.f32.mrb[0].mxu0
          %v1688 = vadd.f32 0.0, %v1687
          %v1689 = vpop.f32.mrb[0].mxu0
          %1690 = vmatprep.mubr.bf16.mxu0 0
          %1691 = vmatmul.mubr.bf16.gmra.mrb[0].mxu0 %v1561
          %v1692 = vpop.f32.mrb[0].mxu0
          %v1693 = vadd.f32 0.0, %v1692
          %v1694 = vpop.f32.mrb[0].mxu0
          %v1695 = vpop.f32.mrb[0].mxu0
          %v1696 = vadd.f32 0.0, %v1695
          %v1697 = vpop.f32.mrb[0].mxu0
          %1698 = vmatprep.mubr.bf16.mxu0 0
          %1699 = vmatmul.mubr.bf16.gmra.mrb[0].mxu0 %v1564
          %v1700 = vpop.f32.mrb[0].mxu0
          %v1701 = vadd.f32 0.0, %v1700
          %v1702 = vpop.f32.mrb[0].mxu0
          %v1703 = vpop.f32.mrb[0].mxu0
          %v1704 = vadd.f32 0.0, %v1703
          %v1705 = vpop.f32.mrb[0].mxu0
          %1706 = vmatprep.mubr.bf16.mxu0 0
          %1707 = vmatmul.mubr.bf16.gmra.mrb[0].mxu0 %v1567
          %v1708 = vpop.f32.mrb[0].mxu0
          %v1709 = vadd.f32 0.0, %v1708
          %v1710 = vpop.f32.mrb[0].mxu0
          %v1711 = vpop.f32.mrb[0].mxu0
          %v1712 = vadd.f32 0.0, %v1711
          %v1713 = vpop.f32.mrb[0].mxu0
          %1714 = vmatprep.mubr.bf16.mxu0 0
          %1715 = vmatmul.mubr.bf16.gmra.mrb[0].mxu0 %v1570
          %v1716 = vpop.f32.mrb[0].mxu0
          %v1717 = vadd.f32 0.0, %v1716
          %v1718 = vpop.f32.mrb[0].mxu0
          %v1719 = vpop.f32.mrb[0].mxu0
          %v1720 = vadd.f32 0.0, %v1719
          %v1721 = vpop.f32.mrb[0].mxu0
          %1722 = vmatprep.mubr.bf16.mxu0 0
          %1723 = vmatmul.mubr.bf16.gmra.mrb[0].mxu0 %v1573
          %v1724 = vpop.f32.mrb[0].mxu0
          %v1725 = vadd.f32 0.0, %v1724
          %v1726 = vpop.f32.mrb[0].mxu0
          %v1727 = vpop.f32.mrb[0].mxu0
          %v1728 = vadd.f32 0.0, %v1727
          %v1729 = vpop.f32.mrb[0].mxu0
          %1730 = vmatprep.mubr.bf16.mxu0 0
          %1731 = vmatmul.mubr.bf16.gmra.mrb[0].mxu0 %v1576
          %v1732 = vpop.f32.mrb[0].mxu0
          %v1733 = vadd.f32 0.0, %v1732
          %v1734 = vpop.f32.mrb[0].mxu0
          %v1735 = vpop.f32.mrb[0].mxu0
          %v1736 = vadd.f32 0.0, %v1735
          %v1737 = vpop.f32.mrb[0].mxu0
          %1738 = vdwg.mxu0
          %v1739 = vld [vmem:[#allocation10] sm:$0x1]
          %v1741 = vlaneseq
          %v1742 = vshrl.u32 %v1741, 7
          %v1743 = vsub.s32 0, %v1742
          %v1744 = vrot.slane %v1739, %v1743
          %v1746 = vmul.f32 %v1613, %v1744
          %v1747 = vmul.f32 %v1616, %v1744
          %v1748 = vmul.f32 %v1621, %v1744
          %v1749 = vmul.f32 %v1624, %v1744
          %v1750 = vmul.f32 %v1629, %v1744
          %v1751 = vmul.f32 %v1632, %v1744
          %v1752 = vmul.f32 %v1637, %v1744
          %v1753 = vmul.f32 %v1640, %v1744
          %v1754 = vmul.f32 %v1645, %v1744
          %v1755 = vmul.f32 %v1648, %v1744
          %v1756 = vmul.f32 %v1653, %v1744
          %v1757 = vmul.f32 %v1656, %v1744
          %v1758 = vmul.f32 %v1661, %v1744
          %v1759 = vmul.f32 %v1664, %v1744
          %v1760 = vmul.f32 %v1669, %v1744
          %v1761 = vmul.f32 %v1672, %v1744
          %v1762 = vmul.f32 %v1677, %v1744
          %v1763 = vmul.f32 %v1680, %v1744
          %v1764 = vmul.f32 %v1685, %v1744
          %v1765 = vmul.f32 %v1688, %v1744
          %v1766 = vmul.f32 %v1693, %v1744
          %v1767 = vmul.f32 %v1696, %v1744
          %v1768 = vmul.f32 %v1701, %v1744
          %v1769 = vmul.f32 %v1704, %v1744
          %v1770 = vmul.f32 %v1709, %v1744
          %v1771 = vmul.f32 %v1712, %v1744
          %v1772 = vmul.f32 %v1717, %v1744
          %v1773 = vmul.f32 %v1720, %v1744
          %v1774 = vmul.f32 %v1725, %v1744
          %v1775 = vmul.f32 %v1728, %v1744
          %v1776 = vmul.f32 %v1733, %v1744
          %v1777 = vmul.f32 %v1736, %v1744
          %v1778 = vld [vmem:[#allocation12] sm:$0x1]
          %v1780 = vlaneseq
          %v1781 = vshrl.u32 %v1780, 7
          %v1782 = vsub.s32 0, %v1781
          %v1783 = vrot.slane %v1778, %v1782
          %v1785 = vadd.f32 %v1746, %v1783
          %v1786 = vadd.f32 %v1747, %v1783
          %v1787 = vadd.f32 %v1748, %v1783
          %v1788 = vadd.f32 %v1749, %v1783
          %v1789 = vadd.f32 %v1750, %v1783
          %v1790 = vadd.f32 %v1751, %v1783
          %v1791 = vadd.f32 %v1752, %v1783
          %v1792 = vadd.f32 %v1753, %v1783
          %v1793 = vadd.f32 %v1754, %v1783
          %v1794 = vadd.f32 %v1755, %v1783
          %v1795 = vadd.f32 %v1756, %v1783
          %v1796 = vadd.f32 %v1757, %v1783
          %v1797 = vadd.f32 %v1758, %v1783
          %v1798 = vadd.f32 %v1759, %v1783
          %v1799 = vadd.f32 %v1760, %v1783
          %v1800 = vadd.f32 %v1761, %v1783
          %v1801 = vadd.f32 %v1762, %v1783
          %v1802 = vadd.f32 %v1763, %v1783
          %v1803 = vadd.f32 %v1764, %v1783
          %v1804 = vadd.f32 %v1765, %v1783
          %v1805 = vadd.f32 %v1766, %v1783
          %v1806 = vadd.f32 %v1767, %v1783
          %v1807 = vadd.f32 %v1768, %v1783
          %v1808 = vadd.f32 %v1769, %v1783
          %v1809 = vadd.f32 %v1770, %v1783
          %v1810 = vadd.f32 %v1771, %v1783
          %v1811 = vadd.f32 %v1772, %v1783
          %v1812 = vadd.f32 %v1773, %v1783
          %v1813 = vadd.f32 %v1774, %v1783
          %v1814 = vadd.f32 %v1775, %v1783
          %v1815 = vadd.f32 %v1776, %v1783
          %v1816 = vadd.f32 %v1777, %v1783
          %v1817 = vpack.c.bf16 %v1786, %v1785
          %v1818 = vpack.c.bf16 %v1788, %v1787
          %v1819 = vpack.c.bf16 %v1790, %v1789
          %v1820 = vpack.c.bf16 %v1792, %v1791
          %v1821 = vpack.c.bf16 %v1794, %v1793
          %v1822 = vpack.c.bf16 %v1796, %v1795
          %v1823 = vpack.c.bf16 %v1798, %v1797
          %v1824 = vpack.c.bf16 %v1800, %v1799
          %v1825 = vpack.c.bf16 %v1802, %v1801
          %v1826 = vpack.c.bf16 %v1804, %v1803
          %v1827 = vpack.c.bf16 %v1806, %v1805
          %v1828 = vpack.c.bf16 %v1808, %v1807
          %v1829 = vpack.c.bf16 %v1810, %v1809
          %v1830 = vpack.c.bf16 %v1812, %v1811
          %v1831 = vpack.c.bf16 %v1814, %v1813
          %v1832 = vpack.c.bf16 %v1816, %v1815
          %s1833 = scalar_lea.vmem [#allocation2], 128
          %1834 = vst.msk [vmem:[%s1833] sm:$0xff] %vm1136, %v1817
          %1835 = vst.msk [vmem:[%s1833 + $0x8] sm:$0xff] %vm1136, %v1818
          %1836 = vst.msk [vmem:[%s1833 + $0x10] sm:$0xff] %vm1136, %v1819
          %1837 = vst.msk [vmem:[%s1833 + $0x18] sm:$0xff] %vm1136, %v1820
          %1838 = vst.msk [vmem:[%s1833 + $0x20] sm:$0xff] %vm1136, %v1821
          %1839 = vst.msk [vmem:[%s1833 + $0x28] sm:$0xff] %vm1136, %v1822
          %1840 = vst.msk [vmem:[%s1833 + $0x30] sm:$0xff] %vm1136, %v1823
          %1841 = vst.msk [vmem:[%s1833 + $0x38] sm:$0xff] %vm1136, %v1824
          %1842 = vst.msk [vmem:[%s1833 + $0x40] sm:$0xff] %vm1136, %v1825
          %1843 = vst.msk [vmem:[%s1833 + $0x48] sm:$0xff] %vm1136, %v1826
          %1844 = vst.msk [vmem:[%s1833 + $0x50] sm:$0xff] %vm1136, %v1827
          %1845 = vst.msk [vmem:[%s1833 + $0x58] sm:$0xff] %vm1136, %v1828
          %1846 = vst.msk [vmem:[%s1833 + $0x60] sm:$0xff] %vm1136, %v1829
          %1847 = vst.msk [vmem:[%s1833 + $0x68] sm:$0xff] %vm1136, %v1830
          %1848 = vst.msk [vmem:[%s1833 + $0x70] sm:$0xff] %vm1136, %v1831
          %1849 = vst.msk [vmem:[%s1833 + $0x78] sm:$0xff] %vm1136, %v1832
          %v1850 = vld [vmem:[#allocation13] sm:$0xf]
          %v1851 = vld [vmem:[#allocation13 + $0x4] sm:$0xf]
          %v1852 = vld [vmem:[#allocation13 + $0x8] sm:$0xf]
          %v1853 = vld [vmem:[#allocation13 + $0xc] sm:$0xf]
          %v1854 = vld [vmem:[#allocation13 + $0x10] sm:$0xf]
          %v1855 = vld [vmem:[#allocation13 + $0x14] sm:$0xf]
          %v1856 = vld [vmem:[#allocation13 + $0x18] sm:$0xf]
          %v1857 = vld [vmem:[#allocation13 + $0x1c] sm:$0xf]
          %v1858 = vld [vmem:[#allocation15] sm:$0x1]
          %v1860 = vlaneseq
          %v1861 = vshrl.u32 %v1860, 7
          %v1862 = vsub.s32 0, %v1861
          %v1863 = vrot.slane %v1858, %v1862
          %v1873 = vunpack.c.l.b16 %v1850
          %v1874 = vunpack.c.l.b16 %v1851
          %v1875 = vunpack.c.l.b16 %v1852
          %v1876 = vunpack.c.l.b16 %v1853
          %v1877 = vunpack.c.l.b16 %v1854
          %v1878 = vunpack.c.l.b16 %v1855
          %v1879 = vunpack.c.l.b16 %v1856
          %v1880 = vunpack.c.l.b16 %v1857
          %v1881 = vpack.c.b16 %v1874, %v1873
          %v1882 = vpack.c.b16 %v1876, %v1875
          %v1883 = vpack.c.b16 %v1878, %v1877
          %v1884 = vpack.c.b16 %v1880, %v1879
          %1889 = vmatprep.subr.bf16.mxu0 0
          %1890 = vmatpush1.bf16.msra.mxu0 %v1881
          %1891 = vmatprep.subr.bf16.mxu0 0
          %1892 = vmatpush1.bf16.msra.mxu0 %v1882
          %1893 = vmatprep.subr.bf16.mxu0 0
          %1894 = vmatpush1.bf16.msra.mxu0 %v1883
          %1895 = vmatprep.subr.bf16.mxu0 0
          %1896 = vmatpush1.bf16.msra.mxu0 %v1884
          %1897 = vmatprep.subr.bf16.mxu0 0
          %1898 = vmatpush1.bf16.msra.mxu0 0
          %1899 = vmatprep.subr.bf16.mxu0 0
          %1900 = vmatpush1.bf16.msra.mxu0 0
          %1901 = vmatprep.subr.bf16.mxu0 0
          %1902 = vmatpush1.bf16.msra.mxu0 0
          %1903 = vmatprep.subr.bf16.mxu0 0
          %1904 = vmatpush1.bf16.msra.mxu0 0
          %1905 = vmatprep.subr.bf16.mxu0 0
          %1906 = vmatpush1.bf16.msra.mxu0 0
          %1907 = vmatprep.subr.bf16.mxu0 0
          %1908 = vmatpush1.bf16.msra.mxu0 0
          %1909 = vmatprep.subr.bf16.mxu0 0
          %1910 = vmatpush1.bf16.msra.mxu0 0
          %1911 = vmatprep.subr.bf16.mxu0 0
          %1912 = vmatpush1.bf16.msra.mxu0 0
          %1913 = vmatprep.subr.bf16.mxu0 0
          %1914 = vmatpush1.bf16.msra.mxu0 0
          %1915 = vmatprep.subr.bf16.mxu0 0
          %1916 = vmatpush1.bf16.msra.mxu0 0
          %1917 = vmatprep.subr.bf16.mxu0 0
          %1918 = vmatpush1.bf16.msra.mxu0 0
          %1919 = vmatprep.subr.bf16.mxu0 0
          %1920 = vmatpush1.bf16.msra.mxu0 0
          %1921 = vmatprep.mubr.bf16.mxu0 0
          %1922 = vmatmul.mubr.bf16.gmra.mrb[0].mxu0 %v1531
          %v1923 = vpop.f32.mrb[0].mxu0
          %v1924 = vadd.f32 %v1863, %v1923
          %v1925 = vpop.f32.mrb[0].mxu0
          %v1926 = vpop.f32.mrb[0].mxu0
          %v1927 = vadd.f32 %v1863, %v1926
          %v1928 = vpop.f32.mrb[0].mxu0
          %1929 = vmatprep.mubr.bf16.mxu0 0
          %1930 = vmatmul.mubr.bf16.gmra.mrb[0].mxu0 %v1534
          %v1931 = vpop.f32.mrb[0].mxu0
          %v1932 = vadd.f32 %v1863, %v1931
          %v1933 = vpop.f32.mrb[0].mxu0
          %v1934 = vpop.f32.mrb[0].mxu0
          %v1935 = vadd.f32 %v1863, %v1934
          %v1936 = vpop.f32.mrb[0].mxu0
          %1937 = vmatprep.mubr.bf16.mxu0 0
          %1938 = vmatmul.mubr.bf16.gmra.mrb[0].mxu0 %v1537
          %v1939 = vpop.f32.mrb[0].mxu0
          %v1940 = vadd.f32 %v1863, %v1939
          %v1941 = vpop.f32.mrb[0].mxu0
          %v1942 = vpop.f32.mrb[0].mxu0
          %v1943 = vadd.f32 %v1863, %v1942
          %v1944 = vpop.f32.mrb[0].mxu0
          %1945 = vmatprep.mubr.bf16.mxu0 0
          %1946 = vmatmul.mubr.bf16.gmra.mrb[0].mxu0 %v1540
          %v1947 = vpop.f32.mrb[0].mxu0
          %v1948 = vadd.f32 %v1863, %v1947
          %v1949 = vpop.f32.mrb[0].mxu0
          %v1950 = vpop.f32.mrb[0].mxu0
          %v1951 = vadd.f32 %v1863, %v1950
          %v1952 = vpop.f32.mrb[0].mxu0
          %1953 = vmatprep.mubr.bf16.mxu0 0
          %1954 = vmatmul.mubr.bf16.gmra.mrb[0].mxu0 %v1543
          %v1955 = vpop.f32.mrb[0].mxu0
          %v1956 = vadd.f32 %v1863, %v1955
          %v1957 = vpop.f32.mrb[0].mxu0
          %v1958 = vpop.f32.mrb[0].mxu0
          %v1959 = vadd.f32 %v1863, %v1958
          %v1960 = vpop.f32.mrb[0].mxu0
          %1961 = vmatprep.mubr.bf16.mxu0 0
          %1962 = vmatmul.mubr.bf16.gmra.mrb[0].mxu0 %v1546
          %v1963 = vpop.f32.mrb[0].mxu0
          %v1964 = vadd.f32 %v1863, %v1963
          %v1965 = vpop.f32.mrb[0].mxu0
          %v1966 = vpop.f32.mrb[0].mxu0
          %v1967 = vadd.f32 %v1863, %v1966
          %v1968 = vpop.f32.mrb[0].mxu0
          %1969 = vmatprep.mubr.bf16.mxu0 0
          %1970 = vmatmul.mubr.bf16.gmra.mrb[0].mxu0 %v1549
          %v1971 = vpop.f32.mrb[0].mxu0
          %v1972 = vadd.f32 %v1863, %v1971
          %v1973 = vpop.f32.mrb[0].mxu0
          %v1974 = vpop.f32.mrb[0].mxu0
          %v1975 = vadd.f32 %v1863, %v1974
          %v1976 = vpop.f32.mrb[0].mxu0
          %1977 = vmatprep.mubr.bf16.mxu0 0
          %1978 = vmatmul.mubr.bf16.gmra.mrb[0].mxu0 %v1552
          %v1979 = vpop.f32.mrb[0].mxu0
          %v1980 = vadd.f32 %v1863, %v1979
          %v1981 = vpop.f32.mrb[0].mxu0
          %v1982 = vpop.f32.mrb[0].mxu0
          %v1983 = vadd.f32 %v1863, %v1982
          %v1984 = vpop.f32.mrb[0].mxu0
          %1985 = vmatprep.mubr.bf16.mxu0 0
          %1986 = vmatmul.mubr.bf16.gmra.mrb[0].mxu0 %v1555
          %v1987 = vpop.f32.mrb[0].mxu0
          %v1988 = vadd.f32 %v1863, %v1987
          %v1989 = vpop.f32.mrb[0].mxu0
          %v1990 = vpop.f32.mrb[0].mxu0
          %v1991 = vadd.f32 %v1863, %v1990
          %v1992 = vpop.f32.mrb[0].mxu0
          %1993 = vmatprep.mubr.bf16.mxu0 0
          %1994 = vmatmul.mubr.bf16.gmra.mrb[0].mxu0 %v1558
          %v1995 = vpop.f32.mrb[0].mxu0
          %v1996 = vadd.f32 %v1863, %v1995
          %v1997 = vpop.f32.mrb[0].mxu0
          %v1998 = vpop.f32.mrb[0].mxu0
          %v1999 = vadd.f32 %v1863, %v1998
          %v2000 = vpop.f32.mrb[0].mxu0
          %2001 = vmatprep.mubr.bf16.mxu0 0
          %2002 = vmatmul.mubr.bf16.gmra.mrb[0].mxu0 %v1561
          %v2003 = vpop.f32.mrb[0].mxu0
          %v2004 = vadd.f32 %v1863, %v2003
          %v2005 = vpop.f32.mrb[0].mxu0
          %v2006 = vpop.f32.mrb[0].mxu0
          %v2007 = vadd.f32 %v1863, %v2006
          %v2008 = vpop.f32.mrb[0].mxu0
          %2009 = vmatprep.mubr.bf16.mxu0 0
          %2010 = vmatmul.mubr.bf16.gmra.mrb[0].mxu0 %v1564
          %v2011 = vpop.f32.mrb[0].mxu0
          %v2012 = vadd.f32 %v1863, %v2011
          %v2013 = vpop.f32.mrb[0].mxu0
          %v2014 = vpop.f32.mrb[0].mxu0
          %v2015 = vadd.f32 %v1863, %v2014
          %v2016 = vpop.f32.mrb[0].mxu0
          %2017 = vmatprep.mubr.bf16.mxu0 0
          %2018 = vmatmul.mubr.bf16.gmra.mrb[0].mxu0 %v1567
          %v2019 = vpop.f32.mrb[0].mxu0
          %v2020 = vadd.f32 %v1863, %v2019
          %v2021 = vpop.f32.mrb[0].mxu0
          %v2022 = vpop.f32.mrb[0].mxu0
          %v2023 = vadd.f32 %v1863, %v2022
          %v2024 = vpop.f32.mrb[0].mxu0
          %2025 = vmatprep.mubr.bf16.mxu0 0
          %2026 = vmatmul.mubr.bf16.gmra.mrb[0].mxu0 %v1570
          %v2027 = vpop.f32.mrb[0].mxu0
          %v2028 = vadd.f32 %v1863, %v2027
          %v2029 = vpop.f32.mrb[0].mxu0
          %v2030 = vpop.f32.mrb[0].mxu0
          %v2031 = vadd.f32 %v1863, %v2030
          %v2032 = vpop.f32.mrb[0].mxu0
          %2033 = vmatprep.mubr.bf16.mxu0 0
          %2034 = vmatmul.mubr.bf16.gmra.mrb[0].mxu0 %v1573
          %v2035 = vpop.f32.mrb[0].mxu0
          %v2036 = vadd.f32 %v1863, %v2035
          %v2037 = vpop.f32.mrb[0].mxu0
          %v2038 = vpop.f32.mrb[0].mxu0
          %v2039 = vadd.f32 %v1863, %v2038
          %v2040 = vpop.f32.mrb[0].mxu0
          %2041 = vmatprep.mubr.bf16.mxu0 0
          %2042 = vmatmul.mubr.bf16.gmra.mrb[0].mxu0 %v1576
          %v2043 = vpop.f32.mrb[0].mxu0
          %v2044 = vadd.f32 %v1863, %v2043
          %v2045 = vpop.f32.mrb[0].mxu0
          %v2046 = vpop.f32.mrb[0].mxu0
          %v2047 = vadd.f32 %v1863, %v2046
          %v2048 = vpop.f32.mrb[0].mxu0
          %2049 = vdwg.mxu0
          %v2050 = vpack.c.bf16 %v1927, %v1924
          %v2051 = vpack.c.bf16 %v1935, %v1932
          %v2052 = vpack.c.bf16 %v1943, %v1940
          %v2053 = vpack.c.bf16 %v1951, %v1948
          %v2054 = vpack.c.bf16 %v1959, %v1956
          %v2055 = vpack.c.bf16 %v1967, %v1964
          %v2056 = vpack.c.bf16 %v1975, %v1972
          %v2057 = vpack.c.bf16 %v1983, %v1980
          %v2058 = vpack.c.bf16 %v1991, %v1988
          %v2059 = vpack.c.bf16 %v1999, %v1996
          %v2060 = vpack.c.bf16 %v2007, %v2004
          %v2061 = vpack.c.bf16 %v2015, %v2012
          %v2062 = vpack.c.bf16 %v2023, %v2020
          %v2063 = vpack.c.bf16 %v2031, %v2028
          %v2064 = vpack.c.bf16 %v2039, %v2036
          %v2065 = vpack.c.bf16 %v2047, %v2044
          %s2066 = scalar_lea.vmem [#allocation3], 128
          %2067 = vst.msk [vmem:[%s2066] sm:$0xff] %vm1136, %v2050
          %2068 = vst.msk [vmem:[%s2066 + $0x8] sm:$0xff] %vm1136, %v2051
          %2069 = vst.msk [vmem:[%s2066 + $0x10] sm:$0xff] %vm1136, %v2052
          %2070 = vst.msk [vmem:[%s2066 + $0x18] sm:$0xff] %vm1136, %v2053
          %2071 = vst.msk [vmem:[%s2066 + $0x20] sm:$0xff] %vm1136, %v2054
          %2072 = vst.msk [vmem:[%s2066 + $0x28] sm:$0xff] %vm1136, %v2055
          %2073 = vst.msk [vmem:[%s2066 + $0x30] sm:$0xff] %vm1136, %v2056
          %2074 = vst.msk [vmem:[%s2066 + $0x38] sm:$0xff] %vm1136, %v2057
          %2075 = vst.msk [vmem:[%s2066 + $0x40] sm:$0xff] %vm1136, %v2058
          %2076 = vst.msk [vmem:[%s2066 + $0x48] sm:$0xff] %vm1136, %v2059
          %2077 = vst.msk [vmem:[%s2066 + $0x50] sm:$0xff] %vm1136, %v2060
          %2078 = vst.msk [vmem:[%s2066 + $0x58] sm:$0xff] %vm1136, %v2061
          %2079 = vst.msk [vmem:[%s2066 + $0x60] sm:$0xff] %vm1136, %v2062
          %2080 = vst.msk [vmem:[%s2066 + $0x68] sm:$0xff] %vm1136, %v2063
          %2081 = vst.msk [vmem:[%s2066 + $0x70] sm:$0xff] %vm1136, %v2064
          %2082 = vst.msk [vmem:[%s2066 + $0x78] sm:$0xff] %vm1136, %v2065
          %s2083 = scalar_lea.vmem %s576, 256 [#allocation4]
          %v2084 = vld [vmem:[%s2083] sm:$0xf]
          %v2085 = vld [vmem:[%s2083 + $0x4] sm:$0xf]
          %v2086 = vld [vmem:[%s2083 + $0x8] sm:$0xf]
          %v2087 = vld [vmem:[%s2083 + $0xc] sm:$0xf]
          %v2088 = vld [vmem:[%s2083 + $0x10] sm:$0xf]
          %v2089 = vld [vmem:[%s2083 + $0x14] sm:$0xf]
          %v2090 = vld [vmem:[%s2083 + $0x18] sm:$0xf]
          %v2091 = vld [vmem:[%s2083 + $0x1c] sm:$0xf]
          %v2092 = vld [vmem:[%s2083 + $0x20] sm:$0xf]
          %v2093 = vld [vmem:[%s2083 + $0x24] sm:$0xf]
          %v2094 = vld [vmem:[%s2083 + $0x28] sm:$0xf]
          %v2095 = vld [vmem:[%s2083 + $0x2c] sm:$0xf]
          %v2096 = vld [vmem:[%s2083 + $0x30] sm:$0xf]
          %v2097 = vld [vmem:[%s2083 + $0x34] sm:$0xf]
          %v2098 = vld [vmem:[%s2083 + $0x38] sm:$0xf]
          %v2099 = vld [vmem:[%s2083 + $0x3c] sm:$0xf]
          %v2100 = vld [vmem:[%s2083 + $0x40] sm:$0xf]
          %v2101 = vld [vmem:[%s2083 + $0x44] sm:$0xf]
          %v2102 = vld [vmem:[%s2083 + $0x48] sm:$0xf]
          %v2103 = vld [vmem:[%s2083 + $0x4c] sm:$0xf]
          %v2104 = vld [vmem:[%s2083 + $0x50] sm:$0xf]
          %v2105 = vld [vmem:[%s2083 + $0x54] sm:$0xf]
          %v2106 = vld [vmem:[%s2083 + $0x58] sm:$0xf]
          %v2107 = vld [vmem:[%s2083 + $0x5c] sm:$0xf]
          %v2108 = vld [vmem:[%s2083 + $0x60] sm:$0xf]
          %v2109 = vld [vmem:[%s2083 + $0x64] sm:$0xf]
          %v2110 = vld [vmem:[%s2083 + $0x68] sm:$0xf]
          %v2111 = vld [vmem:[%s2083 + $0x6c] sm:$0xf]
          %v2112 = vld [vmem:[%s2083 + $0x70] sm:$0xf]
          %v2113 = vld [vmem:[%s2083 + $0x74] sm:$0xf]
          %v2114 = vld [vmem:[%s2083 + $0x78] sm:$0xf]
          %v2115 = vld [vmem:[%s2083 + $0x7c] sm:$0xf]
          %v2116 = vld [vmem:[#allocation9] sm:$0xf]
          %v2117 = vld [vmem:[#allocation9 + $0x4] sm:$0xf]
          %v2118 = vld [vmem:[#allocation9 + $0x8] sm:$0xf]
          %v2119 = vld [vmem:[#allocation9 + $0xc] sm:$0xf]
          %v2120 = vld [vmem:[#allocation9 + $0x10] sm:$0xf]
          %v2121 = vld [vmem:[#allocation9 + $0x14] sm:$0xf]
          %v2122 = vld [vmem:[#allocation9 + $0x18] sm:$0xf]
          %v2123 = vld [vmem:[#allocation9 + $0x1c] sm:$0xf]
          %v2156 = vunpack.c.l.b16 %v2084
          %v2157 = vunpack.c.l.b16 %v2085
          %v2158 = vunpack.c.l.b16 %v2086
          %v2159 = vunpack.c.l.b16 %v2087
          %v2160 = vunpack.c.l.b16 %v2088
          %v2161 = vunpack.c.l.b16 %v2089
          %v2162 = vunpack.c.l.b16 %v2090
          %v2163 = vunpack.c.l.b16 %v2091
          %v2164 = vunpack.c.l.b16 %v2092
          %v2165 = vunpack.c.l.b16 %v2093
          %v2166 = vunpack.c.l.b16 %v2094
          %v2167 = vunpack.c.l.b16 %v2095
          %v2168 = vunpack.c.l.b16 %v2096
          %v2169 = vunpack.c.l.b16 %v2097
          %v2170 = vunpack.c.l.b16 %v2098
          %v2171 = vunpack.c.l.b16 %v2099
          %v2172 = vunpack.c.l.b16 %v2100
          %v2173 = vunpack.c.l.b16 %v2101
          %v2174 = vunpack.c.l.b16 %v2102
          %v2175 = vunpack.c.l.b16 %v2103
          %v2176 = vunpack.c.l.b16 %v2104
          %v2177 = vunpack.c.l.b16 %v2105
          %v2178 = vunpack.c.l.b16 %v2106
          %v2179 = vunpack.c.l.b16 %v2107
          %v2180 = vunpack.c.l.b16 %v2108
          %v2181 = vunpack.c.l.b16 %v2109
          %v2182 = vunpack.c.l.b16 %v2110
          %v2183 = vunpack.c.l.b16 %v2111
          %v2184 = vunpack.c.l.b16 %v2112
          %v2185 = vunpack.c.l.b16 %v2113
          %v2186 = vunpack.c.l.b16 %v2114
          %v2187 = vunpack.c.l.b16 %v2115
          %v2188 = vpack.c.b16 %v2157, %v2156
          %v2189 = vpack.c.b16 %v2159, %v2158
          %v2190 = vpack.c.b16 %v2161, %v2160
          %v2191 = vpack.c.b16 %v2163, %v2162
          %v2192 = vpack.c.b16 %v2165, %v2164
          %v2193 = vpack.c.b16 %v2167, %v2166
          %v2194 = vpack.c.b16 %v2169, %v2168
          %v2195 = vpack.c.b16 %v2171, %v2170
          %v2196 = vpack.c.b16 %v2173, %v2172
          %v2197 = vpack.c.b16 %v2175, %v2174
          %v2198 = vpack.c.b16 %v2177, %v2176
          %v2199 = vpack.c.b16 %v2179, %v2178
          %v2200 = vpack.c.b16 %v2181, %v2180
          %v2201 = vpack.c.b16 %v2183, %v2182
          %v2202 = vpack.c.b16 %v2185, %v2184
          %v2203 = vpack.c.b16 %v2187, %v2186
          %v2212 = vunpack.c.l.b16 %v2116
          %v2213 = vunpack.c.l.b16 %v2117
          %v2214 = vunpack.c.l.b16 %v2118
          %v2215 = vunpack.c.l.b16 %v2119
          %v2216 = vunpack.c.l.b16 %v2120
          %v2217 = vunpack.c.l.b16 %v2121
          %v2218 = vunpack.c.l.b16 %v2122
          %v2219 = vunpack.c.l.b16 %v2123
          %v2220 = vpack.c.b16 %v2213, %v2212
          %v2221 = vpack.c.b16 %v2215, %v2214
          %v2222 = vpack.c.b16 %v2217, %v2216
          %v2223 = vpack.c.b16 %v2219, %v2218
          %v2229 = vsel %vm832, %v2188, 0
          %v2232 = vsel %vm832, %v2189, 0
          %v2235 = vsel %vm832, %v2190, 0
          %v2238 = vsel %vm832, %v2191, 0
          %v2241 = vsel %vm832, %v2192, 0
          %v2244 = vsel %vm832, %v2193, 0
          %v2247 = vsel %vm832, %v2194, 0
          %v2250 = vsel %vm832, %v2195, 0
          %v2253 = vsel %vm832, %v2196, 0
          %v2256 = vsel %vm832, %v2197, 0
          %v2259 = vsel %vm832, %v2198, 0
          %v2262 = vsel %vm832, %v2199, 0
          %v2265 = vsel %vm832, %v2200, 0
          %v2268 = vsel %vm832, %v2201, 0
          %v2271 = vsel %vm832, %v2202, 0
          %v2274 = vsel %vm832, %v2203, 0
          %2276 = vmatprep.subr.bf16.mxu0 0
          %2277 = vmatpush1.bf16.msra.mxu0 %v2220
          %2278 = vmatprep.subr.bf16.mxu0 0
          %2279 = vmatpush1.bf16.msra.mxu0 %v2221
          %2280 = vmatprep.subr.bf16.mxu0 0
          %2281 = vmatpush1.bf16.msra.mxu0 %v2222
          %2282 = vmatprep.subr.bf16.mxu0 0
          %2283 = vmatpush1.bf16.msra.mxu0 %v2223
          %2284 = vmatprep.subr.bf16.mxu0 0
          %2285 = vmatpush1.bf16.msra.mxu0 0
          %2286 = vmatprep.subr.bf16.mxu0 0
          %2287 = vmatpush1.bf16.msra.mxu0 0
          %2288 = vmatprep.subr.bf16.mxu0 0
          %2289 = vmatpush1.bf16.msra.mxu0 0
          %2290 = vmatprep.subr.bf16.mxu0 0
          %2291 = vmatpush1.bf16.msra.mxu0 0
          %2292 = vmatprep.subr.bf16.mxu0 0
          %2293 = vmatpush1.bf16.msra.mxu0 0
          %2294 = vmatprep.subr.bf16.mxu0 0
          %2295 = vmatpush1.bf16.msra.mxu0 0
          %2296 = vmatprep.subr.bf16.mxu0 0
          %2297 = vmatpush1.bf16.msra.mxu0 0
          %2298 = vmatprep.subr.bf16.mxu0 0
          %2299 = vmatpush1.bf16.msra.mxu0 0
          %2300 = vmatprep.subr.bf16.mxu0 0
          %2301 = vmatpush1.bf16.msra.mxu0 0
          %2302 = vmatprep.subr.bf16.mxu0 0
          %2303 = vmatpush1.bf16.msra.mxu0 0
          %2304 = vmatprep.subr.bf16.mxu0 0
          %2305 = vmatpush1.bf16.msra.mxu0 0
          %2306 = vmatprep.subr.bf16.mxu0 0
          %2307 = vmatpush1.bf16.msra.mxu0 0
          %2308 = vmatprep.mubr.bf16.mxu0 0
          %2309 = vmatmul.mubr.bf16.gmra.mrb[0].mxu0 %v2229
          %v2310 = vpop.f32.mrb[0].mxu0
          %v2311 = vadd.f32 0.0, %v2310
          %v2312 = vpop.f32.mrb[0].mxu0
          %v2313 = vpop.f32.mrb[0].mxu0
          %v2314 = vadd.f32 0.0, %v2313
          %v2315 = vpop.f32.mrb[0].mxu0
          %2316 = vmatprep.mubr.bf16.mxu0 0
          %2317 = vmatmul.mubr.bf16.gmra.mrb[0].mxu0 %v2232
          %v2318 = vpop.f32.mrb[0].mxu0
          %v2319 = vadd.f32 0.0, %v2318
          %v2320 = vpop.f32.mrb[0].mxu0
          %v2321 = vpop.f32.mrb[0].mxu0
          %v2322 = vadd.f32 0.0, %v2321
          %v2323 = vpop.f32.mrb[0].mxu0
          %2324 = vmatprep.mubr.bf16.mxu0 0
          %2325 = vmatmul.mubr.bf16.gmra.mrb[0].mxu0 %v2235
          %v2326 = vpop.f32.mrb[0].mxu0
          %v2327 = vadd.f32 0.0, %v2326
          %v2328 = vpop.f32.mrb[0].mxu0
          %v2329 = vpop.f32.mrb[0].mxu0
          %v2330 = vadd.f32 0.0, %v2329
          %v2331 = vpop.f32.mrb[0].mxu0
          %2332 = vmatprep.mubr.bf16.mxu0 0
          %2333 = vmatmul.mubr.bf16.gmra.mrb[0].mxu0 %v2238
          %v2334 = vpop.f32.mrb[0].mxu0
          %v2335 = vadd.f32 0.0, %v2334
          %v2336 = vpop.f32.mrb[0].mxu0
          %v2337 = vpop.f32.mrb[0].mxu0
          %v2338 = vadd.f32 0.0, %v2337
          %v2339 = vpop.f32.mrb[0].mxu0
          %2340 = vmatprep.mubr.bf16.mxu0 0
          %2341 = vmatmul.mubr.bf16.gmra.mrb[0].mxu0 %v2241
          %v2342 = vpop.f32.mrb[0].mxu0
          %v2343 = vadd.f32 0.0, %v2342
          %v2344 = vpop.f32.mrb[0].mxu0
          %v2345 = vpop.f32.mrb[0].mxu0
          %v2346 = vadd.f32 0.0, %v2345
          %v2347 = vpop.f32.mrb[0].mxu0
          %2348 = vmatprep.mubr.bf16.mxu0 0
          %2349 = vmatmul.mubr.bf16.gmra.mrb[0].mxu0 %v2244
          %v2350 = vpop.f32.mrb[0].mxu0
          %v2351 = vadd.f32 0.0, %v2350
          %v2352 = vpop.f32.mrb[0].mxu0
          %v2353 = vpop.f32.mrb[0].mxu0
          %v2354 = vadd.f32 0.0, %v2353
          %v2355 = vpop.f32.mrb[0].mxu0
          %2356 = vmatprep.mubr.bf16.mxu0 0
          %2357 = vmatmul.mubr.bf16.gmra.mrb[0].mxu0 %v2247
          %v2358 = vpop.f32.mrb[0].mxu0
          %v2359 = vadd.f32 0.0, %v2358
          %v2360 = vpop.f32.mrb[0].mxu0
          %v2361 = vpop.f32.mrb[0].mxu0
          %v2362 = vadd.f32 0.0, %v2361
          %v2363 = vpop.f32.mrb[0].mxu0
          %2364 = vmatprep.mubr.bf16.mxu0 0
          %2365 = vmatmul.mubr.bf16.gmra.mrb[0].mxu0 %v2250
          %v2366 = vpop.f32.mrb[0].mxu0
          %v2367 = vadd.f32 0.0, %v2366
          %v2368 = vpop.f32.mrb[0].mxu0
          %v2369 = vpop.f32.mrb[0].mxu0
          %v2370 = vadd.f32 0.0, %v2369
          %v2371 = vpop.f32.mrb[0].mxu0
          %2372 = vmatprep.mubr.bf16.mxu0 0
          %2373 = vmatmul.mubr.bf16.gmra.mrb[0].mxu0 %v2253
          %v2374 = vpop.f32.mrb[0].mxu0
          %v2375 = vadd.f32 0.0, %v2374
          %v2376 = vpop.f32.mrb[0].mxu0
          %v2377 = vpop.f32.mrb[0].mxu0
          %v2378 = vadd.f32 0.0, %v2377
          %v2379 = vpop.f32.mrb[0].mxu0
          %2380 = vmatprep.mubr.bf16.mxu0 0
          %2381 = vmatmul.mubr.bf16.gmra.mrb[0].mxu0 %v2256
          %v2382 = vpop.f32.mrb[0].mxu0
          %v2383 = vadd.f32 0.0, %v2382
          %v2384 = vpop.f32.mrb[0].mxu0
          %v2385 = vpop.f32.mrb[0].mxu0
          %v2386 = vadd.f32 0.0, %v2385
          %v2387 = vpop.f32.mrb[0].mxu0
          %2388 = vmatprep.mubr.bf16.mxu0 0
          %2389 = vmatmul.mubr.bf16.gmra.mrb[0].mxu0 %v2259
          %v2390 = vpop.f32.mrb[0].mxu0
          %v2391 = vadd.f32 0.0, %v2390
          %v2392 = vpop.f32.mrb[0].mxu0
          %v2393 = vpop.f32.mrb[0].mxu0
          %v2394 = vadd.f32 0.0, %v2393
          %v2395 = vpop.f32.mrb[0].mxu0
          %2396 = vmatprep.mubr.bf16.mxu0 0
          %2397 = vmatmul.mubr.bf16.gmra.mrb[0].mxu0 %v2262
          %v2398 = vpop.f32.mrb[0].mxu0
          %v2399 = vadd.f32 0.0, %v2398
          %v2400 = vpop.f32.mrb[0].mxu0
          %v2401 = vpop.f32.mrb[0].mxu0
          %v2402 = vadd.f32 0.0, %v2401
          %v2403 = vpop.f32.mrb[0].mxu0
          %2404 = vmatprep.mubr.bf16.mxu0 0
          %2405 = vmatmul.mubr.bf16.gmra.mrb[0].mxu0 %v2265
          %v2406 = vpop.f32.mrb[0].mxu0
          %v2407 = vadd.f32 0.0, %v2406
          %v2408 = vpop.f32.mrb[0].mxu0
          %v2409 = vpop.f32.mrb[0].mxu0
          %v2410 = vadd.f32 0.0, %v2409
          %v2411 = vpop.f32.mrb[0].mxu0
          %2412 = vmatprep.mubr.bf16.mxu0 0
          %2413 = vmatmul.mubr.bf16.gmra.mrb[0].mxu0 %v2268
          %v2414 = vpop.f32.mrb[0].mxu0
          %v2415 = vadd.f32 0.0, %v2414
          %v2416 = vpop.f32.mrb[0].mxu0
          %v2417 = vpop.f32.mrb[0].mxu0
          %v2418 = vadd.f32 0.0, %v2417
          %v2419 = vpop.f32.mrb[0].mxu0
          %2420 = vmatprep.mubr.bf16.mxu0 0
          %2421 = vmatmul.mubr.bf16.gmra.mrb[0].mxu0 %v2271
          %v2422 = vpop.f32.mrb[0].mxu0
          %v2423 = vadd.f32 0.0, %v2422
          %v2424 = vpop.f32.mrb[0].mxu0
          %v2425 = vpop.f32.mrb[0].mxu0
          %v2426 = vadd.f32 0.0, %v2425
          %v2427 = vpop.f32.mrb[0].mxu0
          %2428 = vmatprep.mubr.bf16.mxu0 0
          %2429 = vmatmul.mubr.bf16.gmra.mrb[0].mxu0 %v2274
          %v2430 = vpop.f32.mrb[0].mxu0
          %v2431 = vadd.f32 0.0, %v2430
          %v2432 = vpop.f32.mrb[0].mxu0
          %v2433 = vpop.f32.mrb[0].mxu0
          %v2434 = vadd.f32 0.0, %v2433
          %v2435 = vpop.f32.mrb[0].mxu0
          %2436 = vdwg.mxu0
          %v2437 = vld [vmem:[#allocation10] sm:$0x1]
          %v2439 = vlaneseq
          %v2440 = vshrl.u32 %v2439, 7
          %v2441 = vsub.s32 0, %v2440
          %v2442 = vrot.slane %v2437, %v2441
          %v2444 = vmul.f32 %v2311, %v2442
          %v2445 = vmul.f32 %v2314, %v2442
          %v2446 = vmul.f32 %v2319, %v2442
          %v2447 = vmul.f32 %v2322, %v2442
          %v2448 = vmul.f32 %v2327, %v2442
          %v2449 = vmul.f32 %v2330, %v2442
          %v2450 = vmul.f32 %v2335, %v2442
          %v2451 = vmul.f32 %v2338, %v2442
          %v2452 = vmul.f32 %v2343, %v2442
          %v2453 = vmul.f32 %v2346, %v2442
          %v2454 = vmul.f32 %v2351, %v2442
          %v2455 = vmul.f32 %v2354, %v2442
          %v2456 = vmul.f32 %v2359, %v2442
          %v2457 = vmul.f32 %v2362, %v2442
          %v2458 = vmul.f32 %v2367, %v2442
          %v2459 = vmul.f32 %v2370, %v2442
          %v2460 = vmul.f32 %v2375, %v2442
          %v2461 = vmul.f32 %v2378, %v2442
          %v2462 = vmul.f32 %v2383, %v2442
          %v2463 = vmul.f32 %v2386, %v2442
          %v2464 = vmul.f32 %v2391, %v2442
          %v2465 = vmul.f32 %v2394, %v2442
          %v2466 = vmul.f32 %v2399, %v2442
          %v2467 = vmul.f32 %v2402, %v2442
          %v2468 = vmul.f32 %v2407, %v2442
          %v2469 = vmul.f32 %v2410, %v2442
          %v2470 = vmul.f32 %v2415, %v2442
          %v2471 = vmul.f32 %v2418, %v2442
          %v2472 = vmul.f32 %v2423, %v2442
          %v2473 = vmul.f32 %v2426, %v2442
          %v2474 = vmul.f32 %v2431, %v2442
          %v2475 = vmul.f32 %v2434, %v2442
          %v2476 = vld [vmem:[#allocation12] sm:$0x1]
          %v2478 = vlaneseq
          %v2479 = vshrl.u32 %v2478, 7
          %v2480 = vsub.s32 0, %v2479
          %v2481 = vrot.slane %v2476, %v2480
          %v2483 = vadd.f32 %v2444, %v2481
          %v2484 = vadd.f32 %v2445, %v2481
          %v2485 = vadd.f32 %v2446, %v2481
          %v2486 = vadd.f32 %v2447, %v2481
          %v2487 = vadd.f32 %v2448, %v2481
          %v2488 = vadd.f32 %v2449, %v2481
          %v2489 = vadd.f32 %v2450, %v2481
          %v2490 = vadd.f32 %v2451, %v2481
          %v2491 = vadd.f32 %v2452, %v2481
          %v2492 = vadd.f32 %v2453, %v2481
          %v2493 = vadd.f32 %v2454, %v2481
          %v2494 = vadd.f32 %v2455, %v2481
          %v2495 = vadd.f32 %v2456, %v2481
          %v2496 = vadd.f32 %v2457, %v2481
          %v2497 = vadd.f32 %v2458, %v2481
          %v2498 = vadd.f32 %v2459, %v2481
          %v2499 = vadd.f32 %v2460, %v2481
          %v2500 = vadd.f32 %v2461, %v2481
          %v2501 = vadd.f32 %v2462, %v2481
          %v2502 = vadd.f32 %v2463, %v2481
          %v2503 = vadd.f32 %v2464, %v2481
          %v2504 = vadd.f32 %v2465, %v2481
          %v2505 = vadd.f32 %v2466, %v2481
          %v2506 = vadd.f32 %v2467, %v2481
          %v2507 = vadd.f32 %v2468, %v2481
          %v2508 = vadd.f32 %v2469, %v2481
          %v2509 = vadd.f32 %v2470, %v2481
          %v2510 = vadd.f32 %v2471, %v2481
          %v2511 = vadd.f32 %v2472, %v2481
          %v2512 = vadd.f32 %v2473, %v2481
          %v2513 = vadd.f32 %v2474, %v2481
          %v2514 = vadd.f32 %v2475, %v2481
          %v2515 = vpack.c.bf16 %v2484, %v2483
          %v2516 = vpack.c.bf16 %v2486, %v2485
          %v2517 = vpack.c.bf16 %v2488, %v2487
          %v2518 = vpack.c.bf16 %v2490, %v2489
          %v2519 = vpack.c.bf16 %v2492, %v2491
          %v2520 = vpack.c.bf16 %v2494, %v2493
          %v2521 = vpack.c.bf16 %v2496, %v2495
          %v2522 = vpack.c.bf16 %v2498, %v2497
          %v2523 = vpack.c.bf16 %v2500, %v2499
          %v2524 = vpack.c.bf16 %v2502, %v2501
          %v2525 = vpack.c.bf16 %v2504, %v2503
          %v2526 = vpack.c.bf16 %v2506, %v2505
          %v2527 = vpack.c.bf16 %v2508, %v2507
          %v2528 = vpack.c.bf16 %v2510, %v2509
          %v2529 = vpack.c.bf16 %v2512, %v2511
          %v2530 = vpack.c.bf16 %v2514, %v2513
          %s2531 = scalar_lea.vmem [#allocation2], 256
          %2532 = vst.msk [vmem:[%s2531] sm:$0xff] %vm1136, %v2515
          %2533 = vst.msk [vmem:[%s2531 + $0x8] sm:$0xff] %vm1136, %v2516
          %2534 = vst.msk [vmem:[%s2531 + $0x10] sm:$0xff] %vm1136, %v2517
          %2535 = vst.msk [vmem:[%s2531 + $0x18] sm:$0xff] %vm1136, %v2518
          %2536 = vst.msk [vmem:[%s2531 + $0x20] sm:$0xff] %vm1136, %v2519
          %2537 = vst.msk [vmem:[%s2531 + $0x28] sm:$0xff] %vm1136, %v2520
          %2538 = vst.msk [vmem:[%s2531 + $0x30] sm:$0xff] %vm1136, %v2521
          %2539 = vst.msk [vmem:[%s2531 + $0x38] sm:$0xff] %vm1136, %v2522
          %2540 = vst.msk [vmem:[%s2531 + $0x40] sm:$0xff] %vm1136, %v2523
          %2541 = vst.msk [vmem:[%s2531 + $0x48] sm:$0xff] %vm1136, %v2524
          %2542 = vst.msk [vmem:[%s2531 + $0x50] sm:$0xff] %vm1136, %v2525
          %2543 = vst.msk [vmem:[%s2531 + $0x58] sm:$0xff] %vm1136, %v2526
          %2544 = vst.msk [vmem:[%s2531 + $0x60] sm:$0xff] %vm1136, %v2527
          %2545 = vst.msk [vmem:[%s2531 + $0x68] sm:$0xff] %vm1136, %v2528
          %2546 = vst.msk [vmem:[%s2531 + $0x70] sm:$0xff] %vm1136, %v2529
          %2547 = vst.msk [vmem:[%s2531 + $0x78] sm:$0xff] %vm1136, %v2530
          %v2548 = vld [vmem:[#allocation13] sm:$0xf]
          %v2549 = vld [vmem:[#allocation13 + $0x4] sm:$0xf]
          %v2550 = vld [vmem:[#allocation13 + $0x8] sm:$0xf]
          %v2551 = vld [vmem:[#allocation13 + $0xc] sm:$0xf]
          %v2552 = vld [vmem:[#allocation13 + $0x10] sm:$0xf]
          %v2553 = vld [vmem:[#allocation13 + $0x14] sm:$0xf]
          %v2554 = vld [vmem:[#allocation13 + $0x18] sm:$0xf]
          %v2555 = vld [vmem:[#allocation13 + $0x1c] sm:$0xf]
          %v2556 = vld [vmem:[#allocation15] sm:$0x1]
          %v2558 = vlaneseq
          %v2559 = vshrl.u32 %v2558, 7
          %v2560 = vsub.s32 0, %v2559
          %v2561 = vrot.slane %v2556, %v2560
          %v2571 = vunpack.c.l.b16 %v2548
          %v2572 = vunpack.c.l.b16 %v2549
          %v2573 = vunpack.c.l.b16 %v2550
          %v2574 = vunpack.c.l.b16 %v2551
          %v2575 = vunpack.c.l.b16 %v2552
          %v2576 = vunpack.c.l.b16 %v2553
          %v2577 = vunpack.c.l.b16 %v2554
          %v2578 = vunpack.c.l.b16 %v2555
          %v2579 = vpack.c.b16 %v2572, %v2571
          %v2580 = vpack.c.b16 %v2574, %v2573
          %v2581 = vpack.c.b16 %v2576, %v2575
          %v2582 = vpack.c.b16 %v2578, %v2577
          %2587 = vmatprep.subr.bf16.mxu0 0
          %2588 = vmatpush1.bf16.msra.mxu0 %v2579
          %2589 = vmatprep.subr.bf16.mxu0 0
          %2590 = vmatpush1.bf16.msra.mxu0 %v2580
          %2591 = vmatprep.subr.bf16.mxu0 0
          %2592 = vmatpush1.bf16.msra.mxu0 %v2581
          %2593 = vmatprep.subr.bf16.mxu0 0
          %2594 = vmatpush1.bf16.msra.mxu0 %v2582
          %2595 = vmatprep.subr.bf16.mxu0 0
          %2596 = vmatpush1.bf16.msra.mxu0 0
          %2597 = vmatprep.subr.bf16.mxu0 0
          %2598 = vmatpush1.bf16.msra.mxu0 0
          %2599 = vmatprep.subr.bf16.mxu0 0
          %2600 = vmatpush1.bf16.msra.mxu0 0
          %2601 = vmatprep.subr.bf16.mxu0 0
          %2602 = vmatpush1.bf16.msra.mxu0 0
          %2603 = vmatprep.subr.bf16.mxu0 0
          %2604 = vmatpush1.bf16.msra.mxu0 0
          %2605 = vmatprep.subr.bf16.mxu0 0
          %2606 = vmatpush1.bf16.msra.mxu0 0
          %2607 = vmatprep.subr.bf16.mxu0 0
          %2608 = vmatpush1.bf16.msra.mxu0 0
          %2609 = vmatprep.subr.bf16.mxu0 0
          %2610 = vmatpush1.bf16.msra.mxu0 0
          %2611 = vmatprep.subr.bf16.mxu0 0
          %2612 = vmatpush1.bf16.msra.mxu0 0
          %2613 = vmatprep.subr.bf16.mxu0 0
          %2614 = vmatpush1.bf16.msra.mxu0 0
          %2615 = vmatprep.subr.bf16.mxu0 0
          %2616 = vmatpush1.bf16.msra.mxu0 0
          %2617 = vmatprep.subr.bf16.mxu0 0
          %2618 = vmatpush1.bf16.msra.mxu0 0
          %2619 = vmatprep.mubr.bf16.mxu0 0
          %2620 = vmatmul.mubr.bf16.gmra.mrb[0].mxu0 %v2229
          %v2621 = vpop.f32.mrb[0].mxu0
          %v2622 = vadd.f32 %v2561, %v2621
          %v2623 = vpop.f32.mrb[0].mxu0
          %v2624 = vpop.f32.mrb[0].mxu0
          %v2625 = vadd.f32 %v2561, %v2624
          %v2626 = vpop.f32.mrb[0].mxu0
          %2627 = vmatprep.mubr.bf16.mxu0 0
          %2628 = vmatmul.mubr.bf16.gmra.mrb[0].mxu0 %v2232
          %v2629 = vpop.f32.mrb[0].mxu0
          %v2630 = vadd.f32 %v2561, %v2629
          %v2631 = vpop.f32.mrb[0].mxu0
          %v2632 = vpop.f32.mrb[0].mxu0
          %v2633 = vadd.f32 %v2561, %v2632
          %v2634 = vpop.f32.mrb[0].mxu0
          %2635 = vmatprep.mubr.bf16.mxu0 0
          %2636 = vmatmul.mubr.bf16.gmra.mrb[0].mxu0 %v2235
          %v2637 = vpop.f32.mrb[0].mxu0
          %v2638 = vadd.f32 %v2561, %v2637
          %v2639 = vpop.f32.mrb[0].mxu0
          %v2640 = vpop.f32.mrb[0].mxu0
          %v2641 = vadd.f32 %v2561, %v2640
          %v2642 = vpop.f32.mrb[0].mxu0
          %2643 = vmatprep.mubr.bf16.mxu0 0
          %2644 = vmatmul.mubr.bf16.gmra.mrb[0].mxu0 %v2238
          %v2645 = vpop.f32.mrb[0].mxu0
          %v2646 = vadd.f32 %v2561, %v2645
          %v2647 = vpop.f32.mrb[0].mxu0
          %v2648 = vpop.f32.mrb[0].mxu0
          %v2649 = vadd.f32 %v2561, %v2648
          %v2650 = vpop.f32.mrb[0].mxu0
          %2651 = vmatprep.mubr.bf16.mxu0 0
          %2652 = vmatmul.mubr.bf16.gmra.mrb[0].mxu0 %v2241
          %v2653 = vpop.f32.mrb[0].mxu0
          %v2654 = vadd.f32 %v2561, %v2653
          %v2655 = vpop.f32.mrb[0].mxu0
          %v2656 = vpop.f32.mrb[0].mxu0
          %v2657 = vadd.f32 %v2561, %v2656
          %v2658 = vpop.f32.mrb[0].mxu0
          %2659 = vmatprep.mubr.bf16.mxu0 0
          %2660 = vmatmul.mubr.bf16.gmra.mrb[0].mxu0 %v2244
          %v2661 = vpop.f32.mrb[0].mxu0
          %v2662 = vadd.f32 %v2561, %v2661
          %v2663 = vpop.f32.mrb[0].mxu0
          %v2664 = vpop.f32.mrb[0].mxu0
          %v2665 = vadd.f32 %v2561, %v2664
          %v2666 = vpop.f32.mrb[0].mxu0
          %2667 = vmatprep.mubr.bf16.mxu0 0
          %2668 = vmatmul.mubr.bf16.gmra.mrb[0].mxu0 %v2247
          %v2669 = vpop.f32.mrb[0].mxu0
          %v2670 = vadd.f32 %v2561, %v2669
          %v2671 = vpop.f32.mrb[0].mxu0
          %v2672 = vpop.f32.mrb[0].mxu0
          %v2673 = vadd.f32 %v2561, %v2672
          %v2674 = vpop.f32.mrb[0].mxu0
          %2675 = vmatprep.mubr.bf16.mxu0 0
          %2676 = vmatmul.mubr.bf16.gmra.mrb[0].mxu0 %v2250
          %v2677 = vpop.f32.mrb[0].mxu0
          %v2678 = vadd.f32 %v2561, %v2677
          %v2679 = vpop.f32.mrb[0].mxu0
          %v2680 = vpop.f32.mrb[0].mxu0
          %v2681 = vadd.f32 %v2561, %v2680
          %v2682 = vpop.f32.mrb[0].mxu0
          %2683 = vmatprep.mubr.bf16.mxu0 0
          %2684 = vmatmul.mubr.bf16.gmra.mrb[0].mxu0 %v2253
          %v2685 = vpop.f32.mrb[0].mxu0
          %v2686 = vadd.f32 %v2561, %v2685
          %v2687 = vpop.f32.mrb[0].mxu0
          %v2688 = vpop.f32.mrb[0].mxu0
          %v2689 = vadd.f32 %v2561, %v2688
          %v2690 = vpop.f32.mrb[0].mxu0
          %2691 = vmatprep.mubr.bf16.mxu0 0
          %2692 = vmatmul.mubr.bf16.gmra.mrb[0].mxu0 %v2256
          %v2693 = vpop.f32.mrb[0].mxu0
          %v2694 = vadd.f32 %v2561, %v2693
          %v2695 = vpop.f32.mrb[0].mxu0
          %v2696 = vpop.f32.mrb[0].mxu0
          %v2697 = vadd.f32 %v2561, %v2696
          %v2698 = vpop.f32.mrb[0].mxu0
          %2699 = vmatprep.mubr.bf16.mxu0 0
          %2700 = vmatmul.mubr.bf16.gmra.mrb[0].mxu0 %v2259
          %v2701 = vpop.f32.mrb[0].mxu0
          %v2702 = vadd.f32 %v2561, %v2701
          %v2703 = vpop.f32.mrb[0].mxu0
          %v2704 = vpop.f32.mrb[0].mxu0
          %v2705 = vadd.f32 %v2561, %v2704
          %v2706 = vpop.f32.mrb[0].mxu0
          %2707 = vmatprep.mubr.bf16.mxu0 0
          %2708 = vmatmul.mubr.bf16.gmra.mrb[0].mxu0 %v2262
          %v2709 = vpop.f32.mrb[0].mxu0
          %v2710 = vadd.f32 %v2561, %v2709
          %v2711 = vpop.f32.mrb[0].mxu0
          %v2712 = vpop.f32.mrb[0].mxu0
          %v2713 = vadd.f32 %v2561, %v2712
          %v2714 = vpop.f32.mrb[0].mxu0
          %2715 = vmatprep.mubr.bf16.mxu0 0
          %2716 = vmatmul.mubr.bf16.gmra.mrb[0].mxu0 %v2265
          %v2717 = vpop.f32.mrb[0].mxu0
          %v2718 = vadd.f32 %v2561, %v2717
          %v2719 = vpop.f32.mrb[0].mxu0
          %v2720 = vpop.f32.mrb[0].mxu0
          %v2721 = vadd.f32 %v2561, %v2720
          %v2722 = vpop.f32.mrb[0].mxu0
          %2723 = vmatprep.mubr.bf16.mxu0 0
          %2724 = vmatmul.mubr.bf16.gmra.mrb[0].mxu0 %v2268
          %v2725 = vpop.f32.mrb[0].mxu0
          %v2726 = vadd.f32 %v2561, %v2725
          %v2727 = vpop.f32.mrb[0].mxu0
          %v2728 = vpop.f32.mrb[0].mxu0
          %v2729 = vadd.f32 %v2561, %v2728
          %v2730 = vpop.f32.mrb[0].mxu0
          %2731 = vmatprep.mubr.bf16.mxu0 0
          %2732 = vmatmul.mubr.bf16.gmra.mrb[0].mxu0 %v2271
          %v2733 = vpop.f32.mrb[0].mxu0
          %v2734 = vadd.f32 %v2561, %v2733
          %v2735 = vpop.f32.mrb[0].mxu0
          %v2736 = vpop.f32.mrb[0].mxu0
          %v2737 = vadd.f32 %v2561, %v2736
          %v2738 = vpop.f32.mrb[0].mxu0
          %2739 = vmatprep.mubr.bf16.mxu0 0
          %2740 = vmatmul.mubr.bf16.gmra.mrb[0].mxu0 %v2274
          %v2741 = vpop.f32.mrb[0].mxu0
          %v2742 = vadd.f32 %v2561, %v2741
          %v2743 = vpop.f32.mrb[0].mxu0
          %v2744 = vpop.f32.mrb[0].mxu0
          %v2745 = vadd.f32 %v2561, %v2744
          %v2746 = vpop.f32.mrb[0].mxu0
          %2747 = vdwg.mxu0
          %v2748 = vpack.c.bf16 %v2625, %v2622
          %v2749 = vpack.c.bf16 %v2633, %v2630
          %v2750 = vpack.c.bf16 %v2641, %v2638
          %v2751 = vpack.c.bf16 %v2649, %v2646
          %v2752 = vpack.c.bf16 %v2657, %v2654
          %v2753 = vpack.c.bf16 %v2665, %v2662
          %v2754 = vpack.c.bf16 %v2673, %v2670
          %v2755 = vpack.c.bf16 %v2681, %v2678
          %v2756 = vpack.c.bf16 %v2689, %v2686
          %v2757 = vpack.c.bf16 %v2697, %v2694
          %v2758 = vpack.c.bf16 %v2705, %v2702
          %v2759 = vpack.c.bf16 %v2713, %v2710
          %v2760 = vpack.c.bf16 %v2721, %v2718
          %v2761 = vpack.c.bf16 %v2729, %v2726
          %v2762 = vpack.c.bf16 %v2737, %v2734
          %v2763 = vpack.c.bf16 %v2745, %v2742
          %s2764 = scalar_lea.vmem [#allocation3], 256
          %2765 = vst.msk [vmem:[%s2764] sm:$0xff] %vm1136, %v2748
          %2766 = vst.msk [vmem:[%s2764 + $0x8] sm:$0xff] %vm1136, %v2749
          %2767 = vst.msk [vmem:[%s2764 + $0x10] sm:$0xff] %vm1136, %v2750
          %2768 = vst.msk [vmem:[%s2764 + $0x18] sm:$0xff] %vm1136, %v2751
          %2769 = vst.msk [vmem:[%s2764 + $0x20] sm:$0xff] %vm1136, %v2752
          %2770 = vst.msk [vmem:[%s2764 + $0x28] sm:$0xff] %vm1136, %v2753
          %2771 = vst.msk [vmem:[%s2764 + $0x30] sm:$0xff] %vm1136, %v2754
          %2772 = vst.msk [vmem:[%s2764 + $0x38] sm:$0xff] %vm1136, %v2755
          %2773 = vst.msk [vmem:[%s2764 + $0x40] sm:$0xff] %vm1136, %v2756
          %2774 = vst.msk [vmem:[%s2764 + $0x48] sm:$0xff] %vm1136, %v2757
          %2775 = vst.msk [vmem:[%s2764 + $0x50] sm:$0xff] %vm1136, %v2758
          %2776 = vst.msk [vmem:[%s2764 + $0x58] sm:$0xff] %vm1136, %v2759
          %2777 = vst.msk [vmem:[%s2764 + $0x60] sm:$0xff] %vm1136, %v2760
          %2778 = vst.msk [vmem:[%s2764 + $0x68] sm:$0xff] %vm1136, %v2761
          %2779 = vst.msk [vmem:[%s2764 + $0x70] sm:$0xff] %vm1136, %v2762
          %2780 = vst.msk [vmem:[%s2764 + $0x78] sm:$0xff] %vm1136, %v2763
        $region120: #{spatial_temp_attn_fwd.5} parent=67 // pred_fallthru
          _
        %v2781 = vld [vmem:[%s585] sm:$0xf]
        %v2782 = vld [vmem:[%s585 + $0x4] sm:$0xf]
        %v2783 = vld [vmem:[%s585 + $0x8] sm:$0xf]
        %v2784 = vld [vmem:[%s585 + $0xc] sm:$0xf]
        %v2785 = vld [vmem:[%s585 + $0x10] sm:$0xf]
        %v2786 = vld [vmem:[%s585 + $0x14] sm:$0xf]
        %v2787 = vld [vmem:[%s585 + $0x18] sm:$0xf]
        %v2788 = vld [vmem:[%s585 + $0x1c] sm:$0xf]
        %v2789 = vld [vmem:[%s585 + $0x20] sm:$0xf]
        %v2790 = vld [vmem:[%s585 + $0x24] sm:$0xf]
        %v2791 = vld [vmem:[%s585 + $0x28] sm:$0xf]
        %v2792 = vld [vmem:[%s585 + $0x2c] sm:$0xf]
        %v2793 = vld [vmem:[%s585 + $0x30] sm:$0xf]
        %v2794 = vld [vmem:[%s585 + $0x34] sm:$0xf]
        %v2795 = vld [vmem:[%s585 + $0x38] sm:$0xf]
        %v2796 = vld [vmem:[%s585 + $0x3c] sm:$0xf]
        %v2797 = vunpack.c.l.bf16 %v2781
        %v2798 = vunpack.c.l.bf16 %v2782
        %v2799 = vunpack.c.l.bf16 %v2783
        %v2800 = vunpack.c.l.bf16 %v2784
        %v2801 = vunpack.c.l.bf16 %v2785
        %v2802 = vunpack.c.l.bf16 %v2786
        %v2803 = vunpack.c.l.bf16 %v2787
        %v2804 = vunpack.c.l.bf16 %v2788
        %v2805 = vunpack.c.l.bf16 %v2789
        %v2806 = vunpack.c.l.bf16 %v2790
        %v2807 = vunpack.c.l.bf16 %v2791
        %v2808 = vunpack.c.l.bf16 %v2792
        %v2809 = vunpack.c.l.bf16 %v2793
        %v2810 = vunpack.c.l.bf16 %v2794
        %v2811 = vunpack.c.l.bf16 %v2795
        %v2812 = vunpack.c.l.bf16 %v2796
        %v2813 = vld [vmem:[#allocation9] sm:$0xf]
        %v2814 = vld [vmem:[#allocation9 + $0x4] sm:$0xf]
        %v2815 = vld [vmem:[#allocation9 + $0x8] sm:$0xf]
        %v2816 = vld [vmem:[#allocation9 + $0xc] sm:$0xf]
        %v2817 = vld [vmem:[#allocation9 + $0x10] sm:$0xf]
        %v2818 = vld [vmem:[#allocation9 + $0x14] sm:$0xf]
        %v2819 = vld [vmem:[#allocation9 + $0x18] sm:$0xf]
        %v2820 = vld [vmem:[#allocation9 + $0x1c] sm:$0xf]
        %v2837 = vunpack.c.l.b16 %v2781
        %v2838 = vunpack.c.l.b16 %v2782
        %v2839 = vunpack.c.l.b16 %v2783
        %v2840 = vunpack.c.l.b16 %v2784
        %v2841 = vunpack.c.l.b16 %v2785
        %v2842 = vunpack.c.l.b16 %v2786
        %v2843 = vunpack.c.l.b16 %v2787
        %v2844 = vunpack.c.l.b16 %v2788
        %v2845 = vunpack.c.l.b16 %v2789
        %v2846 = vunpack.c.l.b16 %v2790
        %v2847 = vunpack.c.l.b16 %v2791
        %v2848 = vunpack.c.l.b16 %v2792
        %v2849 = vunpack.c.l.b16 %v2793
        %v2850 = vunpack.c.l.b16 %v2794
        %v2851 = vunpack.c.l.b16 %v2795
        %v2852 = vunpack.c.l.b16 %v2796
        %v2853 = vpack.c.b16 %v2838, %v2837
        %v2854 = vpack.c.b16 %v2840, %v2839
        %v2855 = vpack.c.b16 %v2842, %v2841
        %v2856 = vpack.c.b16 %v2844, %v2843
        %v2857 = vpack.c.b16 %v2846, %v2845
        %v2858 = vpack.c.b16 %v2848, %v2847
        %v2859 = vpack.c.b16 %v2850, %v2849
        %v2860 = vpack.c.b16 %v2852, %v2851
        %v2869 = vunpack.c.l.b16 %v2813
        %v2870 = vunpack.c.l.b16 %v2814
        %v2871 = vunpack.c.l.b16 %v2815
        %v2872 = vunpack.c.l.b16 %v2816
        %v2873 = vunpack.c.l.b16 %v2817
        %v2874 = vunpack.c.l.b16 %v2818
        %v2875 = vunpack.c.l.b16 %v2819
        %v2876 = vunpack.c.l.b16 %v2820
        %v2877 = vpack.c.b16 %v2870, %v2869
        %v2878 = vpack.c.b16 %v2872, %v2871
        %v2879 = vpack.c.b16 %v2874, %v2873
        %v2880 = vpack.c.b16 %v2876, %v2875
        %vm2885 = vcmask 523264
        %v2887 = vsel %vm2885, %v2853, 0
        %v2890 = vsel %vm2885, %v2854, 0
        %v2893 = vsel %vm2885, %v2855, 0
        %v2896 = vsel %vm2885, %v2856, 0
        %v2899 = vsel %vm2885, %v2857, 0
        %v2902 = vsel %vm2885, %v2858, 0
        %v2905 = vsel %vm2885, %v2859, 0
        %v2908 = vsel %vm2885, %v2860, 0
        %2910 = vmatprep.subr.bf16.mxu0 0
        %2911 = vmatpush1.bf16.msra.mxu0 %v2877
        %2912 = vmatprep.subr.bf16.mxu0 0
        %2913 = vmatpush1.bf16.msra.mxu0 %v2878
        %2914 = vmatprep.subr.bf16.mxu0 0
        %2915 = vmatpush1.bf16.msra.mxu0 %v2879
        %2916 = vmatprep.subr.bf16.mxu0 0
        %2917 = vmatpush1.bf16.msra.mxu0 %v2880
        %2918 = vmatprep.subr.bf16.mxu0 0
        %2919 = vmatpush1.bf16.msra.mxu0 0
        %2920 = vmatprep.subr.bf16.mxu0 0
        %2921 = vmatpush1.bf16.msra.mxu0 0
        %2922 = vmatprep.subr.bf16.mxu0 0
        %2923 = vmatpush1.bf16.msra.mxu0 0
        %2924 = vmatprep.subr.bf16.mxu0 0
        %2925 = vmatpush1.bf16.msra.mxu0 0
        %2926 = vmatprep.subr.bf16.mxu0 0
        %2927 = vmatpush1.bf16.msra.mxu0 0
        %2928 = vmatprep.subr.bf16.mxu0 0
        %2929 = vmatpush1.bf16.msra.mxu0 0
        %2930 = vmatprep.subr.bf16.mxu0 0
        %2931 = vmatpush1.bf16.msra.mxu0 0
        %2932 = vmatprep.subr.bf16.mxu0 0
        %2933 = vmatpush1.bf16.msra.mxu0 0
        %2934 = vmatprep.subr.bf16.mxu0 0
        %2935 = vmatpush1.bf16.msra.mxu0 0
        %2936 = vmatprep.subr.bf16.mxu0 0
        %2937 = vmatpush1.bf16.msra.mxu0 0
        %2938 = vmatprep.subr.bf16.mxu0 0
        %2939 = vmatpush1.bf16.msra.mxu0 0
        %2940 = vmatprep.subr.bf16.mxu0 0
        %2941 = vmatpush1.bf16.msra.mxu0 0
        %2942 = vmatprep.mubr.bf16.mxu0 0
        %2943 = vmatmul.mubr.bf16.gmra.mrb[0].mxu0 %v2887
        %v2944 = vpop.f32.mrb[0].mxu0
        %v2945 = vadd.f32 0.0, %v2944
        %v2946 = vpop.f32.mrb[0].mxu0
        %v2947 = vpop.f32.mrb[0].mxu0
        %v2948 = vadd.f32 0.0, %v2947
        %v2949 = vpop.f32.mrb[0].mxu0
        %2950 = vmatprep.mubr.bf16.mxu0 0
        %2951 = vmatmul.mubr.bf16.gmra.mrb[0].mxu0 %v2890
        %v2952 = vpop.f32.mrb[0].mxu0
        %v2953 = vadd.f32 0.0, %v2952
        %v2954 = vpop.f32.mrb[0].mxu0
        %v2955 = vpop.f32.mrb[0].mxu0
        %v2956 = vadd.f32 0.0, %v2955
        %v2957 = vpop.f32.mrb[0].mxu0
        %2958 = vmatprep.mubr.bf16.mxu0 0
        %2959 = vmatmul.mubr.bf16.gmra.mrb[0].mxu0 %v2893
        %v2960 = vpop.f32.mrb[0].mxu0
        %v2961 = vadd.f32 0.0, %v2960
        %v2962 = vpop.f32.mrb[0].mxu0
        %v2963 = vpop.f32.mrb[0].mxu0
        %v2964 = vadd.f32 0.0, %v2963
        %v2965 = vpop.f32.mrb[0].mxu0
        %2966 = vmatprep.mubr.bf16.mxu0 0
        %2967 = vmatmul.mubr.bf16.gmra.mrb[0].mxu0 %v2896
        %v2968 = vpop.f32.mrb[0].mxu0
        %v2969 = vadd.f32 0.0, %v2968
        %v2970 = vpop.f32.mrb[0].mxu0
        %v2971 = vpop.f32.mrb[0].mxu0
        %v2972 = vadd.f32 0.0, %v2971
        %v2973 = vpop.f32.mrb[0].mxu0
        %2974 = vmatprep.mubr.bf16.mxu0 0
        %2975 = vmatmul.mubr.bf16.gmra.mrb[0].mxu0 %v2899
        %v2976 = vpop.f32.mrb[0].mxu0
        %v2977 = vadd.f32 0.0, %v2976
        %v2978 = vpop.f32.mrb[0].mxu0
        %v2979 = vpop.f32.mrb[0].mxu0
        %v2980 = vadd.f32 0.0, %v2979
        %v2981 = vpop.f32.mrb[0].mxu0
        %2982 = vmatprep.mubr.bf16.mxu0 0
        %2983 = vmatmul.mubr.bf16.gmra.mrb[0].mxu0 %v2902
        %v2984 = vpop.f32.mrb[0].mxu0
        %v2985 = vadd.f32 0.0, %v2984
        %v2986 = vpop.f32.mrb[0].mxu0
        %v2987 = vpop.f32.mrb[0].mxu0
        %v2988 = vadd.f32 0.0, %v2987
        %v2989 = vpop.f32.mrb[0].mxu0
        %2990 = vmatprep.mubr.bf16.mxu0 0
        %2991 = vmatmul.mubr.bf16.gmra.mrb[0].mxu0 %v2905
        %v2992 = vpop.f32.mrb[0].mxu0
        %v2993 = vadd.f32 0.0, %v2992
        %v2994 = vpop.f32.mrb[0].mxu0
        %v2995 = vpop.f32.mrb[0].mxu0
        %v2996 = vadd.f32 0.0, %v2995
        %v2997 = vpop.f32.mrb[0].mxu0
        %2998 = vmatprep.mubr.bf16.mxu0 0
        %2999 = vmatmul.mubr.bf16.gmra.mrb[0].mxu0 %v2908
        %v3000 = vpop.f32.mrb[0].mxu0
        %v3001 = vadd.f32 0.0, %v3000
        %v3002 = vpop.f32.mrb[0].mxu0
        %v3003 = vpop.f32.mrb[0].mxu0
        %v3004 = vadd.f32 0.0, %v3003
        %v3005 = vpop.f32.mrb[0].mxu0
        %3006 = vdwg.mxu0
        %v3007 = vld [vmem:[#allocation10] sm:$0x1]
        %v3009 = vlaneseq
        %v3010 = vshrl.u32 %v3009, 7
        %v3011 = vsub.s32 0, %v3010
        %v3012 = vrot.slane %v3007, %v3011
        %v3014 = vmul.f32 %v2945, %v3012
        %v3015 = vmul.f32 %v2948, %v3012
        %v3016 = vmul.f32 %v2953, %v3012
        %v3017 = vmul.f32 %v2956, %v3012
        %v3018 = vmul.f32 %v2961, %v3012
        %v3019 = vmul.f32 %v2964, %v3012
        %v3020 = vmul.f32 %v2969, %v3012
        %v3021 = vmul.f32 %v2972, %v3012
        %v3022 = vmul.f32 %v2977, %v3012
        %v3023 = vmul.f32 %v2980, %v3012
        %v3024 = vmul.f32 %v2985, %v3012
        %v3025 = vmul.f32 %v2988, %v3012
        %v3026 = vmul.f32 %v2993, %v3012
        %v3027 = vmul.f32 %v2996, %v3012
        %v3028 = vmul.f32 %v3001, %v3012
        %v3029 = vmul.f32 %v3004, %v3012
        %v3030 = vld [vmem:[#allocation12] sm:$0x1]
        %v3032 = vlaneseq
        %v3033 = vshrl.u32 %v3032, 7
        %v3034 = vsub.s32 0, %v3033
        %v3035 = vrot.slane %v3030, %v3034
        %v3037 = vadd.f32 %v3014, %v3035
        %v3038 = vadd.f32 %v3015, %v3035
        %v3039 = vadd.f32 %v3016, %v3035
        %v3040 = vadd.f32 %v3017, %v3035
        %v3041 = vadd.f32 %v3018, %v3035
        %v3042 = vadd.f32 %v3019, %v3035
        %v3043 = vadd.f32 %v3020, %v3035
        %v3044 = vadd.f32 %v3021, %v3035
        %v3045 = vadd.f32 %v3022, %v3035
        %v3046 = vadd.f32 %v3023, %v3035
        %v3047 = vadd.f32 %v3024, %v3035
        %v3048 = vadd.f32 %v3025, %v3035
        %v3049 = vadd.f32 %v3026, %v3035
        %v3050 = vadd.f32 %v3027, %v3035
        %v3051 = vadd.f32 %v3028, %v3035
        %v3052 = vadd.f32 %v3029, %v3035
        %v3053 = vpack.c.bf16 %v3038, %v3037
        %v3054 = vpack.c.bf16 %v3040, %v3039
        %v3055 = vpack.c.bf16 %v3042, %v3041
        %v3056 = vpack.c.bf16 %v3044, %v3043
        %v3057 = vpack.c.bf16 %v3046, %v3045
        %v3058 = vpack.c.bf16 %v3048, %v3047
        %v3059 = vpack.c.bf16 %v3050, %v3049
        %v3060 = vpack.c.bf16 %v3052, %v3051
        loop: start=0, step=1, limit=2
        $region121: #{spatial_temp_attn_fwd.5} parent=67 // loop_pre_header
          _
        $region122: #{spatial_temp_attn_fwd.5} parent=67 // loop_header
          %s3062 = sphi 0, %s3066
          %p3063 = scmp.ge.s32.totalorder %s3062, 2
          %v3067 = vphi 0.0, %v3852
          %v3068 = vphi 0.0, %v3853
          %v3069 = vphi 0.0, %v3854
          %v3070 = vphi 0.0, %v3855
          %v3071 = vphi 0.0, %v3856
          %v3072 = vphi 0.0, %v3857
          %v3073 = vphi 0.0, %v3858
          %v3074 = vphi 0.0, %v3859
          %v3075 = vphi 0.0, %v3860
          %v3076 = vphi 0.0, %v3861
          %v3077 = vphi 0.0, %v3862
          %v3078 = vphi 0.0, %v3863
          %v3079 = vphi 0.0, %v3864
          %v3080 = vphi 0.0, %v3865
          %v3081 = vphi 0.0, %v3866
          %v3082 = vphi 0.0, %v3867
        $region123: #{spatial_temp_attn_fwd.5} parent=67 // loop_header_branch
          %3065 = sbr.rel (%p3063) target = $region127
        $region124: #{spatial_temp_attn_fwd.5} parent=67 // loop_body
          %s3083 = sadd.s32 %s49, %s3062
          %s3084 = sadd.s32 %s3083, 1
          %p3085 = scmp.lt.s32.totalorder %s3084, 0
          %s3086 = ssub.s32 0, %s3084
          %s3087 = scalar_select %p3085, %s3086, %s3084
          %s3088 = sdiv.u32.pop %s3087, 3
          %s3089 = srem.u32.pop %s3087, 3
          %s3090 = ssub.s32 0, %s3089
          %s3091 = scalar_select %p3085, %s3090, %s3089
          %s3092 = smul.u32 %s3091, 16
          %s3093 = smul.addr %s3092, 8
          %s3094 = scalar_lea.vmem [#allocation2], %s3093
          %v3095 = vld [vmem:[%s3094] sm:$0xff]
          %v3096 = vld [vmem:[%s3094 + $0x8] sm:$0xff]
          %v3097 = vld [vmem:[%s3094 + $0x10] sm:$0xff]
          %v3098 = vld [vmem:[%s3094 + $0x18] sm:$0xff]
          %v3099 = vld [vmem:[%s3094 + $0x20] sm:$0xff]
          %v3100 = vld [vmem:[%s3094 + $0x28] sm:$0xff]
          %v3101 = vld [vmem:[%s3094 + $0x30] sm:$0xff]
          %v3102 = vld [vmem:[%s3094 + $0x38] sm:$0xff]
          %v3103 = vld [vmem:[%s3094 + $0x40] sm:$0xff]
          %v3104 = vld [vmem:[%s3094 + $0x48] sm:$0xff]
          %v3105 = vld [vmem:[%s3094 + $0x50] sm:$0xff]
          %v3106 = vld [vmem:[%s3094 + $0x58] sm:$0xff]
          %v3107 = vld [vmem:[%s3094 + $0x60] sm:$0xff]
          %v3108 = vld [vmem:[%s3094 + $0x68] sm:$0xff]
          %v3109 = vld [vmem:[%s3094 + $0x70] sm:$0xff]
          %v3110 = vld [vmem:[%s3094 + $0x78] sm:$0xff]
          %vm3111 = vcmask 261120
          %v3113 = vsel %vm3111, %v3053, 0
          %v3116 = vsel %vm3111, %v3054, 0
          %v3119 = vsel %vm3111, %v3055, 0
          %v3122 = vsel %vm3111, %v3056, 0
          %v3125 = vsel %vm3111, %v3057, 0
          %v3128 = vsel %vm3111, %v3058, 0
          %v3131 = vsel %vm3111, %v3059, 0
          %v3134 = vsel %vm3111, %v3060, 0
          %v3137 = vsel %vm3111, %v3095, 0
          %v3140 = vsel %vm3111, %v3096, 0
          %v3143 = vsel %vm3111, %v3097, 0
          %v3146 = vsel %vm3111, %v3098, 0
          %v3149 = vsel %vm3111, %v3099, 0
          %v3152 = vsel %vm3111, %v3100, 0
          %v3155 = vsel %vm3111, %v3101, 0
          %v3158 = vsel %vm3111, %v3102, 0
          %v3161 = vsel %vm3111, %v3103, 0
          %v3164 = vsel %vm3111, %v3104, 0
          %v3167 = vsel %vm3111, %v3105, 0
          %v3170 = vsel %vm3111, %v3106, 0
          %v3173 = vsel %vm3111, %v3107, 0
          %v3176 = vsel %vm3111, %v3108, 0
          %v3179 = vsel %vm3111, %v3109, 0
          %v3182 = vsel %vm3111, %v3110, 0
          %3184 = vmatprep.subr.bf16.mxu0 0
          %3185 = vmatpush1.bf16.xpose.msra.mxu0 %v3137
          %3186 = vmatprep.subr.bf16.mxu0 0
          %3187 = vmatpush1.bf16.xpose.msra.mxu0 %v3140
          %3188 = vmatprep.subr.bf16.mxu0 0
          %3189 = vmatpush1.bf16.xpose.msra.mxu0 %v3143
          %3190 = vmatprep.subr.bf16.mxu0 0
          %3191 = vmatpush1.bf16.xpose.msra.mxu0 %v3146
          %3192 = vmatprep.subr.bf16.mxu0 0
          %3193 = vmatpush1.bf16.xpose.msra.mxu0 %v3149
          %3194 = vmatprep.subr.bf16.mxu0 0
          %3195 = vmatpush1.bf16.xpose.msra.mxu0 %v3152
          %3196 = vmatprep.subr.bf16.mxu0 0
          %3197 = vmatpush1.bf16.xpose.msra.mxu0 %v3155
          %3198 = vmatprep.subr.bf16.mxu0 0
          %3199 = vmatpush1.bf16.xpose.msra.mxu0 %v3158
          %3200 = vmatprep.subr.bf16.mxu0 0
          %3201 = vmatpush1.bf16.xpose.msra.mxu0 %v3161
          %3202 = vmatprep.subr.bf16.mxu0 0
          %3203 = vmatpush1.bf16.xpose.msra.mxu0 %v3164
          %3204 = vmatprep.subr.bf16.mxu0 0
          %3205 = vmatpush1.bf16.xpose.msra.mxu0 %v3167
          %3206 = vmatprep.subr.bf16.mxu0 0
          %3207 = vmatpush1.bf16.xpose.msra.mxu0 %v3170
          %3208 = vmatprep.subr.bf16.mxu0 0
          %3209 = vmatpush1.bf16.xpose.msra.mxu0 %v3173
          %3210 = vmatprep.subr.bf16.mxu0 0
          %3211 = vmatpush1.bf16.xpose.msra.mxu0 %v3176
          %3212 = vmatprep.subr.bf16.mxu0 0
          %3213 = vmatpush1.bf16.xpose.msra.mxu0 %v3179
          %3214 = vmatprep.subr.bf16.mxu0 0
          %3215 = vmatpush1.bf16.xpose.msra.mxu0 %v3182
          %3216 = vmatprep.mubr.bf16.mxu0 0
          %3217 = vmatmul.mubr.bf16.gmra.mrb[0].mxu0 %v3113
          %v3218 = vpop.f32.mrb[0].mxu0
          %v3219 = vadd.f32 0.0, %v3218
          %v3220 = vpop.f32.mrb[0].mxu0
          %v3221 = vadd.f32 0.0, %v3220
          %v3222 = vpop.f32.mrb[0].mxu0
          %v3223 = vadd.f32 0.0, %v3222
          %v3224 = vpop.f32.mrb[0].mxu0
          %v3225 = vadd.f32 0.0, %v3224
          %3226 = vmatprep.mubr.bf16.mxu0 0
          %3227 = vmatmul.mubr.bf16.gmra.mrb[0].mxu0 %v3116
          %v3228 = vpop.f32.mrb[0].mxu0
          %v3229 = vadd.f32 0.0, %v3228
          %v3230 = vpop.f32.mrb[0].mxu0
          %v3231 = vadd.f32 0.0, %v3230
          %v3232 = vpop.f32.mrb[0].mxu0
          %v3233 = vadd.f32 0.0, %v3232
          %v3234 = vpop.f32.mrb[0].mxu0
          %v3235 = vadd.f32 0.0, %v3234
          %3236 = vmatprep.mubr.bf16.mxu0 0
          %3237 = vmatmul.mubr.bf16.gmra.mrb[0].mxu0 %v3119
          %v3238 = vpop.f32.mrb[0].mxu0
          %v3239 = vadd.f32 0.0, %v3238
          %v3240 = vpop.f32.mrb[0].mxu0
          %v3241 = vadd.f32 0.0, %v3240
          %v3242 = vpop.f32.mrb[0].mxu0
          %v3243 = vadd.f32 0.0, %v3242
          %v3244 = vpop.f32.mrb[0].mxu0
          %v3245 = vadd.f32 0.0, %v3244
          %3246 = vmatprep.mubr.bf16.mxu0 0
          %3247 = vmatmul.mubr.bf16.gmra.mrb[0].mxu0 %v3122
          %v3248 = vpop.f32.mrb[0].mxu0
          %v3249 = vadd.f32 0.0, %v3248
          %v3250 = vpop.f32.mrb[0].mxu0
          %v3251 = vadd.f32 0.0, %v3250
          %v3252 = vpop.f32.mrb[0].mxu0
          %v3253 = vadd.f32 0.0, %v3252
          %v3254 = vpop.f32.mrb[0].mxu0
          %v3255 = vadd.f32 0.0, %v3254
          %3256 = vmatprep.mubr.bf16.mxu0 0
          %3257 = vmatmul.mubr.bf16.gmra.mrb[0].mxu0 %v3125
          %v3258 = vpop.f32.mrb[0].mxu0
          %v3259 = vadd.f32 0.0, %v3258
          %v3260 = vpop.f32.mrb[0].mxu0
          %v3261 = vadd.f32 0.0, %v3260
          %v3262 = vpop.f32.mrb[0].mxu0
          %v3263 = vadd.f32 0.0, %v3262
          %v3264 = vpop.f32.mrb[0].mxu0
          %v3265 = vadd.f32 0.0, %v3264
          %3266 = vmatprep.mubr.bf16.mxu0 0
          %3267 = vmatmul.mubr.bf16.gmra.mrb[0].mxu0 %v3128
          %v3268 = vpop.f32.mrb[0].mxu0
          %v3269 = vadd.f32 0.0, %v3268
          %v3270 = vpop.f32.mrb[0].mxu0
          %v3271 = vadd.f32 0.0, %v3270
          %v3272 = vpop.f32.mrb[0].mxu0
          %v3273 = vadd.f32 0.0, %v3272
          %v3274 = vpop.f32.mrb[0].mxu0
          %v3275 = vadd.f32 0.0, %v3274
          %3276 = vmatprep.mubr.bf16.mxu0 0
          %3277 = vmatmul.mubr.bf16.gmra.mrb[0].mxu0 %v3131
          %v3278 = vpop.f32.mrb[0].mxu0
          %v3279 = vadd.f32 0.0, %v3278
          %v3280 = vpop.f32.mrb[0].mxu0
          %v3281 = vadd.f32 0.0, %v3280
          %v3282 = vpop.f32.mrb[0].mxu0
          %v3283 = vadd.f32 0.0, %v3282
          %v3284 = vpop.f32.mrb[0].mxu0
          %v3285 = vadd.f32 0.0, %v3284
          %3286 = vmatprep.mubr.bf16.mxu0 0
          %3287 = vmatmul.mubr.bf16.gmra.mrb[0].mxu0 %v3134
          %v3288 = vpop.f32.mrb[0].mxu0
          %v3289 = vadd.f32 0.0, %v3288
          %v3290 = vpop.f32.mrb[0].mxu0
          %v3291 = vadd.f32 0.0, %v3290
          %v3292 = vpop.f32.mrb[0].mxu0
          %v3293 = vadd.f32 0.0, %v3292
          %v3294 = vpop.f32.mrb[0].mxu0
          %v3295 = vadd.f32 0.0, %v3294
          %3296 = vdwg.mxu0
          %v3297 = vmul.f32 %v3219, 0.17677669
          %v3298 = vmul.f32 %v3221, 0.17677669
          %v3299 = vmul.f32 %v3223, 0.17677669
          %v3300 = vmul.f32 %v3225, 0.17677669
          %v3301 = vmul.f32 %v3229, 0.17677669
          %v3302 = vmul.f32 %v3231, 0.17677669
          %v3303 = vmul.f32 %v3233, 0.17677669
          %v3304 = vmul.f32 %v3235, 0.17677669
          %v3305 = vmul.f32 %v3239, 0.17677669
          %v3306 = vmul.f32 %v3241, 0.17677669
          %v3307 = vmul.f32 %v3243, 0.17677669
          %v3308 = vmul.f32 %v3245, 0.17677669
          %v3309 = vmul.f32 %v3249, 0.17677669
          %v3310 = vmul.f32 %v3251, 0.17677669
          %v3311 = vmul.f32 %v3253, 0.17677669
          %v3312 = vmul.f32 %v3255, 0.17677669
          %v3313 = vmul.f32 %v3259, 0.17677669
          %v3314 = vmul.f32 %v3261, 0.17677669
          %v3315 = vmul.f32 %v3263, 0.17677669
          %v3316 = vmul.f32 %v3265, 0.17677669
          %v3317 = vmul.f32 %v3269, 0.17677669
          %v3318 = vmul.f32 %v3271, 0.17677669
          %v3319 = vmul.f32 %v3273, 0.17677669
          %v3320 = vmul.f32 %v3275, 0.17677669
          %v3321 = vmul.f32 %v3279, 0.17677669
          %v3322 = vmul.f32 %v3281, 0.17677669
          %v3323 = vmul.f32 %v3283, 0.17677669
          %v3324 = vmul.f32 %v3285, 0.17677669
          %v3325 = vmul.f32 %v3289, 0.17677669
          %v3326 = vmul.f32 %v3291, 0.17677669
          %v3327 = vmul.f32 %v3293, 0.17677669
          %v3328 = vmul.f32 %v3295, 0.17677669
          %v3329 = vmax.f32 %v3297, %v3298
          %3330 = vmax.xlane.f32.xlu0 %v3329
          %v3331 = vpop.xlane.xlu0 %3330
          %v3332 = vmax.f32 %v3299, %v3300
          %3333 = vmax.xlane.f32.xlu0 %v3332
          %v3334 = vpop.xlane.xlu0 %3333
          %v3335 = vmax.f32 %v3301, %v3302
          %3336 = vmax.xlane.f32.xlu0 %v3335
          %v3337 = vpop.xlane.xlu0 %3336
          %v3338 = vmax.f32 %v3303, %v3304
          %3339 = vmax.xlane.f32.xlu0 %v3338
          %v3340 = vpop.xlane.xlu0 %3339
          %v3341 = vmax.f32 %v3305, %v3306
          %3342 = vmax.xlane.f32.xlu0 %v3341
          %v3343 = vpop.xlane.xlu0 %3342
          %v3344 = vmax.f32 %v3307, %v3308
          %3345 = vmax.xlane.f32.xlu0 %v3344
          %v3346 = vpop.xlane.xlu0 %3345
          %v3347 = vmax.f32 %v3309, %v3310
          %3348 = vmax.xlane.f32.xlu0 %v3347
          %v3349 = vpop.xlane.xlu0 %3348
          %v3350 = vmax.f32 %v3311, %v3312
          %3351 = vmax.xlane.f32.xlu0 %v3350
          %v3352 = vpop.xlane.xlu0 %3351
          %v3353 = vmax.f32 %v3313, %v3314
          %3354 = vmax.xlane.f32.xlu0 %v3353
          %v3355 = vpop.xlane.xlu0 %3354
          %v3356 = vmax.f32 %v3315, %v3316
          %3357 = vmax.xlane.f32.xlu0 %v3356
          %v3358 = vpop.xlane.xlu0 %3357
          %v3359 = vmax.f32 %v3317, %v3318
          %3360 = vmax.xlane.f32.xlu0 %v3359
          %v3361 = vpop.xlane.xlu0 %3360
          %v3362 = vmax.f32 %v3319, %v3320
          %3363 = vmax.xlane.f32.xlu0 %v3362
          %v3364 = vpop.xlane.xlu0 %3363
          %v3365 = vmax.f32 %v3321, %v3322
          %3366 = vmax.xlane.f32.xlu0 %v3365
          %v3367 = vpop.xlane.xlu0 %3366
          %v3368 = vmax.f32 %v3323, %v3324
          %3369 = vmax.xlane.f32.xlu0 %v3368
          %v3370 = vpop.xlane.xlu0 %3369
          %v3371 = vmax.f32 %v3325, %v3326
          %3372 = vmax.xlane.f32.xlu0 %v3371
          %v3373 = vpop.xlane.xlu0 %3372
          %v3374 = vmax.f32 %v3327, %v3328
          %3375 = vmax.xlane.f32.xlu0 %v3374
          %v3376 = vpop.xlane.xlu0 %3375
          %v3377 = vsub.f32 %v3297, %v3331
          %v3378 = vsub.f32 %v3298, %v3331
          %v3379 = vsub.f32 %v3299, %v3334
          %v3380 = vsub.f32 %v3300, %v3334
          %v3381 = vsub.f32 %v3301, %v3337
          %v3382 = vsub.f32 %v3302, %v3337
          %v3383 = vsub.f32 %v3303, %v3340
          %v3384 = vsub.f32 %v3304, %v3340
          %v3385 = vsub.f32 %v3305, %v3343
          %v3386 = vsub.f32 %v3306, %v3343
          %v3387 = vsub.f32 %v3307, %v3346
          %v3388 = vsub.f32 %v3308, %v3346
          %v3389 = vsub.f32 %v3309, %v3349
          %v3390 = vsub.f32 %v3310, %v3349
          %v3391 = vsub.f32 %v3311, %v3352
          %v3392 = vsub.f32 %v3312, %v3352
          %v3393 = vsub.f32 %v3313, %v3355
          %v3394 = vsub.f32 %v3314, %v3355
          %v3395 = vsub.f32 %v3315, %v3358
          %v3396 = vsub.f32 %v3316, %v3358
          %v3397 = vsub.f32 %v3317, %v3361
          %v3398 = vsub.f32 %v3318, %v3361
          %v3399 = vsub.f32 %v3319, %v3364
          %v3400 = vsub.f32 %v3320, %v3364
          %v3401 = vsub.f32 %v3321, %v3367
          %v3402 = vsub.f32 %v3322, %v3367
          %v3403 = vsub.f32 %v3323, %v3370
          %v3404 = vsub.f32 %v3324, %v3370
          %v3405 = vsub.f32 %v3325, %v3373
          %v3406 = vsub.f32 %v3326, %v3373
          %v3407 = vsub.f32 %v3327, %v3376
          %v3408 = vsub.f32 %v3328, %v3376
          %v3409 = vmul.f32 %v3377, 1.442695
          %v3410 = vpow.pop %v3409
          %v3411 = vmul.f32 %v3378, 1.442695
          %v3412 = vpow.pop %v3411
          %v3413 = vmul.f32 %v3379, 1.442695
          %v3414 = vpow.pop %v3413
          %v3415 = vmul.f32 %v3380, 1.442695
          %v3416 = vpow.pop %v3415
          %v3417 = vmul.f32 %v3381, 1.442695
          %v3418 = vpow.pop %v3417
          %v3419 = vmul.f32 %v3382, 1.442695
          %v3420 = vpow.pop %v3419
          %v3421 = vmul.f32 %v3383, 1.442695
          %v3422 = vpow.pop %v3421
          %v3423 = vmul.f32 %v3384, 1.442695
          %v3424 = vpow.pop %v3423
          %v3425 = vmul.f32 %v3385, 1.442695
          %v3426 = vpow.pop %v3425
          %v3427 = vmul.f32 %v3386, 1.442695
          %v3428 = vpow.pop %v3427
          %v3429 = vmul.f32 %v3387, 1.442695
          %v3430 = vpow.pop %v3429
          %v3431 = vmul.f32 %v3388, 1.442695
          %v3432 = vpow.pop %v3431
          %v3433 = vmul.f32 %v3389, 1.442695
          %v3434 = vpow.pop %v3433
          %v3435 = vmul.f32 %v3390, 1.442695
          %v3436 = vpow.pop %v3435
          %v3437 = vmul.f32 %v3391, 1.442695
          %v3438 = vpow.pop %v3437
          %v3439 = vmul.f32 %v3392, 1.442695
          %v3440 = vpow.pop %v3439
          %v3441 = vmul.f32 %v3393, 1.442695
          %v3442 = vpow.pop %v3441
          %v3443 = vmul.f32 %v3394, 1.442695
          %v3444 = vpow.pop %v3443
          %v3445 = vmul.f32 %v3395, 1.442695
          %v3446 = vpow.pop %v3445
          %v3447 = vmul.f32 %v3396, 1.442695
          %v3448 = vpow.pop %v3447
          %v3449 = vmul.f32 %v3397, 1.442695
          %v3450 = vpow.pop %v3449
          %v3451 = vmul.f32 %v3398, 1.442695
          %v3452 = vpow.pop %v3451
          %v3453 = vmul.f32 %v3399, 1.442695
          %v3454 = vpow.pop %v3453
          %v3455 = vmul.f32 %v3400, 1.442695
          %v3456 = vpow.pop %v3455
          %v3457 = vmul.f32 %v3401, 1.442695
          %v3458 = vpow.pop %v3457
          %v3459 = vmul.f32 %v3402, 1.442695
          %v3460 = vpow.pop %v3459
          %v3461 = vmul.f32 %v3403, 1.442695
          %v3462 = vpow.pop %v3461
          %v3463 = vmul.f32 %v3404, 1.442695
          %v3464 = vpow.pop %v3463
          %v3465 = vmul.f32 %v3405, 1.442695
          %v3466 = vpow.pop %v3465
          %v3467 = vmul.f32 %v3406, 1.442695
          %v3468 = vpow.pop %v3467
          %v3469 = vmul.f32 %v3407, 1.442695
          %v3470 = vpow.pop %v3469
          %v3471 = vmul.f32 %v3408, 1.442695
          %v3472 = vpow.pop %v3471
          %v3473 = vadd.f32 %v3410, %v3412
          %3474 = vadd.xlane.f32.xlu0 %v3473
          %v3475 = vpop.xlane.xlu0 %3474
          %v3476 = vadd.f32 %v3414, %v3416
          %3477 = vadd.xlane.f32.xlu0 %v3476
          %v3478 = vpop.xlane.xlu0 %3477
          %v3479 = vadd.f32 %v3418, %v3420
          %3480 = vadd.xlane.f32.xlu0 %v3479
          %v3481 = vpop.xlane.xlu0 %3480
          %v3482 = vadd.f32 %v3422, %v3424
          %3483 = vadd.xlane.f32.xlu0 %v3482
          %v3484 = vpop.xlane.xlu0 %3483
          %v3485 = vadd.f32 %v3426, %v3428
          %3486 = vadd.xlane.f32.xlu0 %v3485
          %v3487 = vpop.xlane.xlu0 %3486
          %v3488 = vadd.f32 %v3430, %v3432
          %3489 = vadd.xlane.f32.xlu0 %v3488
          %v3490 = vpop.xlane.xlu0 %3489
          %v3491 = vadd.f32 %v3434, %v3436
          %3492 = vadd.xlane.f32.xlu0 %v3491
          %v3493 = vpop.xlane.xlu0 %3492
          %v3494 = vadd.f32 %v3438, %v3440
          %3495 = vadd.xlane.f32.xlu0 %v3494
          %v3496 = vpop.xlane.xlu0 %3495
          %v3497 = vadd.f32 %v3442, %v3444
          %3498 = vadd.xlane.f32.xlu0 %v3497
          %v3499 = vpop.xlane.xlu0 %3498
          %v3500 = vadd.f32 %v3446, %v3448
          %3501 = vadd.xlane.f32.xlu0 %v3500
          %v3502 = vpop.xlane.xlu0 %3501
          %v3503 = vadd.f32 %v3450, %v3452
          %3504 = vadd.xlane.f32.xlu0 %v3503
          %v3505 = vpop.xlane.xlu0 %3504
          %v3506 = vadd.f32 %v3454, %v3456
          %3507 = vadd.xlane.f32.xlu0 %v3506
          %v3508 = vpop.xlane.xlu0 %3507
          %v3509 = vadd.f32 %v3458, %v3460
          %3510 = vadd.xlane.f32.xlu0 %v3509
          %v3511 = vpop.xlane.xlu0 %3510
          %v3512 = vadd.f32 %v3462, %v3464
          %3513 = vadd.xlane.f32.xlu0 %v3512
          %v3514 = vpop.xlane.xlu0 %3513
          %v3515 = vadd.f32 %v3466, %v3468
          %3516 = vadd.xlane.f32.xlu0 %v3515
          %v3517 = vpop.xlane.xlu0 %3516
          %v3518 = vadd.f32 %v3470, %v3472
          %3519 = vadd.xlane.f32.xlu0 %v3518
          %v3520 = vpop.xlane.xlu0 %3519
          %v3521 = vrcp.pop %v3475
          %v3522 = vrcp.pop %v3478
          %v3523 = vrcp.pop %v3481
          %v3524 = vrcp.pop %v3484
          %v3525 = vrcp.pop %v3487
          %v3526 = vrcp.pop %v3490
          %v3527 = vrcp.pop %v3493
          %v3528 = vrcp.pop %v3496
          %v3529 = vrcp.pop %v3499
          %v3530 = vrcp.pop %v3502
          %v3531 = vrcp.pop %v3505
          %v3532 = vrcp.pop %v3508
          %v3533 = vrcp.pop %v3511
          %v3534 = vrcp.pop %v3514
          %v3535 = vrcp.pop %v3517
          %v3536 = vrcp.pop %v3520
          %v3537 = vmul.f32 %v3410, %v3521
          %v3538 = vmul.f32 %v3412, %v3521
          %v3539 = vmul.f32 %v3414, %v3522
          %v3540 = vmul.f32 %v3416, %v3522
          %v3541 = vmul.f32 %v3418, %v3523
          %v3542 = vmul.f32 %v3420, %v3523
          %v3543 = vmul.f32 %v3422, %v3524
          %v3544 = vmul.f32 %v3424, %v3524
          %v3545 = vmul.f32 %v3426, %v3525
          %v3546 = vmul.f32 %v3428, %v3525
          %v3547 = vmul.f32 %v3430, %v3526
          %v3548 = vmul.f32 %v3432, %v3526
          %v3549 = vmul.f32 %v3434, %v3527
          %v3550 = vmul.f32 %v3436, %v3527
          %v3551 = vmul.f32 %v3438, %v3528
          %v3552 = vmul.f32 %v3440, %v3528
          %v3553 = vmul.f32 %v3442, %v3529
          %v3554 = vmul.f32 %v3444, %v3529
          %v3555 = vmul.f32 %v3446, %v3530
          %v3556 = vmul.f32 %v3448, %v3530
          %v3557 = vmul.f32 %v3450, %v3531
          %v3558 = vmul.f32 %v3452, %v3531
          %v3559 = vmul.f32 %v3454, %v3532
          %v3560 = vmul.f32 %v3456, %v3532
          %v3561 = vmul.f32 %v3458, %v3533
          %v3562 = vmul.f32 %v3460, %v3533
          %v3563 = vmul.f32 %v3462, %v3534
          %v3564 = vmul.f32 %v3464, %v3534
          %v3565 = vmul.f32 %v3466, %v3535
          %v3566 = vmul.f32 %v3468, %v3535
          %v3567 = vmul.f32 %v3470, %v3536
          %v3568 = vmul.f32 %v3472, %v3536
          %v3569 = vpack.c.bf16 %v3539, %v3537
          %v3570 = vpack.c.bf16 %v3540, %v3538
          %v3571 = vpack.c.bf16 %v3543, %v3541
          %v3572 = vpack.c.bf16 %v3544, %v3542
          %v3573 = vpack.c.bf16 %v3547, %v3545
          %v3574 = vpack.c.bf16 %v3548, %v3546
          %v3575 = vpack.c.bf16 %v3551, %v3549
          %v3576 = vpack.c.bf16 %v3552, %v3550
          %v3577 = vpack.c.bf16 %v3555, %v3553
          %v3578 = vpack.c.bf16 %v3556, %v3554
          %v3579 = vpack.c.bf16 %v3559, %v3557
          %v3580 = vpack.c.bf16 %v3560, %v3558
          %v3581 = vpack.c.bf16 %v3563, %v3561
          %v3582 = vpack.c.bf16 %v3564, %v3562
          %v3583 = vpack.c.bf16 %v3567, %v3565
          %v3584 = vpack.c.bf16 %v3568, %v3566
          %s3585 = smul.addr %s3092, 8
          %s3586 = scalar_lea.vmem [#allocation3], %s3585
          %v3587 = vld [vmem:[%s3586] sm:$0xff]
          %v3588 = vld [vmem:[%s3586 + $0x8] sm:$0xff]
          %v3589 = vld [vmem:[%s3586 + $0x10] sm:$0xff]
          %v3590 = vld [vmem:[%s3586 + $0x18] sm:$0xff]
          %v3591 = vld [vmem:[%s3586 + $0x20] sm:$0xff]
          %v3592 = vld [vmem:[%s3586 + $0x28] sm:$0xff]
          %v3593 = vld [vmem:[%s3586 + $0x30] sm:$0xff]
          %v3594 = vld [vmem:[%s3586 + $0x38] sm:$0xff]
          %v3595 = vld [vmem:[%s3586 + $0x40] sm:$0xff]
          %v3596 = vld [vmem:[%s3586 + $0x48] sm:$0xff]
          %v3597 = vld [vmem:[%s3586 + $0x50] sm:$0xff]
          %v3598 = vld [vmem:[%s3586 + $0x58] sm:$0xff]
          %v3599 = vld [vmem:[%s3586 + $0x60] sm:$0xff]
          %v3600 = vld [vmem:[%s3586 + $0x68] sm:$0xff]
          %v3601 = vld [vmem:[%s3586 + $0x70] sm:$0xff]
          %v3602 = vld [vmem:[%s3586 + $0x78] sm:$0xff]
          %3603 = vmatprep.subr.bf16.mxu0 0
          %3604 = vmatpush1.bf16.msra.mxu0 %v3587
          %3605 = vmatprep.subr.bf16.mxu0 0
          %3606 = vmatpush1.bf16.msra.mxu0 %v3588
          %3607 = vmatprep.subr.bf16.mxu0 0
          %3608 = vmatpush1.bf16.msra.mxu0 %v3589
          %3609 = vmatprep.subr.bf16.mxu0 0
          %3610 = vmatpush1.bf16.msra.mxu0 %v3590
          %3611 = vmatprep.subr.bf16.mxu0 0
          %3612 = vmatpush1.bf16.msra.mxu0 %v3591
          %3613 = vmatprep.subr.bf16.mxu0 0
          %3614 = vmatpush1.bf16.msra.mxu0 %v3592
          %3615 = vmatprep.subr.bf16.mxu0 0
          %3616 = vmatpush1.bf16.msra.mxu0 %v3593
          %3617 = vmatprep.subr.bf16.mxu0 0
          %3618 = vmatpush1.bf16.msra.mxu0 %v3594
          %3619 = vmatprep.subr.bf16.mxu0 0
          %3620 = vmatpush1.bf16.msra.mxu0 %v3595
          %3621 = vmatprep.subr.bf16.mxu0 0
          %3622 = vmatpush1.bf16.msra.mxu0 %v3596
          %3623 = vmatprep.subr.bf16.mxu0 0
          %3624 = vmatpush1.bf16.msra.mxu0 %v3597
          %3625 = vmatprep.subr.bf16.mxu0 0
          %3626 = vmatpush1.bf16.msra.mxu0 %v3598
          %3627 = vmatprep.subr.bf16.mxu0 0
          %3628 = vmatpush1.bf16.msra.mxu0 %v3599
          %3629 = vmatprep.subr.bf16.mxu0 0
          %3630 = vmatpush1.bf16.msra.mxu0 %v3600
          %3631 = vmatprep.subr.bf16.mxu0 0
          %3632 = vmatpush1.bf16.msra.mxu0 %v3601
          %3633 = vmatprep.subr.bf16.mxu0 0
          %3634 = vmatpush1.bf16.msra.mxu0 %v3602
          %3635 = vmatprep.mubr.bf16.mxu0 %v3570
          %3636 = vmatmul.mubr.bf16.gmra.mrb[0].mxu0 %v3569
          %v3637 = vpop.f32.mrb[0].mxu0
          %v3638 = vadd.f32 0.0, %v3637
          %v3639 = vpop.f32.mrb[0].mxu0
          %v3640 = vpop.f32.mrb[0].mxu0
          %v3641 = vadd.f32 0.0, %v3640
          %v3642 = vpop.f32.mrb[0].mxu0
          %3643 = vmatprep.mubr.bf16.mxu0 %v3572
          %3644 = vmatmul.mubr.bf16.gmra.mrb[0].mxu0 %v3571
          %v3645 = vpop.f32.mrb[0].mxu0
          %v3646 = vadd.f32 0.0, %v3645
          %v3647 = vpop.f32.mrb[0].mxu0
          %v3648 = vpop.f32.mrb[0].mxu0
          %v3649 = vadd.f32 0.0, %v3648
          %v3650 = vpop.f32.mrb[0].mxu0
          %3651 = vmatprep.mubr.bf16.mxu0 %v3574
          %3652 = vmatmul.mubr.bf16.gmra.mrb[0].mxu0 %v3573
          %v3653 = vpop.f32.mrb[0].mxu0
          %v3654 = vadd.f32 0.0, %v3653
          %v3655 = vpop.f32.mrb[0].mxu0
          %v3656 = vpop.f32.mrb[0].mxu0
          %v3657 = vadd.f32 0.0, %v3656
          %v3658 = vpop.f32.mrb[0].mxu0
          %3659 = vmatprep.mubr.bf16.mxu0 %v3576
          %3660 = vmatmul.mubr.bf16.gmra.mrb[0].mxu0 %v3575
          %v3661 = vpop.f32.mrb[0].mxu0
          %v3662 = vadd.f32 0.0, %v3661
          %v3663 = vpop.f32.mrb[0].mxu0
          %v3664 = vpop.f32.mrb[0].mxu0
          %v3665 = vadd.f32 0.0, %v3664
          %v3666 = vpop.f32.mrb[0].mxu0
          %3667 = vmatprep.mubr.bf16.mxu0 %v3578
          %3668 = vmatmul.mubr.bf16.gmra.mrb[0].mxu0 %v3577
          %v3669 = vpop.f32.mrb[0].mxu0
          %v3670 = vadd.f32 0.0, %v3669
          %v3671 = vpop.f32.mrb[0].mxu0
          %v3672 = vpop.f32.mrb[0].mxu0
          %v3673 = vadd.f32 0.0, %v3672
          %v3674 = vpop.f32.mrb[0].mxu0
          %3675 = vmatprep.mubr.bf16.mxu0 %v3580
          %3676 = vmatmul.mubr.bf16.gmra.mrb[0].mxu0 %v3579
          %v3677 = vpop.f32.mrb[0].mxu0
          %v3678 = vadd.f32 0.0, %v3677
          %v3679 = vpop.f32.mrb[0].mxu0
          %v3680 = vpop.f32.mrb[0].mxu0
          %v3681 = vadd.f32 0.0, %v3680
          %v3682 = vpop.f32.mrb[0].mxu0
          %3683 = vmatprep.mubr.bf16.mxu0 %v3582
          %3684 = vmatmul.mubr.bf16.gmra.mrb[0].mxu0 %v3581
          %v3685 = vpop.f32.mrb[0].mxu0
          %v3686 = vadd.f32 0.0, %v3685
          %v3687 = vpop.f32.mrb[0].mxu0
          %v3688 = vpop.f32.mrb[0].mxu0
          %v3689 = vadd.f32 0.0, %v3688
          %v3690 = vpop.f32.mrb[0].mxu0
          %3691 = vmatprep.mubr.bf16.mxu0 %v3584
          %3692 = vmatmul.mubr.bf16.gmra.mrb[0].mxu0 %v3583
          %v3693 = vpop.f32.mrb[0].mxu0
          %v3694 = vadd.f32 0.0, %v3693
          %v3695 = vpop.f32.mrb[0].mxu0
          %v3696 = vpop.f32.mrb[0].mxu0
          %v3697 = vadd.f32 0.0, %v3696
          %v3698 = vpop.f32.mrb[0].mxu0
          %3699 = vdwg.mxu0
          %v3700 = vpack.c.bf16 %v3641, %v3638
          %v3701 = vpack.c.bf16 %v3649, %v3646
          %v3702 = vpack.c.bf16 %v3657, %v3654
          %v3703 = vpack.c.bf16 %v3665, %v3662
          %v3704 = vpack.c.bf16 %v3673, %v3670
          %v3705 = vpack.c.bf16 %v3681, %v3678
          %v3706 = vpack.c.bf16 %v3689, %v3686
          %v3707 = vpack.c.bf16 %v3697, %v3694
          %v3708 = vld [vmem:[#allocation16] sm:$0xf]
          %v3709 = vld [vmem:[#allocation16 + $0x4] sm:$0xf]
          %v3710 = vld [vmem:[#allocation16 + $0x8] sm:$0xf]
          %v3711 = vld [vmem:[#allocation16 + $0xc] sm:$0xf]
          %v3712 = vld [vmem:[#allocation18] sm:$0x1]
          %v3714 = vlaneseq
          %v3715 = vshrl.u32 %v3714, 7
          %v3716 = vsub.s32 0, %v3715
          %v3717 = vrot.slane %v3712, %v3716
          %v3723 = vunpack.c.l.b16 %v3708
          %v3724 = vunpack.c.l.b16 %v3709
          %v3725 = vunpack.c.l.b16 %v3710
          %v3726 = vunpack.c.l.b16 %v3711
          %v3727 = vpack.c.b16 %v3724, %v3723
          %v3728 = vpack.c.b16 %v3726, %v3725
          %v3732 = vsel %vm3111, %v3700, 0
          %v3735 = vsel %vm3111, %v3701, 0
          %v3738 = vsel %vm3111, %v3702, 0
          %v3741 = vsel %vm3111, %v3703, 0
          %v3744 = vsel %vm3111, %v3704, 0
          %v3747 = vsel %vm3111, %v3705, 0
          %v3750 = vsel %vm3111, %v3706, 0
          %v3753 = vsel %vm3111, %v3707, 0
          %3755 = vmatprep.subr.bf16.mxu0 0
          %3756 = vmatpush1.bf16.msra.mxu0 %v3727
          %3757 = vmatprep.subr.bf16.mxu0 0
          %3758 = vmatpush1.bf16.msra.mxu0 %v3728
          %3759 = vmatprep.subr.bf16.mxu0 0
          %3760 = vmatpush1.bf16.msra.mxu0 0
          %3761 = vmatprep.subr.bf16.mxu0 0
          %3762 = vmatpush1.bf16.msra.mxu0 0
          %3763 = vmatprep.subr.bf16.mxu0 0
          %3764 = vmatpush1.bf16.msra.mxu0 0
          %3765 = vmatprep.subr.bf16.mxu0 0
          %3766 = vmatpush1.bf16.msra.mxu0 0
          %3767 = vmatprep.subr.bf16.mxu0 0
          %3768 = vmatpush1.bf16.msra.mxu0 0
          %3769 = vmatprep.subr.bf16.mxu0 0
          %3770 = vmatpush1.bf16.msra.mxu0 0
          %3771 = vmatprep.subr.bf16.mxu0 0
          %3772 = vmatpush1.bf16.msra.mxu0 0
          %3773 = vmatprep.subr.bf16.mxu0 0
          %3774 = vmatpush1.bf16.msra.mxu0 0
          %3775 = vmatprep.subr.bf16.mxu0 0
          %3776 = vmatpush1.bf16.msra.mxu0 0
          %3777 = vmatprep.subr.bf16.mxu0 0
          %3778 = vmatpush1.bf16.msra.mxu0 0
          %3779 = vmatprep.subr.bf16.mxu0 0
          %3780 = vmatpush1.bf16.msra.mxu0 0
          %3781 = vmatprep.subr.bf16.mxu0 0
          %3782 = vmatpush1.bf16.msra.mxu0 0
          %3783 = vmatprep.subr.bf16.mxu0 0
          %3784 = vmatpush1.bf16.msra.mxu0 0
          %3785 = vmatprep.subr.bf16.mxu0 0
          %3786 = vmatpush1.bf16.msra.mxu0 0
          %3787 = vmatprep.mubr.bf16.mxu0 0
          %3788 = vmatmul.mubr.bf16.gmra.mrb[0].mxu0 %v3732
          %v3789 = vpop.f32.mrb[0].mxu0
          %v3790 = vadd.f32 %v3717, %v3789
          %v3791 = vpop.f32.mrb[0].mxu0
          %v3792 = vpop.f32.mrb[0].mxu0
          %v3793 = vadd.f32 %v3717, %v3792
          %v3794 = vpop.f32.mrb[0].mxu0
          %3795 = vmatprep.mubr.bf16.mxu0 0
          %3796 = vmatmul.mubr.bf16.gmra.mrb[0].mxu0 %v3735
          %v3797 = vpop.f32.mrb[0].mxu0
          %v3798 = vadd.f32 %v3717, %v3797
          %v3799 = vpop.f32.mrb[0].mxu0
          %v3800 = vpop.f32.mrb[0].mxu0
          %v3801 = vadd.f32 %v3717, %v3800
          %v3802 = vpop.f32.mrb[0].mxu0
          %3803 = vmatprep.mubr.bf16.mxu0 0
          %3804 = vmatmul.mubr.bf16.gmra.mrb[0].mxu0 %v3738
          %v3805 = vpop.f32.mrb[0].mxu0
          %v3806 = vadd.f32 %v3717, %v3805
          %v3807 = vpop.f32.mrb[0].mxu0
          %v3808 = vpop.f32.mrb[0].mxu0
          %v3809 = vadd.f32 %v3717, %v3808
          %v3810 = vpop.f32.mrb[0].mxu0
          %3811 = vmatprep.mubr.bf16.mxu0 0
          %3812 = vmatmul.mubr.bf16.gmra.mrb[0].mxu0 %v3741
          %v3813 = vpop.f32.mrb[0].mxu0
          %v3814 = vadd.f32 %v3717, %v3813
          %v3815 = vpop.f32.mrb[0].mxu0
          %v3816 = vpop.f32.mrb[0].mxu0
          %v3817 = vadd.f32 %v3717, %v3816
          %v3818 = vpop.f32.mrb[0].mxu0
          %3819 = vmatprep.mubr.bf16.mxu0 0
          %3820 = vmatmul.mubr.bf16.gmra.mrb[0].mxu0 %v3744
          %v3821 = vpop.f32.mrb[0].mxu0
          %v3822 = vadd.f32 %v3717, %v3821
          %v3823 = vpop.f32.mrb[0].mxu0
          %v3824 = vpop.f32.mrb[0].mxu0
          %v3825 = vadd.f32 %v3717, %v3824
          %v3826 = vpop.f32.mrb[0].mxu0
          %3827 = vmatprep.mubr.bf16.mxu0 0
          %3828 = vmatmul.mubr.bf16.gmra.mrb[0].mxu0 %v3747
          %v3829 = vpop.f32.mrb[0].mxu0
          %v3830 = vadd.f32 %v3717, %v3829
          %v3831 = vpop.f32.mrb[0].mxu0
          %v3832 = vpop.f32.mrb[0].mxu0
          %v3833 = vadd.f32 %v3717, %v3832
          %v3834 = vpop.f32.mrb[0].mxu0
          %3835 = vmatprep.mubr.bf16.mxu0 0
          %3836 = vmatmul.mubr.bf16.gmra.mrb[0].mxu0 %v3750
          %v3837 = vpop.f32.mrb[0].mxu0
          %v3838 = vadd.f32 %v3717, %v3837
          %v3839 = vpop.f32.mrb[0].mxu0
          %v3840 = vpop.f32.mrb[0].mxu0
          %v3841 = vadd.f32 %v3717, %v3840
          %v3842 = vpop.f32.mrb[0].mxu0
          %3843 = vmatprep.mubr.bf16.mxu0 0
          %3844 = vmatmul.mubr.bf16.gmra.mrb[0].mxu0 %v3753
          %v3845 = vpop.f32.mrb[0].mxu0
          %v3846 = vadd.f32 %v3717, %v3845
          %v3847 = vpop.f32.mrb[0].mxu0
          %v3848 = vpop.f32.mrb[0].mxu0
          %v3849 = vadd.f32 %v3717, %v3848
          %v3850 = vpop.f32.mrb[0].mxu0
          %3851 = vdwg.mxu0
          %v3852 = vadd.f32 %v3067, %v3790
          %v3853 = vadd.f32 %v3068, %v3793
          %v3854 = vadd.f32 %v3069, %v3798
          %v3855 = vadd.f32 %v3070, %v3801
          %v3856 = vadd.f32 %v3071, %v3806
          %v3857 = vadd.f32 %v3072, %v3809
          %v3858 = vadd.f32 %v3073, %v3814
          %v3859 = vadd.f32 %v3074, %v3817
          %v3860 = vadd.f32 %v3075, %v3822
          %v3861 = vadd.f32 %v3076, %v3825
          %v3862 = vadd.f32 %v3077, %v3830
          %v3863 = vadd.f32 %v3078, %v3833
          %v3864 = vadd.f32 %v3079, %v3838
          %v3865 = vadd.f32 %v3080, %v3841
          %v3866 = vadd.f32 %v3081, %v3846
          %v3867 = vadd.f32 %v3082, %v3849
          // Predicated region
          $region128: #{spatial_temp_attn_fwd.5} parent=124 // pred_check
            %p3868 = pneg %p683
          $region129: #{spatial_temp_attn_fwd.5} parent=124 // pred_check_branch
            %3870 = sbr.rel (%p3868) target = $region131
          $region130: #{spatial_temp_attn_fwd.5} parent=124 // pred_region
            %s3871 = smul.u32 %s3062, 32
            %s3872 = smul.addr %s3871, 8
            %s3873 = scalar_lea.vmem %s677, %s3872 [#allocation25]
            %3874 = vst [vmem:[%s3873] sm:$0xff] %v3537
            %3875 = vst [vmem:[%s3873 + $0x8] sm:$0xff] %v3538
            %3876 = vst [vmem:[%s3873 + $0x10] sm:$0xff] %v3539
            %3877 = vst [vmem:[%s3873 + $0x18] sm:$0xff] %v3540
            %3878 = vst [vmem:[%s3873 + $0x20] sm:$0xff] %v3541
            %3879 = vst [vmem:[%s3873 + $0x28] sm:$0xff] %v3542
            %3880 = vst [vmem:[%s3873 + $0x30] sm:$0xff] %v3543
            %3881 = vst [vmem:[%s3873 + $0x38] sm:$0xff] %v3544
            %3882 = vst [vmem:[%s3873 + $0x40] sm:$0xff] %v3545
            %3883 = vst [vmem:[%s3873 + $0x48] sm:$0xff] %v3546
            %3884 = vst [vmem:[%s3873 + $0x50] sm:$0xff] %v3547
            %3885 = vst [vmem:[%s3873 + $0x58] sm:$0xff] %v3548
            %3886 = vst [vmem:[%s3873 + $0x60] sm:$0xff] %v3549
            %3887 = vst [vmem:[%s3873 + $0x68] sm:$0xff] %v3550
            %3888 = vst [vmem:[%s3873 + $0x70] sm:$0xff] %v3551
            %3889 = vst [vmem:[%s3873 + $0x78] sm:$0xff] %v3552
            %3890 = vst [vmem:[%s3873 + $0x80] sm:$0xff] %v3553
            %3891 = vst [vmem:[%s3873 + $0x88] sm:$0xff] %v3554
            %3892 = vst [vmem:[%s3873 + $0x90] sm:$0xff] %v3555
            %3893 = vst [vmem:[%s3873 + $0x98] sm:$0xff] %v3556
            %3894 = vst [vmem:[%s3873 + $0xa0] sm:$0xff] %v3557
            %3895 = vst [vmem:[%s3873 + $0xa8] sm:$0xff] %v3558
            %3896 = vst [vmem:[%s3873 + $0xb0] sm:$0xff] %v3559
            %3897 = vst [vmem:[%s3873 + $0xb8] sm:$0xff] %v3560
            %3898 = vst [vmem:[%s3873 + $0xc0] sm:$0xff] %v3561
            %3899 = vst [vmem:[%s3873 + $0xc8] sm:$0xff] %v3562
            %3900 = vst [vmem:[%s3873 + $0xd0] sm:$0xff] %v3563
            %3901 = vst [vmem:[%s3873 + $0xd8] sm:$0xff] %v3564
            %3902 = vst [vmem:[%s3873 + $0xe0] sm:$0xff] %v3565
            %3903 = vst [vmem:[%s3873 + $0xe8] sm:$0xff] %v3566
            %3904 = vst [vmem:[%s3873 + $0xf0] sm:$0xff] %v3567
            %3905 = vst [vmem:[%s3873 + $0xf8] sm:$0xff] %v3568
          $region131: #{spatial_temp_attn_fwd.5} parent=124 // pred_fallthru
            _
        $region125: #{spatial_temp_attn_fwd.5} parent=67 // loop_footer
          %s3066 = sadd.s32 1, %s3062
        $region126: #{spatial_temp_attn_fwd.5} parent=67 // loop_footer_branch
          %3061 = sbr.rel target = $region122
        $region127: #{spatial_temp_attn_fwd.5} parent=67 // loop_exit
          _
        %v3906 = vld [vmem:[#allocation19] sm:$0xf]
        %v3907 = vld [vmem:[#allocation19 + $0x4] sm:$0xf]
        %v3908 = vld [vmem:[#allocation19 + $0x8] sm:$0xf]
        %v3909 = vld [vmem:[#allocation19 + $0xc] sm:$0xf]
        %v3910 = vld [vmem:[#allocation19 + $0x10] sm:$0xf]
        %v3911 = vld [vmem:[#allocation19 + $0x14] sm:$0xf]
        %v3912 = vld [vmem:[#allocation19 + $0x18] sm:$0xf]
        %v3913 = vld [vmem:[#allocation19 + $0x1c] sm:$0xf]
        %v3914 = vpack.c.bf16 %v3068, %v3067
        %v3915 = vpack.c.bf16 %v3070, %v3069
        %v3916 = vpack.c.bf16 %v3072, %v3071
        %v3917 = vpack.c.bf16 %v3074, %v3073
        %v3918 = vpack.c.bf16 %v3076, %v3075
        %v3919 = vpack.c.bf16 %v3078, %v3077
        %v3920 = vpack.c.bf16 %v3080, %v3079
        %v3921 = vpack.c.bf16 %v3082, %v3081
        %v3922 = vld [vmem:[#allocation21] sm:$0xf]
        %v3923 = vld [vmem:[#allocation21 + $0x4] sm:$0xf]
        %v3924 = vld [vmem:[#allocation21 + $0x8] sm:$0xf]
        %v3925 = vld [vmem:[#allocation21 + $0xc] sm:$0xf]
        %v3926 = vld [vmem:[#allocation21 + $0x10] sm:$0xf]
        %v3927 = vld [vmem:[#allocation21 + $0x14] sm:$0xf]
        %v3928 = vld [vmem:[#allocation21 + $0x18] sm:$0xf]
        %v3929 = vld [vmem:[#allocation21 + $0x1c] sm:$0xf]
        %v3938 = vunpack.c.l.b16 %v3922
        %v3939 = vunpack.c.l.b16 %v3923
        %v3940 = vunpack.c.l.b16 %v3924
        %v3941 = vunpack.c.l.b16 %v3925
        %v3942 = vunpack.c.l.b16 %v3926
        %v3943 = vunpack.c.l.b16 %v3927
        %v3944 = vunpack.c.l.b16 %v3928
        %v3945 = vunpack.c.l.b16 %v3929
        %v3946 = vpack.c.b16 %v3939, %v3938
        %v3947 = vpack.c.b16 %v3941, %v3940
        %v3948 = vpack.c.b16 %v3943, %v3942
        %v3949 = vpack.c.b16 %v3945, %v3944
        %v3955 = vsel %vm2885, %v3914, 0
        %v3958 = vsel %vm2885, %v3915, 0
        %v3961 = vsel %vm2885, %v3916, 0
        %v3964 = vsel %vm2885, %v3917, 0
        %v3967 = vsel %vm2885, %v3918, 0
        %v3970 = vsel %vm2885, %v3919, 0
        %v3973 = vsel %vm2885, %v3920, 0
        %v3976 = vsel %vm2885, %v3921, 0
        %3978 = vmatprep.subr.bf16.mxu0 0
        %3979 = vmatpush1.bf16.msra.mxu0 %v3946
        %3980 = vmatprep.subr.bf16.mxu0 0
        %3981 = vmatpush1.bf16.msra.mxu0 %v3947
        %3982 = vmatprep.subr.bf16.mxu0 0
        %3983 = vmatpush1.bf16.msra.mxu0 %v3948
        %3984 = vmatprep.subr.bf16.mxu0 0
        %3985 = vmatpush1.bf16.msra.mxu0 %v3949
        %3986 = vmatprep.subr.bf16.mxu0 0
        %3987 = vmatpush1.bf16.msra.mxu0 0
        %3988 = vmatprep.subr.bf16.mxu0 0
        %3989 = vmatpush1.bf16.msra.mxu0 0
        %3990 = vmatprep.subr.bf16.mxu0 0
        %3991 = vmatpush1.bf16.msra.mxu0 0
        %3992 = vmatprep.subr.bf16.mxu0 0
        %3993 = vmatpush1.bf16.msra.mxu0 0
        %3994 = vmatprep.subr.bf16.mxu0 0
        %3995 = vmatpush1.bf16.msra.mxu0 0
        %3996 = vmatprep.subr.bf16.mxu0 0
        %3997 = vmatpush1.bf16.msra.mxu0 0
        %3998 = vmatprep.subr.bf16.mxu0 0
        %3999 = vmatpush1.bf16.msra.mxu0 0
        %4000 = vmatprep.subr.bf16.mxu0 0
        %4001 = vmatpush1.bf16.msra.mxu0 0
        %4002 = vmatprep.subr.bf16.mxu0 0
        %4003 = vmatpush1.bf16.msra.mxu0 0
        %4004 = vmatprep.subr.bf16.mxu0 0
        %4005 = vmatpush1.bf16.msra.mxu0 0
        %4006 = vmatprep.subr.bf16.mxu0 0
        %4007 = vmatpush1.bf16.msra.mxu0 0
        %4008 = vmatprep.subr.bf16.mxu0 0
        %4009 = vmatpush1.bf16.msra.mxu0 0
        %4010 = vmatprep.mubr.bf16.mxu0 0
        %4011 = vmatmul.mubr.bf16.gmra.mrb[0].mxu0 %v3955
        %v4012 = vpop.f32.mrb[0].mxu0
        %v4013 = vadd.f32 0.0, %v4012
        %v4014 = vpop.f32.mrb[0].mxu0
        %v4015 = vpop.f32.mrb[0].mxu0
        %v4016 = vadd.f32 0.0, %v4015
        %v4017 = vpop.f32.mrb[0].mxu0
        %4018 = vmatprep.mubr.bf16.mxu0 0
        %4019 = vmatmul.mubr.bf16.gmra.mrb[0].mxu0 %v3958
        %v4020 = vpop.f32.mrb[0].mxu0
        %v4021 = vadd.f32 0.0, %v4020
        %v4022 = vpop.f32.mrb[0].mxu0
        %v4023 = vpop.f32.mrb[0].mxu0
        %v4024 = vadd.f32 0.0, %v4023
        %v4025 = vpop.f32.mrb[0].mxu0
        %4026 = vmatprep.mubr.bf16.mxu0 0
        %4027 = vmatmul.mubr.bf16.gmra.mrb[0].mxu0 %v3961
        %v4028 = vpop.f32.mrb[0].mxu0
        %v4029 = vadd.f32 0.0, %v4028
        %v4030 = vpop.f32.mrb[0].mxu0
        %v4031 = vpop.f32.mrb[0].mxu0
        %v4032 = vadd.f32 0.0, %v4031
        %v4033 = vpop.f32.mrb[0].mxu0
        %4034 = vmatprep.mubr.bf16.mxu0 0
        %4035 = vmatmul.mubr.bf16.gmra.mrb[0].mxu0 %v3964
        %v4036 = vpop.f32.mrb[0].mxu0
        %v4037 = vadd.f32 0.0, %v4036
        %v4038 = vpop.f32.mrb[0].mxu0
        %v4039 = vpop.f32.mrb[0].mxu0
        %v4040 = vadd.f32 0.0, %v4039
        %v4041 = vpop.f32.mrb[0].mxu0
        %4042 = vmatprep.mubr.bf16.mxu0 0
        %4043 = vmatmul.mubr.bf16.gmra.mrb[0].mxu0 %v3967
        %v4044 = vpop.f32.mrb[0].mxu0
        %v4045 = vadd.f32 0.0, %v4044
        %v4046 = vpop.f32.mrb[0].mxu0
        %v4047 = vpop.f32.mrb[0].mxu0
        %v4048 = vadd.f32 0.0, %v4047
        %v4049 = vpop.f32.mrb[0].mxu0
        %4050 = vmatprep.mubr.bf16.mxu0 0
        %4051 = vmatmul.mubr.bf16.gmra.mrb[0].mxu0 %v3970
        %v4052 = vpop.f32.mrb[0].mxu0
        %v4053 = vadd.f32 0.0, %v4052
        %v4054 = vpop.f32.mrb[0].mxu0
        %v4055 = vpop.f32.mrb[0].mxu0
        %v4056 = vadd.f32 0.0, %v4055
        %v4057 = vpop.f32.mrb[0].mxu0
        %4058 = vmatprep.mubr.bf16.mxu0 0
        %4059 = vmatmul.mubr.bf16.gmra.mrb[0].mxu0 %v3973
        %v4060 = vpop.f32.mrb[0].mxu0
        %v4061 = vadd.f32 0.0, %v4060
        %v4062 = vpop.f32.mrb[0].mxu0
        %v4063 = vpop.f32.mrb[0].mxu0
        %v4064 = vadd.f32 0.0, %v4063
        %v4065 = vpop.f32.mrb[0].mxu0
        %4066 = vmatprep.mubr.bf16.mxu0 0
        %4067 = vmatmul.mubr.bf16.gmra.mrb[0].mxu0 %v3976
        %v4068 = vpop.f32.mrb[0].mxu0
        %v4069 = vadd.f32 0.0, %v4068
        %v4070 = vpop.f32.mrb[0].mxu0
        %v4071 = vpop.f32.mrb[0].mxu0
        %v4072 = vadd.f32 0.0, %v4071
        %v4073 = vpop.f32.mrb[0].mxu0
        %4074 = vdwg.mxu0
        %v4083 = vunpack.c.l.b16 %v3906
        %v4084 = vunpack.c.l.b16 %v3907
        %v4085 = vunpack.c.l.b16 %v3908
        %v4086 = vunpack.c.l.b16 %v3909
        %v4087 = vunpack.c.l.b16 %v3910
        %v4088 = vunpack.c.l.b16 %v3911
        %v4089 = vunpack.c.l.b16 %v3912
        %v4090 = vunpack.c.l.b16 %v3913
        %v4091 = vpack.c.b16 %v4084, %v4083
        %v4092 = vpack.c.b16 %v4086, %v4085
        %v4093 = vpack.c.b16 %v4088, %v4087
        %v4094 = vpack.c.b16 %v4090, %v4089
        %4099 = vmatprep.subr.bf16.mxu0 0
        %4100 = vmatpush1.bf16.msra.mxu0 %v4091
        %4101 = vmatprep.subr.bf16.mxu0 0
        %4102 = vmatpush1.bf16.msra.mxu0 %v4092
        %4103 = vmatprep.subr.bf16.mxu0 0
        %4104 = vmatpush1.bf16.msra.mxu0 %v4093
        %4105 = vmatprep.subr.bf16.mxu0 0
        %4106 = vmatpush1.bf16.msra.mxu0 %v4094
        %4107 = vmatprep.subr.bf16.mxu0 0
        %4108 = vmatpush1.bf16.msra.mxu0 0
        %4109 = vmatprep.subr.bf16.mxu0 0
        %4110 = vmatpush1.bf16.msra.mxu0 0
        %4111 = vmatprep.subr.bf16.mxu0 0
        %4112 = vmatpush1.bf16.msra.mxu0 0
        %4113 = vmatprep.subr.bf16.mxu0 0
        %4114 = vmatpush1.bf16.msra.mxu0 0
        %4115 = vmatprep.subr.bf16.mxu0 0
        %4116 = vmatpush1.bf16.msra.mxu0 0
        %4117 = vmatprep.subr.bf16.mxu0 0
        %4118 = vmatpush1.bf16.msra.mxu0 0
        %4119 = vmatprep.subr.bf16.mxu0 0
        %4120 = vmatpush1.bf16.msra.mxu0 0
        %4121 = vmatprep.subr.bf16.mxu0 0
        %4122 = vmatpush1.bf16.msra.mxu0 0
        %4123 = vmatprep.subr.bf16.mxu0 0
        %4124 = vmatpush1.bf16.msra.mxu0 0
        %4125 = vmatprep.subr.bf16.mxu0 0
        %4126 = vmatpush1.bf16.msra.mxu0 0
        %4127 = vmatprep.subr.bf16.mxu0 0
        %4128 = vmatpush1.bf16.msra.mxu0 0
        %4129 = vmatprep.subr.bf16.mxu0 0
        %4130 = vmatpush1.bf16.msra.mxu0 0
        %4131 = vmatprep.mubr.bf16.mxu0 0
        %4132 = vmatmul.mubr.bf16.gmra.mrb[0].mxu0 %v2887
        %v4133 = vpop.f32.mrb[0].mxu0
        %v4134 = vadd.f32 %v4013, %v4133
        %v4135 = vpop.f32.mrb[0].mxu0
        %v4136 = vpop.f32.mrb[0].mxu0
        %v4137 = vadd.f32 %v4016, %v4136
        %v4138 = vpop.f32.mrb[0].mxu0
        %4139 = vmatprep.mubr.bf16.mxu0 0
        %4140 = vmatmul.mubr.bf16.gmra.mrb[0].mxu0 %v2890
        %v4141 = vpop.f32.mrb[0].mxu0
        %v4142 = vadd.f32 %v4021, %v4141
        %v4143 = vpop.f32.mrb[0].mxu0
        %v4144 = vpop.f32.mrb[0].mxu0
        %v4145 = vadd.f32 %v4024, %v4144
        %v4146 = vpop.f32.mrb[0].mxu0
        %4147 = vmatprep.mubr.bf16.mxu0 0
        %4148 = vmatmul.mubr.bf16.gmra.mrb[0].mxu0 %v2893
        %v4149 = vpop.f32.mrb[0].mxu0
        %v4150 = vadd.f32 %v4029, %v4149
        %v4151 = vpop.f32.mrb[0].mxu0
        %v4152 = vpop.f32.mrb[0].mxu0
        %v4153 = vadd.f32 %v4032, %v4152
        %v4154 = vpop.f32.mrb[0].mxu0
        %4155 = vmatprep.mubr.bf16.mxu0 0
        %4156 = vmatmul.mubr.bf16.gmra.mrb[0].mxu0 %v2896
        %v4157 = vpop.f32.mrb[0].mxu0
        %v4158 = vadd.f32 %v4037, %v4157
        %v4159 = vpop.f32.mrb[0].mxu0
        %v4160 = vpop.f32.mrb[0].mxu0
        %v4161 = vadd.f32 %v4040, %v4160
        %v4162 = vpop.f32.mrb[0].mxu0
        %4163 = vmatprep.mubr.bf16.mxu0 0
        %4164 = vmatmul.mubr.bf16.gmra.mrb[0].mxu0 %v2899
        %v4165 = vpop.f32.mrb[0].mxu0
        %v4166 = vadd.f32 %v4045, %v4165
        %v4167 = vpop.f32.mrb[0].mxu0
        %v4168 = vpop.f32.mrb[0].mxu0
        %v4169 = vadd.f32 %v4048, %v4168
        %v4170 = vpop.f32.mrb[0].mxu0
        %4171 = vmatprep.mubr.bf16.mxu0 0
        %4172 = vmatmul.mubr.bf16.gmra.mrb[0].mxu0 %v2902
        %v4173 = vpop.f32.mrb[0].mxu0
        %v4174 = vadd.f32 %v4053, %v4173
        %v4175 = vpop.f32.mrb[0].mxu0
        %v4176 = vpop.f32.mrb[0].mxu0
        %v4177 = vadd.f32 %v4056, %v4176
        %v4178 = vpop.f32.mrb[0].mxu0
        %4179 = vmatprep.mubr.bf16.mxu0 0
        %4180 = vmatmul.mubr.bf16.gmra.mrb[0].mxu0 %v2905
        %v4181 = vpop.f32.mrb[0].mxu0
        %v4182 = vadd.f32 %v4061, %v4181
        %v4183 = vpop.f32.mrb[0].mxu0
        %v4184 = vpop.f32.mrb[0].mxu0
        %v4185 = vadd.f32 %v4064, %v4184
        %v4186 = vpop.f32.mrb[0].mxu0
        %4187 = vmatprep.mubr.bf16.mxu0 0
        %4188 = vmatmul.mubr.bf16.gmra.mrb[0].mxu0 %v2908
        %v4189 = vpop.f32.mrb[0].mxu0
        %v4190 = vadd.f32 %v4069, %v4189
        %v4191 = vpop.f32.mrb[0].mxu0
        %v4192 = vpop.f32.mrb[0].mxu0
        %v4193 = vadd.f32 %v4072, %v4192
        %v4194 = vpop.f32.mrb[0].mxu0
        %4195 = vdwg.mxu0
        %v4196 = vld [vmem:[#allocation22] sm:$0x1]
        %v4198 = vlaneseq
        %v4199 = vshrl.u32 %v4198, 7
        %v4200 = vsub.s32 0, %v4199
        %v4201 = vrot.slane %v4196, %v4200
        %v4203 = vadd.f32 %v4134, %v4201
        %v4204 = vadd.f32 %v4137, %v4201
        %v4205 = vadd.f32 %v4142, %v4201
        %v4206 = vadd.f32 %v4145, %v4201
        %v4207 = vadd.f32 %v4150, %v4201
        %v4208 = vadd.f32 %v4153, %v4201
        %v4209 = vadd.f32 %v4158, %v4201
        %v4210 = vadd.f32 %v4161, %v4201
        %v4211 = vadd.f32 %v4166, %v4201
        %v4212 = vadd.f32 %v4169, %v4201
        %v4213 = vadd.f32 %v4174, %v4201
        %v4214 = vadd.f32 %v4177, %v4201
        %v4215 = vadd.f32 %v4182, %v4201
        %v4216 = vadd.f32 %v4185, %v4201
        %v4217 = vadd.f32 %v4190, %v4201
        %v4218 = vadd.f32 %v4193, %v4201
        %v4219 = vadd.f32 %v2797, %v4203
        %v4220 = vadd.f32 %v2798, %v4204
        %v4221 = vadd.f32 %v2799, %v4205
        %v4222 = vadd.f32 %v2800, %v4206
        %v4223 = vadd.f32 %v2801, %v4207
        %v4224 = vadd.f32 %v2802, %v4208
        %v4225 = vadd.f32 %v2803, %v4209
        %v4226 = vadd.f32 %v2804, %v4210
        %v4227 = vadd.f32 %v2805, %v4211
        %v4228 = vadd.f32 %v2806, %v4212
        %v4229 = vadd.f32 %v2807, %v4213
        %v4230 = vadd.f32 %v2808, %v4214
        %v4231 = vadd.f32 %v2809, %v4215
        %v4232 = vadd.f32 %v2810, %v4216
        %v4233 = vadd.f32 %v2811, %v4217
        %v4234 = vadd.f32 %v2812, %v4218
        %4235 = vst.msk [vmem:[%s670] sm:$0xff] %vm2885, %v4219
        %4236 = vst.msk [vmem:[%s670 + $0x8] sm:$0xff] %vm2885, %v4220
        %4237 = vst.msk [vmem:[%s670 + $0x10] sm:$0xff] %vm2885, %v4221
        %4238 = vst.msk [vmem:[%s670 + $0x18] sm:$0xff] %vm2885, %v4222
        %4239 = vst.msk [vmem:[%s670 + $0x20] sm:$0xff] %vm2885, %v4223
        %4240 = vst.msk [vmem:[%s670 + $0x28] sm:$0xff] %vm2885, %v4224
        %4241 = vst.msk [vmem:[%s670 + $0x30] sm:$0xff] %vm2885, %v4225
        %4242 = vst.msk [vmem:[%s670 + $0x38] sm:$0xff] %vm2885, %v4226
        %4243 = vst.msk [vmem:[%s670 + $0x40] sm:$0xff] %vm2885, %v4227
        %4244 = vst.msk [vmem:[%s670 + $0x48] sm:$0xff] %vm2885, %v4228
        %4245 = vst.msk [vmem:[%s670 + $0x50] sm:$0xff] %vm2885, %v4229
        %4246 = vst.msk [vmem:[%s670 + $0x58] sm:$0xff] %vm2885, %v4230
        %4247 = vst.msk [vmem:[%s670 + $0x60] sm:$0xff] %vm2885, %v4231
        %4248 = vst.msk [vmem:[%s670 + $0x68] sm:$0xff] %vm2885, %v4232
        %4249 = vst.msk [vmem:[%s670 + $0x70] sm:$0xff] %vm2885, %v4233
        %4250 = vst.msk [vmem:[%s670 + $0x78] sm:$0xff] %vm2885, %v4234
        %s4251 = sand.u32 %s339, 1
        %s4252 = scalar_lea.sflag [#allocation6], %s4251
        %s4253 = sand.u32 %s339, 1
        %s4254 = smul.addr %s4253, 128
        %s4255 = scalar_lea.vmem [#allocation24], %s4254
        %s4256 = sand.u32 %s367, 1
        %s4257 = scalar_lea.sflag [#allocation26], %s4256
        %s4258 = sand.u32 %s367, 1
        %s4259 = smul.addr %s4258, 512
        %s4260 = scalar_lea.vmem [#allocation25], %s4259
        // Predicated region
        $region132: #{spatial_temp_attn_fwd.5} parent=67 // pred_check
          %p4261 = pneg %p349
        $region133: #{spatial_temp_attn_fwd.5} parent=67 // pred_check_branch
          %4263 = sbr.rel (%p4261) target = $region135
        $region134: #{spatial_temp_attn_fwd.5} parent=67 // pred_region
          %s4264 = smul.u32 16, %s48
          %s4266 = ssub.s32 2048, 2048
          %4267 = vsyncadd %s4252, %s4266
          %s4268 = smul.addr %s49, 32
          %s4269 = sadd.s32 %s4264, %s4268
          %s4270 = smul.addr %s47, 96
          %s4271 = sadd.s32 %s4269, %s4270
          %s4272 = smul.addr %s4271, 128
          %s4273 = scalar_lea.hbm %s12, %s4272
          %s4274 = sshll.u32 %s4255, 4
          %s4275 = int_to_ptr.vmem [resolvable:$true] %s4274
          %4280 = dma.vmem_to_hbm [thread:$0]  %s4275, 2048, %s4273, %s4252, 128, 128, 8
        $region135: #{spatial_temp_attn_fwd.5} parent=67 // pred_fallthru
          _
        // Predicated region
        $region136: #{spatial_temp_attn_fwd.5} parent=67 // pred_check
          %p4281 = pneg %p377
        $region137: #{spatial_temp_attn_fwd.5} parent=67 // pred_check_branch
          %4283 = sbr.rel (%p4281) target = $region139
        $region138: #{spatial_temp_attn_fwd.5} parent=67 // pred_region
          #allocation28 [shape = 'u32[6]{0}', space=smem, size = 0x18, scoped, tag = 'DMA stride descriptor']
          %s4284 = smul.u32 16, %s48
          %s4286 = ssub.s32 8192, 8192
          %4287 = vsyncadd %s4257, %s4286
          %s4288 = smul.addr %s4284, 2
          %s4289 = smul.addr %s47, 128
          %s4290 = sadd.s32 %s4288, %s4289
          %s4291 = smul.addr %s4290, 128
          %s4292 = scalar_lea.hbm %s13, %s4291
          %s4294 = sshll.u32 1, 14
          %s4295 = sxor.u32 4294967295, %s4294
          %s4298 = sshll.u32 7, 18
          %s4299 = sxor.u32 4294967295, %s4298
          %s4300 = sand.u32 0, %s4299
          %s4302 = sor.u32 %s4300, 0
          %s4304 = sshll.u32 3, 24
          %s4305 = sxor.u32 4294967295, %s4304
          %s4306 = sand.u32 %s4302, %s4305
          %s4308 = sor.u32 %s4306, 0
          %s4309 = sshll.u32 %s4260, 4
          %s4310 = int_to_ptr.vmem [resolvable:$true] %s4309
          %4316 = sst [smem:[#allocation28]] 4096
          %s4317 = scalar_lea.smem [#allocation28], 1
          %4318 = sst [smem:[%s4317]] 8192
          %s4319 = scalar_lea.smem [#allocation28], 2
          %4320 = sst [smem:[%s4319]] 16
          %s4321 = scalar_lea.smem [#allocation28], 3
          %4322 = sst [smem:[%s4321]] 256
          %s4323 = scalar_lea.smem [#allocation28], 4
          %4324 = sst [smem:[%s4323]] 256
          %s4325 = scalar_lea.smem [#allocation28], 5
          %4326 = sst [smem:[%s4325]] 16
          %4328 = dma.general %s4310, 8192, %s4292, %s4257, [#allocation27], [#allocation28], %s4308, 0
        $region139: #{spatial_temp_attn_fwd.5} parent=67 // pred_fallthru
          _
      $region68: #{spatial_temp_attn_fwd.5} parent=5 // pred_fallthru
        _
      %p4329 = scmp.le.s32.totalorder 2, %s37
      // Predicated region
      $region140: #{spatial_temp_attn_fwd.5} parent=5 // pred_check
        %p4330 = pneg %p4329
      $region141: #{spatial_temp_attn_fwd.5} parent=5 // pred_check_branch
        %4332 = sbr.rel (%p4330) target = $region143
      $region142: #{spatial_temp_attn_fwd.5} parent=5 // pred_region
        %s4333 = ssub.s32 %s37, 2
        // Predicated region
        $region144: #{spatial_temp_attn_fwd.5} parent=142 // pred_check
          %p4334 = pneg %p355
        $region145: #{spatial_temp_attn_fwd.5} parent=142 // pred_check_branch
          %4336 = sbr.rel (%p4334) target = $region147
        $region146: #{spatial_temp_attn_fwd.5} parent=142 // pred_region
          %s4337 = sand.u32 %s340, 1
          %s4338 = scalar_lea.sflag [#allocation6], %s4337
          %s4339 = sand.u32 %s340, 1
          %s4340 = smul.addr %s4339, 128
          %s4341 = scalar_lea.vmem [#allocation24], %s4340
          %4342 = dma.done %s4338, 2048
        $region147: #{spatial_temp_attn_fwd.5} parent=142 // pred_fallthru
          _
        // Predicated region
        $region148: #{spatial_temp_attn_fwd.5} parent=142 // pred_check
          %p4343 = pneg %p383
        $region149: #{spatial_temp_attn_fwd.5} parent=142 // pred_check_branch
          %4345 = sbr.rel (%p4343) target = $region151
        $region150: #{spatial_temp_attn_fwd.5} parent=142 // pred_region
          %s4346 = sand.u32 %s368, 1
          %s4347 = scalar_lea.sflag [#allocation26], %s4346
          %s4348 = sand.u32 %s368, 1
          %s4349 = smul.addr %s4348, 512
          %s4350 = scalar_lea.vmem [#allocation25], %s4349
          %4351 = dma.done %s4347, 8192
        $region151: #{spatial_temp_attn_fwd.5} parent=142 // pred_fallthru
          _
      $region143: #{spatial_temp_attn_fwd.5} parent=5 // pred_fallthru
        _
    $region6: #{spatial_temp_attn_fwd.5} parent=1 // loop_footer
      %s41 = sadd.s32 1, %s37
    $region7: #{spatial_temp_attn_fwd.5} parent=1 // loop_footer_branch
      %36 = sbr.rel target = $region3
    $region8: #{spatial_temp_attn_fwd.5} parent=1 // loop_exit
      _
    %4352 = vsyncpa [#allocation5], 1
    %s4353 = scalar_lea.sflag [#allocation5], 1
    %4354 = vsyncpa %s4353, 1
    %4355 = vsyncpa [#allocation8], 1
    %s4356 = scalar_lea.sflag [#allocation8], 1
    %4357 = vsyncpa %s4356, 1
    %4358 = vsyncpa [#allocation11], 1
    %4359 = vsyncpa [#allocation14], 1
    %4360 = vsyncpa [#allocation17], 1
    %4361 = vsyncpa [#allocation20], 1
    %4362 = vsyncpa [#allocation23], 1
    %4363 = vsyncpa [#allocation6], 1
    %s4364 = scalar_lea.sflag [#allocation6], 1
    %4365 = vsyncpa %s4364, 1
    %4366 = vsyncpa [#allocation26], 1
    %s4367 = scalar_lea.sflag [#allocation26], 1
    %4368 = vsyncpa %s4367, 1

</llo_original>
